<compile_context>
chip_gen: v7x
topology: tpu7x:2x2x1
jax: 0.10.0
libtpu: 0.0.40
codegen_flags: <defaults>
</compile_context>

<pallas_src>
import jax
import jax.numpy as jnp
from jax.experimental import pallas as pl
from jax.experimental.pallas import tpu as pltpu

NUM_INPUTS = 4          # num_inputs
HIDDEN     = 32         # hidden_dim (small, per instructions)
NUM_HEADS  = 4
NUM_LAYERS = 4
HEAD_DIM   = HIDDEN // NUM_HEADS
VOCAB_T    = 100000     # nn.Embedding(100000, hidden_dim)
LN_EPS     = 1e-5


def _layernorm(x, g, b):
    mean = jnp.mean(x, axis=-1, keepdims=True)
    var = jnp.mean((x - mean) ** 2, axis=-1, keepdims=True)
    return (x - mean) * jax.lax.rsqrt(var + LN_EPS) * g + b


def tab_transformer_kernel(
    x_ref, t_ref,
    emb_w_ref, emb_b_ref,
    wqkv_ref, bqkv_ref,
    wo_ref, bo_ref,
    lin1_w_ref, lin1_b_ref, lin2_w_ref, lin2_b_ref,
    ln1_g_ref, ln1_b_ref, ln2_g_ref, ln2_b_ref,
    out_w_ref, out_b_ref,
    o_ref,
):
    TB, S, D_in = x_ref.shape
    M = TB * S

    # ---- input Linear on a flat (M, H) activation ----
    x = x_ref[...].reshape(M, D_in)
    h = jnp.dot(x, emb_w_ref[...], preferred_element_type=jnp.float32) + emb_b_ref[...]
    # broadcast the (TB, 1, H) time embedding over the sequence dim in-kernel
    h = (h.reshape(TB, S, HIDDEN) + t_ref[...]).reshape(M, HIDDEN)

    for l in range(NUM_LAYERS):
        # ---------- multi-head self-attention ----------
        # fused QKV projection: one (M, H) x (H, 3H) matmul (scale folded in)
        qkv = jnp.dot(h, wqkv_ref[l], preferred_element_type=jnp.float32) + bqkv_ref[l]
        qkv = qkv.reshape(TB, S, 3 * HIDDEN)

        ctx_heads = []
        for hd in range(NUM_HEADS):
            q = qkv[:, :, 0 * HIDDEN + hd * HEAD_DIM: 0 * HIDDEN + (hd + 1) * HEAD_DIM]
            k = qkv[:, :, 1 * HIDDEN + hd * HEAD_DIM: 1 * HIDDEN + (hd + 1) * HEAD_DIM]
            v = qkv[:, :, 2 * HIDDEN + hd * HEAD_DIM: 2 * HIDDEN + (hd + 1) * HEAD_DIM]
            s = jnp.einsum('bqd,bkd->bqk', q, k,
                           preferred_element_type=jnp.float32)            # (TB, S, S)
            s = s - jnp.max(s, axis=-1, keepdims=True)
            p = jnp.exp(s)
            p = p * pl.reciprocal(jnp.sum(p, axis=-1, keepdims=True), approx=True)
            ctx_heads.append(jnp.einsum('bqk,bkd->bqd', p, v,
                                        preferred_element_type=jnp.float32))

        # lane-concat heads, single (M, H) x (H, H) out-projection
        ctx = jnp.concatenate(ctx_heads, axis=-1).reshape(M, HIDDEN)
        attn = jnp.dot(ctx, wo_ref[l], preferred_element_type=jnp.float32) + bo_ref[l]

        # residual + LayerNorm1 (post-norm; dropout = identity in eval mode)
        h = _layernorm(h + attn, ln1_g_ref[l], ln1_b_ref[l])

        # ---------- feed-forward (ReLU, dim_feedforward == hidden_dim) ----------
        ff = jnp.dot(h, lin1_w_ref[l], preferred_element_type=jnp.float32) + lin1_b_ref[l]
        ff = jnp.maximum(ff, 0.0)
        ff = jnp.dot(ff, lin2_w_ref[l], preferred_element_type=jnp.float32) + lin2_b_ref[l]
        h = _layernorm(h + ff, ln2_g_ref[l], ln2_b_ref[l])

    # ---------- output Linear, lane-tight (TB, S, NUM_INPUTS) store ----------
    o = jnp.dot(h, out_w_ref[...], preferred_element_type=jnp.float32) + out_b_ref[...]
    o_ref[...] = o.reshape(TB, S, NUM_INPUTS).astype(o_ref.dtype)


def prepare_params(params):
    """One-time layout prep (call once, outside the per-step forward):
    transpose torch (out,in) weights to (in,out), keep the fused QKV projection
    (columns [q|k|v]), and fold the 1/sqrt(head_dim) score scale into Q."""
    (emb_w, emb_b, inproj_w, inproj_b, outproj_w, outproj_b,
     lin1_w, lin1_b, lin2_w, lin2_b, ln1_g, ln1_b, ln2_g, ln2_b,
     out_w, out_b) = params
    H = HIDDEN
    scale = 1.0 / (HEAD_DIM ** 0.5)

    wqkv = jnp.swapaxes(inproj_w, -1, -2)            # (L, H_in, 3H), cols = [q|k|v]
    bqkv = inproj_b                                  # (L, 1, 3H)
    q_scale = jnp.concatenate([jnp.full((H,), scale, jnp.float32),
                               jnp.ones((2 * H,), jnp.float32)])
    wqkv = wqkv * q_scale                            # fold attention scale into Q
    bqkv = bqkv * q_scale

    wo = jnp.swapaxes(outproj_w, -1, -2)             # (L, H, H)
    bo = outproj_b                                   # (L, 1, H)

    return (emb_w.T, emb_b,
            wqkv, bqkv, wo, bo,
            jnp.swapaxes(lin1_w, -1, -2), lin1_b,
            jnp.swapaxes(lin2_w, -1, -2), lin2_b,
            ln1_g, ln1_b, ln2_g, ln2_b,
            out_w.T, out_b)


def _num_tensorcores():
    """2 for chips whose 'parallel' grid axes shard across TensorCores."""
    try:
        kind = (jax.devices()[0].device_kind or "").lower()
    except Exception:
        return 1
    if any(t in kind for t in ("v7", "v4", "v5p")):
        return 2
    return 1


def _plan_batch_tiling(B, S, num_cores):
    """Target ~2048 rows (TB*S) per grid step; on 2-core chips keep an even
    grid of >= 2 steps when the batch allows it; otherwise grid=1 is fine."""
    target_rows = 2048
    tb = max(1, target_rows // max(S, 1))
    if num_cores >= 2 and B >= 2:
        tb = min(tb, pl.cdiv(B, 2))
    tb = min(tb, B)
    grid = pl.cdiv(B, tb)
    if num_cores >= 2 and grid > 1 and grid % 2 == 1:
        grid += 1                                    # keep both TCs busy
    return tb, grid, tb * grid


def tab_transformer_forward(x, timesteps, time_table, prepared_params):
    """x: (B, S, D_in) f32, timesteps: (B, 1) i32, prepared_params from prepare_params()."""
    B, S, D_in = x.shape
    tb, grid, b_pad = _plan_batch_tiling(B, S, _num_tensorcores())

    # glue: embedding-table gather only -> (B, 1, H); broadcast happens in-kernel.
    time_emb = time_table[timesteps].astype(jnp.float32)

    if b_pad != B:
        pad = b_pad - B
        x = jnp.pad(x, ((0, pad), (0, 0), (0, 0)))
        time_emb = jnp.pad(time_emb, ((0, pad), (0, 0), (0, 0)))

    def full_spec(a):
        return pl.BlockSpec(a.shape, lambda b, _nd=a.ndim: (0,) * _nd)

    in_specs = [
        pl.BlockSpec((tb, S, D_in), lambda b: (b, 0, 0)),
        pl.BlockSpec((tb, 1, HIDDEN), lambda b: (b, 0, 0)),
    ] + [full_spec(p) for p in prepared_params]

    out_specs = pl.BlockSpec((tb, S, NUM_INPUTS), lambda b: (b, 0, 0))

    out = pl.pallas_call(
        tab_transformer_kernel,
        out_shape=jax.ShapeDtypeStruct((b_pad, S, NUM_INPUTS), jnp.float32),
        grid=(grid,),
        in_specs=in_specs,
        out_specs=out_specs,
        compiler_params=pltpu.CompilerParams(dimension_semantics=("parallel",)),
    )(x, time_emb, *prepared_params)

    return out[:B]


def init_params(key):
    """Deterministic synthetic parameters in PyTorch layout (out_features, in_features)."""
    ks = jax.random.split(key, 12)
    w = lambda k, shape: 0.02 * jax.random.normal(k, shape, dtype=jnp.float32)
    emb_w = w(ks[0], (HIDDEN, NUM_INPUTS))
    emb_b = w(ks[1], (1, HIDDEN))
    inproj_w = w(ks[2], (NUM_LAYERS, 3 * HIDDEN, HIDDEN))
    inproj_b = w(ks[3], (NUM_LAYERS, 1, 3 * HIDDEN))
    outproj_w = w(ks[4], (NUM_LAYERS, HIDDEN, HIDDEN))
    outproj_b = w(ks[5], (NUM_LAYERS, 1, HIDDEN))
    lin1_w = w(ks[6], (NUM_LAYERS, HIDDEN, HIDDEN))
    lin1_b = w(ks[7], (NUM_LAYERS, 1, HIDDEN))
    lin2_w = w(ks[8], (NUM_LAYERS, HIDDEN, HIDDEN))
    lin2_b = w(ks[9], (NUM_LAYERS, 1, HIDDEN))
    ln1_g = jnp.ones((NUM_LAYERS, 1, HIDDEN), jnp.float32)
    ln1_b = jnp.zeros((NUM_LAYERS, 1, HIDDEN), jnp.float32)
    ln2_g = jnp.ones((NUM_LAYERS, 1, HIDDEN), jnp.float32)
    ln2_b = jnp.zeros((NUM_LAYERS, 1, HIDDEN), jnp.float32)
    out_w = w(ks[10], (NUM_INPUTS, HIDDEN))
    out_b = w(ks[11], (1, NUM_INPUTS))
    return (emb_w, emb_b, inproj_w, inproj_b, outproj_w, outproj_b,
            lin1_w, lin1_b, lin2_w, lin2_b, ln1_g, ln1_b, ln2_g, ln2_b,
            out_w, out_b)


def reference_forward(x, timesteps, time_table, params):
    """Pure-JAX reference mirroring PyTorch semantics (eval mode)."""
    (emb_w, emb_b, inproj_w, inproj_b, outproj_w, outproj_b,
     lin1_w, lin1_b, lin2_w, lin2_b, ln1_g, ln1_b, ln2_g, ln2_b,
     out_w, out_b) = params
    B, S, _ = x.shape
    time_emb = time_table[timesteps]                                   # (B, 1, H)
    h = jnp.einsum('bsd,hd->bsh', x, emb_w) + emb_b[0] + time_emb
    scale = 1.0 / (HEAD_DIM ** 0.5)
    for l in range(NUM_LAYERS):
        qkv = jnp.einsum('bsh,oh->bso', h, inproj_w[l]) + inproj_b[l, 0]
        q, k, v = jnp.split(qkv, 3, axis=-1)
        qh = q.reshape(B, S, NUM_HEADS, HEAD_DIM)
        kh = k.reshape(B, S, NUM_HEADS, HEAD_DIM)
        vh = v.reshape(B, S, NUM_HEADS, HEAD_DIM)
        s = jnp.einsum('bqnd,bknd->bnqk', qh, kh) * scale
        p = jax.nn.softmax(s, axis=-1)
        o = jnp.einsum('bnqk,bknd->bqnd', p, vh).reshape(B, S, HIDDEN)
        attn = jnp.einsum('bsh,oh->bso', o, outproj_w[l]) + outproj_b[l, 0]
        h = _layernorm(h + attn, ln1_g[l, 0], ln1_b[l, 0])
        ff = jax.nn.relu(jnp.einsum('bsh,oh->bso', h, lin1_w[l]) + lin1_b[l, 0])
        ff = jnp.einsum('bsh,oh->bso', ff, lin2_w[l]) + lin2_b[l, 0]
        h = _layernorm(h + ff, ln2_g[l, 0], ln2_b[l, 0])
    return jnp.einsum('bsh,dh->bsd', h, out_w) + out_b[0]


if __name__ == "__main__":
    key = jax.random.PRNGKey(0)
    k_x, k_t, k_tab, k_p, k_x2, k_t2 = jax.random.split(key, 6)

    time_table = 0.02 * jax.random.normal(k_tab, (VOCAB_T, HIDDEN), dtype=jnp.float32)
    params = init_params(k_p)
    prepared = prepare_params(params)          # layout prep hoisted out of the forward

    # two small cases: B=2 and B=8 (S=8) to exercise batching / tiling / padding
    for (B, S, kx, kt) in [(2, 8, k_x, k_t), (8, 8, k_x2, k_t2)]:
        x = jax.random.normal(kx, (B, S, NUM_INPUTS), dtype=jnp.float32)
        timesteps = jax.random.randint(kt, (B, 1), 0, VOCAB_T, dtype=jnp.int32)

        out = jax.block_until_ready(tab_transformer_forward(x, timesteps, time_table, prepared))
        ref = reference_forward(x, timesteps, time_table, params)

        assert out.shape == (B, S, NUM_INPUTS)
        max_diff = float(jnp.max(jnp.abs(out - ref)))
        assert jnp.allclose(out, ref, atol=3e-3, rtol=3e-3), (
            f"kernel/reference mismatch (B={B}): max abs diff {max_diff}")

    print("KERNEL_OK")
</pallas_src>

<mosaic_0001>
module attributes {stable_mosaic.version = 11 : i64} {
  func.func @tab_transformer_kernel(%arg0: i32, %arg1: memref<2x8x4xf32, #tpu.memory_space<vmem>>, %arg2: memref<2x1x32xf32, #tpu.memory_space<vmem>>, %arg3: memref<4x32xf32, #tpu.memory_space<vmem>>, %arg4: memref<1x32xf32, #tpu.memory_space<vmem>>, %arg5: memref<4x32x96xf32, #tpu.memory_space<vmem>>, %arg6: memref<4x1x96xf32, #tpu.memory_space<vmem>>, %arg7: memref<4x32x32xf32, #tpu.memory_space<vmem>>, %arg8: memref<4x1x32xf32, #tpu.memory_space<vmem>>, %arg9: memref<4x32x32xf32, #tpu.memory_space<vmem>>, %arg10: memref<4x1x32xf32, #tpu.memory_space<vmem>>, %arg11: memref<4x32x32xf32, #tpu.memory_space<vmem>>, %arg12: memref<4x1x32xf32, #tpu.memory_space<vmem>>, %arg13: memref<4x1x32xf32, #tpu.memory_space<vmem>>, %arg14: memref<4x1x32xf32, #tpu.memory_space<vmem>>, %arg15: memref<4x1x32xf32, #tpu.memory_space<vmem>>, %arg16: memref<4x1x32xf32, #tpu.memory_space<vmem>>, %arg17: memref<32x4xf32, #tpu.memory_space<vmem>>, %arg18: memref<1x4xf32, #tpu.memory_space<vmem>>, %arg19: memref<2x8x4xf32, #tpu.memory_space<vmem>>) attributes {dimension_semantics = [#tpu.dimension_semantics<parallel>], iteration_bounds = array<i64: 1>, scalar_prefetch = 0 : i64, scratch_operands = 0 : i64, tpu.core_type = #tpu.core_type<tc>, window_params = [{transform_indices = @transform_0, window_bounds = array<i64: 2, 8, 4>}, {transform_indices = @transform_1, window_bounds = array<i64: 2, 1, 32>}, {pipeline_mode = #tpu.pipeline_mode<synchronous>, transform_indices = @transform_2, window_bounds = array<i64: 4, 32>}, {pipeline_mode = #tpu.pipeline_mode<synchronous>, transform_indices = @transform_3, window_bounds = array<i64: 1, 32>}, {pipeline_mode = #tpu.pipeline_mode<synchronous>, transform_indices = @transform_4, window_bounds = array<i64: 4, 32, 96>}, {pipeline_mode = #tpu.pipeline_mode<synchronous>, transform_indices = @transform_5, window_bounds = array<i64: 4, 1, 96>}, {pipeline_mode = #tpu.pipeline_mode<synchronous>, transform_indices = @transform_6, window_bounds = array<i64: 4, 32, 32>}, {pipeline_mode = #tpu.pipeline_mode<synchronous>, transform_indices = @transform_7, window_bounds = array<i64: 4, 1, 32>}, {pipeline_mode = #tpu.pipeline_mode<synchronous>, transform_indices = @transform_8, window_bounds = array<i64: 4, 32, 32>}, {pipeline_mode = #tpu.pipeline_mode<synchronous>, transform_indices = @transform_9, window_bounds = array<i64: 4, 1, 32>}, {pipeline_mode = #tpu.pipeline_mode<synchronous>, transform_indices = @transform_10, window_bounds = array<i64: 4, 32, 32>}, {pipeline_mode = #tpu.pipeline_mode<synchronous>, transform_indices = @transform_11, window_bounds = array<i64: 4, 1, 32>}, {pipeline_mode = #tpu.pipeline_mode<synchronous>, transform_indices = @transform_12, window_bounds = array<i64: 4, 1, 32>}, {pipeline_mode = #tpu.pipeline_mode<synchronous>, transform_indices = @transform_13, window_bounds = array<i64: 4, 1, 32>}, {pipeline_mode = #tpu.pipeline_mode<synchronous>, transform_indices = @transform_14, window_bounds = array<i64: 4, 1, 32>}, {pipeline_mode = #tpu.pipeline_mode<synchronous>, transform_indices = @transform_15, window_bounds = array<i64: 4, 1, 32>}, {pipeline_mode = #tpu.pipeline_mode<synchronous>, transform_indices = @transform_16, window_bounds = array<i64: 32, 4>}, {pipeline_mode = #tpu.pipeline_mode<synchronous>, transform_indices = @transform_17, window_bounds = array<i64: 1, 4>}, {transform_indices = @transform_18, window_bounds = array<i64: 2, 8, 4>}]} {
    %c0 = arith.constant 0 : index
    %c0_0 = arith.constant 0 : index
    %c0_1 = arith.constant 0 : index
    %0 = vector.load %arg1[%c0, %c0_0, %c0_1] : memref<2x8x4xf32, #tpu.memory_space<vmem>>, vector<2x8x4xf32>
    %1 = vector.shape_cast %0 : vector<2x8x4xf32> to vector<16x4xf32>
    %c0_2 = arith.constant 0 : index
    %c0_3 = arith.constant 0 : index
    %2 = vector.load %arg3[%c0_2, %c0_3] : memref<4x32xf32, #tpu.memory_space<vmem>>, vector<4x32xf32>
    %cst = arith.constant dense<0.000000e+00> : vector<16x32xf32>
    %3 = tpu.matmul %1, %2, %cst {dimension_numbers = #tpu.dot_dimension_numbers<[1], [0], [0], [1], [0, 0, 1, 1], [], []>} : vector<16x4xf32>, vector<4x32xf32>, vector<16x32xf32> -> vector<16x32xf32>
    %c0_4 = arith.constant 0 : index
    %c0_5 = arith.constant 0 : index
    %4 = vector.load %arg4[%c0_4, %c0_5] : memref<1x32xf32, #tpu.memory_space<vmem>>, vector<1x32xf32>
    %5 = vector.broadcast %4 : vector<1x32xf32> to vector<16x32xf32>
    %6 = arith.addf %3, %5 : vector<16x32xf32>
    %7 = vector.shape_cast %6 : vector<16x32xf32> to vector<2x8x32xf32>
    %c0_6 = arith.constant 0 : index
    %c0_7 = arith.constant 0 : index
    %c0_8 = arith.constant 0 : index
    %8 = vector.load %arg2[%c0_6, %c0_7, %c0_8] : memref<2x1x32xf32, #tpu.memory_space<vmem>>, vector<2x1x32xf32>
    %9 = vector.broadcast %8 : vector<2x1x32xf32> to vector<2x8x32xf32>
    %10 = arith.addf %7, %9 : vector<2x8x32xf32>
    %11 = vector.shape_cast %10 : vector<2x8x32xf32> to vector<16x32xf32>
    %c0_9 = arith.constant 0 : index
    %c0_10 = arith.constant 0 : index
    %c0_11 = arith.constant 0 : index
    %12 = vector.load %arg5[%c0_9, %c0_10, %c0_11] : memref<4x32x96xf32, #tpu.memory_space<vmem>>, vector<1x32x96xf32>
    %13 = vector.shape_cast %12 : vector<1x32x96xf32> to vector<32x96xf32>
    %cst_12 = arith.constant dense<0.000000e+00> : vector<16x96xf32>
    %14 = tpu.matmul %11, %13, %cst_12 {dimension_numbers = #tpu.dot_dimension_numbers<[1], [0], [0], [1], [0, 0, 1, 1], [], []>} : vector<16x32xf32>, vector<32x96xf32>, vector<16x96xf32> -> vector<16x96xf32>
    %c0_13 = arith.constant 0 : index
    %c0_14 = arith.constant 0 : index
    %c0_15 = arith.constant 0 : index
    %15 = vector.load %arg6[%c0_13, %c0_14, %c0_15] : memref<4x1x96xf32, #tpu.memory_space<vmem>>, vector<1x1x96xf32>
    %16 = vector.shape_cast %15 : vector<1x1x96xf32> to vector<1x96xf32>
    %17 = vector.broadcast %16 : vector<1x96xf32> to vector<16x96xf32>
    %18 = arith.addf %14, %17 : vector<16x96xf32>
    %19 = vector.shape_cast %18 : vector<16x96xf32> to vector<2x8x96xf32>
    %20 = vector.extract_strided_slice %19 {offsets = [0, 0, 0], sizes = [2, 8, 8], strides = [1, 1, 1]} : vector<2x8x96xf32> to vector<2x8x8xf32>
    %21 = vector.extract_strided_slice %19 {offsets = [0, 0, 32], sizes = [2, 8, 8], strides = [1, 1, 1]} : vector<2x8x96xf32> to vector<2x8x8xf32>
    %22 = vector.extract_strided_slice %19 {offsets = [0, 0, 64], sizes = [2, 8, 8], strides = [1, 1, 1]} : vector<2x8x96xf32> to vector<2x8x8xf32>
    "tpu.trace_start"() <{level = 10 : i32, message = "bqd,bkd->bqk"}> : () -> ()
    %cst_16 = arith.constant dense<0.000000e+00> : vector<2x8x8xf32>
    %23 = tpu.matmul %20, %21, %cst_16 {dimension_numbers = #tpu.dot_dimension_numbers<[2], [2], [1], [1], [0, 0, 0, 1, 1, 1], [0], [0]>} : vector<2x8x8xf32>, vector<2x8x8xf32>, vector<2x8x8xf32> -> vector<2x8x8xf32>
    "tpu.trace_stop"() : () -> ()
    %cst_17 = arith.constant dense<0xFF800000> : vector<2x8xf32>
    %24 = vector.multi_reduction <maximumf>, %23, %cst_17 [2] : vector<2x8x8xf32> to vector<2x8xf32>
    %25 = vector.shape_cast %24 : vector<2x8xf32> to vector<2x8x1xf32>
    %26 = vector.broadcast %25 : vector<2x8x1xf32> to vector<2x8x8xf32>
    %27 = arith.subf %23, %26 : vector<2x8x8xf32>
    %28 = math.exp %27 : vector<2x8x8xf32>
    %cst_18 = arith.constant dense<0.000000e+00> : vector<2x8xf32>
    %29 = vector.multi_reduction <add>, %28, %cst_18 [2] : vector<2x8x8xf32> to vector<2x8xf32>
    %30 = vector.shape_cast %29 : vector<2x8xf32> to vector<2x8x1xf32>
    %31 = tpu.reciprocal %30 {approx = true} : vector<2x8x1xf32> -> vector<2x8x1xf32>
    %32 = vector.broadcast %31 : vector<2x8x1xf32> to vector<2x8x8xf32>
    %33 = arith.mulf %28, %32 : vector<2x8x8xf32>
    "tpu.trace_start"() <{level = 10 : i32, message = "bqk,bkd->bqd"}> : () -> ()
    %cst_19 = arith.constant dense<0.000000e+00> : vector<2x8x8xf32>
    %34 = tpu.matmul %33, %22, %cst_19 {dimension_numbers = #tpu.dot_dimension_numbers<[2], [1], [1], [2], [0, 0, 0, 1, 1, 2], [0], [0]>} : vector<2x8x8xf32>, vector<2x8x8xf32>, vector<2x8x8xf32> -> vector<2x8x8xf32>
    "tpu.trace_stop"() : () -> ()
    %35 = vector.extract_strided_slice %19 {offsets = [0, 0, 8], sizes = [2, 8, 8], strides = [1, 1, 1]} : vector<2x8x96xf32> to vector<2x8x8xf32>
    %36 = vector.extract_strided_slice %19 {offsets = [0, 0, 40], sizes = [2, 8, 8], strides = [1, 1, 1]} : vector<2x8x96xf32> to vector<2x8x8xf32>
    %37 = vector.extract_strided_slice %19 {offsets = [0, 0, 72], sizes = [2, 8, 8], strides = [1, 1, 1]} : vector<2x8x96xf32> to vector<2x8x8xf32>
    "tpu.trace_start"() <{level = 10 : i32, message = "bqd,bkd->bqk"}> : () -> ()
    %cst_20 = arith.constant dense<0.000000e+00> : vector<2x8x8xf32>
    %38 = tpu.matmul %35, %36, %cst_20 {dimension_numbers = #tpu.dot_dimension_numbers<[2], [2], [1], [1], [0, 0, 0, 1, 1, 1], [0], [0]>} : vector<2x8x8xf32>, vector<2x8x8xf32>, vector<2x8x8xf32> -> vector<2x8x8xf32>
    "tpu.trace_stop"() : () -> ()
    %cst_21 = arith.constant dense<0xFF800000> : vector<2x8xf32>
    %39 = vector.multi_reduction <maximumf>, %38, %cst_21 [2] : vector<2x8x8xf32> to vector<2x8xf32>
    %40 = vector.shape_cast %39 : vector<2x8xf32> to vector<2x8x1xf32>
    %41 = vector.broadcast %40 : vector<2x8x1xf32> to vector<2x8x8xf32>
    %42 = arith.subf %38, %41 : vector<2x8x8xf32>
    %43 = math.exp %42 : vector<2x8x8xf32>
    %cst_22 = arith.constant dense<0.000000e+00> : vector<2x8xf32>
    %44 = vector.multi_reduction <add>, %43, %cst_22 [2] : vector<2x8x8xf32> to vector<2x8xf32>
    %45 = vector.shape_cast %44 : vector<2x8xf32> to vector<2x8x1xf32>
    %46 = tpu.reciprocal %45 {approx = true} : vector<2x8x1xf32> -> vector<2x8x1xf32>
    %47 = vector.broadcast %46 : vector<2x8x1xf32> to vector<2x8x8xf32>
    %48 = arith.mulf %43, %47 : vector<2x8x8xf32>
    "tpu.trace_start"() <{level = 10 : i32, message = "bqk,bkd->bqd"}> : () -> ()
    %cst_23 = arith.constant dense<0.000000e+00> : vector<2x8x8xf32>
    %49 = tpu.matmul %48, %37, %cst_23 {dimension_numbers = #tpu.dot_dimension_numbers<[2], [1], [1], [2], [0, 0, 0, 1, 1, 2], [0], [0]>} : vector<2x8x8xf32>, vector<2x8x8xf32>, vector<2x8x8xf32> -> vector<2x8x8xf32>
    "tpu.trace_stop"() : () -> ()
    %50 = vector.extract_strided_slice %19 {offsets = [0, 0, 16], sizes = [2, 8, 8], strides = [1, 1, 1]} : vector<2x8x96xf32> to vector<2x8x8xf32>
    %51 = vector.extract_strided_slice %19 {offsets = [0, 0, 48], sizes = [2, 8, 8], strides = [1, 1, 1]} : vector<2x8x96xf32> to vector<2x8x8xf32>
    %52 = vector.extract_strided_slice %19 {offsets = [0, 0, 80], sizes = [2, 8, 8], strides = [1, 1, 1]} : vector<2x8x96xf32> to vector<2x8x8xf32>
    "tpu.trace_start"() <{level = 10 : i32, message = "bqd,bkd->bqk"}> : () -> ()
    %cst_24 = arith.constant dense<0.000000e+00> : vector<2x8x8xf32>
    %53 = tpu.matmul %50, %51, %cst_24 {dimension_numbers = #tpu.dot_dimension_numbers<[2], [2], [1], [1], [0, 0, 0, 1, 1, 1], [0], [0]>} : vector<2x8x8xf32>, vector<2x8x8xf32>, vector<2x8x8xf32> -> vector<2x8x8xf32>
    "tpu.trace_stop"() : () -> ()
    %cst_25 = arith.constant dense<0xFF800000> : vector<2x8xf32>
    %54 = vector.multi_reduction <maximumf>, %53, %cst_25 [2] : vector<2x8x8xf32> to vector<2x8xf32>
    %55 = vector.shape_cast %54 : vector<2x8xf32> to vector<2x8x1xf32>
    %56 = vector.broadcast %55 : vector<2x8x1xf32> to vector<2x8x8xf32>
    %57 = arith.subf %53, %56 : vector<2x8x8xf32>
    %58 = math.exp %57 : vector<2x8x8xf32>
    %cst_26 = arith.constant dense<0.000000e+00> : vector<2x8xf32>
    %59 = vector.multi_reduction <add>, %58, %cst_26 [2] : vector<2x8x8xf32> to vector<2x8xf32>
    %60 = vector.shape_cast %59 : vector<2x8xf32> to vector<2x8x1xf32>
    %61 = tpu.reciprocal %60 {approx = true} : vector<2x8x1xf32> -> vector<2x8x1xf32>
    %62 = vector.broadcast %61 : vector<2x8x1xf32> to vector<2x8x8xf32>
    %63 = arith.mulf %58, %62 : vector<2x8x8xf32>
    "tpu.trace_start"() <{level = 10 : i32, message = "bqk,bkd->bqd"}> : () -> ()
    %cst_27 = arith.constant dense<0.000000e+00> : vector<2x8x8xf32>
    %64 = tpu.matmul %63, %52, %cst_27 {dimension_numbers = #tpu.dot_dimension_numbers<[2], [1], [1], [2], [0, 0, 0, 1, 1, 2], [0], [0]>} : vector<2x8x8xf32>, vector<2x8x8xf32>, vector<2x8x8xf32> -> vector<2x8x8xf32>
    "tpu.trace_stop"() : () -> ()
    %65 = vector.extract_strided_slice %19 {offsets = [0, 0, 24], sizes = [2, 8, 8], strides = [1, 1, 1]} : vector<2x8x96xf32> to vector<2x8x8xf32>
    %66 = vector.extract_strided_slice %19 {offsets = [0, 0, 56], sizes = [2, 8, 8], strides = [1, 1, 1]} : vector<2x8x96xf32> to vector<2x8x8xf32>
    %67 = vector.extract_strided_slice %19 {offsets = [0, 0, 88], sizes = [2, 8, 8], strides = [1, 1, 1]} : vector<2x8x96xf32> to vector<2x8x8xf32>
    "tpu.trace_start"() <{level = 10 : i32, message = "bqd,bkd->bqk"}> : () -> ()
    %cst_28 = arith.constant dense<0.000000e+00> : vector<2x8x8xf32>
    %68 = tpu.matmul %65, %66, %cst_28 {dimension_numbers = #tpu.dot_dimension_numbers<[2], [2], [1], [1], [0, 0, 0, 1, 1, 1], [0], [0]>} : vector<2x8x8xf32>, vector<2x8x8xf32>, vector<2x8x8xf32> -> vector<2x8x8xf32>
    "tpu.trace_stop"() : () -> ()
    %cst_29 = arith.constant dense<0xFF800000> : vector<2x8xf32>
    %69 = vector.multi_reduction <maximumf>, %68, %cst_29 [2] : vector<2x8x8xf32> to vector<2x8xf32>
    %70 = vector.shape_cast %69 : vector<2x8xf32> to vector<2x8x1xf32>
    %71 = vector.broadcast %70 : vector<2x8x1xf32> to vector<2x8x8xf32>
    %72 = arith.subf %68, %71 : vector<2x8x8xf32>
    %73 = math.exp %72 : vector<2x8x8xf32>
    %cst_30 = arith.constant dense<0.000000e+00> : vector<2x8xf32>
    %74 = vector.multi_reduction <add>, %73, %cst_30 [2] : vector<2x8x8xf32> to vector<2x8xf32>
    %75 = vector.shape_cast %74 : vector<2x8xf32> to vector<2x8x1xf32>
    %76 = tpu.reciprocal %75 {approx = true} : vector<2x8x1xf32> -> vector<2x8x1xf32>
    %77 = vector.broadcast %76 : vector<2x8x1xf32> to vector<2x8x8xf32>
    %78 = arith.mulf %73, %77 : vector<2x8x8xf32>
    "tpu.trace_start"() <{level = 10 : i32, message = "bqk,bkd->bqd"}> : () -> ()
    %cst_31 = arith.constant dense<0.000000e+00> : vector<2x8x8xf32>
    %79 = tpu.matmul %78, %67, %cst_31 {dimension_numbers = #tpu.dot_dimension_numbers<[2], [1], [1], [2], [0, 0, 0, 1, 1, 2], [0], [0]>} : vector<2x8x8xf32>, vector<2x8x8xf32>, vector<2x8x8xf32> -> vector<2x8x8xf32>
    "tpu.trace_stop"() : () -> ()
    %80 = tpu.concatenate %34, %49, %64, %79 in 2 : vector<2x8x8xf32>, vector<2x8x8xf32>, vector<2x8x8xf32>, vector<2x8x8xf32> -> vector<2x8x32xf32>
    %81 = vector.shape_cast %80 : vector<2x8x32xf32> to vector<16x32xf32>
    %c0_32 = arith.constant 0 : index
    %c0_33 = arith.constant 0 : index
    %c0_34 = arith.constant 0 : index
    %82 = vector.load %arg7[%c0_32, %c0_33, %c0_34] : memref<4x32x32xf32, #tpu.memory_space<vmem>>, vector<1x32x32xf32>
    %83 = vector.shape_cast %82 : vector<1x32x32xf32> to vector<32x32xf32>
    %cst_35 = arith.constant dense<0.000000e+00> : vector<16x32xf32>
    %84 = tpu.matmul %81, %83, %cst_35 {dimension_numbers = #tpu.dot_dimension_numbers<[1], [0], [0], [1], [0, 0, 1, 1], [], []>} : vector<16x32xf32>, vector<32x32xf32>, vector<16x32xf32> -> vector<16x32xf32>
    %c0_36 = arith.constant 0 : index
    %c0_37 = arith.constant 0 : index
    %c0_38 = arith.constant 0 : index
    %85 = vector.load %arg8[%c0_36, %c0_37, %c0_38] : memref<4x1x32xf32, #tpu.memory_space<vmem>>, vector<1x1x32xf32>
    %86 = vector.shape_cast %85 : vector<1x1x32xf32> to vector<1x32xf32>
    %87 = vector.broadcast %86 : vector<1x32xf32> to vector<16x32xf32>
    %88 = arith.addf %84, %87 : vector<16x32xf32>
    %89 = arith.addf %11, %88 : vector<16x32xf32>
    %c0_39 = arith.constant 0 : index
    %c0_40 = arith.constant 0 : index
    %c0_41 = arith.constant 0 : index
    %90 = vector.load %arg13[%c0_39, %c0_40, %c0_41] : memref<4x1x32xf32, #tpu.memory_space<vmem>>, vector<1x1x32xf32>
    %91 = vector.shape_cast %90 : vector<1x1x32xf32> to vector<1x32xf32>
    %c0_42 = arith.constant 0 : index
    %c0_43 = arith.constant 0 : index
    %c0_44 = arith.constant 0 : index
    %92 = vector.load %arg14[%c0_42, %c0_43, %c0_44] : memref<4x1x32xf32, #tpu.memory_space<vmem>>, vector<1x1x32xf32>
    %93 = vector.shape_cast %92 : vector<1x1x32xf32> to vector<1x32xf32>
    %cst_45 = arith.constant dense<0.000000e+00> : vector<16xf32>
    %94 = vector.multi_reduction <add>, %89, %cst_45 [1] : vector<16x32xf32> to vector<16xf32>
    %95 = vector.shape_cast %94 : vector<16xf32> to vector<16x1xf32>
    %cst_46 = arith.constant 3.200000e+01 : f32
    %96 = vector.broadcast %cst_46 : f32 to vector<16x1xf32>
    %97 = arith.divf %95, %96 : vector<16x1xf32>
    %98 = vector.broadcast %97 : vector<16x1xf32> to vector<16x32xf32>
    %99 = arith.subf %89, %98 : vector<16x32xf32>
    %100 = arith.mulf %99, %99 : vector<16x32xf32>
    %cst_47 = arith.constant dense<0.000000e+00> : vector<16xf32>
    %101 = vector.multi_reduction <add>, %100, %cst_47 [1] : vector<16x32xf32> to vector<16xf32>
    %102 = vector.shape_cast %101 : vector<16xf32> to vector<16x1xf32>
    %cst_48 = arith.constant 3.200000e+01 : f32
    %103 = vector.broadcast %cst_48 : f32 to vector<16x1xf32>
    %104 = arith.divf %102, %103 : vector<16x1xf32>
    %105 = vector.broadcast %97 : vector<16x1xf32> to vector<16x32xf32>
    %106 = arith.subf %89, %105 : vector<16x32xf32>
    %cst_49 = arith.constant 9.99999974E-6 : f32
    %107 = vector.broadcast %cst_49 : f32 to vector<16x1xf32>
    %108 = arith.addf %104, %107 : vector<16x1xf32>
    %109 = math.rsqrt %108 : vector<16x1xf32>
    %110 = vector.broadcast %109 : vector<16x1xf32> to vector<16x32xf32>
    %111 = arith.mulf %106, %110 : vector<16x32xf32>
    %112 = vector.broadcast %91 : vector<1x32xf32> to vector<16x32xf32>
    %113 = arith.mulf %111, %112 : vector<16x32xf32>
    %114 = vector.broadcast %93 : vector<1x32xf32> to vector<16x32xf32>
    %115 = arith.addf %113, %114 : vector<16x32xf32>
    %c0_50 = arith.constant 0 : index
    %c0_51 = arith.constant 0 : index
    %c0_52 = arith.constant 0 : index
    %116 = vector.load %arg9[%c0_50, %c0_51, %c0_52] : memref<4x32x32xf32, #tpu.memory_space<vmem>>, vector<1x32x32xf32>
    %117 = vector.shape_cast %116 : vector<1x32x32xf32> to vector<32x32xf32>
    %cst_53 = arith.constant dense<0.000000e+00> : vector<16x32xf32>
    %118 = tpu.matmul %115, %117, %cst_53 {dimension_numbers = #tpu.dot_dimension_numbers<[1], [0], [0], [1], [0, 0, 1, 1], [], []>} : vector<16x32xf32>, vector<32x32xf32>, vector<16x32xf32> -> vector<16x32xf32>
    %c0_54 = arith.constant 0 : index
    %c0_55 = arith.constant 0 : index
    %c0_56 = arith.constant 0 : index
    %119 = vector.load %arg10[%c0_54, %c0_55, %c0_56] : memref<4x1x32xf32, #tpu.memory_space<vmem>>, vector<1x1x32xf32>
    %120 = vector.shape_cast %119 : vector<1x1x32xf32> to vector<1x32xf32>
    %121 = vector.broadcast %120 : vector<1x32xf32> to vector<16x32xf32>
    %122 = arith.addf %118, %121 : vector<16x32xf32>
    %cst_57 = arith.constant 0.000000e+00 : f32
    %123 = vector.broadcast %cst_57 : f32 to vector<16x32xf32>
    %124 = arith.maximumf %122, %123 : vector<16x32xf32>
    %c0_58 = arith.constant 0 : index
    %c0_59 = arith.constant 0 : index
    %c0_60 = arith.constant 0 : index
    %125 = vector.load %arg11[%c0_58, %c0_59, %c0_60] : memref<4x32x32xf32, #tpu.memory_space<vmem>>, vector<1x32x32xf32>
    %126 = vector.shape_cast %125 : vector<1x32x32xf32> to vector<32x32xf32>
    %cst_61 = arith.constant dense<0.000000e+00> : vector<16x32xf32>
    %127 = tpu.matmul %124, %126, %cst_61 {dimension_numbers = #tpu.dot_dimension_numbers<[1], [0], [0], [1], [0, 0, 1, 1], [], []>} : vector<16x32xf32>, vector<32x32xf32>, vector<16x32xf32> -> vector<16x32xf32>
    %c0_62 = arith.constant 0 : index
    %c0_63 = arith.constant 0 : index
    %c0_64 = arith.constant 0 : index
    %128 = vector.load %arg12[%c0_62, %c0_63, %c0_64] : memref<4x1x32xf32, #tpu.memory_space<vmem>>, vector<1x1x32xf32>
    %129 = vector.shape_cast %128 : vector<1x1x32xf32> to vector<1x32xf32>
    %130 = vector.broadcast %129 : vector<1x32xf32> to vector<16x32xf32>
    %131 = arith.addf %127, %130 : vector<16x32xf32>
    %132 = arith.addf %115, %131 : vector<16x32xf32>
    %c0_65 = arith.constant 0 : index
    %c0_66 = arith.constant 0 : index
    %c0_67 = arith.constant 0 : index
    %133 = vector.load %arg15[%c0_65, %c0_66, %c0_67] : memref<4x1x32xf32, #tpu.memory_space<vmem>>, vector<1x1x32xf32>
    %134 = vector.shape_cast %133 : vector<1x1x32xf32> to vector<1x32xf32>
    %c0_68 = arith.constant 0 : index
    %c0_69 = arith.constant 0 : index
    %c0_70 = arith.constant 0 : index
    %135 = vector.load %arg16[%c0_68, %c0_69, %c0_70] : memref<4x1x32xf32, #tpu.memory_space<vmem>>, vector<1x1x32xf32>
    %136 = vector.shape_cast %135 : vector<1x1x32xf32> to vector<1x32xf32>
    %cst_71 = arith.constant dense<0.000000e+00> : vector<16xf32>
    %137 = vector.multi_reduction <add>, %132, %cst_71 [1] : vector<16x32xf32> to vector<16xf32>
    %138 = vector.shape_cast %137 : vector<16xf32> to vector<16x1xf32>
    %cst_72 = arith.constant 3.200000e+01 : f32
    %139 = vector.broadcast %cst_72 : f32 to vector<16x1xf32>
    %140 = arith.divf %138, %139 : vector<16x1xf32>
    %141 = vector.broadcast %140 : vector<16x1xf32> to vector<16x32xf32>
    %142 = arith.subf %132, %141 : vector<16x32xf32>
    %143 = arith.mulf %142, %142 : vector<16x32xf32>
    %cst_73 = arith.constant dense<0.000000e+00> : vector<16xf32>
    %144 = vector.multi_reduction <add>, %143, %cst_73 [1] : vector<16x32xf32> to vector<16xf32>
    %145 = vector.shape_cast %144 : vector<16xf32> to vector<16x1xf32>
    %cst_74 = arith.constant 3.200000e+01 : f32
    %146 = vector.broadcast %cst_74 : f32 to vector<16x1xf32>
    %147 = arith.divf %145, %146 : vector<16x1xf32>
    %148 = vector.broadcast %140 : vector<16x1xf32> to vector<16x32xf32>
    %149 = arith.subf %132, %148 : vector<16x32xf32>
    %cst_75 = arith.constant 9.99999974E-6 : f32
    %150 = vector.broadcast %cst_75 : f32 to vector<16x1xf32>
    %151 = arith.addf %147, %150 : vector<16x1xf32>
    %152 = math.rsqrt %151 : vector<16x1xf32>
    %153 = vector.broadcast %152 : vector<16x1xf32> to vector<16x32xf32>
    %154 = arith.mulf %149, %153 : vector<16x32xf32>
    %155 = vector.broadcast %134 : vector<1x32xf32> to vector<16x32xf32>
    %156 = arith.mulf %154, %155 : vector<16x32xf32>
    %157 = vector.broadcast %136 : vector<1x32xf32> to vector<16x32xf32>
    %158 = arith.addf %156, %157 : vector<16x32xf32>
    %c1 = arith.constant 1 : index
    %c0_76 = arith.constant 0 : index
    %c0_77 = arith.constant 0 : index
    %159 = vector.load %arg5[%c1, %c0_76, %c0_77] : memref<4x32x96xf32, #tpu.memory_space<vmem>>, vector<1x32x96xf32>
    %160 = vector.shape_cast %159 : vector<1x32x96xf32> to vector<32x96xf32>
    %cst_78 = arith.constant dense<0.000000e+00> : vector<16x96xf32>
    %161 = tpu.matmul %158, %160, %cst_78 {dimension_numbers = #tpu.dot_dimension_numbers<[1], [0], [0], [1], [0, 0, 1, 1], [], []>} : vector<16x32xf32>, vector<32x96xf32>, vector<16x96xf32> -> vector<16x96xf32>
    %c1_79 = arith.constant 1 : index
    %c0_80 = arith.constant 0 : index
    %c0_81 = arith.constant 0 : index
    %162 = vector.load %arg6[%c1_79, %c0_80, %c0_81] : memref<4x1x96xf32, #tpu.memory_space<vmem>>, vector<1x1x96xf32>
    %163 = vector.shape_cast %162 : vector<1x1x96xf32> to vector<1x96xf32>
    %164 = vector.broadcast %163 : vector<1x96xf32> to vector<16x96xf32>
    %165 = arith.addf %161, %164 : vector<16x96xf32>
    %166 = vector.shape_cast %165 : vector<16x96xf32> to vector<2x8x96xf32>
    %167 = vector.extract_strided_slice %166 {offsets = [0, 0, 0], sizes = [2, 8, 8], strides = [1, 1, 1]} : vector<2x8x96xf32> to vector<2x8x8xf32>
    %168 = vector.extract_strided_slice %166 {offsets = [0, 0, 32], sizes = [2, 8, 8], strides = [1, 1, 1]} : vector<2x8x96xf32> to vector<2x8x8xf32>
    %169 = vector.extract_strided_slice %166 {offsets = [0, 0, 64], sizes = [2, 8, 8], strides = [1, 1, 1]} : vector<2x8x96xf32> to vector<2x8x8xf32>
    "tpu.trace_start"() <{level = 10 : i32, message = "bqd,bkd->bqk"}> : () -> ()
    %cst_82 = arith.constant dense<0.000000e+00> : vector<2x8x8xf32>
    %170 = tpu.matmul %167, %168, %cst_82 {dimension_numbers = #tpu.dot_dimension_numbers<[2], [2], [1], [1], [0, 0, 0, 1, 1, 1], [0], [0]>} : vector<2x8x8xf32>, vector<2x8x8xf32>, vector<2x8x8xf32> -> vector<2x8x8xf32>
    "tpu.trace_stop"() : () -> ()
    %cst_83 = arith.constant dense<0xFF800000> : vector<2x8xf32>
    %171 = vector.multi_reduction <maximumf>, %170, %cst_83 [2] : vector<2x8x8xf32> to vector<2x8xf32>
    %172 = vector.shape_cast %171 : vector<2x8xf32> to vector<2x8x1xf32>
    %173 = vector.broadcast %172 : vector<2x8x1xf32> to vector<2x8x8xf32>
    %174 = arith.subf %170, %173 : vector<2x8x8xf32>
    %175 = math.exp %174 : vector<2x8x8xf32>
    %cst_84 = arith.constant dense<0.000000e+00> : vector<2x8xf32>
    %176 = vector.multi_reduction <add>, %175, %cst_84 [2] : vector<2x8x8xf32> to vector<2x8xf32>
    %177 = vector.shape_cast %176 : vector<2x8xf32> to vector<2x8x1xf32>
    %178 = tpu.reciprocal %177 {approx = true} : vector<2x8x1xf32> -> vector<2x8x1xf32>
    %179 = vector.broadcast %178 : vector<2x8x1xf32> to vector<2x8x8xf32>
    %180 = arith.mulf %175, %179 : vector<2x8x8xf32>
    "tpu.trace_start"() <{level = 10 : i32, message = "bqk,bkd->bqd"}> : () -> ()
    %cst_85 = arith.constant dense<0.000000e+00> : vector<2x8x8xf32>
    %181 = tpu.matmul %180, %169, %cst_85 {dimension_numbers = #tpu.dot_dimension_numbers<[2], [1], [1], [2], [0, 0, 0, 1, 1, 2], [0], [0]>} : vector<2x8x8xf32>, vector<2x8x8xf32>, vector<2x8x8xf32> -> vector<2x8x8xf32>
    "tpu.trace_stop"() : () -> ()
    %182 = vector.extract_strided_slice %166 {offsets = [0, 0, 8], sizes = [2, 8, 8], strides = [1, 1, 1]} : vector<2x8x96xf32> to vector<2x8x8xf32>
    %183 = vector.extract_strided_slice %166 {offsets = [0, 0, 40], sizes = [2, 8, 8], strides = [1, 1, 1]} : vector<2x8x96xf32> to vector<2x8x8xf32>
    %184 = vector.extract_strided_slice %166 {offsets = [0, 0, 72], sizes = [2, 8, 8], strides = [1, 1, 1]} : vector<2x8x96xf32> to vector<2x8x8xf32>
    "tpu.trace_start"() <{level = 10 : i32, message = "bqd,bkd->bqk"}> : () -> ()
    %cst_86 = arith.constant dense<0.000000e+00> : vector<2x8x8xf32>
    %185 = tpu.matmul %182, %183, %cst_86 {dimension_numbers = #tpu.dot_dimension_numbers<[2], [2], [1], [1], [0, 0, 0, 1, 1, 1], [0], [0]>} : vector<2x8x8xf32>, vector<2x8x8xf32>, vector<2x8x8xf32> -> vector<2x8x8xf32>
    "tpu.trace_stop"() : () -> ()
    %cst_87 = arith.constant dense<0xFF800000> : vector<2x8xf32>
    %186 = vector.multi_reduction <maximumf>, %185, %cst_87 [2] : vector<2x8x8xf32> to vector<2x8xf32>
    %187 = vector.shape_cast %186 : vector<2x8xf32> to vector<2x8x1xf32>
    %188 = vector.broadcast %187 : vector<2x8x1xf32> to vector<2x8x8xf32>
    %189 = arith.subf %185, %188 : vector<2x8x8xf32>
    %190 = math.exp %189 : vector<2x8x8xf32>
    %cst_88 = arith.constant dense<0.000000e+00> : vector<2x8xf32>
    %191 = vector.multi_reduction <add>, %190, %cst_88 [2] : vector<2x8x8xf32> to vector<2x8xf32>
    %192 = vector.shape_cast %191 : vector<2x8xf32> to vector<2x8x1xf32>
    %193 = tpu.reciprocal %192 {approx = true} : vector<2x8x1xf32> -> vector<2x8x1xf32>
    %194 = vector.broadcast %193 : vector<2x8x1xf32> to vector<2x8x8xf32>
    %195 = arith.mulf %190, %194 : vector<2x8x8xf32>
    "tpu.trace_start"() <{level = 10 : i32, message = "bqk,bkd->bqd"}> : () -> ()
    %cst_89 = arith.constant dense<0.000000e+00> : vector<2x8x8xf32>
    %196 = tpu.matmul %195, %184, %cst_89 {dimension_numbers = #tpu.dot_dimension_numbers<[2], [1], [1], [2], [0, 0, 0, 1, 1, 2], [0], [0]>} : vector<2x8x8xf32>, vector<2x8x8xf32>, vector<2x8x8xf32> -> vector<2x8x8xf32>
    "tpu.trace_stop"() : () -> ()
    %197 = vector.extract_strided_slice %166 {offsets = [0, 0, 16], sizes = [2, 8, 8], strides = [1, 1, 1]} : vector<2x8x96xf32> to vector<2x8x8xf32>
    %198 = vector.extract_strided_slice %166 {offsets = [0, 0, 48], sizes = [2, 8, 8], strides = [1, 1, 1]} : vector<2x8x96xf32> to vector<2x8x8xf32>
    %199 = vector.extract_strided_slice %166 {offsets = [0, 0, 80], sizes = [2, 8, 8], strides = [1, 1, 1]} : vector<2x8x96xf32> to vector<2x8x8xf32>
    "tpu.trace_start"() <{level = 10 : i32, message = "bqd,bkd->bqk"}> : () -> ()
    %cst_90 = arith.constant dense<0.000000e+00> : vector<2x8x8xf32>
    %200 = tpu.matmul %197, %198, %cst_90 {dimension_numbers = #tpu.dot_dimension_numbers<[2], [2], [1], [1], [0, 0, 0, 1, 1, 1], [0], [0]>} : vector<2x8x8xf32>, vector<2x8x8xf32>, vector<2x8x8xf32> -> vector<2x8x8xf32>
    "tpu.trace_stop"() : () -> ()
    %cst_91 = arith.constant dense<0xFF800000> : vector<2x8xf32>
    %201 = vector.multi_reduction <maximumf>, %200, %cst_91 [2] : vector<2x8x8xf32> to vector<2x8xf32>
    %202 = vector.shape_cast %201 : vector<2x8xf32> to vector<2x8x1xf32>
    %203 = vector.broadcast %202 : vector<2x8x1xf32> to vector<2x8x8xf32>
    %204 = arith.subf %200, %203 : vector<2x8x8xf32>
    %205 = math.exp %204 : vector<2x8x8xf32>
    %cst_92 = arith.constant dense<0.000000e+00> : vector<2x8xf32>
    %206 = vector.multi_reduction <add>, %205, %cst_92 [2] : vector<2x8x8xf32> to vector<2x8xf32>
    %207 = vector.shape_cast %206 : vector<2x8xf32> to vector<2x8x1xf32>
    %208 = tpu.reciprocal %207 {approx = true} : vector<2x8x1xf32> -> vector<2x8x1xf32>
    %209 = vector.broadcast %208 : vector<2x8x1xf32> to vector<2x8x8xf32>
    %210 = arith.mulf %205, %209 : vector<2x8x8xf32>
    "tpu.trace_start"() <{level = 10 : i32, message = "bqk,bkd->bqd"}> : () -> ()
    %cst_93 = arith.constant dense<0.000000e+00> : vector<2x8x8xf32>
    %211 = tpu.matmul %210, %199, %cst_93 {dimension_numbers = #tpu.dot_dimension_numbers<[2], [1], [1], [2], [0, 0, 0, 1, 1, 2], [0], [0]>} : vector<2x8x8xf32>, vector<2x8x8xf32>, vector<2x8x8xf32> -> vector<2x8x8xf32>
    "tpu.trace_stop"() : () -> ()
    %212 = vector.extract_strided_slice %166 {offsets = [0, 0, 24], sizes = [2, 8, 8], strides = [1, 1, 1]} : vector<2x8x96xf32> to vector<2x8x8xf32>
    %213 = vector.extract_strided_slice %166 {offsets = [0, 0, 56], sizes = [2, 8, 8], strides = [1, 1, 1]} : vector<2x8x96xf32> to vector<2x8x8xf32>
    %214 = vector.extract_strided_slice %166 {offsets = [0, 0, 88], sizes = [2, 8, 8], strides = [1, 1, 1]} : vector<2x8x96xf32> to vector<2x8x8xf32>
    "tpu.trace_start"() <{level = 10 : i32, message = "bqd,bkd->bqk"}> : () -> ()
    %cst_94 = arith.constant dense<0.000000e+00> : vector<2x8x8xf32>
    %215 = tpu.matmul %212, %213, %cst_94 {dimension_numbers = #tpu.dot_dimension_numbers<[2], [2], [1], [1], [0, 0, 0, 1, 1, 1], [0], [0]>} : vector<2x8x8xf32>, vector<2x8x8xf32>, vector<2x8x8xf32> -> vector<2x8x8xf32>
    "tpu.trace_stop"() : () -> ()
    %cst_95 = arith.constant dense<0xFF800000> : vector<2x8xf32>
    %216 = vector.multi_reduction <maximumf>, %215, %cst_95 [2] : vector<2x8x8xf32> to vector<2x8xf32>
    %217 = vector.shape_cast %216 : vector<2x8xf32> to vector<2x8x1xf32>
    %218 = vector.broadcast %217 : vector<2x8x1xf32> to vector<2x8x8xf32>
    %219 = arith.subf %215, %218 : vector<2x8x8xf32>
    %220 = math.exp %219 : vector<2x8x8xf32>
    %cst_96 = arith.constant dense<0.000000e+00> : vector<2x8xf32>
    %221 = vector.multi_reduction <add>, %220, %cst_96 [2] : vector<2x8x8xf32> to vector<2x8xf32>
    %222 = vector.shape_cast %221 : vector<2x8xf32> to vector<2x8x1xf32>
    %223 = tpu.reciprocal %222 {approx = true} : vector<2x8x1xf32> -> vector<2x8x1xf32>
    %224 = vector.broadcast %223 : vector<2x8x1xf32> to vector<2x8x8xf32>
    %225 = arith.mulf %220, %224 : vector<2x8x8xf32>
    "tpu.trace_start"() <{level = 10 : i32, message = "bqk,bkd->bqd"}> : () -> ()
    %cst_97 = arith.constant dense<0.000000e+00> : vector<2x8x8xf32>
    %226 = tpu.matmul %225, %214, %cst_97 {dimension_numbers = #tpu.dot_dimension_numbers<[2], [1], [1], [2], [0, 0, 0, 1, 1, 2], [0], [0]>} : vector<2x8x8xf32>, vector<2x8x8xf32>, vector<2x8x8xf32> -> vector<2x8x8xf32>
    "tpu.trace_stop"() : () -> ()
    %227 = tpu.concatenate %181, %196, %211, %226 in 2 : vector<2x8x8xf32>, vector<2x8x8xf32>, vector<2x8x8xf32>, vector<2x8x8xf32> -> vector<2x8x32xf32>
    %228 = vector.shape_cast %227 : vector<2x8x32xf32> to vector<16x32xf32>
    %c1_98 = arith.constant 1 : index
    %c0_99 = arith.constant 0 : index
    %c0_100 = arith.constant 0 : index
    %229 = vector.load %arg7[%c1_98, %c0_99, %c0_100] : memref<4x32x32xf32, #tpu.memory_space<vmem>>, vector<1x32x32xf32>
    %230 = vector.shape_cast %229 : vector<1x32x32xf32> to vector<32x32xf32>
    %cst_101 = arith.constant dense<0.000000e+00> : vector<16x32xf32>
    %231 = tpu.matmul %228, %230, %cst_101 {dimension_numbers = #tpu.dot_dimension_numbers<[1], [0], [0], [1], [0, 0, 1, 1], [], []>} : vector<16x32xf32>, vector<32x32xf32>, vector<16x32xf32> -> vector<16x32xf32>
    %c1_102 = arith.constant 1 : index
    %c0_103 = arith.constant 0 : index
    %c0_104 = arith.constant 0 : index
    %232 = vector.load %arg8[%c1_102, %c0_103, %c0_104] : memref<4x1x32xf32, #tpu.memory_space<vmem>>, vector<1x1x32xf32>
    %233 = vector.shape_cast %232 : vector<1x1x32xf32> to vector<1x32xf32>
    %234 = vector.broadcast %233 : vector<1x32xf32> to vector<16x32xf32>
    %235 = arith.addf %231, %234 : vector<16x32xf32>
    %236 = arith.addf %158, %235 : vector<16x32xf32>
    %c1_105 = arith.constant 1 : index
    %c0_106 = arith.constant 0 : index
    %c0_107 = arith.constant 0 : index
    %237 = vector.load %arg13[%c1_105, %c0_106, %c0_107] : memref<4x1x32xf32, #tpu.memory_space<vmem>>, vector<1x1x32xf32>
    %238 = vector.shape_cast %237 : vector<1x1x32xf32> to vector<1x32xf32>
    %c1_108 = arith.constant 1 : index
    %c0_109 = arith.constant 0 : index
    %c0_110 = arith.constant 0 : index
    %239 = vector.load %arg14[%c1_108, %c0_109, %c0_110] : memref<4x1x32xf32, #tpu.memory_space<vmem>>, vector<1x1x32xf32>
    %240 = vector.shape_cast %239 : vector<1x1x32xf32> to vector<1x32xf32>
    %cst_111 = arith.constant dense<0.000000e+00> : vector<16xf32>
    %241 = vector.multi_reduction <add>, %236, %cst_111 [1] : vector<16x32xf32> to vector<16xf32>
    %242 = vector.shape_cast %241 : vector<16xf32> to vector<16x1xf32>
    %cst_112 = arith.constant 3.200000e+01 : f32
    %243 = vector.broadcast %cst_112 : f32 to vector<16x1xf32>
    %244 = arith.divf %242, %243 : vector<16x1xf32>
    %245 = vector.broadcast %244 : vector<16x1xf32> to vector<16x32xf32>
    %246 = arith.subf %236, %245 : vector<16x32xf32>
    %247 = arith.mulf %246, %246 : vector<16x32xf32>
    %cst_113 = arith.constant dense<0.000000e+00> : vector<16xf32>
    %248 = vector.multi_reduction <add>, %247, %cst_113 [1] : vector<16x32xf32> to vector<16xf32>
    %249 = vector.shape_cast %248 : vector<16xf32> to vector<16x1xf32>
    %cst_114 = arith.constant 3.200000e+01 : f32
    %250 = vector.broadcast %cst_114 : f32 to vector<16x1xf32>
    %251 = arith.divf %249, %250 : vector<16x1xf32>
    %252 = vector.broadcast %244 : vector<16x1xf32> to vector<16x32xf32>
    %253 = arith.subf %236, %252 : vector<16x32xf32>
    %cst_115 = arith.constant 9.99999974E-6 : f32
    %254 = vector.broadcast %cst_115 : f32 to vector<16x1xf32>
    %255 = arith.addf %251, %254 : vector<16x1xf32>
    %256 = math.rsqrt %255 : vector<16x1xf32>
    %257 = vector.broadcast %256 : vector<16x1xf32> to vector<16x32xf32>
    %258 = arith.mulf %253, %257 : vector<16x32xf32>
    %259 = vector.broadcast %238 : vector<1x32xf32> to vector<16x32xf32>
    %260 = arith.mulf %258, %259 : vector<16x32xf32>
    %261 = vector.broadcast %240 : vector<1x32xf32> to vector<16x32xf32>
    %262 = arith.addf %260, %261 : vector<16x32xf32>
    %c1_116 = arith.constant 1 : index
    %c0_117 = arith.constant 0 : index
    %c0_118 = arith.constant 0 : index
    %263 = vector.load %arg9[%c1_116, %c0_117, %c0_118] : memref<4x32x32xf32, #tpu.memory_space<vmem>>, vector<1x32x32xf32>
    %264 = vector.shape_cast %263 : vector<1x32x32xf32> to vector<32x32xf32>
    %cst_119 = arith.constant dense<0.000000e+00> : vector<16x32xf32>
    %265 = tpu.matmul %262, %264, %cst_119 {dimension_numbers = #tpu.dot_dimension_numbers<[1], [0], [0], [1], [0, 0, 1, 1], [], []>} : vector<16x32xf32>, vector<32x32xf32>, vector<16x32xf32> -> vector<16x32xf32>
    %c1_120 = arith.constant 1 : index
    %c0_121 = arith.constant 0 : index
    %c0_122 = arith.constant 0 : index
    %266 = vector.load %arg10[%c1_120, %c0_121, %c0_122] : memref<4x1x32xf32, #tpu.memory_space<vmem>>, vector<1x1x32xf32>
    %267 = vector.shape_cast %266 : vector<1x1x32xf32> to vector<1x32xf32>
    %268 = vector.broadcast %267 : vector<1x32xf32> to vector<16x32xf32>
    %269 = arith.addf %265, %268 : vector<16x32xf32>
    %cst_123 = arith.constant 0.000000e+00 : f32
    %270 = vector.broadcast %cst_123 : f32 to vector<16x32xf32>
    %271 = arith.maximumf %269, %270 : vector<16x32xf32>
    %c1_124 = arith.constant 1 : index
    %c0_125 = arith.constant 0 : index
    %c0_126 = arith.constant 0 : index
    %272 = vector.load %arg11[%c1_124, %c0_125, %c0_126] : memref<4x32x32xf32, #tpu.memory_space<vmem>>, vector<1x32x32xf32>
    %273 = vector.shape_cast %272 : vector<1x32x32xf32> to vector<32x32xf32>
    %cst_127 = arith.constant dense<0.000000e+00> : vector<16x32xf32>
    %274 = tpu.matmul %271, %273, %cst_127 {dimension_numbers = #tpu.dot_dimension_numbers<[1], [0], [0], [1], [0, 0, 1, 1], [], []>} : vector<16x32xf32>, vector<32x32xf32>, vector<16x32xf32> -> vector<16x32xf32>
    %c1_128 = arith.constant 1 : index
    %c0_129 = arith.constant 0 : index
    %c0_130 = arith.constant 0 : index
    %275 = vector.load %arg12[%c1_128, %c0_129, %c0_130] : memref<4x1x32xf32, #tpu.memory_space<vmem>>, vector<1x1x32xf32>
    %276 = vector.shape_cast %275 : vector<1x1x32xf32> to vector<1x32xf32>
    %277 = vector.broadcast %276 : vector<1x32xf32> to vector<16x32xf32>
    %278 = arith.addf %274, %277 : vector<16x32xf32>
    %279 = arith.addf %262, %278 : vector<16x32xf32>
    %c1_131 = arith.constant 1 : index
    %c0_132 = arith.constant 0 : index
    %c0_133 = arith.constant 0 : index
    %280 = vector.load %arg15[%c1_131, %c0_132, %c0_133] : memref<4x1x32xf32, #tpu.memory_space<vmem>>, vector<1x1x32xf32>
    %281 = vector.shape_cast %280 : vector<1x1x32xf32> to vector<1x32xf32>
    %c1_134 = arith.constant 1 : index
    %c0_135 = arith.constant 0 : index
    %c0_136 = arith.constant 0 : index
    %282 = vector.load %arg16[%c1_134, %c0_135, %c0_136] : memref<4x1x32xf32, #tpu.memory_space<vmem>>, vector<1x1x32xf32>
    %283 = vector.shape_cast %282 : vector<1x1x32xf32> to vector<1x32xf32>
    %cst_137 = arith.constant dense<0.000000e+00> : vector<16xf32>
    %284 = vector.multi_reduction <add>, %279, %cst_137 [1] : vector<16x32xf32> to vector<16xf32>
    %285 = vector.shape_cast %284 : vector<16xf32> to vector<16x1xf32>
    %cst_138 = arith.constant 3.200000e+01 : f32
    %286 = vector.broadcast %cst_138 : f32 to vector<16x1xf32>
    %287 = arith.divf %285, %286 : vector<16x1xf32>
    %288 = vector.broadcast %287 : vector<16x1xf32> to vector<16x32xf32>
    %289 = arith.subf %279, %288 : vector<16x32xf32>
    %290 = arith.mulf %289, %289 : vector<16x32xf32>
    %cst_139 = arith.constant dense<0.000000e+00> : vector<16xf32>
    %291 = vector.multi_reduction <add>, %290, %cst_139 [1] : vector<16x32xf32> to vector<16xf32>
    %292 = vector.shape_cast %291 : vector<16xf32> to vector<16x1xf32>
    %cst_140 = arith.constant 3.200000e+01 : f32
    %293 = vector.broadcast %cst_140 : f32 to vector<16x1xf32>
    %294 = arith.divf %292, %293 : vector<16x1xf32>
    %295 = vector.broadcast %287 : vector<16x1xf32> to vector<16x32xf32>
    %296 = arith.subf %279, %295 : vector<16x32xf32>
    %cst_141 = arith.constant 9.99999974E-6 : f32
    %297 = vector.broadcast %cst_141 : f32 to vector<16x1xf32>
    %298 = arith.addf %294, %297 : vector<16x1xf32>
    %299 = math.rsqrt %298 : vector<16x1xf32>
    %300 = vector.broadcast %299 : vector<16x1xf32> to vector<16x32xf32>
    %301 = arith.mulf %296, %300 : vector<16x32xf32>
    %302 = vector.broadcast %281 : vector<1x32xf32> to vector<16x32xf32>
    %303 = arith.mulf %301, %302 : vector<16x32xf32>
    %304 = vector.broadcast %283 : vector<1x32xf32> to vector<16x32xf32>
    %305 = arith.addf %303, %304 : vector<16x32xf32>
    %c2 = arith.constant 2 : index
    %c0_142 = arith.constant 0 : index
    %c0_143 = arith.constant 0 : index
    %306 = vector.load %arg5[%c2, %c0_142, %c0_143] : memref<4x32x96xf32, #tpu.memory_space<vmem>>, vector<1x32x96xf32>
    %307 = vector.shape_cast %306 : vector<1x32x96xf32> to vector<32x96xf32>
    %cst_144 = arith.constant dense<0.000000e+00> : vector<16x96xf32>
    %308 = tpu.matmul %305, %307, %cst_144 {dimension_numbers = #tpu.dot_dimension_numbers<[1], [0], [0], [1], [0, 0, 1, 1], [], []>} : vector<16x32xf32>, vector<32x96xf32>, vector<16x96xf32> -> vector<16x96xf32>
    %c2_145 = arith.constant 2 : index
    %c0_146 = arith.constant 0 : index
    %c0_147 = arith.constant 0 : index
    %309 = vector.load %arg6[%c2_145, %c0_146, %c0_147] : memref<4x1x96xf32, #tpu.memory_space<vmem>>, vector<1x1x96xf32>
    %310 = vector.shape_cast %309 : vector<1x1x96xf32> to vector<1x96xf32>
    %311 = vector.broadcast %310 : vector<1x96xf32> to vector<16x96xf32>
    %312 = arith.addf %308, %311 : vector<16x96xf32>
    %313 = vector.shape_cast %312 : vector<16x96xf32> to vector<2x8x96xf32>
    %314 = vector.extract_strided_slice %313 {offsets = [0, 0, 0], sizes = [2, 8, 8], strides = [1, 1, 1]} : vector<2x8x96xf32> to vector<2x8x8xf32>
    %315 = vector.extract_strided_slice %313 {offsets = [0, 0, 32], sizes = [2, 8, 8], strides = [1, 1, 1]} : vector<2x8x96xf32> to vector<2x8x8xf32>
    %316 = vector.extract_strided_slice %313 {offsets = [0, 0, 64], sizes = [2, 8, 8], strides = [1, 1, 1]} : vector<2x8x96xf32> to vector<2x8x8xf32>
    "tpu.trace_start"() <{level = 10 : i32, message = "bqd,bkd->bqk"}> : () -> ()
    %cst_148 = arith.constant dense<0.000000e+00> : vector<2x8x8xf32>
    %317 = tpu.matmul %314, %315, %cst_148 {dimension_numbers = #tpu.dot_dimension_numbers<[2], [2], [1], [1], [0, 0, 0, 1, 1, 1], [0], [0]>} : vector<2x8x8xf32>, vector<2x8x8xf32>, vector<2x8x8xf32> -> vector<2x8x8xf32>
    "tpu.trace_stop"() : () -> ()
    %cst_149 = arith.constant dense<0xFF800000> : vector<2x8xf32>
    %318 = vector.multi_reduction <maximumf>, %317, %cst_149 [2] : vector<2x8x8xf32> to vector<2x8xf32>
    %319 = vector.shape_cast %318 : vector<2x8xf32> to vector<2x8x1xf32>
    %320 = vector.broadcast %319 : vector<2x8x1xf32> to vector<2x8x8xf32>
    %321 = arith.subf %317, %320 : vector<2x8x8xf32>
    %322 = math.exp %321 : vector<2x8x8xf32>
    %cst_150 = arith.constant dense<0.000000e+00> : vector<2x8xf32>
    %323 = vector.multi_reduction <add>, %322, %cst_150 [2] : vector<2x8x8xf32> to vector<2x8xf32>
    %324 = vector.shape_cast %323 : vector<2x8xf32> to vector<2x8x1xf32>
    %325 = tpu.reciprocal %324 {approx = true} : vector<2x8x1xf32> -> vector<2x8x1xf32>
    %326 = vector.broadcast %325 : vector<2x8x1xf32> to vector<2x8x8xf32>
    %327 = arith.mulf %322, %326 : vector<2x8x8xf32>
    "tpu.trace_start"() <{level = 10 : i32, message = "bqk,bkd->bqd"}> : () -> ()
    %cst_151 = arith.constant dense<0.000000e+00> : vector<2x8x8xf32>
    %328 = tpu.matmul %327, %316, %cst_151 {dimension_numbers = #tpu.dot_dimension_numbers<[2], [1], [1], [2], [0, 0, 0, 1, 1, 2], [0], [0]>} : vector<2x8x8xf32>, vector<2x8x8xf32>, vector<2x8x8xf32> -> vector<2x8x8xf32>
    "tpu.trace_stop"() : () -> ()
    %329 = vector.extract_strided_slice %313 {offsets = [0, 0, 8], sizes = [2, 8, 8], strides = [1, 1, 1]} : vector<2x8x96xf32> to vector<2x8x8xf32>
    %330 = vector.extract_strided_slice %313 {offsets = [0, 0, 40], sizes = [2, 8, 8], strides = [1, 1, 1]} : vector<2x8x96xf32> to vector<2x8x8xf32>
    %331 = vector.extract_strided_slice %313 {offsets = [0, 0, 72], sizes = [2, 8, 8], strides = [1, 1, 1]} : vector<2x8x96xf32> to vector<2x8x8xf32>
    "tpu.trace_start"() <{level = 10 : i32, message = "bqd,bkd->bqk"}> : () -> ()
    %cst_152 = arith.constant dense<0.000000e+00> : vector<2x8x8xf32>
    %332 = tpu.matmul %329, %330, %cst_152 {dimension_numbers = #tpu.dot_dimension_numbers<[2], [2], [1], [1], [0, 0, 0, 1, 1, 1], [0], [0]>} : vector<2x8x8xf32>, vector<2x8x8xf32>, vector<2x8x8xf32> -> vector<2x8x8xf32>
    "tpu.trace_stop"() : () -> ()
    %cst_153 = arith.constant dense<0xFF800000> : vector<2x8xf32>
    %333 = vector.multi_reduction <maximumf>, %332, %cst_153 [2] : vector<2x8x8xf32> to vector<2x8xf32>
    %334 = vector.shape_cast %333 : vector<2x8xf32> to vector<2x8x1xf32>
    %335 = vector.broadcast %334 : vector<2x8x1xf32> to vector<2x8x8xf32>
    %336 = arith.subf %332, %335 : vector<2x8x8xf32>
    %337 = math.exp %336 : vector<2x8x8xf32>
    %cst_154 = arith.constant dense<0.000000e+00> : vector<2x8xf32>
    %338 = vector.multi_reduction <add>, %337, %cst_154 [2] : vector<2x8x8xf32> to vector<2x8xf32>
    %339 = vector.shape_cast %338 : vector<2x8xf32> to vector<2x8x1xf32>
    %340 = tpu.reciprocal %339 {approx = true} : vector<2x8x1xf32> -> vector<2x8x1xf32>
    %341 = vector.broadcast %340 : vector<2x8x1xf32> to vector<2x8x8xf32>
    %342 = arith.mulf %337, %341 : vector<2x8x8xf32>
    "tpu.trace_start"() <{level = 10 : i32, message = "bqk,bkd->bqd"}> : () -> ()
    %cst_155 = arith.constant dense<0.000000e+00> : vector<2x8x8xf32>
    %343 = tpu.matmul %342, %331, %cst_155 {dimension_numbers = #tpu.dot_dimension_numbers<[2], [1], [1], [2], [0, 0, 0, 1, 1, 2], [0], [0]>} : vector<2x8x8xf32>, vector<2x8x8xf32>, vector<2x8x8xf32> -> vector<2x8x8xf32>
    "tpu.trace_stop"() : () -> ()
    %344 = vector.extract_strided_slice %313 {offsets = [0, 0, 16], sizes = [2, 8, 8], strides = [1, 1, 1]} : vector<2x8x96xf32> to vector<2x8x8xf32>
    %345 = vector.extract_strided_slice %313 {offsets = [0, 0, 48], sizes = [2, 8, 8], strides = [1, 1, 1]} : vector<2x8x96xf32> to vector<2x8x8xf32>
    %346 = vector.extract_strided_slice %313 {offsets = [0, 0, 80], sizes = [2, 8, 8], strides = [1, 1, 1]} : vector<2x8x96xf32> to vector<2x8x8xf32>
    "tpu.trace_start"() <{level = 10 : i32, message = "bqd,bkd->bqk"}> : () -> ()
    %cst_156 = arith.constant dense<0.000000e+00> : vector<2x8x8xf32>
    %347 = tpu.matmul %344, %345, %cst_156 {dimension_numbers = #tpu.dot_dimension_numbers<[2], [2], [1], [1], [0, 0, 0, 1, 1, 1], [0], [0]>} : vector<2x8x8xf32>, vector<2x8x8xf32>, vector<2x8x8xf32> -> vector<2x8x8xf32>
    "tpu.trace_stop"() : () -> ()
    %cst_157 = arith.constant dense<0xFF800000> : vector<2x8xf32>
    %348 = vector.multi_reduction <maximumf>, %347, %cst_157 [2] : vector<2x8x8xf32> to vector<2x8xf32>
    %349 = vector.shape_cast %348 : vector<2x8xf32> to vector<2x8x1xf32>
    %350 = vector.broadcast %349 : vector<2x8x1xf32> to vector<2x8x8xf32>
    %351 = arith.subf %347, %350 : vector<2x8x8xf32>
    %352 = math.exp %351 : vector<2x8x8xf32>
    %cst_158 = arith.constant dense<0.000000e+00> : vector<2x8xf32>
    %353 = vector.multi_reduction <add>, %352, %cst_158 [2] : vector<2x8x8xf32> to vector<2x8xf32>
    %354 = vector.shape_cast %353 : vector<2x8xf32> to vector<2x8x1xf32>
    %355 = tpu.reciprocal %354 {approx = true} : vector<2x8x1xf32> -> vector<2x8x1xf32>
    %356 = vector.broadcast %355 : vector<2x8x1xf32> to vector<2x8x8xf32>
    %357 = arith.mulf %352, %356 : vector<2x8x8xf32>
    "tpu.trace_start"() <{level = 10 : i32, message = "bqk,bkd->bqd"}> : () -> ()
    %cst_159 = arith.constant dense<0.000000e+00> : vector<2x8x8xf32>
    %358 = tpu.matmul %357, %346, %cst_159 {dimension_numbers = #tpu.dot_dimension_numbers<[2], [1], [1], [2], [0, 0, 0, 1, 1, 2], [0], [0]>} : vector<2x8x8xf32>, vector<2x8x8xf32>, vector<2x8x8xf32> -> vector<2x8x8xf32>
    "tpu.trace_stop"() : () -> ()
    %359 = vector.extract_strided_slice %313 {offsets = [0, 0, 24], sizes = [2, 8, 8], strides = [1, 1, 1]} : vector<2x8x96xf32> to vector<2x8x8xf32>
    %360 = vector.extract_strided_slice %313 {offsets = [0, 0, 56], sizes = [2, 8, 8], strides = [1, 1, 1]} : vector<2x8x96xf32> to vector<2x8x8xf32>
    %361 = vector.extract_strided_slice %313 {offsets = [0, 0, 88], sizes = [2, 8, 8], strides = [1, 1, 1]} : vector<2x8x96xf32> to vector<2x8x8xf32>
    "tpu.trace_start"() <{level = 10 : i32, message = "bqd,bkd->bqk"}> : () -> ()
    %cst_160 = arith.constant dense<0.000000e+00> : vector<2x8x8xf32>
    %362 = tpu.matmul %359, %360, %cst_160 {dimension_numbers = #tpu.dot_dimension_numbers<[2], [2], [1], [1], [0, 0, 0, 1, 1, 1], [0], [0]>} : vector<2x8x8xf32>, vector<2x8x8xf32>, vector<2x8x8xf32> -> vector<2x8x8xf32>
    "tpu.trace_stop"() : () -> ()
    %cst_161 = arith.constant dense<0xFF800000> : vector<2x8xf32>
    %363 = vector.multi_reduction <maximumf>, %362, %cst_161 [2] : vector<2x8x8xf32> to vector<2x8xf32>
    %364 = vector.shape_cast %363 : vector<2x8xf32> to vector<2x8x1xf32>
    %365 = vector.broadcast %364 : vector<2x8x1xf32> to vector<2x8x8xf32>
    %366 = arith.subf %362, %365 : vector<2x8x8xf32>
    %367 = math.exp %366 : vector<2x8x8xf32>
    %cst_162 = arith.constant dense<0.000000e+00> : vector<2x8xf32>
    %368 = vector.multi_reduction <add>, %367, %cst_162 [2] : vector<2x8x8xf32> to vector<2x8xf32>
    %369 = vector.shape_cast %368 : vector<2x8xf32> to vector<2x8x1xf32>
    %370 = tpu.reciprocal %369 {approx = true} : vector<2x8x1xf32> -> vector<2x8x1xf32>
    %371 = vector.broadcast %370 : vector<2x8x1xf32> to vector<2x8x8xf32>
    %372 = arith.mulf %367, %371 : vector<2x8x8xf32>
    "tpu.trace_start"() <{level = 10 : i32, message = "bqk,bkd->bqd"}> : () -> ()
    %cst_163 = arith.constant dense<0.000000e+00> : vector<2x8x8xf32>
    %373 = tpu.matmul %372, %361, %cst_163 {dimension_numbers = #tpu.dot_dimension_numbers<[2], [1], [1], [2], [0, 0, 0, 1, 1, 2], [0], [0]>} : vector<2x8x8xf32>, vector<2x8x8xf32>, vector<2x8x8xf32> -> vector<2x8x8xf32>
    "tpu.trace_stop"() : () -> ()
    %374 = tpu.concatenate %328, %343, %358, %373 in 2 : vector<2x8x8xf32>, vector<2x8x8xf32>, vector<2x8x8xf32>, vector<2x8x8xf32> -> vector<2x8x32xf32>
    %375 = vector.shape_cast %374 : vector<2x8x32xf32> to vector<16x32xf32>
    %c2_164 = arith.constant 2 : index
    %c0_165 = arith.constant 0 : index
    %c0_166 = arith.constant 0 : index
    %376 = vector.load %arg7[%c2_164, %c0_165, %c0_166] : memref<4x32x32xf32, #tpu.memory_space<vmem>>, vector<1x32x32xf32>
    %377 = vector.shape_cast %376 : vector<1x32x32xf32> to vector<32x32xf32>
    %cst_167 = arith.constant dense<0.000000e+00> : vector<16x32xf32>
    %378 = tpu.matmul %375, %377, %cst_167 {dimension_numbers = #tpu.dot_dimension_numbers<[1], [0], [0], [1], [0, 0, 1, 1], [], []>} : vector<16x32xf32>, vector<32x32xf32>, vector<16x32xf32> -> vector<16x32xf32>
    %c2_168 = arith.constant 2 : index
    %c0_169 = arith.constant 0 : index
    %c0_170 = arith.constant 0 : index
    %379 = vector.load %arg8[%c2_168, %c0_169, %c0_170] : memref<4x1x32xf32, #tpu.memory_space<vmem>>, vector<1x1x32xf32>
    %380 = vector.shape_cast %379 : vector<1x1x32xf32> to vector<1x32xf32>
    %381 = vector.broadcast %380 : vector<1x32xf32> to vector<16x32xf32>
    %382 = arith.addf %378, %381 : vector<16x32xf32>
    %383 = arith.addf %305, %382 : vector<16x32xf32>
    %c2_171 = arith.constant 2 : index
    %c0_172 = arith.constant 0 : index
    %c0_173 = arith.constant 0 : index
    %384 = vector.load %arg13[%c2_171, %c0_172, %c0_173] : memref<4x1x32xf32, #tpu.memory_space<vmem>>, vector<1x1x32xf32>
    %385 = vector.shape_cast %384 : vector<1x1x32xf32> to vector<1x32xf32>
    %c2_174 = arith.constant 2 : index
    %c0_175 = arith.constant 0 : index
    %c0_176 = arith.constant 0 : index
    %386 = vector.load %arg14[%c2_174, %c0_175, %c0_176] : memref<4x1x32xf32, #tpu.memory_space<vmem>>, vector<1x1x32xf32>
    %387 = vector.shape_cast %386 : vector<1x1x32xf32> to vector<1x32xf32>
    %cst_177 = arith.constant dense<0.000000e+00> : vector<16xf32>
    %388 = vector.multi_reduction <add>, %383, %cst_177 [1] : vector<16x32xf32> to vector<16xf32>
    %389 = vector.shape_cast %388 : vector<16xf32> to vector<16x1xf32>
    %cst_178 = arith.constant 3.200000e+01 : f32
    %390 = vector.broadcast %cst_178 : f32 to vector<16x1xf32>
    %391 = arith.divf %389, %390 : vector<16x1xf32>
    %392 = vector.broadcast %391 : vector<16x1xf32> to vector<16x32xf32>
    %393 = arith.subf %383, %392 : vector<16x32xf32>
    %394 = arith.mulf %393, %393 : vector<16x32xf32>
    %cst_179 = arith.constant dense<0.000000e+00> : vector<16xf32>
    %395 = vector.multi_reduction <add>, %394, %cst_179 [1] : vector<16x32xf32> to vector<16xf32>
    %396 = vector.shape_cast %395 : vector<16xf32> to vector<16x1xf32>
    %cst_180 = arith.constant 3.200000e+01 : f32
    %397 = vector.broadcast %cst_180 : f32 to vector<16x1xf32>
    %398 = arith.divf %396, %397 : vector<16x1xf32>
    %399 = vector.broadcast %391 : vector<16x1xf32> to vector<16x32xf32>
    %400 = arith.subf %383, %399 : vector<16x32xf32>
    %cst_181 = arith.constant 9.99999974E-6 : f32
    %401 = vector.broadcast %cst_181 : f32 to vector<16x1xf32>
    %402 = arith.addf %398, %401 : vector<16x1xf32>
    %403 = math.rsqrt %402 : vector<16x1xf32>
    %404 = vector.broadcast %403 : vector<16x1xf32> to vector<16x32xf32>
    %405 = arith.mulf %400, %404 : vector<16x32xf32>
    %406 = vector.broadcast %385 : vector<1x32xf32> to vector<16x32xf32>
    %407 = arith.mulf %405, %406 : vector<16x32xf32>
    %408 = vector.broadcast %387 : vector<1x32xf32> to vector<16x32xf32>
    %409 = arith.addf %407, %408 : vector<16x32xf32>
    %c2_182 = arith.constant 2 : index
    %c0_183 = arith.constant 0 : index
    %c0_184 = arith.constant 0 : index
    %410 = vector.load %arg9[%c2_182, %c0_183, %c0_184] : memref<4x32x32xf32, #tpu.memory_space<vmem>>, vector<1x32x32xf32>
    %411 = vector.shape_cast %410 : vector<1x32x32xf32> to vector<32x32xf32>
    %cst_185 = arith.constant dense<0.000000e+00> : vector<16x32xf32>
    %412 = tpu.matmul %409, %411, %cst_185 {dimension_numbers = #tpu.dot_dimension_numbers<[1], [0], [0], [1], [0, 0, 1, 1], [], []>} : vector<16x32xf32>, vector<32x32xf32>, vector<16x32xf32> -> vector<16x32xf32>
    %c2_186 = arith.constant 2 : index
    %c0_187 = arith.constant 0 : index
    %c0_188 = arith.constant 0 : index
    %413 = vector.load %arg10[%c2_186, %c0_187, %c0_188] : memref<4x1x32xf32, #tpu.memory_space<vmem>>, vector<1x1x32xf32>
    %414 = vector.shape_cast %413 : vector<1x1x32xf32> to vector<1x32xf32>
    %415 = vector.broadcast %414 : vector<1x32xf32> to vector<16x32xf32>
    %416 = arith.addf %412, %415 : vector<16x32xf32>
    %cst_189 = arith.constant 0.000000e+00 : f32
    %417 = vector.broadcast %cst_189 : f32 to vector<16x32xf32>
    %418 = arith.maximumf %416, %417 : vector<16x32xf32>
    %c2_190 = arith.constant 2 : index
    %c0_191 = arith.constant 0 : index
    %c0_192 = arith.constant 0 : index
    %419 = vector.load %arg11[%c2_190, %c0_191, %c0_192] : memref<4x32x32xf32, #tpu.memory_space<vmem>>, vector<1x32x32xf32>
    %420 = vector.shape_cast %419 : vector<1x32x32xf32> to vector<32x32xf32>
    %cst_193 = arith.constant dense<0.000000e+00> : vector<16x32xf32>
    %421 = tpu.matmul %418, %420, %cst_193 {dimension_numbers = #tpu.dot_dimension_numbers<[1], [0], [0], [1], [0, 0, 1, 1], [], []>} : vector<16x32xf32>, vector<32x32xf32>, vector<16x32xf32> -> vector<16x32xf32>
    %c2_194 = arith.constant 2 : index
    %c0_195 = arith.constant 0 : index
    %c0_196 = arith.constant 0 : index
    %422 = vector.load %arg12[%c2_194, %c0_195, %c0_196] : memref<4x1x32xf32, #tpu.memory_space<vmem>>, vector<1x1x32xf32>
    %423 = vector.shape_cast %422 : vector<1x1x32xf32> to vector<1x32xf32>
    %424 = vector.broadcast %423 : vector<1x32xf32> to vector<16x32xf32>
    %425 = arith.addf %421, %424 : vector<16x32xf32>
    %426 = arith.addf %409, %425 : vector<16x32xf32>
    %c2_197 = arith.constant 2 : index
    %c0_198 = arith.constant 0 : index
    %c0_199 = arith.constant 0 : index
    %427 = vector.load %arg15[%c2_197, %c0_198, %c0_199] : memref<4x1x32xf32, #tpu.memory_space<vmem>>, vector<1x1x32xf32>
    %428 = vector.shape_cast %427 : vector<1x1x32xf32> to vector<1x32xf32>
    %c2_200 = arith.constant 2 : index
    %c0_201 = arith.constant 0 : index
    %c0_202 = arith.constant 0 : index
    %429 = vector.load %arg16[%c2_200, %c0_201, %c0_202] : memref<4x1x32xf32, #tpu.memory_space<vmem>>, vector<1x1x32xf32>
    %430 = vector.shape_cast %429 : vector<1x1x32xf32> to vector<1x32xf32>
    %cst_203 = arith.constant dense<0.000000e+00> : vector<16xf32>
    %431 = vector.multi_reduction <add>, %426, %cst_203 [1] : vector<16x32xf32> to vector<16xf32>
    %432 = vector.shape_cast %431 : vector<16xf32> to vector<16x1xf32>
    %cst_204 = arith.constant 3.200000e+01 : f32
    %433 = vector.broadcast %cst_204 : f32 to vector<16x1xf32>
    %434 = arith.divf %432, %433 : vector<16x1xf32>
    %435 = vector.broadcast %434 : vector<16x1xf32> to vector<16x32xf32>
    %436 = arith.subf %426, %435 : vector<16x32xf32>
    %437 = arith.mulf %436, %436 : vector<16x32xf32>
    %cst_205 = arith.constant dense<0.000000e+00> : vector<16xf32>
    %438 = vector.multi_reduction <add>, %437, %cst_205 [1] : vector<16x32xf32> to vector<16xf32>
    %439 = vector.shape_cast %438 : vector<16xf32> to vector<16x1xf32>
    %cst_206 = arith.constant 3.200000e+01 : f32
    %440 = vector.broadcast %cst_206 : f32 to vector<16x1xf32>
    %441 = arith.divf %439, %440 : vector<16x1xf32>
    %442 = vector.broadcast %434 : vector<16x1xf32> to vector<16x32xf32>
    %443 = arith.subf %426, %442 : vector<16x32xf32>
    %cst_207 = arith.constant 9.99999974E-6 : f32
    %444 = vector.broadcast %cst_207 : f32 to vector<16x1xf32>
    %445 = arith.addf %441, %444 : vector<16x1xf32>
    %446 = math.rsqrt %445 : vector<16x1xf32>
    %447 = vector.broadcast %446 : vector<16x1xf32> to vector<16x32xf32>
    %448 = arith.mulf %443, %447 : vector<16x32xf32>
    %449 = vector.broadcast %428 : vector<1x32xf32> to vector<16x32xf32>
    %450 = arith.mulf %448, %449 : vector<16x32xf32>
    %451 = vector.broadcast %430 : vector<1x32xf32> to vector<16x32xf32>
    %452 = arith.addf %450, %451 : vector<16x32xf32>
    %c3 = arith.constant 3 : index
    %c0_208 = arith.constant 0 : index
    %c0_209 = arith.constant 0 : index
    %453 = vector.load %arg5[%c3, %c0_208, %c0_209] : memref<4x32x96xf32, #tpu.memory_space<vmem>>, vector<1x32x96xf32>
    %454 = vector.shape_cast %453 : vector<1x32x96xf32> to vector<32x96xf32>
    %cst_210 = arith.constant dense<0.000000e+00> : vector<16x96xf32>
    %455 = tpu.matmul %452, %454, %cst_210 {dimension_numbers = #tpu.dot_dimension_numbers<[1], [0], [0], [1], [0, 0, 1, 1], [], []>} : vector<16x32xf32>, vector<32x96xf32>, vector<16x96xf32> -> vector<16x96xf32>
    %c3_211 = arith.constant 3 : index
    %c0_212 = arith.constant 0 : index
    %c0_213 = arith.constant 0 : index
    %456 = vector.load %arg6[%c3_211, %c0_212, %c0_213] : memref<4x1x96xf32, #tpu.memory_space<vmem>>, vector<1x1x96xf32>
    %457 = vector.shape_cast %456 : vector<1x1x96xf32> to vector<1x96xf32>
    %458 = vector.broadcast %457 : vector<1x96xf32> to vector<16x96xf32>
    %459 = arith.addf %455, %458 : vector<16x96xf32>
    %460 = vector.shape_cast %459 : vector<16x96xf32> to vector<2x8x96xf32>
    %461 = vector.extract_strided_slice %460 {offsets = [0, 0, 0], sizes = [2, 8, 8], strides = [1, 1, 1]} : vector<2x8x96xf32> to vector<2x8x8xf32>
    %462 = vector.extract_strided_slice %460 {offsets = [0, 0, 32], sizes = [2, 8, 8], strides = [1, 1, 1]} : vector<2x8x96xf32> to vector<2x8x8xf32>
    %463 = vector.extract_strided_slice %460 {offsets = [0, 0, 64], sizes = [2, 8, 8], strides = [1, 1, 1]} : vector<2x8x96xf32> to vector<2x8x8xf32>
    "tpu.trace_start"() <{level = 10 : i32, message = "bqd,bkd->bqk"}> : () -> ()
    %cst_214 = arith.constant dense<0.000000e+00> : vector<2x8x8xf32>
    %464 = tpu.matmul %461, %462, %cst_214 {dimension_numbers = #tpu.dot_dimension_numbers<[2], [2], [1], [1], [0, 0, 0, 1, 1, 1], [0], [0]>} : vector<2x8x8xf32>, vector<2x8x8xf32>, vector<2x8x8xf32> -> vector<2x8x8xf32>
    "tpu.trace_stop"() : () -> ()
    %cst_215 = arith.constant dense<0xFF800000> : vector<2x8xf32>
    %465 = vector.multi_reduction <maximumf>, %464, %cst_215 [2] : vector<2x8x8xf32> to vector<2x8xf32>
    %466 = vector.shape_cast %465 : vector<2x8xf32> to vector<2x8x1xf32>
    %467 = vector.broadcast %466 : vector<2x8x1xf32> to vector<2x8x8xf32>
    %468 = arith.subf %464, %467 : vector<2x8x8xf32>
    %469 = math.exp %468 : vector<2x8x8xf32>
    %cst_216 = arith.constant dense<0.000000e+00> : vector<2x8xf32>
    %470 = vector.multi_reduction <add>, %469, %cst_216 [2] : vector<2x8x8xf32> to vector<2x8xf32>
    %471 = vector.shape_cast %470 : vector<2x8xf32> to vector<2x8x1xf32>
    %472 = tpu.reciprocal %471 {approx = true} : vector<2x8x1xf32> -> vector<2x8x1xf32>
    %473 = vector.broadcast %472 : vector<2x8x1xf32> to vector<2x8x8xf32>
    %474 = arith.mulf %469, %473 : vector<2x8x8xf32>
    "tpu.trace_start"() <{level = 10 : i32, message = "bqk,bkd->bqd"}> : () -> ()
    %cst_217 = arith.constant dense<0.000000e+00> : vector<2x8x8xf32>
    %475 = tpu.matmul %474, %463, %cst_217 {dimension_numbers = #tpu.dot_dimension_numbers<[2], [1], [1], [2], [0, 0, 0, 1, 1, 2], [0], [0]>} : vector<2x8x8xf32>, vector<2x8x8xf32>, vector<2x8x8xf32> -> vector<2x8x8xf32>
    "tpu.trace_stop"() : () -> ()
    %476 = vector.extract_strided_slice %460 {offsets = [0, 0, 8], sizes = [2, 8, 8], strides = [1, 1, 1]} : vector<2x8x96xf32> to vector<2x8x8xf32>
    %477 = vector.extract_strided_slice %460 {offsets = [0, 0, 40], sizes = [2, 8, 8], strides = [1, 1, 1]} : vector<2x8x96xf32> to vector<2x8x8xf32>
    %478 = vector.extract_strided_slice %460 {offsets = [0, 0, 72], sizes = [2, 8, 8], strides = [1, 1, 1]} : vector<2x8x96xf32> to vector<2x8x8xf32>
    "tpu.trace_start"() <{level = 10 : i32, message = "bqd,bkd->bqk"}> : () -> ()
    %cst_218 = arith.constant dense<0.000000e+00> : vector<2x8x8xf32>
    %479 = tpu.matmul %476, %477, %cst_218 {dimension_numbers = #tpu.dot_dimension_numbers<[2], [2], [1], [1], [0, 0, 0, 1, 1, 1], [0], [0]>} : vector<2x8x8xf32>, vector<2x8x8xf32>, vector<2x8x8xf32> -> vector<2x8x8xf32>
    "tpu.trace_stop"() : () -> ()
    %cst_219 = arith.constant dense<0xFF800000> : vector<2x8xf32>
    %480 = vector.multi_reduction <maximumf>, %479, %cst_219 [2] : vector<2x8x8xf32> to vector<2x8xf32>
    %481 = vector.shape_cast %480 : vector<2x8xf32> to vector<2x8x1xf32>
    %482 = vector.broadcast %481 : vector<2x8x1xf32> to vector<2x8x8xf32>
    %483 = arith.subf %479, %482 : vector<2x8x8xf32>
    %484 = math.exp %483 : vector<2x8x8xf32>
    %cst_220 = arith.constant dense<0.000000e+00> : vector<2x8xf32>
    %485 = vector.multi_reduction <add>, %484, %cst_220 [2] : vector<2x8x8xf32> to vector<2x8xf32>
    %486 = vector.shape_cast %485 : vector<2x8xf32> to vector<2x8x1xf32>
    %487 = tpu.reciprocal %486 {approx = true} : vector<2x8x1xf32> -> vector<2x8x1xf32>
    %488 = vector.broadcast %487 : vector<2x8x1xf32> to vector<2x8x8xf32>
    %489 = arith.mulf %484, %488 : vector<2x8x8xf32>
    "tpu.trace_start"() <{level = 10 : i32, message = "bqk,bkd->bqd"}> : () -> ()
    %cst_221 = arith.constant dense<0.000000e+00> : vector<2x8x8xf32>
    %490 = tpu.matmul %489, %478, %cst_221 {dimension_numbers = #tpu.dot_dimension_numbers<[2], [1], [1], [2], [0, 0, 0, 1, 1, 2], [0], [0]>} : vector<2x8x8xf32>, vector<2x8x8xf32>, vector<2x8x8xf32> -> vector<2x8x8xf32>
    "tpu.trace_stop"() : () -> ()
    %491 = vector.extract_strided_slice %460 {offsets = [0, 0, 16], sizes = [2, 8, 8], strides = [1, 1, 1]} : vector<2x8x96xf32> to vector<2x8x8xf32>
    %492 = vector.extract_strided_slice %460 {offsets = [0, 0, 48], sizes = [2, 8, 8], strides = [1, 1, 1]} : vector<2x8x96xf32> to vector<2x8x8xf32>
    %493 = vector.extract_strided_slice %460 {offsets = [0, 0, 80], sizes = [2, 8, 8], strides = [1, 1, 1]} : vector<2x8x96xf32> to vector<2x8x8xf32>
    "tpu.trace_start"() <{level = 10 : i32, message = "bqd,bkd->bqk"}> : () -> ()
    %cst_222 = arith.constant dense<0.000000e+00> : vector<2x8x8xf32>
    %494 = tpu.matmul %491, %492, %cst_222 {dimension_numbers = #tpu.dot_dimension_numbers<[2], [2], [1], [1], [0, 0, 0, 1, 1, 1], [0], [0]>} : vector<2x8x8xf32>, vector<2x8x8xf32>, vector<2x8x8xf32> -> vector<2x8x8xf32>
    "tpu.trace_stop"() : () -> ()
    %cst_223 = arith.constant dense<0xFF800000> : vector<2x8xf32>
    %495 = vector.multi_reduction <maximumf>, %494, %cst_223 [2] : vector<2x8x8xf32> to vector<2x8xf32>
    %496 = vector.shape_cast %495 : vector<2x8xf32> to vector<2x8x1xf32>
    %497 = vector.broadcast %496 : vector<2x8x1xf32> to vector<2x8x8xf32>
    %498 = arith.subf %494, %497 : vector<2x8x8xf32>
    %499 = math.exp %498 : vector<2x8x8xf32>
    %cst_224 = arith.constant dense<0.000000e+00> : vector<2x8xf32>
    %500 = vector.multi_reduction <add>, %499, %cst_224 [2] : vector<2x8x8xf32> to vector<2x8xf32>
    %501 = vector.shape_cast %500 : vector<2x8xf32> to vector<2x8x1xf32>
    %502 = tpu.reciprocal %501 {approx = true} : vector<2x8x1xf32> -> vector<2x8x1xf32>
    %503 = vector.broadcast %502 : vector<2x8x1xf32> to vector<2x8x8xf32>
    %504 = arith.mulf %499, %503 : vector<2x8x8xf32>
    "tpu.trace_start"() <{level = 10 : i32, message = "bqk,bkd->bqd"}> : () -> ()
    %cst_225 = arith.constant dense<0.000000e+00> : vector<2x8x8xf32>
    %505 = tpu.matmul %504, %493, %cst_225 {dimension_numbers = #tpu.dot_dimension_numbers<[2], [1], [1], [2], [0, 0, 0, 1, 1, 2], [0], [0]>} : vector<2x8x8xf32>, vector<2x8x8xf32>, vector<2x8x8xf32> -> vector<2x8x8xf32>
    "tpu.trace_stop"() : () -> ()
    %506 = vector.extract_strided_slice %460 {offsets = [0, 0, 24], sizes = [2, 8, 8], strides = [1, 1, 1]} : vector<2x8x96xf32> to vector<2x8x8xf32>
    %507 = vector.extract_strided_slice %460 {offsets = [0, 0, 56], sizes = [2, 8, 8], strides = [1, 1, 1]} : vector<2x8x96xf32> to vector<2x8x8xf32>
    %508 = vector.extract_strided_slice %460 {offsets = [0, 0, 88], sizes = [2, 8, 8], strides = [1, 1, 1]} : vector<2x8x96xf32> to vector<2x8x8xf32>
    "tpu.trace_start"() <{level = 10 : i32, message = "bqd,bkd->bqk"}> : () -> ()
    %cst_226 = arith.constant dense<0.000000e+00> : vector<2x8x8xf32>
    %509 = tpu.matmul %506, %507, %cst_226 {dimension_numbers = #tpu.dot_dimension_numbers<[2], [2], [1], [1], [0, 0, 0, 1, 1, 1], [0], [0]>} : vector<2x8x8xf32>, vector<2x8x8xf32>, vector<2x8x8xf32> -> vector<2x8x8xf32>
    "tpu.trace_stop"() : () -> ()
    %cst_227 = arith.constant dense<0xFF800000> : vector<2x8xf32>
    %510 = vector.multi_reduction <maximumf>, %509, %cst_227 [2] : vector<2x8x8xf32> to vector<2x8xf32>
    %511 = vector.shape_cast %510 : vector<2x8xf32> to vector<2x8x1xf32>
    %512 = vector.broadcast %511 : vector<2x8x1xf32> to vector<2x8x8xf32>
    %513 = arith.subf %509, %512 : vector<2x8x8xf32>
    %514 = math.exp %513 : vector<2x8x8xf32>
    %cst_228 = arith.constant dense<0.000000e+00> : vector<2x8xf32>
    %515 = vector.multi_reduction <add>, %514, %cst_228 [2] : vector<2x8x8xf32> to vector<2x8xf32>
    %516 = vector.shape_cast %515 : vector<2x8xf32> to vector<2x8x1xf32>
    %517 = tpu.reciprocal %516 {approx = true} : vector<2x8x1xf32> -> vector<2x8x1xf32>
    %518 = vector.broadcast %517 : vector<2x8x1xf32> to vector<2x8x8xf32>
    %519 = arith.mulf %514, %518 : vector<2x8x8xf32>
    "tpu.trace_start"() <{level = 10 : i32, message = "bqk,bkd->bqd"}> : () -> ()
    %cst_229 = arith.constant dense<0.000000e+00> : vector<2x8x8xf32>
    %520 = tpu.matmul %519, %508, %cst_229 {dimension_numbers = #tpu.dot_dimension_numbers<[2], [1], [1], [2], [0, 0, 0, 1, 1, 2], [0], [0]>} : vector<2x8x8xf32>, vector<2x8x8xf32>, vector<2x8x8xf32> -> vector<2x8x8xf32>
    "tpu.trace_stop"() : () -> ()
    %521 = tpu.concatenate %475, %490, %505, %520 in 2 : vector<2x8x8xf32>, vector<2x8x8xf32>, vector<2x8x8xf32>, vector<2x8x8xf32> -> vector<2x8x32xf32>
    %522 = vector.shape_cast %521 : vector<2x8x32xf32> to vector<16x32xf32>
    %c3_230 = arith.constant 3 : index
    %c0_231 = arith.constant 0 : index
    %c0_232 = arith.constant 0 : index
    %523 = vector.load %arg7[%c3_230, %c0_231, %c0_232] : memref<4x32x32xf32, #tpu.memory_space<vmem>>, vector<1x32x32xf32>
    %524 = vector.shape_cast %523 : vector<1x32x32xf32> to vector<32x32xf32>
    %cst_233 = arith.constant dense<0.000000e+00> : vector<16x32xf32>
    %525 = tpu.matmul %522, %524, %cst_233 {dimension_numbers = #tpu.dot_dimension_numbers<[1], [0], [0], [1], [0, 0, 1, 1], [], []>} : vector<16x32xf32>, vector<32x32xf32>, vector<16x32xf32> -> vector<16x32xf32>
    %c3_234 = arith.constant 3 : index
    %c0_235 = arith.constant 0 : index
    %c0_236 = arith.constant 0 : index
    %526 = vector.load %arg8[%c3_234, %c0_235, %c0_236] : memref<4x1x32xf32, #tpu.memory_space<vmem>>, vector<1x1x32xf32>
    %527 = vector.shape_cast %526 : vector<1x1x32xf32> to vector<1x32xf32>
    %528 = vector.broadcast %527 : vector<1x32xf32> to vector<16x32xf32>
    %529 = arith.addf %525, %528 : vector<16x32xf32>
    %530 = arith.addf %452, %529 : vector<16x32xf32>
    %c3_237 = arith.constant 3 : index
    %c0_238 = arith.constant 0 : index
    %c0_239 = arith.constant 0 : index
    %531 = vector.load %arg13[%c3_237, %c0_238, %c0_239] : memref<4x1x32xf32, #tpu.memory_space<vmem>>, vector<1x1x32xf32>
    %532 = vector.shape_cast %531 : vector<1x1x32xf32> to vector<1x32xf32>
    %c3_240 = arith.constant 3 : index
    %c0_241 = arith.constant 0 : index
    %c0_242 = arith.constant 0 : index
    %533 = vector.load %arg14[%c3_240, %c0_241, %c0_242] : memref<4x1x32xf32, #tpu.memory_space<vmem>>, vector<1x1x32xf32>
    %534 = vector.shape_cast %533 : vector<1x1x32xf32> to vector<1x32xf32>
    %cst_243 = arith.constant dense<0.000000e+00> : vector<16xf32>
    %535 = vector.multi_reduction <add>, %530, %cst_243 [1] : vector<16x32xf32> to vector<16xf32>
    %536 = vector.shape_cast %535 : vector<16xf32> to vector<16x1xf32>
    %cst_244 = arith.constant 3.200000e+01 : f32
    %537 = vector.broadcast %cst_244 : f32 to vector<16x1xf32>
    %538 = arith.divf %536, %537 : vector<16x1xf32>
    %539 = vector.broadcast %538 : vector<16x1xf32> to vector<16x32xf32>
    %540 = arith.subf %530, %539 : vector<16x32xf32>
    %541 = arith.mulf %540, %540 : vector<16x32xf32>
    %cst_245 = arith.constant dense<0.000000e+00> : vector<16xf32>
    %542 = vector.multi_reduction <add>, %541, %cst_245 [1] : vector<16x32xf32> to vector<16xf32>
    %543 = vector.shape_cast %542 : vector<16xf32> to vector<16x1xf32>
    %cst_246 = arith.constant 3.200000e+01 : f32
    %544 = vector.broadcast %cst_246 : f32 to vector<16x1xf32>
    %545 = arith.divf %543, %544 : vector<16x1xf32>
    %546 = vector.broadcast %538 : vector<16x1xf32> to vector<16x32xf32>
    %547 = arith.subf %530, %546 : vector<16x32xf32>
    %cst_247 = arith.constant 9.99999974E-6 : f32
    %548 = vector.broadcast %cst_247 : f32 to vector<16x1xf32>
    %549 = arith.addf %545, %548 : vector<16x1xf32>
    %550 = math.rsqrt %549 : vector<16x1xf32>
    %551 = vector.broadcast %550 : vector<16x1xf32> to vector<16x32xf32>
    %552 = arith.mulf %547, %551 : vector<16x32xf32>
    %553 = vector.broadcast %532 : vector<1x32xf32> to vector<16x32xf32>
    %554 = arith.mulf %552, %553 : vector<16x32xf32>
    %555 = vector.broadcast %534 : vector<1x32xf32> to vector<16x32xf32>
    %556 = arith.addf %554, %555 : vector<16x32xf32>
    %c3_248 = arith.constant 3 : index
    %c0_249 = arith.constant 0 : index
    %c0_250 = arith.constant 0 : index
    %557 = vector.load %arg9[%c3_248, %c0_249, %c0_250] : memref<4x32x32xf32, #tpu.memory_space<vmem>>, vector<1x32x32xf32>
    %558 = vector.shape_cast %557 : vector<1x32x32xf32> to vector<32x32xf32>
    %cst_251 = arith.constant dense<0.000000e+00> : vector<16x32xf32>
    %559 = tpu.matmul %556, %558, %cst_251 {dimension_numbers = #tpu.dot_dimension_numbers<[1], [0], [0], [1], [0, 0, 1, 1], [], []>} : vector<16x32xf32>, vector<32x32xf32>, vector<16x32xf32> -> vector<16x32xf32>
    %c3_252 = arith.constant 3 : index
    %c0_253 = arith.constant 0 : index
    %c0_254 = arith.constant 0 : index
    %560 = vector.load %arg10[%c3_252, %c0_253, %c0_254] : memref<4x1x32xf32, #tpu.memory_space<vmem>>, vector<1x1x32xf32>
    %561 = vector.shape_cast %560 : vector<1x1x32xf32> to vector<1x32xf32>
    %562 = vector.broadcast %561 : vector<1x32xf32> to vector<16x32xf32>
    %563 = arith.addf %559, %562 : vector<16x32xf32>
    %cst_255 = arith.constant 0.000000e+00 : f32
    %564 = vector.broadcast %cst_255 : f32 to vector<16x32xf32>
    %565 = arith.maximumf %563, %564 : vector<16x32xf32>
    %c3_256 = arith.constant 3 : index
    %c0_257 = arith.constant 0 : index
    %c0_258 = arith.constant 0 : index
    %566 = vector.load %arg11[%c3_256, %c0_257, %c0_258] : memref<4x32x32xf32, #tpu.memory_space<vmem>>, vector<1x32x32xf32>
    %567 = vector.shape_cast %566 : vector<1x32x32xf32> to vector<32x32xf32>
    %cst_259 = arith.constant dense<0.000000e+00> : vector<16x32xf32>
    %568 = tpu.matmul %565, %567, %cst_259 {dimension_numbers = #tpu.dot_dimension_numbers<[1], [0], [0], [1], [0, 0, 1, 1], [], []>} : vector<16x32xf32>, vector<32x32xf32>, vector<16x32xf32> -> vector<16x32xf32>
    %c3_260 = arith.constant 3 : index
    %c0_261 = arith.constant 0 : index
    %c0_262 = arith.constant 0 : index
    %569 = vector.load %arg12[%c3_260, %c0_261, %c0_262] : memref<4x1x32xf32, #tpu.memory_space<vmem>>, vector<1x1x32xf32>
    %570 = vector.shape_cast %569 : vector<1x1x32xf32> to vector<1x32xf32>
    %571 = vector.broadcast %570 : vector<1x32xf32> to vector<16x32xf32>
    %572 = arith.addf %568, %571 : vector<16x32xf32>
    %573 = arith.addf %556, %572 : vector<16x32xf32>
    %c3_263 = arith.constant 3 : index
    %c0_264 = arith.constant 0 : index
    %c0_265 = arith.constant 0 : index
    %574 = vector.load %arg15[%c3_263, %c0_264, %c0_265] : memref<4x1x32xf32, #tpu.memory_space<vmem>>, vector<1x1x32xf32>
    %575 = vector.shape_cast %574 : vector<1x1x32xf32> to vector<1x32xf32>
    %c3_266 = arith.constant 3 : index
    %c0_267 = arith.constant 0 : index
    %c0_268 = arith.constant 0 : index
    %576 = vector.load %arg16[%c3_266, %c0_267, %c0_268] : memref<4x1x32xf32, #tpu.memory_space<vmem>>, vector<1x1x32xf32>
    %577 = vector.shape_cast %576 : vector<1x1x32xf32> to vector<1x32xf32>
    %cst_269 = arith.constant dense<0.000000e+00> : vector<16xf32>
    %578 = vector.multi_reduction <add>, %573, %cst_269 [1] : vector<16x32xf32> to vector<16xf32>
    %579 = vector.shape_cast %578 : vector<16xf32> to vector<16x1xf32>
    %cst_270 = arith.constant 3.200000e+01 : f32
    %580 = vector.broadcast %cst_270 : f32 to vector<16x1xf32>
    %581 = arith.divf %579, %580 : vector<16x1xf32>
    %582 = vector.broadcast %581 : vector<16x1xf32> to vector<16x32xf32>
    %583 = arith.subf %573, %582 : vector<16x32xf32>
    %584 = arith.mulf %583, %583 : vector<16x32xf32>
    %cst_271 = arith.constant dense<0.000000e+00> : vector<16xf32>
    %585 = vector.multi_reduction <add>, %584, %cst_271 [1] : vector<16x32xf32> to vector<16xf32>
    %586 = vector.shape_cast %585 : vector<16xf32> to vector<16x1xf32>
    %cst_272 = arith.constant 3.200000e+01 : f32
    %587 = vector.broadcast %cst_272 : f32 to vector<16x1xf32>
    %588 = arith.divf %586, %587 : vector<16x1xf32>
    %589 = vector.broadcast %581 : vector<16x1xf32> to vector<16x32xf32>
    %590 = arith.subf %573, %589 : vector<16x32xf32>
    %cst_273 = arith.constant 9.99999974E-6 : f32
    %591 = vector.broadcast %cst_273 : f32 to vector<16x1xf32>
    %592 = arith.addf %588, %591 : vector<16x1xf32>
    %593 = math.rsqrt %592 : vector<16x1xf32>
    %594 = vector.broadcast %593 : vector<16x1xf32> to vector<16x32xf32>
    %595 = arith.mulf %590, %594 : vector<16x32xf32>
    %596 = vector.broadcast %575 : vector<1x32xf32> to vector<16x32xf32>
    %597 = arith.mulf %595, %596 : vector<16x32xf32>
    %598 = vector.broadcast %577 : vector<1x32xf32> to vector<16x32xf32>
    %599 = arith.addf %597, %598 : vector<16x32xf32>
    %c0_274 = arith.constant 0 : index
    %c0_275 = arith.constant 0 : index
    %600 = vector.load %arg17[%c0_274, %c0_275] : memref<32x4xf32, #tpu.memory_space<vmem>>, vector<32x4xf32>
    %cst_276 = arith.constant dense<0.000000e+00> : vector<16x4xf32>
    %601 = tpu.matmul %599, %600, %cst_276 {dimension_numbers = #tpu.dot_dimension_numbers<[1], [0], [0], [1], [0, 0, 1, 1], [], []>} : vector<16x32xf32>, vector<32x4xf32>, vector<16x4xf32> -> vector<16x4xf32>
    %c0_277 = arith.constant 0 : index
    %c0_278 = arith.constant 0 : index
    %602 = vector.load %arg18[%c0_277, %c0_278] : memref<1x4xf32, #tpu.memory_space<vmem>>, vector<1x4xf32>
    %603 = vector.broadcast %602 : vector<1x4xf32> to vector<16x4xf32>
    %604 = arith.addf %601, %603 : vector<16x4xf32>
    %605 = vector.shape_cast %604 : vector<16x4xf32> to vector<2x8x4xf32>
    %c0_279 = arith.constant 0 : index
    %c0_280 = arith.constant 0 : index
    %c0_281 = arith.constant 0 : index
    %606 = vector.load %arg19[%c0_279, %c0_280, %c0_281] : memref<2x8x4xf32, #tpu.memory_space<vmem>>, vector<2x8x4xf32>
    tpu.vector_store %arg19[%c0_279, %c0_280, %c0_281], %605 {strides = array<i32>} : memref<2x8x4xf32, #tpu.memory_space<vmem>>, vector<2x8x4xf32>,
    return
  }
  func.func @transform_0(%arg0: i32) -> (i32, i32, i32) {
    %c0_i32 = arith.constant 0 : i32
    %c0_i32_0 = arith.constant 0 : i32
    %c0_i32_1 = arith.constant 0 : i32
    return %arg0, %c0_i32, %c0_i32_0 : i32, i32, i32
  }
  func.func @transform_1(%arg0: i32) -> (i32, i32, i32) {
    %c0_i32 = arith.constant 0 : i32
    %c0_i32_0 = arith.constant 0 : i32
    %c0_i32_1 = arith.constant 0 : i32
    return %arg0, %c0_i32, %c0_i32_0 : i32, i32, i32
  }
  func.func @transform_2(%arg0: i32) -> (i32, i32) {
    %c0_i32 = arith.constant 0 : i32
    %c0_i32_0 = arith.constant 0 : i32
    %c0_i32_1 = arith.constant 0 : i32
    return %c0_i32, %c0_i32_0 : i32, i32
  }
  func.func @transform_3(%arg0: i32) -> (i32, i32) {
    %c0_i32 = arith.constant 0 : i32
    %c0_i32_0 = arith.constant 0 : i32
    %c0_i32_1 = arith.constant 0 : i32
    return %c0_i32, %c0_i32_0 : i32, i32
  }
  func.func @transform_4(%arg0: i32) -> (i32, i32, i32) {
    %c0_i32 = arith.constant 0 : i32
    %c0_i32_0 = arith.constant 0 : i32
    %c0_i32_1 = arith.constant 0 : i32
    %c0_i32_2 = arith.constant 0 : i32
    return %c0_i32, %c0_i32_0, %c0_i32_1 : i32, i32, i32
  }
  func.func @transform_5(%arg0: i32) -> (i32, i32, i32) {
    %c0_i32 = arith.constant 0 : i32
    %c0_i32_0 = arith.constant 0 : i32
    %c0_i32_1 = arith.constant 0 : i32
    %c0_i32_2 = arith.constant 0 : i32
    return %c0_i32, %c0_i32_0, %c0_i32_1 : i32, i32, i32
  }
  func.func @transform_6(%arg0: i32) -> (i32, i32, i32) {
    %c0_i32 = arith.constant 0 : i32
    %c0_i32_0 = arith.constant 0 : i32
    %c0_i32_1 = arith.constant 0 : i32
    %c0_i32_2 = arith.constant 0 : i32
    return %c0_i32, %c0_i32_0, %c0_i32_1 : i32, i32, i32
  }
  func.func @transform_7(%arg0: i32) -> (i32, i32, i32) {
    %c0_i32 = arith.constant 0 : i32
    %c0_i32_0 = arith.constant 0 : i32
    %c0_i32_1 = arith.constant 0 : i32
    %c0_i32_2 = arith.constant 0 : i32
    return %c0_i32, %c0_i32_0, %c0_i32_1 : i32, i32, i32
  }
  func.func @transform_8(%arg0: i32) -> (i32, i32, i32) {
    %c0_i32 = arith.constant 0 : i32
    %c0_i32_0 = arith.constant 0 : i32
    %c0_i32_1 = arith.constant 0 : i32
    %c0_i32_2 = arith.constant 0 : i32
    return %c0_i32, %c0_i32_0, %c0_i32_1 : i32, i32, i32
  }
  func.func @transform_9(%arg0: i32) -> (i32, i32, i32) {
    %c0_i32 = arith.constant 0 : i32
    %c0_i32_0 = arith.constant 0 : i32
    %c0_i32_1 = arith.constant 0 : i32
    %c0_i32_2 = arith.constant 0 : i32
    return %c0_i32, %c0_i32_0, %c0_i32_1 : i32, i32, i32
  }
  func.func @transform_10(%arg0: i32) -> (i32, i32, i32) {
    %c0_i32 = arith.constant 0 : i32
    %c0_i32_0 = arith.constant 0 : i32
    %c0_i32_1 = arith.constant 0 : i32
    %c0_i32_2 = arith.constant 0 : i32
    return %c0_i32, %c0_i32_0, %c0_i32_1 : i32, i32, i32
  }
  func.func @transform_11(%arg0: i32) -> (i32, i32, i32) {
    %c0_i32 = arith.constant 0 : i32
    %c0_i32_0 = arith.constant 0 : i32
    %c0_i32_1 = arith.constant 0 : i32
    %c0_i32_2 = arith.constant 0 : i32
    return %c0_i32, %c0_i32_0, %c0_i32_1 : i32, i32, i32
  }
  func.func @transform_12(%arg0: i32) -> (i32, i32, i32) {
    %c0_i32 = arith.constant 0 : i32
    %c0_i32_0 = arith.constant 0 : i32
    %c0_i32_1 = arith.constant 0 : i32
    %c0_i32_2 = arith.constant 0 : i32
    return %c0_i32, %c0_i32_0, %c0_i32_1 : i32, i32, i32
  }
  func.func @transform_13(%arg0: i32) -> (i32, i32, i32) {
    %c0_i32 = arith.constant 0 : i32
    %c0_i32_0 = arith.constant 0 : i32
    %c0_i32_1 = arith.constant 0 : i32
    %c0_i32_2 = arith.constant 0 : i32
    return %c0_i32, %c0_i32_0, %c0_i32_1 : i32, i32, i32
  }
  func.func @transform_14(%arg0: i32) -> (i32, i32, i32) {
    %c0_i32 = arith.constant 0 : i32
    %c0_i32_0 = arith.constant 0 : i32
    %c0_i32_1 = arith.constant 0 : i32
    %c0_i32_2 = arith.constant 0 : i32
    return %c0_i32, %c0_i32_0, %c0_i32_1 : i32, i32, i32
  }
  func.func @transform_15(%arg0: i32) -> (i32, i32, i32) {
    %c0_i32 = arith.constant 0 : i32
    %c0_i32_0 = arith.constant 0 : i32
    %c0_i32_1 = arith.constant 0 : i32
    %c0_i32_2 = arith.constant 0 : i32
    return %c0_i32, %c0_i32_0, %c0_i32_1 : i32, i32, i32
  }
  func.func @transform_16(%arg0: i32) -> (i32, i32) {
    %c0_i32 = arith.constant 0 : i32
    %c0_i32_0 = arith.constant 0 : i32
    %c0_i32_1 = arith.constant 0 : i32
    return %c0_i32, %c0_i32_0 : i32, i32
  }
  func.func @transform_17(%arg0: i32) -> (i32, i32) {
    %c0_i32 = arith.constant 0 : i32
    %c0_i32_0 = arith.constant 0 : i32
    %c0_i32_1 = arith.constant 0 : i32
    return %c0_i32, %c0_i32_0 : i32, i32
  }
  func.func @transform_18(%arg0: i32) -> (i32, i32, i32) {
    %c0_i32 = arith.constant 0 : i32
    %c0_i32_0 = arith.constant 0 : i32
    %c0_i32_1 = arith.constant 0 : i32
    return %arg0, %c0_i32, %c0_i32_0 : i32, i32, i32
  }
}

</mosaic_0001>

<llo_original>
// kernel: tpu_custom_call.1
$region0: #{tpu_custom_call.1}
  #allocation0 [shape = 'u32[]', space=smem, size = 0x4, offset = 0x4, fixed_abs, tag = 'smem constant byte address 0x4 - core index']
  #allocation1 [shape = 'u32[144,128]{1,0:T(1,128)}', space=vmem, size = 0x12000, scoped, tag = 'internal scratch']
  %s0 = inlined_call_operand.vmem [shape: f32[2,8,4], index: 0, kind: input, shape index: {}]
  %s1 = inlined_call_operand.vmem [shape: f32[2,1,32], index: 1, kind: input, shape index: {}]
  %s2 = inlined_call_operand.vmem [shape: f32[4,32], index: 2, kind: input, shape index: {}]
  %s3 = inlined_call_operand.vmem [shape: f32[1,32], index: 3, kind: input, shape index: {}]
  %s4 = inlined_call_operand.hbm [shape: f32[4,32,96], index: 4, kind: input, shape index: {}]
  %s5 = inlined_call_operand.vmem [shape: f32[4,1,96], index: 5, kind: input, shape index: {}]
  %s6 = inlined_call_operand.hbm [shape: f32[4,32,32], index: 6, kind: input, shape index: {}]
  %s7 = inlined_call_operand.vmem [shape: f32[4,1,32], index: 7, kind: input, shape index: {}]
  %s8 = inlined_call_operand.hbm [shape: f32[4,32,32], index: 8, kind: input, shape index: {}]
  %s9 = inlined_call_operand.vmem [shape: f32[4,1,32], index: 9, kind: input, shape index: {}]
  %s10 = inlined_call_operand.hbm [shape: f32[4,32,32], index: 10, kind: input, shape index: {}]
  %s11 = inlined_call_operand.vmem [shape: f32[4,1,32], index: 11, kind: input, shape index: {}]
  %s12 = inlined_call_operand.vmem [shape: f32[4,1,32], index: 12, kind: input, shape index: {}]
  %s13 = inlined_call_operand.vmem [shape: f32[4,1,32], index: 13, kind: input, shape index: {}]
  %s14 = inlined_call_operand.vmem [shape: f32[4,1,32], index: 14, kind: input, shape index: {}]
  %s15 = inlined_call_operand.vmem [shape: f32[4,1,32], index: 15, kind: input, shape index: {}]
  %s16 = inlined_call_operand.vmem [shape: f32[32,4], index: 16, kind: input, shape index: {}]
  %s17 = inlined_call_operand.vmem [shape: f32[1,4], index: 17, kind: input, shape index: {}]
  %s18 = inlined_call_operand.vmem [shape: f32[2,8,4], index: 18, kind: output, shape index: {}]
  %s19 = sld [smem:[#allocation0]]
  $region98: #{tpu_custom_call.1} parent=0
    _
  %s21 = ssub.s32 1, %s19
  %s22 = scalar_select 0, %s21, %s19
  $region1: #{tpu_custom_call.1} parent=0
    #allocation2 [shape = 'u8[65536]{0}', space=vmem, size = 0x10000, scoped, tag = 'input window, operand 4, single buffered']
    #allocation3 [shape = 's32[1]{0}', space=sflag, size = 0x4, scoped, tag = 'scoped memory for tpu_custom_call.1']
    #allocation4 [shape = 'u8[65536]{0}', space=vmem, size = 0x10000, scoped, tag = 'input window, operand 6, single buffered']
    #allocation5 [shape = 's32[1]{0}', space=sflag, size = 0x4, scoped, tag = 'scoped memory for tpu_custom_call.1']
    #allocation6 [shape = 'u8[65536]{0}', space=vmem, size = 0x10000, scoped, tag = 'input window, operand 8, single buffered']
    #allocation7 [shape = 'u8[65536]{0}', space=vmem, size = 0x10000, scoped, tag = 'input window, operand 10, single buffered']
    #allocation8 [shape = 's32[1]{0}', space=sflag, size = 0x4, scoped, tag = 'scoped memory for tpu_custom_call.1']
    %23 = vsyncpa [#allocation3], 0
    %24 = vsyncpa [#allocation5], 0
    %25 = vsyncpa [#allocation8], 0
    // Predicated region
    $region2: #{tpu_custom_call.1} parent=1 // pred_check
      _
    $region3: #{tpu_custom_call.1} parent=1 // pred_check_branch
      %27 = sbr.rel (0) target = $region5
    $region4: #{tpu_custom_call.1} parent=1 // pred_region
      _
    $region5: #{tpu_custom_call.1} parent=1 // pred_fallthru
      _
    // Predicated region
    $region6: #{tpu_custom_call.1} parent=1 // pred_check
      _
    $region7: #{tpu_custom_call.1} parent=1 // pred_check_branch
      %29 = sbr.rel (0) target = $region9
    $region8: #{tpu_custom_call.1} parent=1 // pred_region
      _
    $region9: #{tpu_custom_call.1} parent=1 // pred_fallthru
      _
    // Predicated region
    $region10: #{tpu_custom_call.1} parent=1 // pred_check
      _
    $region11: #{tpu_custom_call.1} parent=1 // pred_check_branch
      %31 = sbr.rel (0) target = $region13
    $region12: #{tpu_custom_call.1} parent=1 // pred_region
      _
    $region13: #{tpu_custom_call.1} parent=1 // pred_fallthru
      _
    // Predicated region
    $region14: #{tpu_custom_call.1} parent=1 // pred_check
      _
    $region15: #{tpu_custom_call.1} parent=1 // pred_check_branch
      %33 = sbr.rel (0) target = $region17
    $region16: #{tpu_custom_call.1} parent=1 // pred_region
      _
    $region17: #{tpu_custom_call.1} parent=1 // pred_fallthru
      _
    // Predicated region
    $region18: #{tpu_custom_call.1} parent=1 // pred_check
      _
    $region19: #{tpu_custom_call.1} parent=1 // pred_check_branch
      %35 = sbr.rel (0) target = $region21
    $region20: #{tpu_custom_call.1} parent=1 // pred_region
      %s37 = ssub.s32 2048, 2048
      %38 = vsyncadd [#allocation3], %s37
      %s39 = sshll.u32 [#allocation2], 4
      %s40 = int_to_ptr.vmem [resolvable:$true] %s39
      %45 = dma.hbm_to_vmem [thread:$0]  %s4, 2048, %s40, [#allocation3], 128, 128, 8
    $region21: #{tpu_custom_call.1} parent=1 // pred_fallthru
      _
    // Predicated region
    $region22: #{tpu_custom_call.1} parent=1 // pred_check
      _
    $region23: #{tpu_custom_call.1} parent=1 // pred_check_branch
      %47 = sbr.rel (0) target = $region25
    $region24: #{tpu_custom_call.1} parent=1 // pred_region
      _
    $region25: #{tpu_custom_call.1} parent=1 // pred_fallthru
      _
    // Predicated region
    $region26: #{tpu_custom_call.1} parent=1 // pred_check
      _
    $region27: #{tpu_custom_call.1} parent=1 // pred_check_branch
      %49 = sbr.rel (0) target = $region29
    $region28: #{tpu_custom_call.1} parent=1 // pred_region
      %s51 = ssub.s32 2048, 2048
      %52 = vsyncadd [#allocation5], %s51
      %s53 = sshll.u32 [#allocation4], 4
      %s54 = int_to_ptr.vmem [resolvable:$true] %s53
      %59 = dma.hbm_to_vmem [thread:$0]  %s6, 2048, %s54, [#allocation5], 128, 128, 8
    $region29: #{tpu_custom_call.1} parent=1 // pred_fallthru
      _
    // Predicated region
    $region30: #{tpu_custom_call.1} parent=1 // pred_check
      _
    $region31: #{tpu_custom_call.1} parent=1 // pred_check_branch
      %61 = sbr.rel (0) target = $region33
    $region32: #{tpu_custom_call.1} parent=1 // pred_region
      _
    $region33: #{tpu_custom_call.1} parent=1 // pred_fallthru
      _
    // Predicated region
    $region34: #{tpu_custom_call.1} parent=1 // pred_check
      _
    $region35: #{tpu_custom_call.1} parent=1 // pred_check_branch
      %63 = sbr.rel (0) target = $region37
    $region36: #{tpu_custom_call.1} parent=1 // pred_region
      %s65 = ssub.s32 2048, 2048
      %66 = vsyncadd [#allocation5], %s65
      %s67 = sshll.u32 [#allocation6], 4
      %s68 = int_to_ptr.vmem [resolvable:$true] %s67
      %73 = dma.hbm_to_vmem [thread:$0]  %s8, 2048, %s68, [#allocation5], 128, 128, 8
    $region37: #{tpu_custom_call.1} parent=1 // pred_fallthru
      _
    // Predicated region
    $region38: #{tpu_custom_call.1} parent=1 // pred_check
      _
    $region39: #{tpu_custom_call.1} parent=1 // pred_check_branch
      %75 = sbr.rel (0) target = $region41
    $region40: #{tpu_custom_call.1} parent=1 // pred_region
      _
    $region41: #{tpu_custom_call.1} parent=1 // pred_fallthru
      _
    // Predicated region
    $region42: #{tpu_custom_call.1} parent=1 // pred_check
      _
    $region43: #{tpu_custom_call.1} parent=1 // pred_check_branch
      %77 = sbr.rel (0) target = $region45
    $region44: #{tpu_custom_call.1} parent=1 // pred_region
      %s79 = ssub.s32 2048, 2048
      %80 = vsyncadd [#allocation8], %s79
      %s81 = sshll.u32 [#allocation7], 4
      %s82 = int_to_ptr.vmem [resolvable:$true] %s81
      %87 = dma.hbm_to_vmem [thread:$0]  %s10, 2048, %s82, [#allocation8], 128, 128, 8
    $region45: #{tpu_custom_call.1} parent=1 // pred_fallthru
      _
    // Predicated region
    $region46: #{tpu_custom_call.1} parent=1 // pred_check
      _
    $region47: #{tpu_custom_call.1} parent=1 // pred_check_branch
      %89 = sbr.rel (0) target = $region49
    $region48: #{tpu_custom_call.1} parent=1 // pred_region
      _
    $region49: #{tpu_custom_call.1} parent=1 // pred_fallthru
      _
    // Predicated region
    $region50: #{tpu_custom_call.1} parent=1 // pred_check
      _
    $region51: #{tpu_custom_call.1} parent=1 // pred_check_branch
      %91 = sbr.rel (0) target = $region53
    $region52: #{tpu_custom_call.1} parent=1 // pred_region
      _
    $region53: #{tpu_custom_call.1} parent=1 // pred_fallthru
      _
    // Predicated region
    $region54: #{tpu_custom_call.1} parent=1 // pred_check
      _
    $region55: #{tpu_custom_call.1} parent=1 // pred_check_branch
      %93 = sbr.rel (0) target = $region57
    $region56: #{tpu_custom_call.1} parent=1 // pred_region
      _
    $region57: #{tpu_custom_call.1} parent=1 // pred_fallthru
      _
    // Predicated region
    $region58: #{tpu_custom_call.1} parent=1 // pred_check
      _
    $region59: #{tpu_custom_call.1} parent=1 // pred_check_branch
      %95 = sbr.rel (0) target = $region61
    $region60: #{tpu_custom_call.1} parent=1 // pred_region
      _
    $region61: #{tpu_custom_call.1} parent=1 // pred_fallthru
      _
    // Predicated region
    $region62: #{tpu_custom_call.1} parent=1 // pred_check
      _
    $region63: #{tpu_custom_call.1} parent=1 // pred_check_branch
      %97 = sbr.rel (0) target = $region65
    $region64: #{tpu_custom_call.1} parent=1 // pred_region
      _
    $region65: #{tpu_custom_call.1} parent=1 // pred_fallthru
      _
    // Predicated region
    $region66: #{tpu_custom_call.1} parent=1 // pred_check
      _
    $region67: #{tpu_custom_call.1} parent=1 // pred_check_branch
      %99 = sbr.rel (0) target = $region69
    $region68: #{tpu_custom_call.1} parent=1 // pred_region
      _
    $region69: #{tpu_custom_call.1} parent=1 // pred_fallthru
      _
    // Predicated region
    $region70: #{tpu_custom_call.1} parent=1 // pred_check
      _
    $region71: #{tpu_custom_call.1} parent=1 // pred_check_branch
      %101 = sbr.rel (0) target = $region73
    $region72: #{tpu_custom_call.1} parent=1 // pred_region
      _
    $region73: #{tpu_custom_call.1} parent=1 // pred_fallthru
      _
    // Predicated region
    $region74: #{tpu_custom_call.1} parent=1 // pred_check
      _
    $region75: #{tpu_custom_call.1} parent=1 // pred_check_branch
      %103 = sbr.rel (0) target = $region77
    $region76: #{tpu_custom_call.1} parent=1 // pred_region
      %104 = dma.done [#allocation3], 2048
    $region77: #{tpu_custom_call.1} parent=1 // pred_fallthru
      _
    // Predicated region
    $region78: #{tpu_custom_call.1} parent=1 // pred_check
      _
    $region79: #{tpu_custom_call.1} parent=1 // pred_check_branch
      %106 = sbr.rel (0) target = $region81
    $region80: #{tpu_custom_call.1} parent=1 // pred_region
      %107 = dma.done [#allocation5], 2048
    $region81: #{tpu_custom_call.1} parent=1 // pred_fallthru
      _
    // Predicated region
    $region82: #{tpu_custom_call.1} parent=1 // pred_check
      _
    $region83: #{tpu_custom_call.1} parent=1 // pred_check_branch
      %109 = sbr.rel (0) target = $region85
    $region84: #{tpu_custom_call.1} parent=1 // pred_region
      %110 = dma.done [#allocation5], 2048
    $region85: #{tpu_custom_call.1} parent=1 // pred_fallthru
      _
    // Predicated region
    $region86: #{tpu_custom_call.1} parent=1 // pred_check
      _
    $region87: #{tpu_custom_call.1} parent=1 // pred_check_branch
      %112 = sbr.rel (0) target = $region89
    $region88: #{tpu_custom_call.1} parent=1 // pred_region
      %113 = dma.done [#allocation8], 2048
    $region89: #{tpu_custom_call.1} parent=1 // pred_fallthru
      _
    %v114 = vld [vmem:[%s0] sm:$0xff]
    %v115 = vld [vmem:[%s0 + $0x8] sm:$0xff]
    %v116 = vld [vmem:[%s2] sm:$0xf]
    %v117 = vld [vmem:[%s3] sm:$0x1]
    %v119 = vlaneseq
    %v120 = vshrl.u32 %v119, 7
    %v121 = vsub.s32 0, %v120
    %v122 = vrot.slane %v117, %v121
    %vm124 = vcmask 31744
    %v126 = vsel %vm124, %v114, 0
    %v129 = vsel %vm124, %v115, 0
    %vm131 = vcmask 1043456
    %v133 = vsel %vm131, %v116, 0
    %135 = vmatprep.subr.mxu0 0.0
    %136 = vmatpush1.msra.mxu0 %v133
    %137 = vmatprep.subr.mxu0 0.0
    %138 = vmatpush1.msra.mxu0 0.0
    %139 = vmatprep.subr.mxu0 0.0
    %140 = vmatpush1.msra.mxu0 0.0
    %141 = vmatprep.subr.mxu0 0.0
    %142 = vmatpush1.msra.mxu0 0.0
    %143 = vmatprep.subr.mxu0 0.0
    %144 = vmatpush1.msra.mxu0 0.0
    %145 = vmatprep.subr.mxu0 0.0
    %146 = vmatpush1.msra.mxu0 0.0
    %147 = vmatprep.subr.mxu0 0.0
    %148 = vmatpush1.msra.mxu0 0.0
    %149 = vmatprep.subr.mxu0 0.0
    %150 = vmatpush1.msra.mxu0 0.0
    %151 = vmatprep.subr.mxu0 0.0
    %152 = vmatpush1.msra.mxu0 0.0
    %153 = vmatprep.subr.mxu0 0.0
    %154 = vmatpush1.msra.mxu0 0.0
    %155 = vmatprep.subr.mxu0 0.0
    %156 = vmatpush1.msra.mxu0 0.0
    %157 = vmatprep.subr.mxu0 0.0
    %158 = vmatpush1.msra.mxu0 0.0
    %159 = vmatprep.subr.mxu0 0.0
    %160 = vmatpush1.msra.mxu0 0.0
    %161 = vmatprep.subr.mxu0 0.0
    %162 = vmatpush1.msra.mxu0 0.0
    %163 = vmatprep.subr.mxu0 0.0
    %164 = vmatpush1.msra.mxu0 0.0
    %165 = vmatprep.subr.mxu0 0.0
    %166 = vmatpush1.msra.mxu0 0.0
    %167 = vmatprep.subr.mxu0 0.0
    %168 = vmatpush1.msra.mxu0 0.0
    %169 = vmatprep.subr.mxu0 0.0
    %170 = vmatpush1.msra.mxu0 0.0
    %171 = vmatprep.subr.mxu0 0.0
    %172 = vmatpush1.msra.mxu0 0.0
    %173 = vmatprep.subr.mxu0 0.0
    %174 = vmatpush1.msra.mxu0 0.0
    %175 = vmatprep.subr.mxu0 0.0
    %176 = vmatpush1.msra.mxu0 0.0
    %177 = vmatprep.subr.mxu0 0.0
    %178 = vmatpush1.msra.mxu0 0.0
    %179 = vmatprep.subr.mxu0 0.0
    %180 = vmatpush1.msra.mxu0 0.0
    %181 = vmatprep.subr.mxu0 0.0
    %182 = vmatpush1.msra.mxu0 0.0
    %183 = vmatprep.subr.mxu0 0.0
    %184 = vmatpush1.msra.mxu0 0.0
    %185 = vmatprep.subr.mxu0 0.0
    %186 = vmatpush1.msra.mxu0 0.0
    %187 = vmatprep.subr.mxu0 0.0
    %188 = vmatpush1.msra.mxu0 0.0
    %189 = vmatprep.subr.mxu0 0.0
    %190 = vmatpush1.msra.mxu0 0.0
    %191 = vmatprep.subr.mxu0 0.0
    %192 = vmatpush1.msra.mxu0 0.0
    %193 = vmatprep.subr.mxu0 0.0
    %194 = vmatpush1.msra.mxu0 0.0
    %195 = vmatprep.subr.mxu0 0.0
    %196 = vmatpush1.msra.mxu0 0.0
    %197 = vmatprep.subr.mxu0 0.0
    %198 = vmatpush1.msra.mxu0 0.0
    %199 = vmatprep.mubr.f32.mxu0 0.0
    %200 = vmatmul.mubr.f32.gmra.mrb[0].mxu0 %v126
    %v201 = vpop.f32.mrb[0].mxu0
    %v202 = vadd.f32 %v122, %v201
    %v203 = vpop.f32.mrb[0].mxu0
    %204 = vmatprep.mubr.f32.mxu0 0.0
    %205 = vmatmul.mubr.f32.gmra.mrb[0].mxu0 %v129
    %v206 = vpop.f32.mrb[0].mxu0
    %v207 = vadd.f32 %v122, %v206
    %v208 = vpop.f32.mrb[0].mxu0
    %209 = vdwg.mxu0
    %v210 = vld [vmem:[%s1] sm:$0x1]
    %v211 = vld [vmem:[%s1 + $0x1] sm:$0x1]
    %v214 = vlaneseq
    %v215 = vshrl.u32 %v214, 7
    %v216 = vsub.s32 0, %v215
    %v217 = vrot.slane %v210, %v216
    %v218 = vlaneseq
    %v219 = vshrl.u32 %v218, 7
    %v220 = vsub.s32 0, %v219
    %v221 = vrot.slane %v211, %v220
    %v224 = vadd.f32 %v202, %v217
    %v225 = vadd.f32 %v207, %v221
    %v226 = vld [vmem:[#allocation2] sm:$0xff]
    %v227 = vld [vmem:[#allocation2 + $0x8] sm:$0xff]
    %v228 = vld [vmem:[#allocation2 + $0x10] sm:$0xff]
    %v229 = vld [vmem:[#allocation2 + $0x18] sm:$0xff]
    %v230 = vld [vmem:[%s5] sm:$0x1]
    %v232 = vlaneseq
    %v233 = vshrl.u32 %v232, 7
    %v234 = vsub.s32 0, %v233
    %v235 = vrot.slane %v230, %v234
    %vm237 = vcmask 261120
    %v239 = vsel %vm237, %v224, 0
    %v242 = vsel %vm237, %v225, 0
    %244 = vmatprep.subr.mxu0 0.0
    %245 = vmatpush1.msra.mxu0 %v226
    %246 = vmatprep.subr.mxu0 0.0
    %247 = vmatpush1.msra.mxu0 %v227
    %248 = vmatprep.subr.mxu0 0.0
    %249 = vmatpush1.msra.mxu0 %v228
    %250 = vmatprep.subr.mxu0 0.0
    %251 = vmatpush1.msra.mxu0 %v229
    %252 = vmatprep.subr.mxu0 0.0
    %253 = vmatpush1.msra.mxu0 0.0
    %254 = vmatprep.subr.mxu0 0.0
    %255 = vmatpush1.msra.mxu0 0.0
    %256 = vmatprep.subr.mxu0 0.0
    %257 = vmatpush1.msra.mxu0 0.0
    %258 = vmatprep.subr.mxu0 0.0
    %259 = vmatpush1.msra.mxu0 0.0
    %260 = vmatprep.subr.mxu0 0.0
    %261 = vmatpush1.msra.mxu0 0.0
    %262 = vmatprep.subr.mxu0 0.0
    %263 = vmatpush1.msra.mxu0 0.0
    %264 = vmatprep.subr.mxu0 0.0
    %265 = vmatpush1.msra.mxu0 0.0
    %266 = vmatprep.subr.mxu0 0.0
    %267 = vmatpush1.msra.mxu0 0.0
    %268 = vmatprep.subr.mxu0 0.0
    %269 = vmatpush1.msra.mxu0 0.0
    %270 = vmatprep.subr.mxu0 0.0
    %271 = vmatpush1.msra.mxu0 0.0
    %272 = vmatprep.subr.mxu0 0.0
    %273 = vmatpush1.msra.mxu0 0.0
    %274 = vmatprep.subr.mxu0 0.0
    %275 = vmatpush1.msra.mxu0 0.0
    %276 = vmatprep.subr.mxu0 0.0
    %277 = vmatpush1.msra.mxu0 0.0
    %278 = vmatprep.subr.mxu0 0.0
    %279 = vmatpush1.msra.mxu0 0.0
    %280 = vmatprep.subr.mxu0 0.0
    %281 = vmatpush1.msra.mxu0 0.0
    %282 = vmatprep.subr.mxu0 0.0
    %283 = vmatpush1.msra.mxu0 0.0
    %284 = vmatprep.subr.mxu0 0.0
    %285 = vmatpush1.msra.mxu0 0.0
    %286 = vmatprep.subr.mxu0 0.0
    %287 = vmatpush1.msra.mxu0 0.0
    %288 = vmatprep.subr.mxu0 0.0
    %289 = vmatpush1.msra.mxu0 0.0
    %290 = vmatprep.subr.mxu0 0.0
    %291 = vmatpush1.msra.mxu0 0.0
    %292 = vmatprep.subr.mxu0 0.0
    %293 = vmatpush1.msra.mxu0 0.0
    %294 = vmatprep.subr.mxu0 0.0
    %295 = vmatpush1.msra.mxu0 0.0
    %296 = vmatprep.subr.mxu0 0.0
    %297 = vmatpush1.msra.mxu0 0.0
    %298 = vmatprep.subr.mxu0 0.0
    %299 = vmatpush1.msra.mxu0 0.0
    %300 = vmatprep.subr.mxu0 0.0
    %301 = vmatpush1.msra.mxu0 0.0
    %302 = vmatprep.subr.mxu0 0.0
    %303 = vmatpush1.msra.mxu0 0.0
    %304 = vmatprep.subr.mxu0 0.0
    %305 = vmatpush1.msra.mxu0 0.0
    %306 = vmatprep.subr.mxu0 0.0
    %307 = vmatpush1.msra.mxu0 0.0
    %308 = vmatprep.mubr.f32.mxu0 0.0
    %309 = vmatmul.mubr.f32.gmra.mrb[0].mxu0 %v239
    %v310 = vpop.f32.mrb[0].mxu0
    %v311 = vadd.f32 %v235, %v310
    %v312 = vpop.f32.mrb[0].mxu0
    %313 = vmatprep.mubr.f32.mxu0 0.0
    %314 = vmatmul.mubr.f32.gmra.mrb[0].mxu0 %v242
    %v315 = vpop.f32.mrb[0].mxu0
    %v316 = vadd.f32 %v235, %v315
    %v317 = vpop.f32.mrb[0].mxu0
    %318 = vdwg.mxu0
    %320 = vrot.lane.b32.xlu0 %v311, 96
    %v321 = vpop.permute.xlu0 %320
    %vm322 = vcmask 64512
    %v323 = vsel %vm322, %v311, 0
    %v325 = vsel %vm322, %v321, 0
    %327 = vmatprep.subr.mxu0 0.0
    %328 = vmatpush1.xpose.msra.mxu0 %v325
    %329 = vmatprep.subr.mxu0 0.0
    %330 = vmatpush1.xpose.msra.mxu0 0.0
    %331 = vmatprep.subr.mxu0 0.0
    %332 = vmatpush1.xpose.msra.mxu0 0.0
    %333 = vmatprep.subr.mxu0 0.0
    %334 = vmatpush1.xpose.msra.mxu0 0.0
    %335 = vmatprep.subr.mxu0 0.0
    %336 = vmatpush1.xpose.msra.mxu0 0.0
    %337 = vmatprep.subr.mxu0 0.0
    %338 = vmatpush1.xpose.msra.mxu0 0.0
    %339 = vmatprep.subr.mxu0 0.0
    %340 = vmatpush1.xpose.msra.mxu0 0.0
    %341 = vmatprep.subr.mxu0 0.0
    %342 = vmatpush1.xpose.msra.mxu0 0.0
    %343 = vmatprep.subr.mxu0 0.0
    %344 = vmatpush1.xpose.msra.mxu0 0.0
    %345 = vmatprep.subr.mxu0 0.0
    %346 = vmatpush1.xpose.msra.mxu0 0.0
    %347 = vmatprep.subr.mxu0 0.0
    %348 = vmatpush1.xpose.msra.mxu0 0.0
    %349 = vmatprep.subr.mxu0 0.0
    %350 = vmatpush1.xpose.msra.mxu0 0.0
    %351 = vmatprep.subr.mxu0 0.0
    %352 = vmatpush1.xpose.msra.mxu0 0.0
    %353 = vmatprep.subr.mxu0 0.0
    %354 = vmatpush1.xpose.msra.mxu0 0.0
    %355 = vmatprep.subr.mxu0 0.0
    %356 = vmatpush1.xpose.msra.mxu0 0.0
    %357 = vmatprep.subr.mxu0 0.0
    %358 = vmatpush1.xpose.msra.mxu0 0.0
    %359 = vmatprep.subr.mxu0 0.0
    %360 = vmatpush1.xpose.msra.mxu0 0.0
    %361 = vmatprep.subr.mxu0 0.0
    %362 = vmatpush1.xpose.msra.mxu0 0.0
    %363 = vmatprep.subr.mxu0 0.0
    %364 = vmatpush1.xpose.msra.mxu0 0.0
    %365 = vmatprep.subr.mxu0 0.0
    %366 = vmatpush1.xpose.msra.mxu0 0.0
    %367 = vmatprep.subr.mxu0 0.0
    %368 = vmatpush1.xpose.msra.mxu0 0.0
    %369 = vmatprep.subr.mxu0 0.0
    %370 = vmatpush1.xpose.msra.mxu0 0.0
    %371 = vmatprep.subr.mxu0 0.0
    %372 = vmatpush1.xpose.msra.mxu0 0.0
    %373 = vmatprep.subr.mxu0 0.0
    %374 = vmatpush1.xpose.msra.mxu0 0.0
    %375 = vmatprep.subr.mxu0 0.0
    %376 = vmatpush1.xpose.msra.mxu0 0.0
    %377 = vmatprep.subr.mxu0 0.0
    %378 = vmatpush1.xpose.msra.mxu0 0.0
    %379 = vmatprep.subr.mxu0 0.0
    %380 = vmatpush1.xpose.msra.mxu0 0.0
    %381 = vmatprep.subr.mxu0 0.0
    %382 = vmatpush1.xpose.msra.mxu0 0.0
    %383 = vmatprep.subr.mxu0 0.0
    %384 = vmatpush1.xpose.msra.mxu0 0.0
    %385 = vmatprep.subr.mxu0 0.0
    %386 = vmatpush1.xpose.msra.mxu0 0.0
    %387 = vmatprep.subr.mxu0 0.0
    %388 = vmatpush1.xpose.msra.mxu0 0.0
    %389 = vmatprep.subr.mxu0 0.0
    %390 = vmatpush1.xpose.msra.mxu0 0.0
    %391 = vmatprep.mubr.f32.mxu0 0.0
    %392 = vmatmul.mubr.f32.gmra.mrb[0].mxu0 %v323
    %v393 = vpop.f32.mrb[0].mxu0
    %v394 = vadd.f32 0.0, %v393
    %v395 = vpop.f32.mrb[0].mxu0
    %396 = vdwg.mxu0
    %398 = vrot.lane.b32.xlu0 %v316, 96
    %v399 = vpop.permute.xlu0 %398
    %v400 = vsel %vm322, %v316, 0
    %v402 = vsel %vm322, %v399, 0
    %404 = vmatprep.subr.mxu0 0.0
    %405 = vmatpush1.xpose.msra.mxu0 %v402
    %406 = vmatprep.subr.mxu0 0.0
    %407 = vmatpush1.xpose.msra.mxu0 0.0
    %408 = vmatprep.subr.mxu0 0.0
    %409 = vmatpush1.xpose.msra.mxu0 0.0
    %410 = vmatprep.subr.mxu0 0.0
    %411 = vmatpush1.xpose.msra.mxu0 0.0
    %412 = vmatprep.subr.mxu0 0.0
    %413 = vmatpush1.xpose.msra.mxu0 0.0
    %414 = vmatprep.subr.mxu0 0.0
    %415 = vmatpush1.xpose.msra.mxu0 0.0
    %416 = vmatprep.subr.mxu0 0.0
    %417 = vmatpush1.xpose.msra.mxu0 0.0
    %418 = vmatprep.subr.mxu0 0.0
    %419 = vmatpush1.xpose.msra.mxu0 0.0
    %420 = vmatprep.subr.mxu0 0.0
    %421 = vmatpush1.xpose.msra.mxu0 0.0
    %422 = vmatprep.subr.mxu0 0.0
    %423 = vmatpush1.xpose.msra.mxu0 0.0
    %424 = vmatprep.subr.mxu0 0.0
    %425 = vmatpush1.xpose.msra.mxu0 0.0
    %426 = vmatprep.subr.mxu0 0.0
    %427 = vmatpush1.xpose.msra.mxu0 0.0
    %428 = vmatprep.subr.mxu0 0.0
    %429 = vmatpush1.xpose.msra.mxu0 0.0
    %430 = vmatprep.subr.mxu0 0.0
    %431 = vmatpush1.xpose.msra.mxu0 0.0
    %432 = vmatprep.subr.mxu0 0.0
    %433 = vmatpush1.xpose.msra.mxu0 0.0
    %434 = vmatprep.subr.mxu0 0.0
    %435 = vmatpush1.xpose.msra.mxu0 0.0
    %436 = vmatprep.subr.mxu0 0.0
    %437 = vmatpush1.xpose.msra.mxu0 0.0
    %438 = vmatprep.subr.mxu0 0.0
    %439 = vmatpush1.xpose.msra.mxu0 0.0
    %440 = vmatprep.subr.mxu0 0.0
    %441 = vmatpush1.xpose.msra.mxu0 0.0
    %442 = vmatprep.subr.mxu0 0.0
    %443 = vmatpush1.xpose.msra.mxu0 0.0
    %444 = vmatprep.subr.mxu0 0.0
    %445 = vmatpush1.xpose.msra.mxu0 0.0
    %446 = vmatprep.subr.mxu0 0.0
    %447 = vmatpush1.xpose.msra.mxu0 0.0
    %448 = vmatprep.subr.mxu0 0.0
    %449 = vmatpush1.xpose.msra.mxu0 0.0
    %450 = vmatprep.subr.mxu0 0.0
    %451 = vmatpush1.xpose.msra.mxu0 0.0
    %452 = vmatprep.subr.mxu0 0.0
    %453 = vmatpush1.xpose.msra.mxu0 0.0
    %454 = vmatprep.subr.mxu0 0.0
    %455 = vmatpush1.xpose.msra.mxu0 0.0
    %456 = vmatprep.subr.mxu0 0.0
    %457 = vmatpush1.xpose.msra.mxu0 0.0
    %458 = vmatprep.subr.mxu0 0.0
    %459 = vmatpush1.xpose.msra.mxu0 0.0
    %460 = vmatprep.subr.mxu0 0.0
    %461 = vmatpush1.xpose.msra.mxu0 0.0
    %462 = vmatprep.subr.mxu0 0.0
    %463 = vmatpush1.xpose.msra.mxu0 0.0
    %464 = vmatprep.subr.mxu0 0.0
    %465 = vmatpush1.xpose.msra.mxu0 0.0
    %466 = vmatprep.subr.mxu0 0.0
    %467 = vmatpush1.xpose.msra.mxu0 0.0
    %468 = vmatprep.mubr.f32.mxu0 0.0
    %469 = vmatmul.mubr.f32.gmra.mrb[0].mxu0 %v400
    %v470 = vpop.f32.mrb[0].mxu0
    %v471 = vadd.f32 0.0, %v470
    %v472 = vpop.f32.mrb[0].mxu0
    %473 = vdwg.mxu0
    %v474 = vsel %vm322, %v394, -inf
    %475 = vmax.xlane.f32.xlu0 %v474
    %v476 = vpop.xlane.xlu0 %475
    %v477 = vsel %vm322, %v471, -inf
    %478 = vmax.xlane.f32.xlu0 %v477
    %v479 = vpop.xlane.xlu0 %478
    %v480 = vsub.f32 %v394, %v476
    %v481 = vsub.f32 %v471, %v479
    %v482 = vmul.f32 %v480, 1.442695
    %v483 = vpow.pop %v482
    %v484 = vmul.f32 %v481, 1.442695
    %v485 = vpow.pop %v484
    %v486 = vsel %vm322, %v483, 0.0
    %487 = vadd.xlane.f32.xlu0 %v486
    %v488 = vpop.xlane.xlu0 %487
    %v489 = vsel %vm322, %v485, 0.0
    %490 = vadd.xlane.f32.xlu0 %v489
    %v491 = vpop.xlane.xlu0 %490
    %v492 = vrcp.pop %v488
    %v493 = vrcp.pop %v491
    %v494 = vmul.f32 %v483, %v492
    %v495 = vmul.f32 %v485, %v493
    %496 = vrot.lane.b32.xlu0 %v311, 64
    %v497 = vpop.permute.xlu0 %496
    %v500 = vsel %vm322, %v494, 0
    %502 = vmatprep.subr.mxu0 0.0
    %503 = vmatpush1.msra.mxu0 %v497
    %504 = vmatprep.subr.mxu0 0.0
    %505 = vmatpush1.msra.mxu0 0.0
    %506 = vmatprep.subr.mxu0 0.0
    %507 = vmatpush1.msra.mxu0 0.0
    %508 = vmatprep.subr.mxu0 0.0
    %509 = vmatpush1.msra.mxu0 0.0
    %510 = vmatprep.subr.mxu0 0.0
    %511 = vmatpush1.msra.mxu0 0.0
    %512 = vmatprep.subr.mxu0 0.0
    %513 = vmatpush1.msra.mxu0 0.0
    %514 = vmatprep.subr.mxu0 0.0
    %515 = vmatpush1.msra.mxu0 0.0
    %516 = vmatprep.subr.mxu0 0.0
    %517 = vmatpush1.msra.mxu0 0.0
    %518 = vmatprep.subr.mxu0 0.0
    %519 = vmatpush1.msra.mxu0 0.0
    %520 = vmatprep.subr.mxu0 0.0
    %521 = vmatpush1.msra.mxu0 0.0
    %522 = vmatprep.subr.mxu0 0.0
    %523 = vmatpush1.msra.mxu0 0.0
    %524 = vmatprep.subr.mxu0 0.0
    %525 = vmatpush1.msra.mxu0 0.0
    %526 = vmatprep.subr.mxu0 0.0
    %527 = vmatpush1.msra.mxu0 0.0
    %528 = vmatprep.subr.mxu0 0.0
    %529 = vmatpush1.msra.mxu0 0.0
    %530 = vmatprep.subr.mxu0 0.0
    %531 = vmatpush1.msra.mxu0 0.0
    %532 = vmatprep.subr.mxu0 0.0
    %533 = vmatpush1.msra.mxu0 0.0
    %534 = vmatprep.subr.mxu0 0.0
    %535 = vmatpush1.msra.mxu0 0.0
    %536 = vmatprep.subr.mxu0 0.0
    %537 = vmatpush1.msra.mxu0 0.0
    %538 = vmatprep.subr.mxu0 0.0
    %539 = vmatpush1.msra.mxu0 0.0
    %540 = vmatprep.subr.mxu0 0.0
    %541 = vmatpush1.msra.mxu0 0.0
    %542 = vmatprep.subr.mxu0 0.0
    %543 = vmatpush1.msra.mxu0 0.0
    %544 = vmatprep.subr.mxu0 0.0
    %545 = vmatpush1.msra.mxu0 0.0
    %546 = vmatprep.subr.mxu0 0.0
    %547 = vmatpush1.msra.mxu0 0.0
    %548 = vmatprep.subr.mxu0 0.0
    %549 = vmatpush1.msra.mxu0 0.0
    %550 = vmatprep.subr.mxu0 0.0
    %551 = vmatpush1.msra.mxu0 0.0
    %552 = vmatprep.subr.mxu0 0.0
    %553 = vmatpush1.msra.mxu0 0.0
    %554 = vmatprep.subr.mxu0 0.0
    %555 = vmatpush1.msra.mxu0 0.0
    %556 = vmatprep.subr.mxu0 0.0
    %557 = vmatpush1.msra.mxu0 0.0
    %558 = vmatprep.subr.mxu0 0.0
    %559 = vmatpush1.msra.mxu0 0.0
    %560 = vmatprep.subr.mxu0 0.0
    %561 = vmatpush1.msra.mxu0 0.0
    %562 = vmatprep.subr.mxu0 0.0
    %563 = vmatpush1.msra.mxu0 0.0
    %564 = vmatprep.subr.mxu0 0.0
    %565 = vmatpush1.msra.mxu0 0.0
    %566 = vmatprep.mubr.f32.mxu0 0.0
    %567 = vmatmul.mubr.f32.gmra.mrb[0].mxu0 %v500
    %v568 = vpop.f32.mrb[0].mxu0
    %v569 = vadd.f32 0.0, %v568
    %v570 = vpop.f32.mrb[0].mxu0
    %571 = vdwg.mxu0
    %572 = vrot.lane.b32.xlu0 %v316, 64
    %v573 = vpop.permute.xlu0 %572
    %v576 = vsel %vm322, %v495, 0
    %578 = vmatprep.subr.mxu0 0.0
    %579 = vmatpush1.msra.mxu0 %v573
    %580 = vmatprep.subr.mxu0 0.0
    %581 = vmatpush1.msra.mxu0 0.0
    %582 = vmatprep.subr.mxu0 0.0
    %583 = vmatpush1.msra.mxu0 0.0
    %584 = vmatprep.subr.mxu0 0.0
    %585 = vmatpush1.msra.mxu0 0.0
    %586 = vmatprep.subr.mxu0 0.0
    %587 = vmatpush1.msra.mxu0 0.0
    %588 = vmatprep.subr.mxu0 0.0
    %589 = vmatpush1.msra.mxu0 0.0
    %590 = vmatprep.subr.mxu0 0.0
    %591 = vmatpush1.msra.mxu0 0.0
    %592 = vmatprep.subr.mxu0 0.0
    %593 = vmatpush1.msra.mxu0 0.0
    %594 = vmatprep.subr.mxu0 0.0
    %595 = vmatpush1.msra.mxu0 0.0
    %596 = vmatprep.subr.mxu0 0.0
    %597 = vmatpush1.msra.mxu0 0.0
    %598 = vmatprep.subr.mxu0 0.0
    %599 = vmatpush1.msra.mxu0 0.0
    %600 = vmatprep.subr.mxu0 0.0
    %601 = vmatpush1.msra.mxu0 0.0
    %602 = vmatprep.subr.mxu0 0.0
    %603 = vmatpush1.msra.mxu0 0.0
    %604 = vmatprep.subr.mxu0 0.0
    %605 = vmatpush1.msra.mxu0 0.0
    %606 = vmatprep.subr.mxu0 0.0
    %607 = vmatpush1.msra.mxu0 0.0
    %608 = vmatprep.subr.mxu0 0.0
    %609 = vmatpush1.msra.mxu0 0.0
    %610 = vmatprep.subr.mxu0 0.0
    %611 = vmatpush1.msra.mxu0 0.0
    %612 = vmatprep.subr.mxu0 0.0
    %613 = vmatpush1.msra.mxu0 0.0
    %614 = vmatprep.subr.mxu0 0.0
    %615 = vmatpush1.msra.mxu0 0.0
    %616 = vmatprep.subr.mxu0 0.0
    %617 = vmatpush1.msra.mxu0 0.0
    %618 = vmatprep.subr.mxu0 0.0
    %619 = vmatpush1.msra.mxu0 0.0
    %620 = vmatprep.subr.mxu0 0.0
    %621 = vmatpush1.msra.mxu0 0.0
    %622 = vmatprep.subr.mxu0 0.0
    %623 = vmatpush1.msra.mxu0 0.0
    %624 = vmatprep.subr.mxu0 0.0
    %625 = vmatpush1.msra.mxu0 0.0
    %626 = vmatprep.subr.mxu0 0.0
    %627 = vmatpush1.msra.mxu0 0.0
    %628 = vmatprep.subr.mxu0 0.0
    %629 = vmatpush1.msra.mxu0 0.0
    %630 = vmatprep.subr.mxu0 0.0
    %631 = vmatpush1.msra.mxu0 0.0
    %632 = vmatprep.subr.mxu0 0.0
    %633 = vmatpush1.msra.mxu0 0.0
    %634 = vmatprep.subr.mxu0 0.0
    %635 = vmatpush1.msra.mxu0 0.0
    %636 = vmatprep.subr.mxu0 0.0
    %637 = vmatpush1.msra.mxu0 0.0
    %638 = vmatprep.subr.mxu0 0.0
    %639 = vmatpush1.msra.mxu0 0.0
    %640 = vmatprep.subr.mxu0 0.0
    %641 = vmatpush1.msra.mxu0 0.0
    %642 = vmatprep.mubr.f32.mxu0 0.0
    %643 = vmatmul.mubr.f32.gmra.mrb[0].mxu0 %v576
    %v644 = vpop.f32.mrb[0].mxu0
    %v645 = vadd.f32 0.0, %v644
    %v646 = vpop.f32.mrb[0].mxu0
    %647 = vdwg.mxu0
    %648 = vrot.lane.b32.xlu0 %v311, 120
    %v649 = vpop.permute.xlu0 %648
    %650 = vrot.lane.b32.xlu0 %v311, 88
    %v651 = vpop.permute.xlu0 %650
    %v652 = vsel %vm322, %v649, 0
    %v654 = vsel %vm322, %v651, 0
    %656 = vmatprep.subr.mxu0 0.0
    %657 = vmatpush1.xpose.msra.mxu0 %v654
    %658 = vmatprep.subr.mxu0 0.0
    %659 = vmatpush1.xpose.msra.mxu0 0.0
    %660 = vmatprep.subr.mxu0 0.0
    %661 = vmatpush1.xpose.msra.mxu0 0.0
    %662 = vmatprep.subr.mxu0 0.0
    %663 = vmatpush1.xpose.msra.mxu0 0.0
    %664 = vmatprep.subr.mxu0 0.0
    %665 = vmatpush1.xpose.msra.mxu0 0.0
    %666 = vmatprep.subr.mxu0 0.0
    %667 = vmatpush1.xpose.msra.mxu0 0.0
    %668 = vmatprep.subr.mxu0 0.0
    %669 = vmatpush1.xpose.msra.mxu0 0.0
    %670 = vmatprep.subr.mxu0 0.0
    %671 = vmatpush1.xpose.msra.mxu0 0.0
    %672 = vmatprep.subr.mxu0 0.0
    %673 = vmatpush1.xpose.msra.mxu0 0.0
    %674 = vmatprep.subr.mxu0 0.0
    %675 = vmatpush1.xpose.msra.mxu0 0.0
    %676 = vmatprep.subr.mxu0 0.0
    %677 = vmatpush1.xpose.msra.mxu0 0.0
    %678 = vmatprep.subr.mxu0 0.0
    %679 = vmatpush1.xpose.msra.mxu0 0.0
    %680 = vmatprep.subr.mxu0 0.0
    %681 = vmatpush1.xpose.msra.mxu0 0.0
    %682 = vmatprep.subr.mxu0 0.0
    %683 = vmatpush1.xpose.msra.mxu0 0.0
    %684 = vmatprep.subr.mxu0 0.0
    %685 = vmatpush1.xpose.msra.mxu0 0.0
    %686 = vmatprep.subr.mxu0 0.0
    %687 = vmatpush1.xpose.msra.mxu0 0.0
    %688 = vmatprep.subr.mxu0 0.0
    %689 = vmatpush1.xpose.msra.mxu0 0.0
    %690 = vmatprep.subr.mxu0 0.0
    %691 = vmatpush1.xpose.msra.mxu0 0.0
    %692 = vmatprep.subr.mxu0 0.0
    %693 = vmatpush1.xpose.msra.mxu0 0.0
    %694 = vmatprep.subr.mxu0 0.0
    %695 = vmatpush1.xpose.msra.mxu0 0.0
    %696 = vmatprep.subr.mxu0 0.0
    %697 = vmatpush1.xpose.msra.mxu0 0.0
    %698 = vmatprep.subr.mxu0 0.0
    %699 = vmatpush1.xpose.msra.mxu0 0.0
    %700 = vmatprep.subr.mxu0 0.0
    %701 = vmatpush1.xpose.msra.mxu0 0.0
    %702 = vmatprep.subr.mxu0 0.0
    %703 = vmatpush1.xpose.msra.mxu0 0.0
    %704 = vmatprep.subr.mxu0 0.0
    %705 = vmatpush1.xpose.msra.mxu0 0.0
    %706 = vmatprep.subr.mxu0 0.0
    %707 = vmatpush1.xpose.msra.mxu0 0.0
    %708 = vmatprep.subr.mxu0 0.0
    %709 = vmatpush1.xpose.msra.mxu0 0.0
    %710 = vmatprep.subr.mxu0 0.0
    %711 = vmatpush1.xpose.msra.mxu0 0.0
    %712 = vmatprep.subr.mxu0 0.0
    %713 = vmatpush1.xpose.msra.mxu0 0.0
    %714 = vmatprep.subr.mxu0 0.0
    %715 = vmatpush1.xpose.msra.mxu0 0.0
    %716 = vmatprep.subr.mxu0 0.0
    %717 = vmatpush1.xpose.msra.mxu0 0.0
    %718 = vmatprep.subr.mxu0 0.0
    %719 = vmatpush1.xpose.msra.mxu0 0.0
    %720 = vmatprep.mubr.f32.mxu0 0.0
    %721 = vmatmul.mubr.f32.gmra.mrb[0].mxu0 %v652
    %v722 = vpop.f32.mrb[0].mxu0
    %v723 = vadd.f32 0.0, %v722
    %v724 = vpop.f32.mrb[0].mxu0
    %725 = vdwg.mxu0
    %726 = vrot.lane.b32.xlu0 %v316, 120
    %v727 = vpop.permute.xlu0 %726
    %728 = vrot.lane.b32.xlu0 %v316, 88
    %v729 = vpop.permute.xlu0 %728
    %v730 = vsel %vm322, %v727, 0
    %v732 = vsel %vm322, %v729, 0
    %734 = vmatprep.subr.mxu0 0.0
    %735 = vmatpush1.xpose.msra.mxu0 %v732
    %736 = vmatprep.subr.mxu0 0.0
    %737 = vmatpush1.xpose.msra.mxu0 0.0
    %738 = vmatprep.subr.mxu0 0.0
    %739 = vmatpush1.xpose.msra.mxu0 0.0
    %740 = vmatprep.subr.mxu0 0.0
    %741 = vmatpush1.xpose.msra.mxu0 0.0
    %742 = vmatprep.subr.mxu0 0.0
    %743 = vmatpush1.xpose.msra.mxu0 0.0
    %744 = vmatprep.subr.mxu0 0.0
    %745 = vmatpush1.xpose.msra.mxu0 0.0
    %746 = vmatprep.subr.mxu0 0.0
    %747 = vmatpush1.xpose.msra.mxu0 0.0
    %748 = vmatprep.subr.mxu0 0.0
    %749 = vmatpush1.xpose.msra.mxu0 0.0
    %750 = vmatprep.subr.mxu0 0.0
    %751 = vmatpush1.xpose.msra.mxu0 0.0
    %752 = vmatprep.subr.mxu0 0.0
    %753 = vmatpush1.xpose.msra.mxu0 0.0
    %754 = vmatprep.subr.mxu0 0.0
    %755 = vmatpush1.xpose.msra.mxu0 0.0
    %756 = vmatprep.subr.mxu0 0.0
    %757 = vmatpush1.xpose.msra.mxu0 0.0
    %758 = vmatprep.subr.mxu0 0.0
    %759 = vmatpush1.xpose.msra.mxu0 0.0
    %760 = vmatprep.subr.mxu0 0.0
    %761 = vmatpush1.xpose.msra.mxu0 0.0
    %762 = vmatprep.subr.mxu0 0.0
    %763 = vmatpush1.xpose.msra.mxu0 0.0
    %764 = vmatprep.subr.mxu0 0.0
    %765 = vmatpush1.xpose.msra.mxu0 0.0
    %766 = vmatprep.subr.mxu0 0.0
    %767 = vmatpush1.xpose.msra.mxu0 0.0
    %768 = vmatprep.subr.mxu0 0.0
    %769 = vmatpush1.xpose.msra.mxu0 0.0
    %770 = vmatprep.subr.mxu0 0.0
    %771 = vmatpush1.xpose.msra.mxu0 0.0
    %772 = vmatprep.subr.mxu0 0.0
    %773 = vmatpush1.xpose.msra.mxu0 0.0
    %774 = vmatprep.subr.mxu0 0.0
    %775 = vmatpush1.xpose.msra.mxu0 0.0
    %776 = vmatprep.subr.mxu0 0.0
    %777 = vmatpush1.xpose.msra.mxu0 0.0
    %778 = vmatprep.subr.mxu0 0.0
    %779 = vmatpush1.xpose.msra.mxu0 0.0
    %780 = vmatprep.subr.mxu0 0.0
    %781 = vmatpush1.xpose.msra.mxu0 0.0
    %782 = vmatprep.subr.mxu0 0.0
    %783 = vmatpush1.xpose.msra.mxu0 0.0
    %784 = vmatprep.subr.mxu0 0.0
    %785 = vmatpush1.xpose.msra.mxu0 0.0
    %786 = vmatprep.subr.mxu0 0.0
    %787 = vmatpush1.xpose.msra.mxu0 0.0
    %788 = vmatprep.subr.mxu0 0.0
    %789 = vmatpush1.xpose.msra.mxu0 0.0
    %790 = vmatprep.subr.mxu0 0.0
    %791 = vmatpush1.xpose.msra.mxu0 0.0
    %792 = vmatprep.subr.mxu0 0.0
    %793 = vmatpush1.xpose.msra.mxu0 0.0
    %794 = vmatprep.subr.mxu0 0.0
    %795 = vmatpush1.xpose.msra.mxu0 0.0
    %796 = vmatprep.subr.mxu0 0.0
    %797 = vmatpush1.xpose.msra.mxu0 0.0
    %798 = vmatprep.mubr.f32.mxu0 0.0
    %799 = vmatmul.mubr.f32.gmra.mrb[0].mxu0 %v730
    %v800 = vpop.f32.mrb[0].mxu0
    %v801 = vadd.f32 0.0, %v800
    %v802 = vpop.f32.mrb[0].mxu0
    %803 = vdwg.mxu0
    %v804 = vsel %vm322, %v723, -inf
    %805 = vmax.xlane.f32.xlu0 %v804
    %v806 = vpop.xlane.xlu0 %805
    %v807 = vsel %vm322, %v801, -inf
    %808 = vmax.xlane.f32.xlu0 %v807
    %v809 = vpop.xlane.xlu0 %808
    %v810 = vsub.f32 %v723, %v806
    %v811 = vsub.f32 %v801, %v809
    %v812 = vmul.f32 %v810, 1.442695
    %v813 = vpow.pop %v812
    %v814 = vmul.f32 %v811, 1.442695
    %v815 = vpow.pop %v814
    %v816 = vsel %vm322, %v813, 0.0
    %817 = vadd.xlane.f32.xlu0 %v816
    %v818 = vpop.xlane.xlu0 %817
    %v819 = vsel %vm322, %v815, 0.0
    %820 = vadd.xlane.f32.xlu0 %v819
    %v821 = vpop.xlane.xlu0 %820
    %v822 = vrcp.pop %v818
    %v823 = vrcp.pop %v821
    %v824 = vmul.f32 %v813, %v822
    %v825 = vmul.f32 %v815, %v823
    %826 = vrot.lane.b32.xlu0 %v311, 56
    %v827 = vpop.permute.xlu0 %826
    %v830 = vsel %vm322, %v824, 0
    %832 = vmatprep.subr.mxu0 0.0
    %833 = vmatpush1.msra.mxu0 %v827
    %834 = vmatprep.subr.mxu0 0.0
    %835 = vmatpush1.msra.mxu0 0.0
    %836 = vmatprep.subr.mxu0 0.0
    %837 = vmatpush1.msra.mxu0 0.0
    %838 = vmatprep.subr.mxu0 0.0
    %839 = vmatpush1.msra.mxu0 0.0
    %840 = vmatprep.subr.mxu0 0.0
    %841 = vmatpush1.msra.mxu0 0.0
    %842 = vmatprep.subr.mxu0 0.0
    %843 = vmatpush1.msra.mxu0 0.0
    %844 = vmatprep.subr.mxu0 0.0
    %845 = vmatpush1.msra.mxu0 0.0
    %846 = vmatprep.subr.mxu0 0.0
    %847 = vmatpush1.msra.mxu0 0.0
    %848 = vmatprep.subr.mxu0 0.0
    %849 = vmatpush1.msra.mxu0 0.0
    %850 = vmatprep.subr.mxu0 0.0
    %851 = vmatpush1.msra.mxu0 0.0
    %852 = vmatprep.subr.mxu0 0.0
    %853 = vmatpush1.msra.mxu0 0.0
    %854 = vmatprep.subr.mxu0 0.0
    %855 = vmatpush1.msra.mxu0 0.0
    %856 = vmatprep.subr.mxu0 0.0
    %857 = vmatpush1.msra.mxu0 0.0
    %858 = vmatprep.subr.mxu0 0.0
    %859 = vmatpush1.msra.mxu0 0.0
    %860 = vmatprep.subr.mxu0 0.0
    %861 = vmatpush1.msra.mxu0 0.0
    %862 = vmatprep.subr.mxu0 0.0
    %863 = vmatpush1.msra.mxu0 0.0
    %864 = vmatprep.subr.mxu0 0.0
    %865 = vmatpush1.msra.mxu0 0.0
    %866 = vmatprep.subr.mxu0 0.0
    %867 = vmatpush1.msra.mxu0 0.0
    %868 = vmatprep.subr.mxu0 0.0
    %869 = vmatpush1.msra.mxu0 0.0
    %870 = vmatprep.subr.mxu0 0.0
    %871 = vmatpush1.msra.mxu0 0.0
    %872 = vmatprep.subr.mxu0 0.0
    %873 = vmatpush1.msra.mxu0 0.0
    %874 = vmatprep.subr.mxu0 0.0
    %875 = vmatpush1.msra.mxu0 0.0
    %876 = vmatprep.subr.mxu0 0.0
    %877 = vmatpush1.msra.mxu0 0.0
    %878 = vmatprep.subr.mxu0 0.0
    %879 = vmatpush1.msra.mxu0 0.0
    %880 = vmatprep.subr.mxu0 0.0
    %881 = vmatpush1.msra.mxu0 0.0
    %882 = vmatprep.subr.mxu0 0.0
    %883 = vmatpush1.msra.mxu0 0.0
    %884 = vmatprep.subr.mxu0 0.0
    %885 = vmatpush1.msra.mxu0 0.0
    %886 = vmatprep.subr.mxu0 0.0
    %887 = vmatpush1.msra.mxu0 0.0
    %888 = vmatprep.subr.mxu0 0.0
    %889 = vmatpush1.msra.mxu0 0.0
    %890 = vmatprep.subr.mxu0 0.0
    %891 = vmatpush1.msra.mxu0 0.0
    %892 = vmatprep.subr.mxu0 0.0
    %893 = vmatpush1.msra.mxu0 0.0
    %894 = vmatprep.subr.mxu0 0.0
    %895 = vmatpush1.msra.mxu0 0.0
    %896 = vmatprep.mubr.f32.mxu0 0.0
    %897 = vmatmul.mubr.f32.gmra.mrb[0].mxu0 %v830
    %v898 = vpop.f32.mrb[0].mxu0
    %v899 = vadd.f32 0.0, %v898
    %v900 = vpop.f32.mrb[0].mxu0
    %901 = vdwg.mxu0
    %902 = vrot.lane.b32.xlu0 %v316, 56
    %v903 = vpop.permute.xlu0 %902
    %v906 = vsel %vm322, %v825, 0
    %908 = vmatprep.subr.mxu0 0.0
    %909 = vmatpush1.msra.mxu0 %v903
    %910 = vmatprep.subr.mxu0 0.0
    %911 = vmatpush1.msra.mxu0 0.0
    %912 = vmatprep.subr.mxu0 0.0
    %913 = vmatpush1.msra.mxu0 0.0
    %914 = vmatprep.subr.mxu0 0.0
    %915 = vmatpush1.msra.mxu0 0.0
    %916 = vmatprep.subr.mxu0 0.0
    %917 = vmatpush1.msra.mxu0 0.0
    %918 = vmatprep.subr.mxu0 0.0
    %919 = vmatpush1.msra.mxu0 0.0
    %920 = vmatprep.subr.mxu0 0.0
    %921 = vmatpush1.msra.mxu0 0.0
    %922 = vmatprep.subr.mxu0 0.0
    %923 = vmatpush1.msra.mxu0 0.0
    %924 = vmatprep.subr.mxu0 0.0
    %925 = vmatpush1.msra.mxu0 0.0
    %926 = vmatprep.subr.mxu0 0.0
    %927 = vmatpush1.msra.mxu0 0.0
    %928 = vmatprep.subr.mxu0 0.0
    %929 = vmatpush1.msra.mxu0 0.0
    %930 = vmatprep.subr.mxu0 0.0
    %931 = vmatpush1.msra.mxu0 0.0
    %932 = vmatprep.subr.mxu0 0.0
    %933 = vmatpush1.msra.mxu0 0.0
    %934 = vmatprep.subr.mxu0 0.0
    %935 = vmatpush1.msra.mxu0 0.0
    %936 = vmatprep.subr.mxu0 0.0
    %937 = vmatpush1.msra.mxu0 0.0
    %938 = vmatprep.subr.mxu0 0.0
    %939 = vmatpush1.msra.mxu0 0.0
    %940 = vmatprep.subr.mxu0 0.0
    %941 = vmatpush1.msra.mxu0 0.0
    %942 = vmatprep.subr.mxu0 0.0
    %943 = vmatpush1.msra.mxu0 0.0
    %944 = vmatprep.subr.mxu0 0.0
    %945 = vmatpush1.msra.mxu0 0.0
    %946 = vmatprep.subr.mxu0 0.0
    %947 = vmatpush1.msra.mxu0 0.0
    %948 = vmatprep.subr.mxu0 0.0
    %949 = vmatpush1.msra.mxu0 0.0
    %950 = vmatprep.subr.mxu0 0.0
    %951 = vmatpush1.msra.mxu0 0.0
    %952 = vmatprep.subr.mxu0 0.0
    %953 = vmatpush1.msra.mxu0 0.0
    %954 = vmatprep.subr.mxu0 0.0
    %955 = vmatpush1.msra.mxu0 0.0
    %956 = vmatprep.subr.mxu0 0.0
    %957 = vmatpush1.msra.mxu0 0.0
    %958 = vmatprep.subr.mxu0 0.0
    %959 = vmatpush1.msra.mxu0 0.0
    %960 = vmatprep.subr.mxu0 0.0
    %961 = vmatpush1.msra.mxu0 0.0
    %962 = vmatprep.subr.mxu0 0.0
    %963 = vmatpush1.msra.mxu0 0.0
    %964 = vmatprep.subr.mxu0 0.0
    %965 = vmatpush1.msra.mxu0 0.0
    %966 = vmatprep.subr.mxu0 0.0
    %967 = vmatpush1.msra.mxu0 0.0
    %968 = vmatprep.subr.mxu0 0.0
    %969 = vmatpush1.msra.mxu0 0.0
    %970 = vmatprep.subr.mxu0 0.0
    %971 = vmatpush1.msra.mxu0 0.0
    %972 = vmatprep.mubr.f32.mxu0 0.0
    %973 = vmatmul.mubr.f32.gmra.mrb[0].mxu0 %v906
    %v974 = vpop.f32.mrb[0].mxu0
    %v975 = vadd.f32 0.0, %v974
    %v976 = vpop.f32.mrb[0].mxu0
    %977 = vdwg.mxu0
    %978 = vrot.lane.b32.xlu0 %v311, 112
    %v979 = vpop.permute.xlu0 %978
    %980 = vrot.lane.b32.xlu0 %v311, 80
    %v981 = vpop.permute.xlu0 %980
    %v982 = vsel %vm322, %v979, 0
    %v984 = vsel %vm322, %v981, 0
    %986 = vmatprep.subr.mxu0 0.0
    %987 = vmatpush1.xpose.msra.mxu0 %v984
    %988 = vmatprep.subr.mxu0 0.0
    %989 = vmatpush1.xpose.msra.mxu0 0.0
    %990 = vmatprep.subr.mxu0 0.0
    %991 = vmatpush1.xpose.msra.mxu0 0.0
    %992 = vmatprep.subr.mxu0 0.0
    %993 = vmatpush1.xpose.msra.mxu0 0.0
    %994 = vmatprep.subr.mxu0 0.0
    %995 = vmatpush1.xpose.msra.mxu0 0.0
    %996 = vmatprep.subr.mxu0 0.0
    %997 = vmatpush1.xpose.msra.mxu0 0.0
    %998 = vmatprep.subr.mxu0 0.0
    %999 = vmatpush1.xpose.msra.mxu0 0.0
    %1000 = vmatprep.subr.mxu0 0.0
    %1001 = vmatpush1.xpose.msra.mxu0 0.0
    %1002 = vmatprep.subr.mxu0 0.0
    %1003 = vmatpush1.xpose.msra.mxu0 0.0
    %1004 = vmatprep.subr.mxu0 0.0
    %1005 = vmatpush1.xpose.msra.mxu0 0.0
    %1006 = vmatprep.subr.mxu0 0.0
    %1007 = vmatpush1.xpose.msra.mxu0 0.0
    %1008 = vmatprep.subr.mxu0 0.0
    %1009 = vmatpush1.xpose.msra.mxu0 0.0
    %1010 = vmatprep.subr.mxu0 0.0
    %1011 = vmatpush1.xpose.msra.mxu0 0.0
    %1012 = vmatprep.subr.mxu0 0.0
    %1013 = vmatpush1.xpose.msra.mxu0 0.0
    %1014 = vmatprep.subr.mxu0 0.0
    %1015 = vmatpush1.xpose.msra.mxu0 0.0
    %1016 = vmatprep.subr.mxu0 0.0
    %1017 = vmatpush1.xpose.msra.mxu0 0.0
    %1018 = vmatprep.subr.mxu0 0.0
    %1019 = vmatpush1.xpose.msra.mxu0 0.0
    %1020 = vmatprep.subr.mxu0 0.0
    %1021 = vmatpush1.xpose.msra.mxu0 0.0
    %1022 = vmatprep.subr.mxu0 0.0
    %1023 = vmatpush1.xpose.msra.mxu0 0.0
    %1024 = vmatprep.subr.mxu0 0.0
    %1025 = vmatpush1.xpose.msra.mxu0 0.0
    %1026 = vmatprep.subr.mxu0 0.0
    %1027 = vmatpush1.xpose.msra.mxu0 0.0
    %1028 = vmatprep.subr.mxu0 0.0
    %1029 = vmatpush1.xpose.msra.mxu0 0.0
    %1030 = vmatprep.subr.mxu0 0.0
    %1031 = vmatpush1.xpose.msra.mxu0 0.0
    %1032 = vmatprep.subr.mxu0 0.0
    %1033 = vmatpush1.xpose.msra.mxu0 0.0
    %1034 = vmatprep.subr.mxu0 0.0
    %1035 = vmatpush1.xpose.msra.mxu0 0.0
    %1036 = vmatprep.subr.mxu0 0.0
    %1037 = vmatpush1.xpose.msra.mxu0 0.0
    %1038 = vmatprep.subr.mxu0 0.0
    %1039 = vmatpush1.xpose.msra.mxu0 0.0
    %1040 = vmatprep.subr.mxu0 0.0
    %1041 = vmatpush1.xpose.msra.mxu0 0.0
    %1042 = vmatprep.subr.mxu0 0.0
    %1043 = vmatpush1.xpose.msra.mxu0 0.0
    %1044 = vmatprep.subr.mxu0 0.0
    %1045 = vmatpush1.xpose.msra.mxu0 0.0
    %1046 = vmatprep.subr.mxu0 0.0
    %1047 = vmatpush1.xpose.msra.mxu0 0.0
    %1048 = vmatprep.subr.mxu0 0.0
    %1049 = vmatpush1.xpose.msra.mxu0 0.0
    %1050 = vmatprep.mubr.f32.mxu0 0.0
    %1051 = vmatmul.mubr.f32.gmra.mrb[0].mxu0 %v982
    %v1052 = vpop.f32.mrb[0].mxu0
    %v1053 = vadd.f32 0.0, %v1052
    %v1054 = vpop.f32.mrb[0].mxu0
    %1055 = vdwg.mxu0
    %1056 = vrot.lane.b32.xlu0 %v316, 112
    %v1057 = vpop.permute.xlu0 %1056
    %1058 = vrot.lane.b32.xlu0 %v316, 80
    %v1059 = vpop.permute.xlu0 %1058
    %v1060 = vsel %vm322, %v1057, 0
    %v1062 = vsel %vm322, %v1059, 0
    %1064 = vmatprep.subr.mxu0 0.0
    %1065 = vmatpush1.xpose.msra.mxu0 %v1062
    %1066 = vmatprep.subr.mxu0 0.0
    %1067 = vmatpush1.xpose.msra.mxu0 0.0
    %1068 = vmatprep.subr.mxu0 0.0
    %1069 = vmatpush1.xpose.msra.mxu0 0.0
    %1070 = vmatprep.subr.mxu0 0.0
    %1071 = vmatpush1.xpose.msra.mxu0 0.0
    %1072 = vmatprep.subr.mxu0 0.0
    %1073 = vmatpush1.xpose.msra.mxu0 0.0
    %1074 = vmatprep.subr.mxu0 0.0
    %1075 = vmatpush1.xpose.msra.mxu0 0.0
    %1076 = vmatprep.subr.mxu0 0.0
    %1077 = vmatpush1.xpose.msra.mxu0 0.0
    %1078 = vmatprep.subr.mxu0 0.0
    %1079 = vmatpush1.xpose.msra.mxu0 0.0
    %1080 = vmatprep.subr.mxu0 0.0
    %1081 = vmatpush1.xpose.msra.mxu0 0.0
    %1082 = vmatprep.subr.mxu0 0.0
    %1083 = vmatpush1.xpose.msra.mxu0 0.0
    %1084 = vmatprep.subr.mxu0 0.0
    %1085 = vmatpush1.xpose.msra.mxu0 0.0
    %1086 = vmatprep.subr.mxu0 0.0
    %1087 = vmatpush1.xpose.msra.mxu0 0.0
    %1088 = vmatprep.subr.mxu0 0.0
    %1089 = vmatpush1.xpose.msra.mxu0 0.0
    %1090 = vmatprep.subr.mxu0 0.0
    %1091 = vmatpush1.xpose.msra.mxu0 0.0
    %1092 = vmatprep.subr.mxu0 0.0
    %1093 = vmatpush1.xpose.msra.mxu0 0.0
    %1094 = vmatprep.subr.mxu0 0.0
    %1095 = vmatpush1.xpose.msra.mxu0 0.0
    %1096 = vmatprep.subr.mxu0 0.0
    %1097 = vmatpush1.xpose.msra.mxu0 0.0
    %1098 = vmatprep.subr.mxu0 0.0
    %1099 = vmatpush1.xpose.msra.mxu0 0.0
    %1100 = vmatprep.subr.mxu0 0.0
    %1101 = vmatpush1.xpose.msra.mxu0 0.0
    %1102 = vmatprep.subr.mxu0 0.0
    %1103 = vmatpush1.xpose.msra.mxu0 0.0
    %1104 = vmatprep.subr.mxu0 0.0
    %1105 = vmatpush1.xpose.msra.mxu0 0.0
    %1106 = vmatprep.subr.mxu0 0.0
    %1107 = vmatpush1.xpose.msra.mxu0 0.0
    %1108 = vmatprep.subr.mxu0 0.0
    %1109 = vmatpush1.xpose.msra.mxu0 0.0
    %1110 = vmatprep.subr.mxu0 0.0
    %1111 = vmatpush1.xpose.msra.mxu0 0.0
    %1112 = vmatprep.subr.mxu0 0.0
    %1113 = vmatpush1.xpose.msra.mxu0 0.0
    %1114 = vmatprep.subr.mxu0 0.0
    %1115 = vmatpush1.xpose.msra.mxu0 0.0
    %1116 = vmatprep.subr.mxu0 0.0
    %1117 = vmatpush1.xpose.msra.mxu0 0.0
    %1118 = vmatprep.subr.mxu0 0.0
    %1119 = vmatpush1.xpose.msra.mxu0 0.0
    %1120 = vmatprep.subr.mxu0 0.0
    %1121 = vmatpush1.xpose.msra.mxu0 0.0
    %1122 = vmatprep.subr.mxu0 0.0
    %1123 = vmatpush1.xpose.msra.mxu0 0.0
    %1124 = vmatprep.subr.mxu0 0.0
    %1125 = vmatpush1.xpose.msra.mxu0 0.0
    %1126 = vmatprep.subr.mxu0 0.0
    %1127 = vmatpush1.xpose.msra.mxu0 0.0
    %1128 = vmatprep.mubr.f32.mxu0 0.0
    %1129 = vmatmul.mubr.f32.gmra.mrb[0].mxu0 %v1060
    %v1130 = vpop.f32.mrb[0].mxu0
    %v1131 = vadd.f32 0.0, %v1130
    %v1132 = vpop.f32.mrb[0].mxu0
    %1133 = vdwg.mxu0
    %v1134 = vsel %vm322, %v1053, -inf
    %1135 = vmax.xlane.f32.xlu0 %v1134
    %v1136 = vpop.xlane.xlu0 %1135
    %v1137 = vsel %vm322, %v1131, -inf
    %1138 = vmax.xlane.f32.xlu0 %v1137
    %v1139 = vpop.xlane.xlu0 %1138
    %v1140 = vsub.f32 %v1053, %v1136
    %v1141 = vsub.f32 %v1131, %v1139
    %v1142 = vmul.f32 %v1140, 1.442695
    %v1143 = vpow.pop %v1142
    %v1144 = vmul.f32 %v1141, 1.442695
    %v1145 = vpow.pop %v1144
    %v1146 = vsel %vm322, %v1143, 0.0
    %1147 = vadd.xlane.f32.xlu0 %v1146
    %v1148 = vpop.xlane.xlu0 %1147
    %v1149 = vsel %vm322, %v1145, 0.0
    %1150 = vadd.xlane.f32.xlu0 %v1149
    %v1151 = vpop.xlane.xlu0 %1150
    %v1152 = vrcp.pop %v1148
    %v1153 = vrcp.pop %v1151
    %v1154 = vmul.f32 %v1143, %v1152
    %v1155 = vmul.f32 %v1145, %v1153
    %1156 = vrot.lane.b32.xlu0 %v311, 48
    %v1157 = vpop.permute.xlu0 %1156
    %v1160 = vsel %vm322, %v1154, 0
    %1162 = vmatprep.subr.mxu0 0.0
    %1163 = vmatpush1.msra.mxu0 %v1157
    %1164 = vmatprep.subr.mxu0 0.0
    %1165 = vmatpush1.msra.mxu0 0.0
    %1166 = vmatprep.subr.mxu0 0.0
    %1167 = vmatpush1.msra.mxu0 0.0
    %1168 = vmatprep.subr.mxu0 0.0
    %1169 = vmatpush1.msra.mxu0 0.0
    %1170 = vmatprep.subr.mxu0 0.0
    %1171 = vmatpush1.msra.mxu0 0.0
    %1172 = vmatprep.subr.mxu0 0.0
    %1173 = vmatpush1.msra.mxu0 0.0
    %1174 = vmatprep.subr.mxu0 0.0
    %1175 = vmatpush1.msra.mxu0 0.0
    %1176 = vmatprep.subr.mxu0 0.0
    %1177 = vmatpush1.msra.mxu0 0.0
    %1178 = vmatprep.subr.mxu0 0.0
    %1179 = vmatpush1.msra.mxu0 0.0
    %1180 = vmatprep.subr.mxu0 0.0
    %1181 = vmatpush1.msra.mxu0 0.0
    %1182 = vmatprep.subr.mxu0 0.0
    %1183 = vmatpush1.msra.mxu0 0.0
    %1184 = vmatprep.subr.mxu0 0.0
    %1185 = vmatpush1.msra.mxu0 0.0
    %1186 = vmatprep.subr.mxu0 0.0
    %1187 = vmatpush1.msra.mxu0 0.0
    %1188 = vmatprep.subr.mxu0 0.0
    %1189 = vmatpush1.msra.mxu0 0.0
    %1190 = vmatprep.subr.mxu0 0.0
    %1191 = vmatpush1.msra.mxu0 0.0
    %1192 = vmatprep.subr.mxu0 0.0
    %1193 = vmatpush1.msra.mxu0 0.0
    %1194 = vmatprep.subr.mxu0 0.0
    %1195 = vmatpush1.msra.mxu0 0.0
    %1196 = vmatprep.subr.mxu0 0.0
    %1197 = vmatpush1.msra.mxu0 0.0
    %1198 = vmatprep.subr.mxu0 0.0
    %1199 = vmatpush1.msra.mxu0 0.0
    %1200 = vmatprep.subr.mxu0 0.0
    %1201 = vmatpush1.msra.mxu0 0.0
    %1202 = vmatprep.subr.mxu0 0.0
    %1203 = vmatpush1.msra.mxu0 0.0
    %1204 = vmatprep.subr.mxu0 0.0
    %1205 = vmatpush1.msra.mxu0 0.0
    %1206 = vmatprep.subr.mxu0 0.0
    %1207 = vmatpush1.msra.mxu0 0.0
    %1208 = vmatprep.subr.mxu0 0.0
    %1209 = vmatpush1.msra.mxu0 0.0
    %1210 = vmatprep.subr.mxu0 0.0
    %1211 = vmatpush1.msra.mxu0 0.0
    %1212 = vmatprep.subr.mxu0 0.0
    %1213 = vmatpush1.msra.mxu0 0.0
    %1214 = vmatprep.subr.mxu0 0.0
    %1215 = vmatpush1.msra.mxu0 0.0
    %1216 = vmatprep.subr.mxu0 0.0
    %1217 = vmatpush1.msra.mxu0 0.0
    %1218 = vmatprep.subr.mxu0 0.0
    %1219 = vmatpush1.msra.mxu0 0.0
    %1220 = vmatprep.subr.mxu0 0.0
    %1221 = vmatpush1.msra.mxu0 0.0
    %1222 = vmatprep.subr.mxu0 0.0
    %1223 = vmatpush1.msra.mxu0 0.0
    %1224 = vmatprep.subr.mxu0 0.0
    %1225 = vmatpush1.msra.mxu0 0.0
    %1226 = vmatprep.mubr.f32.mxu0 0.0
    %1227 = vmatmul.mubr.f32.gmra.mrb[0].mxu0 %v1160
    %v1228 = vpop.f32.mrb[0].mxu0
    %v1229 = vadd.f32 0.0, %v1228
    %v1230 = vpop.f32.mrb[0].mxu0
    %1231 = vdwg.mxu0
    %1232 = vrot.lane.b32.xlu0 %v316, 48
    %v1233 = vpop.permute.xlu0 %1232
    %v1236 = vsel %vm322, %v1155, 0
    %1238 = vmatprep.subr.mxu0 0.0
    %1239 = vmatpush1.msra.mxu0 %v1233
    %1240 = vmatprep.subr.mxu0 0.0
    %1241 = vmatpush1.msra.mxu0 0.0
    %1242 = vmatprep.subr.mxu0 0.0
    %1243 = vmatpush1.msra.mxu0 0.0
    %1244 = vmatprep.subr.mxu0 0.0
    %1245 = vmatpush1.msra.mxu0 0.0
    %1246 = vmatprep.subr.mxu0 0.0
    %1247 = vmatpush1.msra.mxu0 0.0
    %1248 = vmatprep.subr.mxu0 0.0
    %1249 = vmatpush1.msra.mxu0 0.0
    %1250 = vmatprep.subr.mxu0 0.0
    %1251 = vmatpush1.msra.mxu0 0.0
    %1252 = vmatprep.subr.mxu0 0.0
    %1253 = vmatpush1.msra.mxu0 0.0
    %1254 = vmatprep.subr.mxu0 0.0
    %1255 = vmatpush1.msra.mxu0 0.0
    %1256 = vmatprep.subr.mxu0 0.0
    %1257 = vmatpush1.msra.mxu0 0.0
    %1258 = vmatprep.subr.mxu0 0.0
    %1259 = vmatpush1.msra.mxu0 0.0
    %1260 = vmatprep.subr.mxu0 0.0
    %1261 = vmatpush1.msra.mxu0 0.0
    %1262 = vmatprep.subr.mxu0 0.0
    %1263 = vmatpush1.msra.mxu0 0.0
    %1264 = vmatprep.subr.mxu0 0.0
    %1265 = vmatpush1.msra.mxu0 0.0
    %1266 = vmatprep.subr.mxu0 0.0
    %1267 = vmatpush1.msra.mxu0 0.0
    %1268 = vmatprep.subr.mxu0 0.0
    %1269 = vmatpush1.msra.mxu0 0.0
    %1270 = vmatprep.subr.mxu0 0.0
    %1271 = vmatpush1.msra.mxu0 0.0
    %1272 = vmatprep.subr.mxu0 0.0
    %1273 = vmatpush1.msra.mxu0 0.0
    %1274 = vmatprep.subr.mxu0 0.0
    %1275 = vmatpush1.msra.mxu0 0.0
    %1276 = vmatprep.subr.mxu0 0.0
    %1277 = vmatpush1.msra.mxu0 0.0
    %1278 = vmatprep.subr.mxu0 0.0
    %1279 = vmatpush1.msra.mxu0 0.0
    %1280 = vmatprep.subr.mxu0 0.0
    %1281 = vmatpush1.msra.mxu0 0.0
    %1282 = vmatprep.subr.mxu0 0.0
    %1283 = vmatpush1.msra.mxu0 0.0
    %1284 = vmatprep.subr.mxu0 0.0
    %1285 = vmatpush1.msra.mxu0 0.0
    %1286 = vmatprep.subr.mxu0 0.0
    %1287 = vmatpush1.msra.mxu0 0.0
    %1288 = vmatprep.subr.mxu0 0.0
    %1289 = vmatpush1.msra.mxu0 0.0
    %1290 = vmatprep.subr.mxu0 0.0
    %1291 = vmatpush1.msra.mxu0 0.0
    %1292 = vmatprep.subr.mxu0 0.0
    %1293 = vmatpush1.msra.mxu0 0.0
    %1294 = vmatprep.subr.mxu0 0.0
    %1295 = vmatpush1.msra.mxu0 0.0
    %1296 = vmatprep.subr.mxu0 0.0
    %1297 = vmatpush1.msra.mxu0 0.0
    %1298 = vmatprep.subr.mxu0 0.0
    %1299 = vmatpush1.msra.mxu0 0.0
    %1300 = vmatprep.subr.mxu0 0.0
    %1301 = vmatpush1.msra.mxu0 0.0
    %1302 = vmatprep.mubr.f32.mxu0 0.0
    %1303 = vmatmul.mubr.f32.gmra.mrb[0].mxu0 %v1236
    %v1304 = vpop.f32.mrb[0].mxu0
    %v1305 = vadd.f32 0.0, %v1304
    %v1306 = vpop.f32.mrb[0].mxu0
    %1307 = vdwg.mxu0
    %1308 = vrot.lane.b32.xlu0 %v311, 104
    %v1309 = vpop.permute.xlu0 %1308
    %1310 = vrot.lane.b32.xlu0 %v311, 72
    %v1311 = vpop.permute.xlu0 %1310
    %v1312 = vsel %vm322, %v1309, 0
    %v1314 = vsel %vm322, %v1311, 0
    %1316 = vmatprep.subr.mxu0 0.0
    %1317 = vmatpush1.xpose.msra.mxu0 %v1314
    %1318 = vmatprep.subr.mxu0 0.0
    %1319 = vmatpush1.xpose.msra.mxu0 0.0
    %1320 = vmatprep.subr.mxu0 0.0
    %1321 = vmatpush1.xpose.msra.mxu0 0.0
    %1322 = vmatprep.subr.mxu0 0.0
    %1323 = vmatpush1.xpose.msra.mxu0 0.0
    %1324 = vmatprep.subr.mxu0 0.0
    %1325 = vmatpush1.xpose.msra.mxu0 0.0
    %1326 = vmatprep.subr.mxu0 0.0
    %1327 = vmatpush1.xpose.msra.mxu0 0.0
    %1328 = vmatprep.subr.mxu0 0.0
    %1329 = vmatpush1.xpose.msra.mxu0 0.0
    %1330 = vmatprep.subr.mxu0 0.0
    %1331 = vmatpush1.xpose.msra.mxu0 0.0
    %1332 = vmatprep.subr.mxu0 0.0
    %1333 = vmatpush1.xpose.msra.mxu0 0.0
    %1334 = vmatprep.subr.mxu0 0.0
    %1335 = vmatpush1.xpose.msra.mxu0 0.0
    %1336 = vmatprep.subr.mxu0 0.0
    %1337 = vmatpush1.xpose.msra.mxu0 0.0
    %1338 = vmatprep.subr.mxu0 0.0
    %1339 = vmatpush1.xpose.msra.mxu0 0.0
    %1340 = vmatprep.subr.mxu0 0.0
    %1341 = vmatpush1.xpose.msra.mxu0 0.0
    %1342 = vmatprep.subr.mxu0 0.0
    %1343 = vmatpush1.xpose.msra.mxu0 0.0
    %1344 = vmatprep.subr.mxu0 0.0
    %1345 = vmatpush1.xpose.msra.mxu0 0.0
    %1346 = vmatprep.subr.mxu0 0.0
    %1347 = vmatpush1.xpose.msra.mxu0 0.0
    %1348 = vmatprep.subr.mxu0 0.0
    %1349 = vmatpush1.xpose.msra.mxu0 0.0
    %1350 = vmatprep.subr.mxu0 0.0
    %1351 = vmatpush1.xpose.msra.mxu0 0.0
    %1352 = vmatprep.subr.mxu0 0.0
    %1353 = vmatpush1.xpose.msra.mxu0 0.0
    %1354 = vmatprep.subr.mxu0 0.0
    %1355 = vmatpush1.xpose.msra.mxu0 0.0
    %1356 = vmatprep.subr.mxu0 0.0
    %1357 = vmatpush1.xpose.msra.mxu0 0.0
    %1358 = vmatprep.subr.mxu0 0.0
    %1359 = vmatpush1.xpose.msra.mxu0 0.0
    %1360 = vmatprep.subr.mxu0 0.0
    %1361 = vmatpush1.xpose.msra.mxu0 0.0
    %1362 = vmatprep.subr.mxu0 0.0
    %1363 = vmatpush1.xpose.msra.mxu0 0.0
    %1364 = vmatprep.subr.mxu0 0.0
    %1365 = vmatpush1.xpose.msra.mxu0 0.0
    %1366 = vmatprep.subr.mxu0 0.0
    %1367 = vmatpush1.xpose.msra.mxu0 0.0
    %1368 = vmatprep.subr.mxu0 0.0
    %1369 = vmatpush1.xpose.msra.mxu0 0.0
    %1370 = vmatprep.subr.mxu0 0.0
    %1371 = vmatpush1.xpose.msra.mxu0 0.0
    %1372 = vmatprep.subr.mxu0 0.0
    %1373 = vmatpush1.xpose.msra.mxu0 0.0
    %1374 = vmatprep.subr.mxu0 0.0
    %1375 = vmatpush1.xpose.msra.mxu0 0.0
    %1376 = vmatprep.subr.mxu0 0.0
    %1377 = vmatpush1.xpose.msra.mxu0 0.0
    %1378 = vmatprep.subr.mxu0 0.0
    %1379 = vmatpush1.xpose.msra.mxu0 0.0
    %1380 = vmatprep.mubr.f32.mxu0 0.0
    %1381 = vmatmul.mubr.f32.gmra.mrb[0].mxu0 %v1312
    %v1382 = vpop.f32.mrb[0].mxu0
    %v1383 = vadd.f32 0.0, %v1382
    %v1384 = vpop.f32.mrb[0].mxu0
    %1385 = vdwg.mxu0
    %1386 = vrot.lane.b32.xlu0 %v316, 104
    %v1387 = vpop.permute.xlu0 %1386
    %1388 = vrot.lane.b32.xlu0 %v316, 72
    %v1389 = vpop.permute.xlu0 %1388
    %v1390 = vsel %vm322, %v1387, 0
    %v1392 = vsel %vm322, %v1389, 0
    %1394 = vmatprep.subr.mxu0 0.0
    %1395 = vmatpush1.xpose.msra.mxu0 %v1392
    %1396 = vmatprep.subr.mxu0 0.0
    %1397 = vmatpush1.xpose.msra.mxu0 0.0
    %1398 = vmatprep.subr.mxu0 0.0
    %1399 = vmatpush1.xpose.msra.mxu0 0.0
    %1400 = vmatprep.subr.mxu0 0.0
    %1401 = vmatpush1.xpose.msra.mxu0 0.0
    %1402 = vmatprep.subr.mxu0 0.0
    %1403 = vmatpush1.xpose.msra.mxu0 0.0
    %1404 = vmatprep.subr.mxu0 0.0
    %1405 = vmatpush1.xpose.msra.mxu0 0.0
    %1406 = vmatprep.subr.mxu0 0.0
    %1407 = vmatpush1.xpose.msra.mxu0 0.0
    %1408 = vmatprep.subr.mxu0 0.0
    %1409 = vmatpush1.xpose.msra.mxu0 0.0
    %1410 = vmatprep.subr.mxu0 0.0
    %1411 = vmatpush1.xpose.msra.mxu0 0.0
    %1412 = vmatprep.subr.mxu0 0.0
    %1413 = vmatpush1.xpose.msra.mxu0 0.0
    %1414 = vmatprep.subr.mxu0 0.0
    %1415 = vmatpush1.xpose.msra.mxu0 0.0
    %1416 = vmatprep.subr.mxu0 0.0
    %1417 = vmatpush1.xpose.msra.mxu0 0.0
    %1418 = vmatprep.subr.mxu0 0.0
    %1419 = vmatpush1.xpose.msra.mxu0 0.0
    %1420 = vmatprep.subr.mxu0 0.0
    %1421 = vmatpush1.xpose.msra.mxu0 0.0
    %1422 = vmatprep.subr.mxu0 0.0
    %1423 = vmatpush1.xpose.msra.mxu0 0.0
    %1424 = vmatprep.subr.mxu0 0.0
    %1425 = vmatpush1.xpose.msra.mxu0 0.0
    %1426 = vmatprep.subr.mxu0 0.0
    %1427 = vmatpush1.xpose.msra.mxu0 0.0
    %1428 = vmatprep.subr.mxu0 0.0
    %1429 = vmatpush1.xpose.msra.mxu0 0.0
    %1430 = vmatprep.subr.mxu0 0.0
    %1431 = vmatpush1.xpose.msra.mxu0 0.0
    %1432 = vmatprep.subr.mxu0 0.0
    %1433 = vmatpush1.xpose.msra.mxu0 0.0
    %1434 = vmatprep.subr.mxu0 0.0
    %1435 = vmatpush1.xpose.msra.mxu0 0.0
    %1436 = vmatprep.subr.mxu0 0.0
    %1437 = vmatpush1.xpose.msra.mxu0 0.0
    %1438 = vmatprep.subr.mxu0 0.0
    %1439 = vmatpush1.xpose.msra.mxu0 0.0
    %1440 = vmatprep.subr.mxu0 0.0
    %1441 = vmatpush1.xpose.msra.mxu0 0.0
    %1442 = vmatprep.subr.mxu0 0.0
    %1443 = vmatpush1.xpose.msra.mxu0 0.0
    %1444 = vmatprep.subr.mxu0 0.0
    %1445 = vmatpush1.xpose.msra.mxu0 0.0
    %1446 = vmatprep.subr.mxu0 0.0
    %1447 = vmatpush1.xpose.msra.mxu0 0.0
    %1448 = vmatprep.subr.mxu0 0.0
    %1449 = vmatpush1.xpose.msra.mxu0 0.0
    %1450 = vmatprep.subr.mxu0 0.0
    %1451 = vmatpush1.xpose.msra.mxu0 0.0
    %1452 = vmatprep.subr.mxu0 0.0
    %1453 = vmatpush1.xpose.msra.mxu0 0.0
    %1454 = vmatprep.subr.mxu0 0.0
    %1455 = vmatpush1.xpose.msra.mxu0 0.0
    %1456 = vmatprep.subr.mxu0 0.0
    %1457 = vmatpush1.xpose.msra.mxu0 0.0
    %1458 = vmatprep.mubr.f32.mxu0 0.0
    %1459 = vmatmul.mubr.f32.gmra.mrb[0].mxu0 %v1390
    %v1460 = vpop.f32.mrb[0].mxu0
    %v1461 = vadd.f32 0.0, %v1460
    %v1462 = vpop.f32.mrb[0].mxu0
    %1463 = vdwg.mxu0
    %v1464 = vsel %vm322, %v1383, -inf
    %1465 = vmax.xlane.f32.xlu0 %v1464
    %v1466 = vpop.xlane.xlu0 %1465
    %v1467 = vsel %vm322, %v1461, -inf
    %1468 = vmax.xlane.f32.xlu0 %v1467
    %v1469 = vpop.xlane.xlu0 %1468
    %v1470 = vsub.f32 %v1383, %v1466
    %v1471 = vsub.f32 %v1461, %v1469
    %v1472 = vmul.f32 %v1470, 1.442695
    %v1473 = vpow.pop %v1472
    %v1474 = vmul.f32 %v1471, 1.442695
    %v1475 = vpow.pop %v1474
    %v1476 = vsel %vm322, %v1473, 0.0
    %1477 = vadd.xlane.f32.xlu0 %v1476
    %v1478 = vpop.xlane.xlu0 %1477
    %v1479 = vsel %vm322, %v1475, 0.0
    %1480 = vadd.xlane.f32.xlu0 %v1479
    %v1481 = vpop.xlane.xlu0 %1480
    %v1482 = vrcp.pop %v1478
    %v1483 = vrcp.pop %v1481
    %v1484 = vmul.f32 %v1473, %v1482
    %v1485 = vmul.f32 %v1475, %v1483
    %1486 = vrot.lane.b32.xlu0 %v311, 40
    %v1487 = vpop.permute.xlu0 %1486
    %v1490 = vsel %vm322, %v1484, 0
    %1492 = vmatprep.subr.mxu0 0.0
    %1493 = vmatpush1.msra.mxu0 %v1487
    %1494 = vmatprep.subr.mxu0 0.0
    %1495 = vmatpush1.msra.mxu0 0.0
    %1496 = vmatprep.subr.mxu0 0.0
    %1497 = vmatpush1.msra.mxu0 0.0
    %1498 = vmatprep.subr.mxu0 0.0
    %1499 = vmatpush1.msra.mxu0 0.0
    %1500 = vmatprep.subr.mxu0 0.0
    %1501 = vmatpush1.msra.mxu0 0.0
    %1502 = vmatprep.subr.mxu0 0.0
    %1503 = vmatpush1.msra.mxu0 0.0
    %1504 = vmatprep.subr.mxu0 0.0
    %1505 = vmatpush1.msra.mxu0 0.0
    %1506 = vmatprep.subr.mxu0 0.0
    %1507 = vmatpush1.msra.mxu0 0.0
    %1508 = vmatprep.subr.mxu0 0.0
    %1509 = vmatpush1.msra.mxu0 0.0
    %1510 = vmatprep.subr.mxu0 0.0
    %1511 = vmatpush1.msra.mxu0 0.0
    %1512 = vmatprep.subr.mxu0 0.0
    %1513 = vmatpush1.msra.mxu0 0.0
    %1514 = vmatprep.subr.mxu0 0.0
    %1515 = vmatpush1.msra.mxu0 0.0
    %1516 = vmatprep.subr.mxu0 0.0
    %1517 = vmatpush1.msra.mxu0 0.0
    %1518 = vmatprep.subr.mxu0 0.0
    %1519 = vmatpush1.msra.mxu0 0.0
    %1520 = vmatprep.subr.mxu0 0.0
    %1521 = vmatpush1.msra.mxu0 0.0
    %1522 = vmatprep.subr.mxu0 0.0
    %1523 = vmatpush1.msra.mxu0 0.0
    %1524 = vmatprep.subr.mxu0 0.0
    %1525 = vmatpush1.msra.mxu0 0.0
    %1526 = vmatprep.subr.mxu0 0.0
    %1527 = vmatpush1.msra.mxu0 0.0
    %1528 = vmatprep.subr.mxu0 0.0
    %1529 = vmatpush1.msra.mxu0 0.0
    %1530 = vmatprep.subr.mxu0 0.0
    %1531 = vmatpush1.msra.mxu0 0.0
    %1532 = vmatprep.subr.mxu0 0.0
    %1533 = vmatpush1.msra.mxu0 0.0
    %1534 = vmatprep.subr.mxu0 0.0
    %1535 = vmatpush1.msra.mxu0 0.0
    %1536 = vmatprep.subr.mxu0 0.0
    %1537 = vmatpush1.msra.mxu0 0.0
    %1538 = vmatprep.subr.mxu0 0.0
    %1539 = vmatpush1.msra.mxu0 0.0
    %1540 = vmatprep.subr.mxu0 0.0
    %1541 = vmatpush1.msra.mxu0 0.0
    %1542 = vmatprep.subr.mxu0 0.0
    %1543 = vmatpush1.msra.mxu0 0.0
    %1544 = vmatprep.subr.mxu0 0.0
    %1545 = vmatpush1.msra.mxu0 0.0
    %1546 = vmatprep.subr.mxu0 0.0
    %1547 = vmatpush1.msra.mxu0 0.0
    %1548 = vmatprep.subr.mxu0 0.0
    %1549 = vmatpush1.msra.mxu0 0.0
    %1550 = vmatprep.subr.mxu0 0.0
    %1551 = vmatpush1.msra.mxu0 0.0
    %1552 = vmatprep.subr.mxu0 0.0
    %1553 = vmatpush1.msra.mxu0 0.0
    %1554 = vmatprep.subr.mxu0 0.0
    %1555 = vmatpush1.msra.mxu0 0.0
    %1556 = vmatprep.mubr.f32.mxu0 0.0
    %1557 = vmatmul.mubr.f32.gmra.mrb[0].mxu0 %v1490
    %v1558 = vpop.f32.mrb[0].mxu0
    %v1559 = vadd.f32 0.0, %v1558
    %v1560 = vpop.f32.mrb[0].mxu0
    %1561 = vdwg.mxu0
    %1562 = vrot.lane.b32.xlu0 %v316, 40
    %v1563 = vpop.permute.xlu0 %1562
    %v1566 = vsel %vm322, %v1485, 0
    %1568 = vmatprep.subr.mxu0 0.0
    %1569 = vmatpush1.msra.mxu0 %v1563
    %1570 = vmatprep.subr.mxu0 0.0
    %1571 = vmatpush1.msra.mxu0 0.0
    %1572 = vmatprep.subr.mxu0 0.0
    %1573 = vmatpush1.msra.mxu0 0.0
    %1574 = vmatprep.subr.mxu0 0.0
    %1575 = vmatpush1.msra.mxu0 0.0
    %1576 = vmatprep.subr.mxu0 0.0
    %1577 = vmatpush1.msra.mxu0 0.0
    %1578 = vmatprep.subr.mxu0 0.0
    %1579 = vmatpush1.msra.mxu0 0.0
    %1580 = vmatprep.subr.mxu0 0.0
    %1581 = vmatpush1.msra.mxu0 0.0
    %1582 = vmatprep.subr.mxu0 0.0
    %1583 = vmatpush1.msra.mxu0 0.0
    %1584 = vmatprep.subr.mxu0 0.0
    %1585 = vmatpush1.msra.mxu0 0.0
    %1586 = vmatprep.subr.mxu0 0.0
    %1587 = vmatpush1.msra.mxu0 0.0
    %1588 = vmatprep.subr.mxu0 0.0
    %1589 = vmatpush1.msra.mxu0 0.0
    %1590 = vmatprep.subr.mxu0 0.0
    %1591 = vmatpush1.msra.mxu0 0.0
    %1592 = vmatprep.subr.mxu0 0.0
    %1593 = vmatpush1.msra.mxu0 0.0
    %1594 = vmatprep.subr.mxu0 0.0
    %1595 = vmatpush1.msra.mxu0 0.0
    %1596 = vmatprep.subr.mxu0 0.0
    %1597 = vmatpush1.msra.mxu0 0.0
    %1598 = vmatprep.subr.mxu0 0.0
    %1599 = vmatpush1.msra.mxu0 0.0
    %1600 = vmatprep.subr.mxu0 0.0
    %1601 = vmatpush1.msra.mxu0 0.0
    %1602 = vmatprep.subr.mxu0 0.0
    %1603 = vmatpush1.msra.mxu0 0.0
    %1604 = vmatprep.subr.mxu0 0.0
    %1605 = vmatpush1.msra.mxu0 0.0
    %1606 = vmatprep.subr.mxu0 0.0
    %1607 = vmatpush1.msra.mxu0 0.0
    %1608 = vmatprep.subr.mxu0 0.0
    %1609 = vmatpush1.msra.mxu0 0.0
    %1610 = vmatprep.subr.mxu0 0.0
    %1611 = vmatpush1.msra.mxu0 0.0
    %1612 = vmatprep.subr.mxu0 0.0
    %1613 = vmatpush1.msra.mxu0 0.0
    %1614 = vmatprep.subr.mxu0 0.0
    %1615 = vmatpush1.msra.mxu0 0.0
    %1616 = vmatprep.subr.mxu0 0.0
    %1617 = vmatpush1.msra.mxu0 0.0
    %1618 = vmatprep.subr.mxu0 0.0
    %1619 = vmatpush1.msra.mxu0 0.0
    %1620 = vmatprep.subr.mxu0 0.0
    %1621 = vmatpush1.msra.mxu0 0.0
    %1622 = vmatprep.subr.mxu0 0.0
    %1623 = vmatpush1.msra.mxu0 0.0
    %1624 = vmatprep.subr.mxu0 0.0
    %1625 = vmatpush1.msra.mxu0 0.0
    %1626 = vmatprep.subr.mxu0 0.0
    %1627 = vmatpush1.msra.mxu0 0.0
    %1628 = vmatprep.subr.mxu0 0.0
    %1629 = vmatpush1.msra.mxu0 0.0
    %1630 = vmatprep.subr.mxu0 0.0
    %1631 = vmatpush1.msra.mxu0 0.0
    %1632 = vmatprep.mubr.f32.mxu0 0.0
    %1633 = vmatmul.mubr.f32.gmra.mrb[0].mxu0 %v1566
    %v1634 = vpop.f32.mrb[0].mxu0
    %v1635 = vadd.f32 0.0, %v1634
    %v1636 = vpop.f32.mrb[0].mxu0
    %1637 = vdwg.mxu0
    %1640 = vrot.lane.b32.xlu0 %v899, 8
    %v1641 = vpop.permute.xlu0 %1640
    %1642 = vrot.lane.b32.xlu0 %v975, 8
    %v1643 = vpop.permute.xlu0 %1642
    %1648 = vrot.lane.b32.xlu0 %v1229, 16
    %v1649 = vpop.permute.xlu0 %1648
    %1650 = vrot.lane.b32.xlu0 %v1305, 16
    %v1651 = vpop.permute.xlu0 %1650
    %1656 = vrot.lane.b32.xlu0 %v1559, 24
    %v1657 = vpop.permute.xlu0 %1656
    %1658 = vrot.lane.b32.xlu0 %v1635, 24
    %v1659 = vpop.permute.xlu0 %1658
    %v1662 = vsel %vm322, %v569, %v1641
    %v1663 = vsel %vm322, %v645, %v1643
    %vm1664 = vcmask 130048
    %v1665 = vsel %vm1664, %v1662, %v1649
    %v1666 = vsel %vm1664, %v1663, %v1651
    %vm1667 = vcmask 195584
    %v1668 = vsel %vm1667, %v1665, %v1657
    %v1669 = vsel %vm1667, %v1666, %v1659
    %v1670 = vld [vmem:[#allocation4] sm:$0xff]
    %v1671 = vld [vmem:[#allocation4 + $0x8] sm:$0xff]
    %v1672 = vld [vmem:[#allocation4 + $0x10] sm:$0xff]
    %v1673 = vld [vmem:[#allocation4 + $0x18] sm:$0xff]
    %v1674 = vld [vmem:[%s7] sm:$0x1]
    %v1676 = vlaneseq
    %v1677 = vshrl.u32 %v1676, 7
    %v1678 = vsub.s32 0, %v1677
    %v1679 = vrot.slane %v1674, %v1678
    %v1682 = vsel %vm237, %v1668, 0
    %v1685 = vsel %vm237, %v1669, 0
    %1687 = vmatprep.subr.mxu0 0.0
    %1688 = vmatpush1.msra.mxu0 %v1670
    %1689 = vmatprep.subr.mxu0 0.0
    %1690 = vmatpush1.msra.mxu0 %v1671
    %1691 = vmatprep.subr.mxu0 0.0
    %1692 = vmatpush1.msra.mxu0 %v1672
    %1693 = vmatprep.subr.mxu0 0.0
    %1694 = vmatpush1.msra.mxu0 %v1673
    %1695 = vmatprep.subr.mxu0 0.0
    %1696 = vmatpush1.msra.mxu0 0.0
    %1697 = vmatprep.subr.mxu0 0.0
    %1698 = vmatpush1.msra.mxu0 0.0
    %1699 = vmatprep.subr.mxu0 0.0
    %1700 = vmatpush1.msra.mxu0 0.0
    %1701 = vmatprep.subr.mxu0 0.0
    %1702 = vmatpush1.msra.mxu0 0.0
    %1703 = vmatprep.subr.mxu0 0.0
    %1704 = vmatpush1.msra.mxu0 0.0
    %1705 = vmatprep.subr.mxu0 0.0
    %1706 = vmatpush1.msra.mxu0 0.0
    %1707 = vmatprep.subr.mxu0 0.0
    %1708 = vmatpush1.msra.mxu0 0.0
    %1709 = vmatprep.subr.mxu0 0.0
    %1710 = vmatpush1.msra.mxu0 0.0
    %1711 = vmatprep.subr.mxu0 0.0
    %1712 = vmatpush1.msra.mxu0 0.0
    %1713 = vmatprep.subr.mxu0 0.0
    %1714 = vmatpush1.msra.mxu0 0.0
    %1715 = vmatprep.subr.mxu0 0.0
    %1716 = vmatpush1.msra.mxu0 0.0
    %1717 = vmatprep.subr.mxu0 0.0
    %1718 = vmatpush1.msra.mxu0 0.0
    %1719 = vmatprep.subr.mxu0 0.0
    %1720 = vmatpush1.msra.mxu0 0.0
    %1721 = vmatprep.subr.mxu0 0.0
    %1722 = vmatpush1.msra.mxu0 0.0
    %1723 = vmatprep.subr.mxu0 0.0
    %1724 = vmatpush1.msra.mxu0 0.0
    %1725 = vmatprep.subr.mxu0 0.0
    %1726 = vmatpush1.msra.mxu0 0.0
    %1727 = vmatprep.subr.mxu0 0.0
    %1728 = vmatpush1.msra.mxu0 0.0
    %1729 = vmatprep.subr.mxu0 0.0
    %1730 = vmatpush1.msra.mxu0 0.0
    %1731 = vmatprep.subr.mxu0 0.0
    %1732 = vmatpush1.msra.mxu0 0.0
    %1733 = vmatprep.subr.mxu0 0.0
    %1734 = vmatpush1.msra.mxu0 0.0
    %1735 = vmatprep.subr.mxu0 0.0
    %1736 = vmatpush1.msra.mxu0 0.0
    %1737 = vmatprep.subr.mxu0 0.0
    %1738 = vmatpush1.msra.mxu0 0.0
    %1739 = vmatprep.subr.mxu0 0.0
    %1740 = vmatpush1.msra.mxu0 0.0
    %1741 = vmatprep.subr.mxu0 0.0
    %1742 = vmatpush1.msra.mxu0 0.0
    %1743 = vmatprep.subr.mxu0 0.0
    %1744 = vmatpush1.msra.mxu0 0.0
    %1745 = vmatprep.subr.mxu0 0.0
    %1746 = vmatpush1.msra.mxu0 0.0
    %1747 = vmatprep.subr.mxu0 0.0
    %1748 = vmatpush1.msra.mxu0 0.0
    %1749 = vmatprep.subr.mxu0 0.0
    %1750 = vmatpush1.msra.mxu0 0.0
    %1751 = vmatprep.mubr.f32.mxu0 0.0
    %1752 = vmatmul.mubr.f32.gmra.mrb[0].mxu0 %v1682
    %v1753 = vpop.f32.mrb[0].mxu0
    %v1754 = vadd.f32 %v1679, %v1753
    %v1755 = vpop.f32.mrb[0].mxu0
    %1756 = vmatprep.mubr.f32.mxu0 0.0
    %1757 = vmatmul.mubr.f32.gmra.mrb[0].mxu0 %v1685
    %v1758 = vpop.f32.mrb[0].mxu0
    %v1759 = vadd.f32 %v1679, %v1758
    %v1760 = vpop.f32.mrb[0].mxu0
    %1761 = vdwg.mxu0
    %v1762 = vadd.f32 %v224, %v1754
    %v1763 = vadd.f32 %v225, %v1759
    %v1764 = vld [vmem:[%s12] sm:$0x1]
    %v1765 = vld [vmem:[%s13] sm:$0x1]
    %v1766 = vsel %vm237, %v1762, 0.0
    %1767 = vadd.xlane.f32.xlu0 %v1766
    %v1768 = vpop.xlane.xlu0 %1767
    %v1769 = vsel %vm237, %v1763, 0.0
    %1770 = vadd.xlane.f32.xlu0 %v1769
    %v1771 = vpop.xlane.xlu0 %1770
    %v1772 = vrcp.pop 32.0
    %v1773 = vmul.f32 %v1768, %v1772
    %v1774 = vmul.f32 %v1771, %v1772
    %v1775 = vsub.f32 %v1762, %v1773
    %v1776 = vsub.f32 %v1763, %v1774
    %v1777 = vmul.f32 %v1775, %v1775
    %v1778 = vmul.f32 %v1776, %v1776
    %v1779 = vsel %vm237, %v1777, 0.0
    %1780 = vadd.xlane.f32.xlu0 %v1779
    %v1781 = vpop.xlane.xlu0 %1780
    %v1782 = vsel %vm237, %v1778, 0.0
    %1783 = vadd.xlane.f32.xlu0 %v1782
    %v1784 = vpop.xlane.xlu0 %1783
    %v1785 = vmul.f32 %v1781, %v1772
    %v1786 = vmul.f32 %v1784, %v1772
    %v1787 = vadd.f32 %v1785, 1e-05
    %v1788 = vadd.f32 %v1786, 1e-05
    %v1789 = vrsqrt.pop %v1787
    %v1790 = vrsqrt.pop %v1788
    %v1791 = vmul.f32 %v1775, %v1789
    %v1792 = vmul.f32 %v1776, %v1790
    %v1794 = vlaneseq
    %v1795 = vshrl.u32 %v1794, 7
    %v1796 = vsub.s32 0, %v1795
    %v1797 = vrot.slane %v1764, %v1796
    %v1799 = vmul.f32 %v1791, %v1797
    %v1800 = vmul.f32 %v1792, %v1797
    %v1802 = vlaneseq
    %v1803 = vshrl.u32 %v1802, 7
    %v1804 = vsub.s32 0, %v1803
    %v1805 = vrot.slane %v1765, %v1804
    %v1807 = vadd.f32 %v1799, %v1805
    %v1808 = vadd.f32 %v1800, %v1805
    %v1809 = vld [vmem:[#allocation6] sm:$0xff]
    %v1810 = vld [vmem:[#allocation6 + $0x8] sm:$0xff]
    %v1811 = vld [vmem:[#allocation6 + $0x10] sm:$0xff]
    %v1812 = vld [vmem:[#allocation6 + $0x18] sm:$0xff]
    %v1813 = vld [vmem:[%s9] sm:$0x1]
    %v1815 = vlaneseq
    %v1816 = vshrl.u32 %v1815, 7
    %v1817 = vsub.s32 0, %v1816
    %v1818 = vrot.slane %v1813, %v1817
    %v1821 = vsel %vm237, %v1807, 0
    %v1824 = vsel %vm237, %v1808, 0
    %1826 = vmatprep.subr.mxu0 0.0
    %1827 = vmatpush1.msra.mxu0 %v1809
    %1828 = vmatprep.subr.mxu0 0.0
    %1829 = vmatpush1.msra.mxu0 %v1810
    %1830 = vmatprep.subr.mxu0 0.0
    %1831 = vmatpush1.msra.mxu0 %v1811
    %1832 = vmatprep.subr.mxu0 0.0
    %1833 = vmatpush1.msra.mxu0 %v1812
    %1834 = vmatprep.subr.mxu0 0.0
    %1835 = vmatpush1.msra.mxu0 0.0
    %1836 = vmatprep.subr.mxu0 0.0
    %1837 = vmatpush1.msra.mxu0 0.0
    %1838 = vmatprep.subr.mxu0 0.0
    %1839 = vmatpush1.msra.mxu0 0.0
    %1840 = vmatprep.subr.mxu0 0.0
    %1841 = vmatpush1.msra.mxu0 0.0
    %1842 = vmatprep.subr.mxu0 0.0
    %1843 = vmatpush1.msra.mxu0 0.0
    %1844 = vmatprep.subr.mxu0 0.0
    %1845 = vmatpush1.msra.mxu0 0.0
    %1846 = vmatprep.subr.mxu0 0.0
    %1847 = vmatpush1.msra.mxu0 0.0
    %1848 = vmatprep.subr.mxu0 0.0
    %1849 = vmatpush1.msra.mxu0 0.0
    %1850 = vmatprep.subr.mxu0 0.0
    %1851 = vmatpush1.msra.mxu0 0.0
    %1852 = vmatprep.subr.mxu0 0.0
    %1853 = vmatpush1.msra.mxu0 0.0
    %1854 = vmatprep.subr.mxu0 0.0
    %1855 = vmatpush1.msra.mxu0 0.0
    %1856 = vmatprep.subr.mxu0 0.0
    %1857 = vmatpush1.msra.mxu0 0.0
    %1858 = vmatprep.subr.mxu0 0.0
    %1859 = vmatpush1.msra.mxu0 0.0
    %1860 = vmatprep.subr.mxu0 0.0
    %1861 = vmatpush1.msra.mxu0 0.0
    %1862 = vmatprep.subr.mxu0 0.0
    %1863 = vmatpush1.msra.mxu0 0.0
    %1864 = vmatprep.subr.mxu0 0.0
    %1865 = vmatpush1.msra.mxu0 0.0
    %1866 = vmatprep.subr.mxu0 0.0
    %1867 = vmatpush1.msra.mxu0 0.0
    %1868 = vmatprep.subr.mxu0 0.0
    %1869 = vmatpush1.msra.mxu0 0.0
    %1870 = vmatprep.subr.mxu0 0.0
    %1871 = vmatpush1.msra.mxu0 0.0
    %1872 = vmatprep.subr.mxu0 0.0
    %1873 = vmatpush1.msra.mxu0 0.0
    %1874 = vmatprep.subr.mxu0 0.0
    %1875 = vmatpush1.msra.mxu0 0.0
    %1876 = vmatprep.subr.mxu0 0.0
    %1877 = vmatpush1.msra.mxu0 0.0
    %1878 = vmatprep.subr.mxu0 0.0
    %1879 = vmatpush1.msra.mxu0 0.0
    %1880 = vmatprep.subr.mxu0 0.0
    %1881 = vmatpush1.msra.mxu0 0.0
    %1882 = vmatprep.subr.mxu0 0.0
    %1883 = vmatpush1.msra.mxu0 0.0
    %1884 = vmatprep.subr.mxu0 0.0
    %1885 = vmatpush1.msra.mxu0 0.0
    %1886 = vmatprep.subr.mxu0 0.0
    %1887 = vmatpush1.msra.mxu0 0.0
    %1888 = vmatprep.subr.mxu0 0.0
    %1889 = vmatpush1.msra.mxu0 0.0
    %1890 = vmatprep.mubr.f32.mxu0 0.0
    %1891 = vmatmul.mubr.f32.gmra.mrb[0].mxu0 %v1821
    %v1892 = vpop.f32.mrb[0].mxu0
    %v1893 = vadd.f32 %v1818, %v1892
    %v1894 = vpop.f32.mrb[0].mxu0
    %1895 = vmatprep.mubr.f32.mxu0 0.0
    %1896 = vmatmul.mubr.f32.gmra.mrb[0].mxu0 %v1824
    %v1897 = vpop.f32.mrb[0].mxu0
    %v1898 = vadd.f32 %v1818, %v1897
    %v1899 = vpop.f32.mrb[0].mxu0
    %1900 = vdwg.mxu0
    %v1901 = vmax.f32 %v1893, 0.0
    %v1902 = vmax.f32 %v1898, 0.0
    %v1903 = vld [vmem:[#allocation7] sm:$0xff]
    %v1904 = vld [vmem:[#allocation7 + $0x8] sm:$0xff]
    %v1905 = vld [vmem:[#allocation7 + $0x10] sm:$0xff]
    %v1906 = vld [vmem:[#allocation7 + $0x18] sm:$0xff]
    %v1907 = vld [vmem:[%s11] sm:$0x1]
    %v1909 = vlaneseq
    %v1910 = vshrl.u32 %v1909, 7
    %v1911 = vsub.s32 0, %v1910
    %v1912 = vrot.slane %v1907, %v1911
    %v1915 = vsel %vm237, %v1901, 0
    %v1918 = vsel %vm237, %v1902, 0
    %1920 = vmatprep.subr.mxu0 0.0
    %1921 = vmatpush1.msra.mxu0 %v1903
    %1922 = vmatprep.subr.mxu0 0.0
    %1923 = vmatpush1.msra.mxu0 %v1904
    %1924 = vmatprep.subr.mxu0 0.0
    %1925 = vmatpush1.msra.mxu0 %v1905
    %1926 = vmatprep.subr.mxu0 0.0
    %1927 = vmatpush1.msra.mxu0 %v1906
    %1928 = vmatprep.subr.mxu0 0.0
    %1929 = vmatpush1.msra.mxu0 0.0
    %1930 = vmatprep.subr.mxu0 0.0
    %1931 = vmatpush1.msra.mxu0 0.0
    %1932 = vmatprep.subr.mxu0 0.0
    %1933 = vmatpush1.msra.mxu0 0.0
    %1934 = vmatprep.subr.mxu0 0.0
    %1935 = vmatpush1.msra.mxu0 0.0
    %1936 = vmatprep.subr.mxu0 0.0
    %1937 = vmatpush1.msra.mxu0 0.0
    %1938 = vmatprep.subr.mxu0 0.0
    %1939 = vmatpush1.msra.mxu0 0.0
    %1940 = vmatprep.subr.mxu0 0.0
    %1941 = vmatpush1.msra.mxu0 0.0
    %1942 = vmatprep.subr.mxu0 0.0
    %1943 = vmatpush1.msra.mxu0 0.0
    %1944 = vmatprep.subr.mxu0 0.0
    %1945 = vmatpush1.msra.mxu0 0.0
    %1946 = vmatprep.subr.mxu0 0.0
    %1947 = vmatpush1.msra.mxu0 0.0
    %1948 = vmatprep.subr.mxu0 0.0
    %1949 = vmatpush1.msra.mxu0 0.0
    %1950 = vmatprep.subr.mxu0 0.0
    %1951 = vmatpush1.msra.mxu0 0.0
    %1952 = vmatprep.subr.mxu0 0.0
    %1953 = vmatpush1.msra.mxu0 0.0
    %1954 = vmatprep.subr.mxu0 0.0
    %1955 = vmatpush1.msra.mxu0 0.0
    %1956 = vmatprep.subr.mxu0 0.0
    %1957 = vmatpush1.msra.mxu0 0.0
    %1958 = vmatprep.subr.mxu0 0.0
    %1959 = vmatpush1.msra.mxu0 0.0
    %1960 = vmatprep.subr.mxu0 0.0
    %1961 = vmatpush1.msra.mxu0 0.0
    %1962 = vmatprep.subr.mxu0 0.0
    %1963 = vmatpush1.msra.mxu0 0.0
    %1964 = vmatprep.subr.mxu0 0.0
    %1965 = vmatpush1.msra.mxu0 0.0
    %1966 = vmatprep.subr.mxu0 0.0
    %1967 = vmatpush1.msra.mxu0 0.0
    %1968 = vmatprep.subr.mxu0 0.0
    %1969 = vmatpush1.msra.mxu0 0.0
    %1970 = vmatprep.subr.mxu0 0.0
    %1971 = vmatpush1.msra.mxu0 0.0
    %1972 = vmatprep.subr.mxu0 0.0
    %1973 = vmatpush1.msra.mxu0 0.0
    %1974 = vmatprep.subr.mxu0 0.0
    %1975 = vmatpush1.msra.mxu0 0.0
    %1976 = vmatprep.subr.mxu0 0.0
    %1977 = vmatpush1.msra.mxu0 0.0
    %1978 = vmatprep.subr.mxu0 0.0
    %1979 = vmatpush1.msra.mxu0 0.0
    %1980 = vmatprep.subr.mxu0 0.0
    %1981 = vmatpush1.msra.mxu0 0.0
    %1982 = vmatprep.subr.mxu0 0.0
    %1983 = vmatpush1.msra.mxu0 0.0
    %1984 = vmatprep.mubr.f32.mxu0 0.0
    %1985 = vmatmul.mubr.f32.gmra.mrb[0].mxu0 %v1915
    %v1986 = vpop.f32.mrb[0].mxu0
    %v1987 = vadd.f32 %v1912, %v1986
    %v1988 = vpop.f32.mrb[0].mxu0
    %1989 = vmatprep.mubr.f32.mxu0 0.0
    %1990 = vmatmul.mubr.f32.gmra.mrb[0].mxu0 %v1918
    %v1991 = vpop.f32.mrb[0].mxu0
    %v1992 = vadd.f32 %v1912, %v1991
    %v1993 = vpop.f32.mrb[0].mxu0
    %1994 = vdwg.mxu0
    %v1995 = vadd.f32 %v1807, %v1987
    %v1996 = vadd.f32 %v1808, %v1992
    %v1997 = vld [vmem:[%s14] sm:$0x1]
    %v1998 = vld [vmem:[%s15] sm:$0x1]
    %v1999 = vsel %vm237, %v1995, 0.0
    %2000 = vadd.xlane.f32.xlu0 %v1999
    %v2001 = vpop.xlane.xlu0 %2000
    %v2002 = vsel %vm237, %v1996, 0.0
    %2003 = vadd.xlane.f32.xlu0 %v2002
    %v2004 = vpop.xlane.xlu0 %2003
    %v2005 = vmul.f32 %v2001, %v1772
    %v2006 = vmul.f32 %v2004, %v1772
    %v2007 = vsub.f32 %v1995, %v2005
    %v2008 = vsub.f32 %v1996, %v2006
    %v2009 = vmul.f32 %v2007, %v2007
    %v2010 = vmul.f32 %v2008, %v2008
    %v2011 = vsel %vm237, %v2009, 0.0
    %2012 = vadd.xlane.f32.xlu0 %v2011
    %v2013 = vpop.xlane.xlu0 %2012
    %v2014 = vsel %vm237, %v2010, 0.0
    %2015 = vadd.xlane.f32.xlu0 %v2014
    %v2016 = vpop.xlane.xlu0 %2015
    %v2017 = vmul.f32 %v2013, %v1772
    %v2018 = vmul.f32 %v2016, %v1772
    %v2019 = vadd.f32 %v2017, 1e-05
    %v2020 = vadd.f32 %v2018, 1e-05
    %v2021 = vrsqrt.pop %v2019
    %v2022 = vrsqrt.pop %v2020
    %v2023 = vmul.f32 %v2007, %v2021
    %v2024 = vmul.f32 %v2008, %v2022
    %v2026 = vlaneseq
    %v2027 = vshrl.u32 %v2026, 7
    %v2028 = vsub.s32 0, %v2027
    %v2029 = vrot.slane %v1997, %v2028
    %v2031 = vmul.f32 %v2023, %v2029
    %v2032 = vmul.f32 %v2024, %v2029
    %v2034 = vlaneseq
    %v2035 = vshrl.u32 %v2034, 7
    %v2036 = vsub.s32 0, %v2035
    %v2037 = vrot.slane %v1998, %v2036
    %v2039 = vadd.f32 %v2031, %v2037
    %v2040 = vadd.f32 %v2032, %v2037
    %s2041 = scalar_lea.vmem [#allocation2], 32
    %v2042 = vld [vmem:[%s2041] sm:$0xff]
    %v2043 = vld [vmem:[%s2041 + $0x8] sm:$0xff]
    %v2044 = vld [vmem:[%s2041 + $0x10] sm:$0xff]
    %v2045 = vld [vmem:[%s2041 + $0x18] sm:$0xff]
    %s2046 = scalar_lea.vmem %s5, 1
    %v2047 = vld [vmem:[%s2046] sm:$0x1]
    %v2049 = vlaneseq
    %v2050 = vshrl.u32 %v2049, 7
    %v2051 = vsub.s32 0, %v2050
    %v2052 = vrot.slane %v2047, %v2051
    %v2055 = vsel %vm237, %v2039, 0
    %v2058 = vsel %vm237, %v2040, 0
    %2060 = vmatprep.subr.mxu0 0.0
    %2061 = vmatpush1.msra.mxu0 %v2042
    %2062 = vmatprep.subr.mxu0 0.0
    %2063 = vmatpush1.msra.mxu0 %v2043
    %2064 = vmatprep.subr.mxu0 0.0
    %2065 = vmatpush1.msra.mxu0 %v2044
    %2066 = vmatprep.subr.mxu0 0.0
    %2067 = vmatpush1.msra.mxu0 %v2045
    %2068 = vmatprep.subr.mxu0 0.0
    %2069 = vmatpush1.msra.mxu0 0.0
    %2070 = vmatprep.subr.mxu0 0.0
    %2071 = vmatpush1.msra.mxu0 0.0
    %2072 = vmatprep.subr.mxu0 0.0
    %2073 = vmatpush1.msra.mxu0 0.0
    %2074 = vmatprep.subr.mxu0 0.0
    %2075 = vmatpush1.msra.mxu0 0.0
    %2076 = vmatprep.subr.mxu0 0.0
    %2077 = vmatpush1.msra.mxu0 0.0
    %2078 = vmatprep.subr.mxu0 0.0
    %2079 = vmatpush1.msra.mxu0 0.0
    %2080 = vmatprep.subr.mxu0 0.0
    %2081 = vmatpush1.msra.mxu0 0.0
    %2082 = vmatprep.subr.mxu0 0.0
    %2083 = vmatpush1.msra.mxu0 0.0
    %2084 = vmatprep.subr.mxu0 0.0
    %2085 = vmatpush1.msra.mxu0 0.0
    %2086 = vmatprep.subr.mxu0 0.0
    %2087 = vmatpush1.msra.mxu0 0.0
    %2088 = vmatprep.subr.mxu0 0.0
    %2089 = vmatpush1.msra.mxu0 0.0
    %2090 = vmatprep.subr.mxu0 0.0
    %2091 = vmatpush1.msra.mxu0 0.0
    %2092 = vmatprep.subr.mxu0 0.0
    %2093 = vmatpush1.msra.mxu0 0.0
    %2094 = vmatprep.subr.mxu0 0.0
    %2095 = vmatpush1.msra.mxu0 0.0
    %2096 = vmatprep.subr.mxu0 0.0
    %2097 = vmatpush1.msra.mxu0 0.0
    %2098 = vmatprep.subr.mxu0 0.0
    %2099 = vmatpush1.msra.mxu0 0.0
    %2100 = vmatprep.subr.mxu0 0.0
    %2101 = vmatpush1.msra.mxu0 0.0
    %2102 = vmatprep.subr.mxu0 0.0
    %2103 = vmatpush1.msra.mxu0 0.0
    %2104 = vmatprep.subr.mxu0 0.0
    %2105 = vmatpush1.msra.mxu0 0.0
    %2106 = vmatprep.subr.mxu0 0.0
    %2107 = vmatpush1.msra.mxu0 0.0
    %2108 = vmatprep.subr.mxu0 0.0
    %2109 = vmatpush1.msra.mxu0 0.0
    %2110 = vmatprep.subr.mxu0 0.0
    %2111 = vmatpush1.msra.mxu0 0.0
    %2112 = vmatprep.subr.mxu0 0.0
    %2113 = vmatpush1.msra.mxu0 0.0
    %2114 = vmatprep.subr.mxu0 0.0
    %2115 = vmatpush1.msra.mxu0 0.0
    %2116 = vmatprep.subr.mxu0 0.0
    %2117 = vmatpush1.msra.mxu0 0.0
    %2118 = vmatprep.subr.mxu0 0.0
    %2119 = vmatpush1.msra.mxu0 0.0
    %2120 = vmatprep.subr.mxu0 0.0
    %2121 = vmatpush1.msra.mxu0 0.0
    %2122 = vmatprep.subr.mxu0 0.0
    %2123 = vmatpush1.msra.mxu0 0.0
    %2124 = vmatprep.mubr.f32.mxu0 0.0
    %2125 = vmatmul.mubr.f32.gmra.mrb[0].mxu0 %v2055
    %v2126 = vpop.f32.mrb[0].mxu0
    %v2127 = vadd.f32 %v2052, %v2126
    %v2128 = vpop.f32.mrb[0].mxu0
    %2129 = vmatprep.mubr.f32.mxu0 0.0
    %2130 = vmatmul.mubr.f32.gmra.mrb[0].mxu0 %v2058
    %v2131 = vpop.f32.mrb[0].mxu0
    %v2132 = vadd.f32 %v2052, %v2131
    %v2133 = vpop.f32.mrb[0].mxu0
    %2134 = vdwg.mxu0
    %2136 = vrot.lane.b32.xlu0 %v2127, 96
    %v2137 = vpop.permute.xlu0 %2136
    %v2138 = vsel %vm322, %v2127, 0
    %v2140 = vsel %vm322, %v2137, 0
    %2142 = vmatprep.subr.mxu0 0.0
    %2143 = vmatpush1.xpose.msra.mxu0 %v2140
    %2144 = vmatprep.subr.mxu0 0.0
    %2145 = vmatpush1.xpose.msra.mxu0 0.0
    %2146 = vmatprep.subr.mxu0 0.0
    %2147 = vmatpush1.xpose.msra.mxu0 0.0
    %2148 = vmatprep.subr.mxu0 0.0
    %2149 = vmatpush1.xpose.msra.mxu0 0.0
    %2150 = vmatprep.subr.mxu0 0.0
    %2151 = vmatpush1.xpose.msra.mxu0 0.0
    %2152 = vmatprep.subr.mxu0 0.0
    %2153 = vmatpush1.xpose.msra.mxu0 0.0
    %2154 = vmatprep.subr.mxu0 0.0
    %2155 = vmatpush1.xpose.msra.mxu0 0.0
    %2156 = vmatprep.subr.mxu0 0.0
    %2157 = vmatpush1.xpose.msra.mxu0 0.0
    %2158 = vmatprep.subr.mxu0 0.0
    %2159 = vmatpush1.xpose.msra.mxu0 0.0
    %2160 = vmatprep.subr.mxu0 0.0
    %2161 = vmatpush1.xpose.msra.mxu0 0.0
    %2162 = vmatprep.subr.mxu0 0.0
    %2163 = vmatpush1.xpose.msra.mxu0 0.0
    %2164 = vmatprep.subr.mxu0 0.0
    %2165 = vmatpush1.xpose.msra.mxu0 0.0
    %2166 = vmatprep.subr.mxu0 0.0
    %2167 = vmatpush1.xpose.msra.mxu0 0.0
    %2168 = vmatprep.subr.mxu0 0.0
    %2169 = vmatpush1.xpose.msra.mxu0 0.0
    %2170 = vmatprep.subr.mxu0 0.0
    %2171 = vmatpush1.xpose.msra.mxu0 0.0
    %2172 = vmatprep.subr.mxu0 0.0
    %2173 = vmatpush1.xpose.msra.mxu0 0.0
    %2174 = vmatprep.subr.mxu0 0.0
    %2175 = vmatpush1.xpose.msra.mxu0 0.0
    %2176 = vmatprep.subr.mxu0 0.0
    %2177 = vmatpush1.xpose.msra.mxu0 0.0
    %2178 = vmatprep.subr.mxu0 0.0
    %2179 = vmatpush1.xpose.msra.mxu0 0.0
    %2180 = vmatprep.subr.mxu0 0.0
    %2181 = vmatpush1.xpose.msra.mxu0 0.0
    %2182 = vmatprep.subr.mxu0 0.0
    %2183 = vmatpush1.xpose.msra.mxu0 0.0
    %2184 = vmatprep.subr.mxu0 0.0
    %2185 = vmatpush1.xpose.msra.mxu0 0.0
    %2186 = vmatprep.subr.mxu0 0.0
    %2187 = vmatpush1.xpose.msra.mxu0 0.0
    %2188 = vmatprep.subr.mxu0 0.0
    %2189 = vmatpush1.xpose.msra.mxu0 0.0
    %2190 = vmatprep.subr.mxu0 0.0
    %2191 = vmatpush1.xpose.msra.mxu0 0.0
    %2192 = vmatprep.subr.mxu0 0.0
    %2193 = vmatpush1.xpose.msra.mxu0 0.0
    %2194 = vmatprep.subr.mxu0 0.0
    %2195 = vmatpush1.xpose.msra.mxu0 0.0
    %2196 = vmatprep.subr.mxu0 0.0
    %2197 = vmatpush1.xpose.msra.mxu0 0.0
    %2198 = vmatprep.subr.mxu0 0.0
    %2199 = vmatpush1.xpose.msra.mxu0 0.0
    %2200 = vmatprep.subr.mxu0 0.0
    %2201 = vmatpush1.xpose.msra.mxu0 0.0
    %2202 = vmatprep.subr.mxu0 0.0
    %2203 = vmatpush1.xpose.msra.mxu0 0.0
    %2204 = vmatprep.subr.mxu0 0.0
    %2205 = vmatpush1.xpose.msra.mxu0 0.0
    %2206 = vmatprep.mubr.f32.mxu0 0.0
    %2207 = vmatmul.mubr.f32.gmra.mrb[0].mxu0 %v2138
    %v2208 = vpop.f32.mrb[0].mxu0
    %v2209 = vadd.f32 0.0, %v2208
    %v2210 = vpop.f32.mrb[0].mxu0
    %2211 = vdwg.mxu0
    %2213 = vrot.lane.b32.xlu0 %v2132, 96
    %v2214 = vpop.permute.xlu0 %2213
    %v2215 = vsel %vm322, %v2132, 0
    %v2217 = vsel %vm322, %v2214, 0
    %2219 = vmatprep.subr.mxu0 0.0
    %2220 = vmatpush1.xpose.msra.mxu0 %v2217
    %2221 = vmatprep.subr.mxu0 0.0
    %2222 = vmatpush1.xpose.msra.mxu0 0.0
    %2223 = vmatprep.subr.mxu0 0.0
    %2224 = vmatpush1.xpose.msra.mxu0 0.0
    %2225 = vmatprep.subr.mxu0 0.0
    %2226 = vmatpush1.xpose.msra.mxu0 0.0
    %2227 = vmatprep.subr.mxu0 0.0
    %2228 = vmatpush1.xpose.msra.mxu0 0.0
    %2229 = vmatprep.subr.mxu0 0.0
    %2230 = vmatpush1.xpose.msra.mxu0 0.0
    %2231 = vmatprep.subr.mxu0 0.0
    %2232 = vmatpush1.xpose.msra.mxu0 0.0
    %2233 = vmatprep.subr.mxu0 0.0
    %2234 = vmatpush1.xpose.msra.mxu0 0.0
    %2235 = vmatprep.subr.mxu0 0.0
    %2236 = vmatpush1.xpose.msra.mxu0 0.0
    %2237 = vmatprep.subr.mxu0 0.0
    %2238 = vmatpush1.xpose.msra.mxu0 0.0
    %2239 = vmatprep.subr.mxu0 0.0
    %2240 = vmatpush1.xpose.msra.mxu0 0.0
    %2241 = vmatprep.subr.mxu0 0.0
    %2242 = vmatpush1.xpose.msra.mxu0 0.0
    %2243 = vmatprep.subr.mxu0 0.0
    %2244 = vmatpush1.xpose.msra.mxu0 0.0
    %2245 = vmatprep.subr.mxu0 0.0
    %2246 = vmatpush1.xpose.msra.mxu0 0.0
    %2247 = vmatprep.subr.mxu0 0.0
    %2248 = vmatpush1.xpose.msra.mxu0 0.0
    %2249 = vmatprep.subr.mxu0 0.0
    %2250 = vmatpush1.xpose.msra.mxu0 0.0
    %2251 = vmatprep.subr.mxu0 0.0
    %2252 = vmatpush1.xpose.msra.mxu0 0.0
    %2253 = vmatprep.subr.mxu0 0.0
    %2254 = vmatpush1.xpose.msra.mxu0 0.0
    %2255 = vmatprep.subr.mxu0 0.0
    %2256 = vmatpush1.xpose.msra.mxu0 0.0
    %2257 = vmatprep.subr.mxu0 0.0
    %2258 = vmatpush1.xpose.msra.mxu0 0.0
    %2259 = vmatprep.subr.mxu0 0.0
    %2260 = vmatpush1.xpose.msra.mxu0 0.0
    %2261 = vmatprep.subr.mxu0 0.0
    %2262 = vmatpush1.xpose.msra.mxu0 0.0
    %2263 = vmatprep.subr.mxu0 0.0
    %2264 = vmatpush1.xpose.msra.mxu0 0.0
    %2265 = vmatprep.subr.mxu0 0.0
    %2266 = vmatpush1.xpose.msra.mxu0 0.0
    %2267 = vmatprep.subr.mxu0 0.0
    %2268 = vmatpush1.xpose.msra.mxu0 0.0
    %2269 = vmatprep.subr.mxu0 0.0
    %2270 = vmatpush1.xpose.msra.mxu0 0.0
    %2271 = vmatprep.subr.mxu0 0.0
    %2272 = vmatpush1.xpose.msra.mxu0 0.0
    %2273 = vmatprep.subr.mxu0 0.0
    %2274 = vmatpush1.xpose.msra.mxu0 0.0
    %2275 = vmatprep.subr.mxu0 0.0
    %2276 = vmatpush1.xpose.msra.mxu0 0.0
    %2277 = vmatprep.subr.mxu0 0.0
    %2278 = vmatpush1.xpose.msra.mxu0 0.0
    %2279 = vmatprep.subr.mxu0 0.0
    %2280 = vmatpush1.xpose.msra.mxu0 0.0
    %2281 = vmatprep.subr.mxu0 0.0
    %2282 = vmatpush1.xpose.msra.mxu0 0.0
    %2283 = vmatprep.mubr.f32.mxu0 0.0
    %2284 = vmatmul.mubr.f32.gmra.mrb[0].mxu0 %v2215
    %v2285 = vpop.f32.mrb[0].mxu0
    %v2286 = vadd.f32 0.0, %v2285
    %v2287 = vpop.f32.mrb[0].mxu0
    %2288 = vdwg.mxu0
    %v2289 = vsel %vm322, %v2209, -inf
    %2290 = vmax.xlane.f32.xlu0 %v2289
    %v2291 = vpop.xlane.xlu0 %2290
    %v2292 = vsel %vm322, %v2286, -inf
    %2293 = vmax.xlane.f32.xlu0 %v2292
    %v2294 = vpop.xlane.xlu0 %2293
    %v2295 = vsub.f32 %v2209, %v2291
    %v2296 = vsub.f32 %v2286, %v2294
    %v2297 = vmul.f32 %v2295, 1.442695
    %v2298 = vpow.pop %v2297
    %v2299 = vmul.f32 %v2296, 1.442695
    %v2300 = vpow.pop %v2299
    %v2301 = vsel %vm322, %v2298, 0.0
    %2302 = vadd.xlane.f32.xlu0 %v2301
    %v2303 = vpop.xlane.xlu0 %2302
    %v2304 = vsel %vm322, %v2300, 0.0
    %2305 = vadd.xlane.f32.xlu0 %v2304
    %v2306 = vpop.xlane.xlu0 %2305
    %v2307 = vrcp.pop %v2303
    %v2308 = vrcp.pop %v2306
    %v2309 = vmul.f32 %v2298, %v2307
    %v2310 = vmul.f32 %v2300, %v2308
    %2311 = vrot.lane.b32.xlu0 %v2127, 64
    %v2312 = vpop.permute.xlu0 %2311
    %v2315 = vsel %vm322, %v2309, 0
    %2317 = vmatprep.subr.mxu0 0.0
    %2318 = vmatpush1.msra.mxu0 %v2312
    %2319 = vmatprep.subr.mxu0 0.0
    %2320 = vmatpush1.msra.mxu0 0.0
    %2321 = vmatprep.subr.mxu0 0.0
    %2322 = vmatpush1.msra.mxu0 0.0
    %2323 = vmatprep.subr.mxu0 0.0
    %2324 = vmatpush1.msra.mxu0 0.0
    %2325 = vmatprep.subr.mxu0 0.0
    %2326 = vmatpush1.msra.mxu0 0.0
    %2327 = vmatprep.subr.mxu0 0.0
    %2328 = vmatpush1.msra.mxu0 0.0
    %2329 = vmatprep.subr.mxu0 0.0
    %2330 = vmatpush1.msra.mxu0 0.0
    %2331 = vmatprep.subr.mxu0 0.0
    %2332 = vmatpush1.msra.mxu0 0.0
    %2333 = vmatprep.subr.mxu0 0.0
    %2334 = vmatpush1.msra.mxu0 0.0
    %2335 = vmatprep.subr.mxu0 0.0
    %2336 = vmatpush1.msra.mxu0 0.0
    %2337 = vmatprep.subr.mxu0 0.0
    %2338 = vmatpush1.msra.mxu0 0.0
    %2339 = vmatprep.subr.mxu0 0.0
    %2340 = vmatpush1.msra.mxu0 0.0
    %2341 = vmatprep.subr.mxu0 0.0
    %2342 = vmatpush1.msra.mxu0 0.0
    %2343 = vmatprep.subr.mxu0 0.0
    %2344 = vmatpush1.msra.mxu0 0.0
    %2345 = vmatprep.subr.mxu0 0.0
    %2346 = vmatpush1.msra.mxu0 0.0
    %2347 = vmatprep.subr.mxu0 0.0
    %2348 = vmatpush1.msra.mxu0 0.0
    %2349 = vmatprep.subr.mxu0 0.0
    %2350 = vmatpush1.msra.mxu0 0.0
    %2351 = vmatprep.subr.mxu0 0.0
    %2352 = vmatpush1.msra.mxu0 0.0
    %2353 = vmatprep.subr.mxu0 0.0
    %2354 = vmatpush1.msra.mxu0 0.0
    %2355 = vmatprep.subr.mxu0 0.0
    %2356 = vmatpush1.msra.mxu0 0.0
    %2357 = vmatprep.subr.mxu0 0.0
    %2358 = vmatpush1.msra.mxu0 0.0
    %2359 = vmatprep.subr.mxu0 0.0
    %2360 = vmatpush1.msra.mxu0 0.0
    %2361 = vmatprep.subr.mxu0 0.0
    %2362 = vmatpush1.msra.mxu0 0.0
    %2363 = vmatprep.subr.mxu0 0.0
    %2364 = vmatpush1.msra.mxu0 0.0
    %2365 = vmatprep.subr.mxu0 0.0
    %2366 = vmatpush1.msra.mxu0 0.0
    %2367 = vmatprep.subr.mxu0 0.0
    %2368 = vmatpush1.msra.mxu0 0.0
    %2369 = vmatprep.subr.mxu0 0.0
    %2370 = vmatpush1.msra.mxu0 0.0
    %2371 = vmatprep.subr.mxu0 0.0
    %2372 = vmatpush1.msra.mxu0 0.0
    %2373 = vmatprep.subr.mxu0 0.0
    %2374 = vmatpush1.msra.mxu0 0.0
    %2375 = vmatprep.subr.mxu0 0.0
    %2376 = vmatpush1.msra.mxu0 0.0
    %2377 = vmatprep.subr.mxu0 0.0
    %2378 = vmatpush1.msra.mxu0 0.0
    %2379 = vmatprep.subr.mxu0 0.0
    %2380 = vmatpush1.msra.mxu0 0.0
    %2381 = vmatprep.mubr.f32.mxu0 0.0
    %2382 = vmatmul.mubr.f32.gmra.mrb[0].mxu0 %v2315
    %v2383 = vpop.f32.mrb[0].mxu0
    %v2384 = vadd.f32 0.0, %v2383
    %v2385 = vpop.f32.mrb[0].mxu0
    %2386 = vdwg.mxu0
    %2387 = vrot.lane.b32.xlu0 %v2132, 64
    %v2388 = vpop.permute.xlu0 %2387
    %v2391 = vsel %vm322, %v2310, 0
    %2393 = vmatprep.subr.mxu0 0.0
    %2394 = vmatpush1.msra.mxu0 %v2388
    %2395 = vmatprep.subr.mxu0 0.0
    %2396 = vmatpush1.msra.mxu0 0.0
    %2397 = vmatprep.subr.mxu0 0.0
    %2398 = vmatpush1.msra.mxu0 0.0
    %2399 = vmatprep.subr.mxu0 0.0
    %2400 = vmatpush1.msra.mxu0 0.0
    %2401 = vmatprep.subr.mxu0 0.0
    %2402 = vmatpush1.msra.mxu0 0.0
    %2403 = vmatprep.subr.mxu0 0.0
    %2404 = vmatpush1.msra.mxu0 0.0
    %2405 = vmatprep.subr.mxu0 0.0
    %2406 = vmatpush1.msra.mxu0 0.0
    %2407 = vmatprep.subr.mxu0 0.0
    %2408 = vmatpush1.msra.mxu0 0.0
    %2409 = vmatprep.subr.mxu0 0.0
    %2410 = vmatpush1.msra.mxu0 0.0
    %2411 = vmatprep.subr.mxu0 0.0
    %2412 = vmatpush1.msra.mxu0 0.0
    %2413 = vmatprep.subr.mxu0 0.0
    %2414 = vmatpush1.msra.mxu0 0.0
    %2415 = vmatprep.subr.mxu0 0.0
    %2416 = vmatpush1.msra.mxu0 0.0
    %2417 = vmatprep.subr.mxu0 0.0
    %2418 = vmatpush1.msra.mxu0 0.0
    %2419 = vmatprep.subr.mxu0 0.0
    %2420 = vmatpush1.msra.mxu0 0.0
    %2421 = vmatprep.subr.mxu0 0.0
    %2422 = vmatpush1.msra.mxu0 0.0
    %2423 = vmatprep.subr.mxu0 0.0
    %2424 = vmatpush1.msra.mxu0 0.0
    %2425 = vmatprep.subr.mxu0 0.0
    %2426 = vmatpush1.msra.mxu0 0.0
    %2427 = vmatprep.subr.mxu0 0.0
    %2428 = vmatpush1.msra.mxu0 0.0
    %2429 = vmatprep.subr.mxu0 0.0
    %2430 = vmatpush1.msra.mxu0 0.0
    %2431 = vmatprep.subr.mxu0 0.0
    %2432 = vmatpush1.msra.mxu0 0.0
    %2433 = vmatprep.subr.mxu0 0.0
    %2434 = vmatpush1.msra.mxu0 0.0
    %2435 = vmatprep.subr.mxu0 0.0
    %2436 = vmatpush1.msra.mxu0 0.0
    %2437 = vmatprep.subr.mxu0 0.0
    %2438 = vmatpush1.msra.mxu0 0.0
    %2439 = vmatprep.subr.mxu0 0.0
    %2440 = vmatpush1.msra.mxu0 0.0
    %2441 = vmatprep.subr.mxu0 0.0
    %2442 = vmatpush1.msra.mxu0 0.0
    %2443 = vmatprep.subr.mxu0 0.0
    %2444 = vmatpush1.msra.mxu0 0.0
    %2445 = vmatprep.subr.mxu0 0.0
    %2446 = vmatpush1.msra.mxu0 0.0
    %2447 = vmatprep.subr.mxu0 0.0
    %2448 = vmatpush1.msra.mxu0 0.0
    %2449 = vmatprep.subr.mxu0 0.0
    %2450 = vmatpush1.msra.mxu0 0.0
    %2451 = vmatprep.subr.mxu0 0.0
    %2452 = vmatpush1.msra.mxu0 0.0
    %2453 = vmatprep.subr.mxu0 0.0
    %2454 = vmatpush1.msra.mxu0 0.0
    %2455 = vmatprep.subr.mxu0 0.0
    %2456 = vmatpush1.msra.mxu0 0.0
    %2457 = vmatprep.mubr.f32.mxu0 0.0
    %2458 = vmatmul.mubr.f32.gmra.mrb[0].mxu0 %v2391
    %v2459 = vpop.f32.mrb[0].mxu0
    %v2460 = vadd.f32 0.0, %v2459
    %v2461 = vpop.f32.mrb[0].mxu0
    %2462 = vdwg.mxu0
    %2463 = vrot.lane.b32.xlu0 %v2127, 120
    %v2464 = vpop.permute.xlu0 %2463
    %2465 = vrot.lane.b32.xlu0 %v2127, 88
    %v2466 = vpop.permute.xlu0 %2465
    %v2467 = vsel %vm322, %v2464, 0
    %v2469 = vsel %vm322, %v2466, 0
    %2471 = vmatprep.subr.mxu0 0.0
    %2472 = vmatpush1.xpose.msra.mxu0 %v2469
    %2473 = vmatprep.subr.mxu0 0.0
    %2474 = vmatpush1.xpose.msra.mxu0 0.0
    %2475 = vmatprep.subr.mxu0 0.0
    %2476 = vmatpush1.xpose.msra.mxu0 0.0
    %2477 = vmatprep.subr.mxu0 0.0
    %2478 = vmatpush1.xpose.msra.mxu0 0.0
    %2479 = vmatprep.subr.mxu0 0.0
    %2480 = vmatpush1.xpose.msra.mxu0 0.0
    %2481 = vmatprep.subr.mxu0 0.0
    %2482 = vmatpush1.xpose.msra.mxu0 0.0
    %2483 = vmatprep.subr.mxu0 0.0
    %2484 = vmatpush1.xpose.msra.mxu0 0.0
    %2485 = vmatprep.subr.mxu0 0.0
    %2486 = vmatpush1.xpose.msra.mxu0 0.0
    %2487 = vmatprep.subr.mxu0 0.0
    %2488 = vmatpush1.xpose.msra.mxu0 0.0
    %2489 = vmatprep.subr.mxu0 0.0
    %2490 = vmatpush1.xpose.msra.mxu0 0.0
    %2491 = vmatprep.subr.mxu0 0.0
    %2492 = vmatpush1.xpose.msra.mxu0 0.0
    %2493 = vmatprep.subr.mxu0 0.0
    %2494 = vmatpush1.xpose.msra.mxu0 0.0
    %2495 = vmatprep.subr.mxu0 0.0
    %2496 = vmatpush1.xpose.msra.mxu0 0.0
    %2497 = vmatprep.subr.mxu0 0.0
    %2498 = vmatpush1.xpose.msra.mxu0 0.0
    %2499 = vmatprep.subr.mxu0 0.0
    %2500 = vmatpush1.xpose.msra.mxu0 0.0
    %2501 = vmatprep.subr.mxu0 0.0
    %2502 = vmatpush1.xpose.msra.mxu0 0.0
    %2503 = vmatprep.subr.mxu0 0.0
    %2504 = vmatpush1.xpose.msra.mxu0 0.0
    %2505 = vmatprep.subr.mxu0 0.0
    %2506 = vmatpush1.xpose.msra.mxu0 0.0
    %2507 = vmatprep.subr.mxu0 0.0
    %2508 = vmatpush1.xpose.msra.mxu0 0.0
    %2509 = vmatprep.subr.mxu0 0.0
    %2510 = vmatpush1.xpose.msra.mxu0 0.0
    %2511 = vmatprep.subr.mxu0 0.0
    %2512 = vmatpush1.xpose.msra.mxu0 0.0
    %2513 = vmatprep.subr.mxu0 0.0
    %2514 = vmatpush1.xpose.msra.mxu0 0.0
    %2515 = vmatprep.subr.mxu0 0.0
    %2516 = vmatpush1.xpose.msra.mxu0 0.0
    %2517 = vmatprep.subr.mxu0 0.0
    %2518 = vmatpush1.xpose.msra.mxu0 0.0
    %2519 = vmatprep.subr.mxu0 0.0
    %2520 = vmatpush1.xpose.msra.mxu0 0.0
    %2521 = vmatprep.subr.mxu0 0.0
    %2522 = vmatpush1.xpose.msra.mxu0 0.0
    %2523 = vmatprep.subr.mxu0 0.0
    %2524 = vmatpush1.xpose.msra.mxu0 0.0
    %2525 = vmatprep.subr.mxu0 0.0
    %2526 = vmatpush1.xpose.msra.mxu0 0.0
    %2527 = vmatprep.subr.mxu0 0.0
    %2528 = vmatpush1.xpose.msra.mxu0 0.0
    %2529 = vmatprep.subr.mxu0 0.0
    %2530 = vmatpush1.xpose.msra.mxu0 0.0
    %2531 = vmatprep.subr.mxu0 0.0
    %2532 = vmatpush1.xpose.msra.mxu0 0.0
    %2533 = vmatprep.subr.mxu0 0.0
    %2534 = vmatpush1.xpose.msra.mxu0 0.0
    %2535 = vmatprep.mubr.f32.mxu0 0.0
    %2536 = vmatmul.mubr.f32.gmra.mrb[0].mxu0 %v2467
    %v2537 = vpop.f32.mrb[0].mxu0
    %v2538 = vadd.f32 0.0, %v2537
    %v2539 = vpop.f32.mrb[0].mxu0
    %2540 = vdwg.mxu0
    %2541 = vrot.lane.b32.xlu0 %v2132, 120
    %v2542 = vpop.permute.xlu0 %2541
    %2543 = vrot.lane.b32.xlu0 %v2132, 88
    %v2544 = vpop.permute.xlu0 %2543
    %v2545 = vsel %vm322, %v2542, 0
    %v2547 = vsel %vm322, %v2544, 0
    %2549 = vmatprep.subr.mxu0 0.0
    %2550 = vmatpush1.xpose.msra.mxu0 %v2547
    %2551 = vmatprep.subr.mxu0 0.0
    %2552 = vmatpush1.xpose.msra.mxu0 0.0
    %2553 = vmatprep.subr.mxu0 0.0
    %2554 = vmatpush1.xpose.msra.mxu0 0.0
    %2555 = vmatprep.subr.mxu0 0.0
    %2556 = vmatpush1.xpose.msra.mxu0 0.0
    %2557 = vmatprep.subr.mxu0 0.0
    %2558 = vmatpush1.xpose.msra.mxu0 0.0
    %2559 = vmatprep.subr.mxu0 0.0
    %2560 = vmatpush1.xpose.msra.mxu0 0.0
    %2561 = vmatprep.subr.mxu0 0.0
    %2562 = vmatpush1.xpose.msra.mxu0 0.0
    %2563 = vmatprep.subr.mxu0 0.0
    %2564 = vmatpush1.xpose.msra.mxu0 0.0
    %2565 = vmatprep.subr.mxu0 0.0
    %2566 = vmatpush1.xpose.msra.mxu0 0.0
    %2567 = vmatprep.subr.mxu0 0.0
    %2568 = vmatpush1.xpose.msra.mxu0 0.0
    %2569 = vmatprep.subr.mxu0 0.0
    %2570 = vmatpush1.xpose.msra.mxu0 0.0
    %2571 = vmatprep.subr.mxu0 0.0
    %2572 = vmatpush1.xpose.msra.mxu0 0.0
    %2573 = vmatprep.subr.mxu0 0.0
    %2574 = vmatpush1.xpose.msra.mxu0 0.0
    %2575 = vmatprep.subr.mxu0 0.0
    %2576 = vmatpush1.xpose.msra.mxu0 0.0
    %2577 = vmatprep.subr.mxu0 0.0
    %2578 = vmatpush1.xpose.msra.mxu0 0.0
    %2579 = vmatprep.subr.mxu0 0.0
    %2580 = vmatpush1.xpose.msra.mxu0 0.0
    %2581 = vmatprep.subr.mxu0 0.0
    %2582 = vmatpush1.xpose.msra.mxu0 0.0
    %2583 = vmatprep.subr.mxu0 0.0
    %2584 = vmatpush1.xpose.msra.mxu0 0.0
    %2585 = vmatprep.subr.mxu0 0.0
    %2586 = vmatpush1.xpose.msra.mxu0 0.0
    %2587 = vmatprep.subr.mxu0 0.0
    %2588 = vmatpush1.xpose.msra.mxu0 0.0
    %2589 = vmatprep.subr.mxu0 0.0
    %2590 = vmatpush1.xpose.msra.mxu0 0.0
    %2591 = vmatprep.subr.mxu0 0.0
    %2592 = vmatpush1.xpose.msra.mxu0 0.0
    %2593 = vmatprep.subr.mxu0 0.0
    %2594 = vmatpush1.xpose.msra.mxu0 0.0
    %2595 = vmatprep.subr.mxu0 0.0
    %2596 = vmatpush1.xpose.msra.mxu0 0.0
    %2597 = vmatprep.subr.mxu0 0.0
    %2598 = vmatpush1.xpose.msra.mxu0 0.0
    %2599 = vmatprep.subr.mxu0 0.0
    %2600 = vmatpush1.xpose.msra.mxu0 0.0
    %2601 = vmatprep.subr.mxu0 0.0
    %2602 = vmatpush1.xpose.msra.mxu0 0.0
    %2603 = vmatprep.subr.mxu0 0.0
    %2604 = vmatpush1.xpose.msra.mxu0 0.0
    %2605 = vmatprep.subr.mxu0 0.0
    %2606 = vmatpush1.xpose.msra.mxu0 0.0
    %2607 = vmatprep.subr.mxu0 0.0
    %2608 = vmatpush1.xpose.msra.mxu0 0.0
    %2609 = vmatprep.subr.mxu0 0.0
    %2610 = vmatpush1.xpose.msra.mxu0 0.0
    %2611 = vmatprep.subr.mxu0 0.0
    %2612 = vmatpush1.xpose.msra.mxu0 0.0
    %2613 = vmatprep.mubr.f32.mxu0 0.0
    %2614 = vmatmul.mubr.f32.gmra.mrb[0].mxu0 %v2545
    %v2615 = vpop.f32.mrb[0].mxu0
    %v2616 = vadd.f32 0.0, %v2615
    %v2617 = vpop.f32.mrb[0].mxu0
    %2618 = vdwg.mxu0
    %v2619 = vsel %vm322, %v2538, -inf
    %2620 = vmax.xlane.f32.xlu0 %v2619
    %v2621 = vpop.xlane.xlu0 %2620
    %v2622 = vsel %vm322, %v2616, -inf
    %2623 = vmax.xlane.f32.xlu0 %v2622
    %v2624 = vpop.xlane.xlu0 %2623
    %v2625 = vsub.f32 %v2538, %v2621
    %v2626 = vsub.f32 %v2616, %v2624
    %v2627 = vmul.f32 %v2625, 1.442695
    %v2628 = vpow.pop %v2627
    %v2629 = vmul.f32 %v2626, 1.442695
    %v2630 = vpow.pop %v2629
    %v2631 = vsel %vm322, %v2628, 0.0
    %2632 = vadd.xlane.f32.xlu0 %v2631
    %v2633 = vpop.xlane.xlu0 %2632
    %v2634 = vsel %vm322, %v2630, 0.0
    %2635 = vadd.xlane.f32.xlu0 %v2634
    %v2636 = vpop.xlane.xlu0 %2635
    %v2637 = vrcp.pop %v2633
    %v2638 = vrcp.pop %v2636
    %v2639 = vmul.f32 %v2628, %v2637
    %v2640 = vmul.f32 %v2630, %v2638
    %2641 = vrot.lane.b32.xlu0 %v2127, 56
    %v2642 = vpop.permute.xlu0 %2641
    %v2645 = vsel %vm322, %v2639, 0
    %2647 = vmatprep.subr.mxu0 0.0
    %2648 = vmatpush1.msra.mxu0 %v2642
    %2649 = vmatprep.subr.mxu0 0.0
    %2650 = vmatpush1.msra.mxu0 0.0
    %2651 = vmatprep.subr.mxu0 0.0
    %2652 = vmatpush1.msra.mxu0 0.0
    %2653 = vmatprep.subr.mxu0 0.0
    %2654 = vmatpush1.msra.mxu0 0.0
    %2655 = vmatprep.subr.mxu0 0.0
    %2656 = vmatpush1.msra.mxu0 0.0
    %2657 = vmatprep.subr.mxu0 0.0
    %2658 = vmatpush1.msra.mxu0 0.0
    %2659 = vmatprep.subr.mxu0 0.0
    %2660 = vmatpush1.msra.mxu0 0.0
    %2661 = vmatprep.subr.mxu0 0.0
    %2662 = vmatpush1.msra.mxu0 0.0
    %2663 = vmatprep.subr.mxu0 0.0
    %2664 = vmatpush1.msra.mxu0 0.0
    %2665 = vmatprep.subr.mxu0 0.0
    %2666 = vmatpush1.msra.mxu0 0.0
    %2667 = vmatprep.subr.mxu0 0.0
    %2668 = vmatpush1.msra.mxu0 0.0
    %2669 = vmatprep.subr.mxu0 0.0
    %2670 = vmatpush1.msra.mxu0 0.0
    %2671 = vmatprep.subr.mxu0 0.0
    %2672 = vmatpush1.msra.mxu0 0.0
    %2673 = vmatprep.subr.mxu0 0.0
    %2674 = vmatpush1.msra.mxu0 0.0
    %2675 = vmatprep.subr.mxu0 0.0
    %2676 = vmatpush1.msra.mxu0 0.0
    %2677 = vmatprep.subr.mxu0 0.0
    %2678 = vmatpush1.msra.mxu0 0.0
    %2679 = vmatprep.subr.mxu0 0.0
    %2680 = vmatpush1.msra.mxu0 0.0
    %2681 = vmatprep.subr.mxu0 0.0
    %2682 = vmatpush1.msra.mxu0 0.0
    %2683 = vmatprep.subr.mxu0 0.0
    %2684 = vmatpush1.msra.mxu0 0.0
    %2685 = vmatprep.subr.mxu0 0.0
    %2686 = vmatpush1.msra.mxu0 0.0
    %2687 = vmatprep.subr.mxu0 0.0
    %2688 = vmatpush1.msra.mxu0 0.0
    %2689 = vmatprep.subr.mxu0 0.0
    %2690 = vmatpush1.msra.mxu0 0.0
    %2691 = vmatprep.subr.mxu0 0.0
    %2692 = vmatpush1.msra.mxu0 0.0
    %2693 = vmatprep.subr.mxu0 0.0
    %2694 = vmatpush1.msra.mxu0 0.0
    %2695 = vmatprep.subr.mxu0 0.0
    %2696 = vmatpush1.msra.mxu0 0.0
    %2697 = vmatprep.subr.mxu0 0.0
    %2698 = vmatpush1.msra.mxu0 0.0
    %2699 = vmatprep.subr.mxu0 0.0
    %2700 = vmatpush1.msra.mxu0 0.0
    %2701 = vmatprep.subr.mxu0 0.0
    %2702 = vmatpush1.msra.mxu0 0.0
    %2703 = vmatprep.subr.mxu0 0.0
    %2704 = vmatpush1.msra.mxu0 0.0
    %2705 = vmatprep.subr.mxu0 0.0
    %2706 = vmatpush1.msra.mxu0 0.0
    %2707 = vmatprep.subr.mxu0 0.0
    %2708 = vmatpush1.msra.mxu0 0.0
    %2709 = vmatprep.subr.mxu0 0.0
    %2710 = vmatpush1.msra.mxu0 0.0
    %2711 = vmatprep.mubr.f32.mxu0 0.0
    %2712 = vmatmul.mubr.f32.gmra.mrb[0].mxu0 %v2645
    %v2713 = vpop.f32.mrb[0].mxu0
    %v2714 = vadd.f32 0.0, %v2713
    %v2715 = vpop.f32.mrb[0].mxu0
    %2716 = vdwg.mxu0
    %2717 = vrot.lane.b32.xlu0 %v2132, 56
    %v2718 = vpop.permute.xlu0 %2717
    %v2721 = vsel %vm322, %v2640, 0
    %2723 = vmatprep.subr.mxu0 0.0
    %2724 = vmatpush1.msra.mxu0 %v2718
    %2725 = vmatprep.subr.mxu0 0.0
    %2726 = vmatpush1.msra.mxu0 0.0
    %2727 = vmatprep.subr.mxu0 0.0
    %2728 = vmatpush1.msra.mxu0 0.0
    %2729 = vmatprep.subr.mxu0 0.0
    %2730 = vmatpush1.msra.mxu0 0.0
    %2731 = vmatprep.subr.mxu0 0.0
    %2732 = vmatpush1.msra.mxu0 0.0
    %2733 = vmatprep.subr.mxu0 0.0
    %2734 = vmatpush1.msra.mxu0 0.0
    %2735 = vmatprep.subr.mxu0 0.0
    %2736 = vmatpush1.msra.mxu0 0.0
    %2737 = vmatprep.subr.mxu0 0.0
    %2738 = vmatpush1.msra.mxu0 0.0
    %2739 = vmatprep.subr.mxu0 0.0
    %2740 = vmatpush1.msra.mxu0 0.0
    %2741 = vmatprep.subr.mxu0 0.0
    %2742 = vmatpush1.msra.mxu0 0.0
    %2743 = vmatprep.subr.mxu0 0.0
    %2744 = vmatpush1.msra.mxu0 0.0
    %2745 = vmatprep.subr.mxu0 0.0
    %2746 = vmatpush1.msra.mxu0 0.0
    %2747 = vmatprep.subr.mxu0 0.0
    %2748 = vmatpush1.msra.mxu0 0.0
    %2749 = vmatprep.subr.mxu0 0.0
    %2750 = vmatpush1.msra.mxu0 0.0
    %2751 = vmatprep.subr.mxu0 0.0
    %2752 = vmatpush1.msra.mxu0 0.0
    %2753 = vmatprep.subr.mxu0 0.0
    %2754 = vmatpush1.msra.mxu0 0.0
    %2755 = vmatprep.subr.mxu0 0.0
    %2756 = vmatpush1.msra.mxu0 0.0
    %2757 = vmatprep.subr.mxu0 0.0
    %2758 = vmatpush1.msra.mxu0 0.0
    %2759 = vmatprep.subr.mxu0 0.0
    %2760 = vmatpush1.msra.mxu0 0.0
    %2761 = vmatprep.subr.mxu0 0.0
    %2762 = vmatpush1.msra.mxu0 0.0
    %2763 = vmatprep.subr.mxu0 0.0
    %2764 = vmatpush1.msra.mxu0 0.0
    %2765 = vmatprep.subr.mxu0 0.0
    %2766 = vmatpush1.msra.mxu0 0.0
    %2767 = vmatprep.subr.mxu0 0.0
    %2768 = vmatpush1.msra.mxu0 0.0
    %2769 = vmatprep.subr.mxu0 0.0
    %2770 = vmatpush1.msra.mxu0 0.0
    %2771 = vmatprep.subr.mxu0 0.0
    %2772 = vmatpush1.msra.mxu0 0.0
    %2773 = vmatprep.subr.mxu0 0.0
    %2774 = vmatpush1.msra.mxu0 0.0
    %2775 = vmatprep.subr.mxu0 0.0
    %2776 = vmatpush1.msra.mxu0 0.0
    %2777 = vmatprep.subr.mxu0 0.0
    %2778 = vmatpush1.msra.mxu0 0.0
    %2779 = vmatprep.subr.mxu0 0.0
    %2780 = vmatpush1.msra.mxu0 0.0
    %2781 = vmatprep.subr.mxu0 0.0
    %2782 = vmatpush1.msra.mxu0 0.0
    %2783 = vmatprep.subr.mxu0 0.0
    %2784 = vmatpush1.msra.mxu0 0.0
    %2785 = vmatprep.subr.mxu0 0.0
    %2786 = vmatpush1.msra.mxu0 0.0
    %2787 = vmatprep.mubr.f32.mxu0 0.0
    %2788 = vmatmul.mubr.f32.gmra.mrb[0].mxu0 %v2721
    %v2789 = vpop.f32.mrb[0].mxu0
    %v2790 = vadd.f32 0.0, %v2789
    %v2791 = vpop.f32.mrb[0].mxu0
    %2792 = vdwg.mxu0
    %2793 = vrot.lane.b32.xlu0 %v2127, 112
    %v2794 = vpop.permute.xlu0 %2793
    %2795 = vrot.lane.b32.xlu0 %v2127, 80
    %v2796 = vpop.permute.xlu0 %2795
    %v2797 = vsel %vm322, %v2794, 0
    %v2799 = vsel %vm322, %v2796, 0
    %2801 = vmatprep.subr.mxu0 0.0
    %2802 = vmatpush1.xpose.msra.mxu0 %v2799
    %2803 = vmatprep.subr.mxu0 0.0
    %2804 = vmatpush1.xpose.msra.mxu0 0.0
    %2805 = vmatprep.subr.mxu0 0.0
    %2806 = vmatpush1.xpose.msra.mxu0 0.0
    %2807 = vmatprep.subr.mxu0 0.0
    %2808 = vmatpush1.xpose.msra.mxu0 0.0
    %2809 = vmatprep.subr.mxu0 0.0
    %2810 = vmatpush1.xpose.msra.mxu0 0.0
    %2811 = vmatprep.subr.mxu0 0.0
    %2812 = vmatpush1.xpose.msra.mxu0 0.0
    %2813 = vmatprep.subr.mxu0 0.0
    %2814 = vmatpush1.xpose.msra.mxu0 0.0
    %2815 = vmatprep.subr.mxu0 0.0
    %2816 = vmatpush1.xpose.msra.mxu0 0.0
    %2817 = vmatprep.subr.mxu0 0.0
    %2818 = vmatpush1.xpose.msra.mxu0 0.0
    %2819 = vmatprep.subr.mxu0 0.0
    %2820 = vmatpush1.xpose.msra.mxu0 0.0
    %2821 = vmatprep.subr.mxu0 0.0
    %2822 = vmatpush1.xpose.msra.mxu0 0.0
    %2823 = vmatprep.subr.mxu0 0.0
    %2824 = vmatpush1.xpose.msra.mxu0 0.0
    %2825 = vmatprep.subr.mxu0 0.0
    %2826 = vmatpush1.xpose.msra.mxu0 0.0
    %2827 = vmatprep.subr.mxu0 0.0
    %2828 = vmatpush1.xpose.msra.mxu0 0.0
    %2829 = vmatprep.subr.mxu0 0.0
    %2830 = vmatpush1.xpose.msra.mxu0 0.0
    %2831 = vmatprep.subr.mxu0 0.0
    %2832 = vmatpush1.xpose.msra.mxu0 0.0
    %2833 = vmatprep.subr.mxu0 0.0
    %2834 = vmatpush1.xpose.msra.mxu0 0.0
    %2835 = vmatprep.subr.mxu0 0.0
    %2836 = vmatpush1.xpose.msra.mxu0 0.0
    %2837 = vmatprep.subr.mxu0 0.0
    %2838 = vmatpush1.xpose.msra.mxu0 0.0
    %2839 = vmatprep.subr.mxu0 0.0
    %2840 = vmatpush1.xpose.msra.mxu0 0.0
    %2841 = vmatprep.subr.mxu0 0.0
    %2842 = vmatpush1.xpose.msra.mxu0 0.0
    %2843 = vmatprep.subr.mxu0 0.0
    %2844 = vmatpush1.xpose.msra.mxu0 0.0
    %2845 = vmatprep.subr.mxu0 0.0
    %2846 = vmatpush1.xpose.msra.mxu0 0.0
    %2847 = vmatprep.subr.mxu0 0.0
    %2848 = vmatpush1.xpose.msra.mxu0 0.0
    %2849 = vmatprep.subr.mxu0 0.0
    %2850 = vmatpush1.xpose.msra.mxu0 0.0
    %2851 = vmatprep.subr.mxu0 0.0
    %2852 = vmatpush1.xpose.msra.mxu0 0.0
    %2853 = vmatprep.subr.mxu0 0.0
    %2854 = vmatpush1.xpose.msra.mxu0 0.0
    %2855 = vmatprep.subr.mxu0 0.0
    %2856 = vmatpush1.xpose.msra.mxu0 0.0
    %2857 = vmatprep.subr.mxu0 0.0
    %2858 = vmatpush1.xpose.msra.mxu0 0.0
    %2859 = vmatprep.subr.mxu0 0.0
    %2860 = vmatpush1.xpose.msra.mxu0 0.0
    %2861 = vmatprep.subr.mxu0 0.0
    %2862 = vmatpush1.xpose.msra.mxu0 0.0
    %2863 = vmatprep.subr.mxu0 0.0
    %2864 = vmatpush1.xpose.msra.mxu0 0.0
    %2865 = vmatprep.mubr.f32.mxu0 0.0
    %2866 = vmatmul.mubr.f32.gmra.mrb[0].mxu0 %v2797
    %v2867 = vpop.f32.mrb[0].mxu0
    %v2868 = vadd.f32 0.0, %v2867
    %v2869 = vpop.f32.mrb[0].mxu0
    %2870 = vdwg.mxu0
    %2871 = vrot.lane.b32.xlu0 %v2132, 112
    %v2872 = vpop.permute.xlu0 %2871
    %2873 = vrot.lane.b32.xlu0 %v2132, 80
    %v2874 = vpop.permute.xlu0 %2873
    %v2875 = vsel %vm322, %v2872, 0
    %v2877 = vsel %vm322, %v2874, 0
    %2879 = vmatprep.subr.mxu0 0.0
    %2880 = vmatpush1.xpose.msra.mxu0 %v2877
    %2881 = vmatprep.subr.mxu0 0.0
    %2882 = vmatpush1.xpose.msra.mxu0 0.0
    %2883 = vmatprep.subr.mxu0 0.0
    %2884 = vmatpush1.xpose.msra.mxu0 0.0
    %2885 = vmatprep.subr.mxu0 0.0
    %2886 = vmatpush1.xpose.msra.mxu0 0.0
    %2887 = vmatprep.subr.mxu0 0.0
    %2888 = vmatpush1.xpose.msra.mxu0 0.0
    %2889 = vmatprep.subr.mxu0 0.0
    %2890 = vmatpush1.xpose.msra.mxu0 0.0
    %2891 = vmatprep.subr.mxu0 0.0
    %2892 = vmatpush1.xpose.msra.mxu0 0.0
    %2893 = vmatprep.subr.mxu0 0.0
    %2894 = vmatpush1.xpose.msra.mxu0 0.0
    %2895 = vmatprep.subr.mxu0 0.0
    %2896 = vmatpush1.xpose.msra.mxu0 0.0
    %2897 = vmatprep.subr.mxu0 0.0
    %2898 = vmatpush1.xpose.msra.mxu0 0.0
    %2899 = vmatprep.subr.mxu0 0.0
    %2900 = vmatpush1.xpose.msra.mxu0 0.0
    %2901 = vmatprep.subr.mxu0 0.0
    %2902 = vmatpush1.xpose.msra.mxu0 0.0
    %2903 = vmatprep.subr.mxu0 0.0
    %2904 = vmatpush1.xpose.msra.mxu0 0.0
    %2905 = vmatprep.subr.mxu0 0.0
    %2906 = vmatpush1.xpose.msra.mxu0 0.0
    %2907 = vmatprep.subr.mxu0 0.0
    %2908 = vmatpush1.xpose.msra.mxu0 0.0
    %2909 = vmatprep.subr.mxu0 0.0
    %2910 = vmatpush1.xpose.msra.mxu0 0.0
    %2911 = vmatprep.subr.mxu0 0.0
    %2912 = vmatpush1.xpose.msra.mxu0 0.0
    %2913 = vmatprep.subr.mxu0 0.0
    %2914 = vmatpush1.xpose.msra.mxu0 0.0
    %2915 = vmatprep.subr.mxu0 0.0
    %2916 = vmatpush1.xpose.msra.mxu0 0.0
    %2917 = vmatprep.subr.mxu0 0.0
    %2918 = vmatpush1.xpose.msra.mxu0 0.0
    %2919 = vmatprep.subr.mxu0 0.0
    %2920 = vmatpush1.xpose.msra.mxu0 0.0
    %2921 = vmatprep.subr.mxu0 0.0
    %2922 = vmatpush1.xpose.msra.mxu0 0.0
    %2923 = vmatprep.subr.mxu0 0.0
    %2924 = vmatpush1.xpose.msra.mxu0 0.0
    %2925 = vmatprep.subr.mxu0 0.0
    %2926 = vmatpush1.xpose.msra.mxu0 0.0
    %2927 = vmatprep.subr.mxu0 0.0
    %2928 = vmatpush1.xpose.msra.mxu0 0.0
    %2929 = vmatprep.subr.mxu0 0.0
    %2930 = vmatpush1.xpose.msra.mxu0 0.0
    %2931 = vmatprep.subr.mxu0 0.0
    %2932 = vmatpush1.xpose.msra.mxu0 0.0
    %2933 = vmatprep.subr.mxu0 0.0
    %2934 = vmatpush1.xpose.msra.mxu0 0.0
    %2935 = vmatprep.subr.mxu0 0.0
    %2936 = vmatpush1.xpose.msra.mxu0 0.0
    %2937 = vmatprep.subr.mxu0 0.0
    %2938 = vmatpush1.xpose.msra.mxu0 0.0
    %2939 = vmatprep.subr.mxu0 0.0
    %2940 = vmatpush1.xpose.msra.mxu0 0.0
    %2941 = vmatprep.subr.mxu0 0.0
    %2942 = vmatpush1.xpose.msra.mxu0 0.0
    %2943 = vmatprep.mubr.f32.mxu0 0.0
    %2944 = vmatmul.mubr.f32.gmra.mrb[0].mxu0 %v2875
    %v2945 = vpop.f32.mrb[0].mxu0
    %v2946 = vadd.f32 0.0, %v2945
    %v2947 = vpop.f32.mrb[0].mxu0
    %2948 = vdwg.mxu0
    %v2949 = vsel %vm322, %v2868, -inf
    %2950 = vmax.xlane.f32.xlu0 %v2949
    %v2951 = vpop.xlane.xlu0 %2950
    %v2952 = vsel %vm322, %v2946, -inf
    %2953 = vmax.xlane.f32.xlu0 %v2952
    %v2954 = vpop.xlane.xlu0 %2953
    %v2955 = vsub.f32 %v2868, %v2951
    %v2956 = vsub.f32 %v2946, %v2954
    %v2957 = vmul.f32 %v2955, 1.442695
    %v2958 = vpow.pop %v2957
    %v2959 = vmul.f32 %v2956, 1.442695
    %v2960 = vpow.pop %v2959
    %v2961 = vsel %vm322, %v2958, 0.0
    %2962 = vadd.xlane.f32.xlu0 %v2961
    %v2963 = vpop.xlane.xlu0 %2962
    %v2964 = vsel %vm322, %v2960, 0.0
    %2965 = vadd.xlane.f32.xlu0 %v2964
    %v2966 = vpop.xlane.xlu0 %2965
    %v2967 = vrcp.pop %v2963
    %v2968 = vrcp.pop %v2966
    %v2969 = vmul.f32 %v2958, %v2967
    %v2970 = vmul.f32 %v2960, %v2968
    %2971 = vrot.lane.b32.xlu0 %v2127, 48
    %v2972 = vpop.permute.xlu0 %2971
    %v2975 = vsel %vm322, %v2969, 0
    %2977 = vmatprep.subr.mxu0 0.0
    %2978 = vmatpush1.msra.mxu0 %v2972
    %2979 = vmatprep.subr.mxu0 0.0
    %2980 = vmatpush1.msra.mxu0 0.0
    %2981 = vmatprep.subr.mxu0 0.0
    %2982 = vmatpush1.msra.mxu0 0.0
    %2983 = vmatprep.subr.mxu0 0.0
    %2984 = vmatpush1.msra.mxu0 0.0
    %2985 = vmatprep.subr.mxu0 0.0
    %2986 = vmatpush1.msra.mxu0 0.0
    %2987 = vmatprep.subr.mxu0 0.0
    %2988 = vmatpush1.msra.mxu0 0.0
    %2989 = vmatprep.subr.mxu0 0.0
    %2990 = vmatpush1.msra.mxu0 0.0
    %2991 = vmatprep.subr.mxu0 0.0
    %2992 = vmatpush1.msra.mxu0 0.0
    %2993 = vmatprep.subr.mxu0 0.0
    %2994 = vmatpush1.msra.mxu0 0.0
    %2995 = vmatprep.subr.mxu0 0.0
    %2996 = vmatpush1.msra.mxu0 0.0
    %2997 = vmatprep.subr.mxu0 0.0
    %2998 = vmatpush1.msra.mxu0 0.0
    %2999 = vmatprep.subr.mxu0 0.0
    %3000 = vmatpush1.msra.mxu0 0.0
    %3001 = vmatprep.subr.mxu0 0.0
    %3002 = vmatpush1.msra.mxu0 0.0
    %3003 = vmatprep.subr.mxu0 0.0
    %3004 = vmatpush1.msra.mxu0 0.0
    %3005 = vmatprep.subr.mxu0 0.0
    %3006 = vmatpush1.msra.mxu0 0.0
    %3007 = vmatprep.subr.mxu0 0.0
    %3008 = vmatpush1.msra.mxu0 0.0
    %3009 = vmatprep.subr.mxu0 0.0
    %3010 = vmatpush1.msra.mxu0 0.0
    %3011 = vmatprep.subr.mxu0 0.0
    %3012 = vmatpush1.msra.mxu0 0.0
    %3013 = vmatprep.subr.mxu0 0.0
    %3014 = vmatpush1.msra.mxu0 0.0
    %3015 = vmatprep.subr.mxu0 0.0
    %3016 = vmatpush1.msra.mxu0 0.0
    %3017 = vmatprep.subr.mxu0 0.0
    %3018 = vmatpush1.msra.mxu0 0.0
    %3019 = vmatprep.subr.mxu0 0.0
    %3020 = vmatpush1.msra.mxu0 0.0
    %3021 = vmatprep.subr.mxu0 0.0
    %3022 = vmatpush1.msra.mxu0 0.0
    %3023 = vmatprep.subr.mxu0 0.0
    %3024 = vmatpush1.msra.mxu0 0.0
    %3025 = vmatprep.subr.mxu0 0.0
    %3026 = vmatpush1.msra.mxu0 0.0
    %3027 = vmatprep.subr.mxu0 0.0
    %3028 = vmatpush1.msra.mxu0 0.0
    %3029 = vmatprep.subr.mxu0 0.0
    %3030 = vmatpush1.msra.mxu0 0.0
    %3031 = vmatprep.subr.mxu0 0.0
    %3032 = vmatpush1.msra.mxu0 0.0
    %3033 = vmatprep.subr.mxu0 0.0
    %3034 = vmatpush1.msra.mxu0 0.0
    %3035 = vmatprep.subr.mxu0 0.0
    %3036 = vmatpush1.msra.mxu0 0.0
    %3037 = vmatprep.subr.mxu0 0.0
    %3038 = vmatpush1.msra.mxu0 0.0
    %3039 = vmatprep.subr.mxu0 0.0
    %3040 = vmatpush1.msra.mxu0 0.0
    %3041 = vmatprep.mubr.f32.mxu0 0.0
    %3042 = vmatmul.mubr.f32.gmra.mrb[0].mxu0 %v2975
    %v3043 = vpop.f32.mrb[0].mxu0
    %v3044 = vadd.f32 0.0, %v3043
    %v3045 = vpop.f32.mrb[0].mxu0
    %3046 = vdwg.mxu0
    %3047 = vrot.lane.b32.xlu0 %v2132, 48
    %v3048 = vpop.permute.xlu0 %3047
    %v3051 = vsel %vm322, %v2970, 0
    %3053 = vmatprep.subr.mxu0 0.0
    %3054 = vmatpush1.msra.mxu0 %v3048
    %3055 = vmatprep.subr.mxu0 0.0
    %3056 = vmatpush1.msra.mxu0 0.0
    %3057 = vmatprep.subr.mxu0 0.0
    %3058 = vmatpush1.msra.mxu0 0.0
    %3059 = vmatprep.subr.mxu0 0.0
    %3060 = vmatpush1.msra.mxu0 0.0
    %3061 = vmatprep.subr.mxu0 0.0
    %3062 = vmatpush1.msra.mxu0 0.0
    %3063 = vmatprep.subr.mxu0 0.0
    %3064 = vmatpush1.msra.mxu0 0.0
    %3065 = vmatprep.subr.mxu0 0.0
    %3066 = vmatpush1.msra.mxu0 0.0
    %3067 = vmatprep.subr.mxu0 0.0
    %3068 = vmatpush1.msra.mxu0 0.0
    %3069 = vmatprep.subr.mxu0 0.0
    %3070 = vmatpush1.msra.mxu0 0.0
    %3071 = vmatprep.subr.mxu0 0.0
    %3072 = vmatpush1.msra.mxu0 0.0
    %3073 = vmatprep.subr.mxu0 0.0
    %3074 = vmatpush1.msra.mxu0 0.0
    %3075 = vmatprep.subr.mxu0 0.0
    %3076 = vmatpush1.msra.mxu0 0.0
    %3077 = vmatprep.subr.mxu0 0.0
    %3078 = vmatpush1.msra.mxu0 0.0
    %3079 = vmatprep.subr.mxu0 0.0
    %3080 = vmatpush1.msra.mxu0 0.0
    %3081 = vmatprep.subr.mxu0 0.0
    %3082 = vmatpush1.msra.mxu0 0.0
    %3083 = vmatprep.subr.mxu0 0.0
    %3084 = vmatpush1.msra.mxu0 0.0
    %3085 = vmatprep.subr.mxu0 0.0
    %3086 = vmatpush1.msra.mxu0 0.0
    %3087 = vmatprep.subr.mxu0 0.0
    %3088 = vmatpush1.msra.mxu0 0.0
    %3089 = vmatprep.subr.mxu0 0.0
    %3090 = vmatpush1.msra.mxu0 0.0
    %3091 = vmatprep.subr.mxu0 0.0
    %3092 = vmatpush1.msra.mxu0 0.0
    %3093 = vmatprep.subr.mxu0 0.0
    %3094 = vmatpush1.msra.mxu0 0.0
    %3095 = vmatprep.subr.mxu0 0.0
    %3096 = vmatpush1.msra.mxu0 0.0
    %3097 = vmatprep.subr.mxu0 0.0
    %3098 = vmatpush1.msra.mxu0 0.0
    %3099 = vmatprep.subr.mxu0 0.0
    %3100 = vmatpush1.msra.mxu0 0.0
    %3101 = vmatprep.subr.mxu0 0.0
    %3102 = vmatpush1.msra.mxu0 0.0
    %3103 = vmatprep.subr.mxu0 0.0
    %3104 = vmatpush1.msra.mxu0 0.0
    %3105 = vmatprep.subr.mxu0 0.0
    %3106 = vmatpush1.msra.mxu0 0.0
    %3107 = vmatprep.subr.mxu0 0.0
    %3108 = vmatpush1.msra.mxu0 0.0
    %3109 = vmatprep.subr.mxu0 0.0
    %3110 = vmatpush1.msra.mxu0 0.0
    %3111 = vmatprep.subr.mxu0 0.0
    %3112 = vmatpush1.msra.mxu0 0.0
    %3113 = vmatprep.subr.mxu0 0.0
    %3114 = vmatpush1.msra.mxu0 0.0
    %3115 = vmatprep.subr.mxu0 0.0
    %3116 = vmatpush1.msra.mxu0 0.0
    %3117 = vmatprep.mubr.f32.mxu0 0.0
    %3118 = vmatmul.mubr.f32.gmra.mrb[0].mxu0 %v3051
    %v3119 = vpop.f32.mrb[0].mxu0
    %v3120 = vadd.f32 0.0, %v3119
    %v3121 = vpop.f32.mrb[0].mxu0
    %3122 = vdwg.mxu0
    %3123 = vrot.lane.b32.xlu0 %v2127, 104
    %v3124 = vpop.permute.xlu0 %3123
    %3125 = vrot.lane.b32.xlu0 %v2127, 72
    %v3126 = vpop.permute.xlu0 %3125
    %v3127 = vsel %vm322, %v3124, 0
    %v3129 = vsel %vm322, %v3126, 0
    %3131 = vmatprep.subr.mxu0 0.0
    %3132 = vmatpush1.xpose.msra.mxu0 %v3129
    %3133 = vmatprep.subr.mxu0 0.0
    %3134 = vmatpush1.xpose.msra.mxu0 0.0
    %3135 = vmatprep.subr.mxu0 0.0
    %3136 = vmatpush1.xpose.msra.mxu0 0.0
    %3137 = vmatprep.subr.mxu0 0.0
    %3138 = vmatpush1.xpose.msra.mxu0 0.0
    %3139 = vmatprep.subr.mxu0 0.0
    %3140 = vmatpush1.xpose.msra.mxu0 0.0
    %3141 = vmatprep.subr.mxu0 0.0
    %3142 = vmatpush1.xpose.msra.mxu0 0.0
    %3143 = vmatprep.subr.mxu0 0.0
    %3144 = vmatpush1.xpose.msra.mxu0 0.0
    %3145 = vmatprep.subr.mxu0 0.0
    %3146 = vmatpush1.xpose.msra.mxu0 0.0
    %3147 = vmatprep.subr.mxu0 0.0
    %3148 = vmatpush1.xpose.msra.mxu0 0.0
    %3149 = vmatprep.subr.mxu0 0.0
    %3150 = vmatpush1.xpose.msra.mxu0 0.0
    %3151 = vmatprep.subr.mxu0 0.0
    %3152 = vmatpush1.xpose.msra.mxu0 0.0
    %3153 = vmatprep.subr.mxu0 0.0
    %3154 = vmatpush1.xpose.msra.mxu0 0.0
    %3155 = vmatprep.subr.mxu0 0.0
    %3156 = vmatpush1.xpose.msra.mxu0 0.0
    %3157 = vmatprep.subr.mxu0 0.0
    %3158 = vmatpush1.xpose.msra.mxu0 0.0
    %3159 = vmatprep.subr.mxu0 0.0
    %3160 = vmatpush1.xpose.msra.mxu0 0.0
    %3161 = vmatprep.subr.mxu0 0.0
    %3162 = vmatpush1.xpose.msra.mxu0 0.0
    %3163 = vmatprep.subr.mxu0 0.0
    %3164 = vmatpush1.xpose.msra.mxu0 0.0
    %3165 = vmatprep.subr.mxu0 0.0
    %3166 = vmatpush1.xpose.msra.mxu0 0.0
    %3167 = vmatprep.subr.mxu0 0.0
    %3168 = vmatpush1.xpose.msra.mxu0 0.0
    %3169 = vmatprep.subr.mxu0 0.0
    %3170 = vmatpush1.xpose.msra.mxu0 0.0
    %3171 = vmatprep.subr.mxu0 0.0
    %3172 = vmatpush1.xpose.msra.mxu0 0.0
    %3173 = vmatprep.subr.mxu0 0.0
    %3174 = vmatpush1.xpose.msra.mxu0 0.0
    %3175 = vmatprep.subr.mxu0 0.0
    %3176 = vmatpush1.xpose.msra.mxu0 0.0
    %3177 = vmatprep.subr.mxu0 0.0
    %3178 = vmatpush1.xpose.msra.mxu0 0.0
    %3179 = vmatprep.subr.mxu0 0.0
    %3180 = vmatpush1.xpose.msra.mxu0 0.0
    %3181 = vmatprep.subr.mxu0 0.0
    %3182 = vmatpush1.xpose.msra.mxu0 0.0
    %3183 = vmatprep.subr.mxu0 0.0
    %3184 = vmatpush1.xpose.msra.mxu0 0.0
    %3185 = vmatprep.subr.mxu0 0.0
    %3186 = vmatpush1.xpose.msra.mxu0 0.0
    %3187 = vmatprep.subr.mxu0 0.0
    %3188 = vmatpush1.xpose.msra.mxu0 0.0
    %3189 = vmatprep.subr.mxu0 0.0
    %3190 = vmatpush1.xpose.msra.mxu0 0.0
    %3191 = vmatprep.subr.mxu0 0.0
    %3192 = vmatpush1.xpose.msra.mxu0 0.0
    %3193 = vmatprep.subr.mxu0 0.0
    %3194 = vmatpush1.xpose.msra.mxu0 0.0
    %3195 = vmatprep.mubr.f32.mxu0 0.0
    %3196 = vmatmul.mubr.f32.gmra.mrb[0].mxu0 %v3127
    %v3197 = vpop.f32.mrb[0].mxu0
    %v3198 = vadd.f32 0.0, %v3197
    %v3199 = vpop.f32.mrb[0].mxu0
    %3200 = vdwg.mxu0
    %3201 = vrot.lane.b32.xlu0 %v2132, 104
    %v3202 = vpop.permute.xlu0 %3201
    %3203 = vrot.lane.b32.xlu0 %v2132, 72
    %v3204 = vpop.permute.xlu0 %3203
    %v3205 = vsel %vm322, %v3202, 0
    %v3207 = vsel %vm322, %v3204, 0
    %3209 = vmatprep.subr.mxu0 0.0
    %3210 = vmatpush1.xpose.msra.mxu0 %v3207
    %3211 = vmatprep.subr.mxu0 0.0
    %3212 = vmatpush1.xpose.msra.mxu0 0.0
    %3213 = vmatprep.subr.mxu0 0.0
    %3214 = vmatpush1.xpose.msra.mxu0 0.0
    %3215 = vmatprep.subr.mxu0 0.0
    %3216 = vmatpush1.xpose.msra.mxu0 0.0
    %3217 = vmatprep.subr.mxu0 0.0
    %3218 = vmatpush1.xpose.msra.mxu0 0.0
    %3219 = vmatprep.subr.mxu0 0.0
    %3220 = vmatpush1.xpose.msra.mxu0 0.0
    %3221 = vmatprep.subr.mxu0 0.0
    %3222 = vmatpush1.xpose.msra.mxu0 0.0
    %3223 = vmatprep.subr.mxu0 0.0
    %3224 = vmatpush1.xpose.msra.mxu0 0.0
    %3225 = vmatprep.subr.mxu0 0.0
    %3226 = vmatpush1.xpose.msra.mxu0 0.0
    %3227 = vmatprep.subr.mxu0 0.0
    %3228 = vmatpush1.xpose.msra.mxu0 0.0
    %3229 = vmatprep.subr.mxu0 0.0
    %3230 = vmatpush1.xpose.msra.mxu0 0.0
    %3231 = vmatprep.subr.mxu0 0.0
    %3232 = vmatpush1.xpose.msra.mxu0 0.0
    %3233 = vmatprep.subr.mxu0 0.0
    %3234 = vmatpush1.xpose.msra.mxu0 0.0
    %3235 = vmatprep.subr.mxu0 0.0
    %3236 = vmatpush1.xpose.msra.mxu0 0.0
    %3237 = vmatprep.subr.mxu0 0.0
    %3238 = vmatpush1.xpose.msra.mxu0 0.0
    %3239 = vmatprep.subr.mxu0 0.0
    %3240 = vmatpush1.xpose.msra.mxu0 0.0
    %3241 = vmatprep.subr.mxu0 0.0
    %3242 = vmatpush1.xpose.msra.mxu0 0.0
    %3243 = vmatprep.subr.mxu0 0.0
    %3244 = vmatpush1.xpose.msra.mxu0 0.0
    %3245 = vmatprep.subr.mxu0 0.0
    %3246 = vmatpush1.xpose.msra.mxu0 0.0
    %3247 = vmatprep.subr.mxu0 0.0
    %3248 = vmatpush1.xpose.msra.mxu0 0.0
    %3249 = vmatprep.subr.mxu0 0.0
    %3250 = vmatpush1.xpose.msra.mxu0 0.0
    %3251 = vmatprep.subr.mxu0 0.0
    %3252 = vmatpush1.xpose.msra.mxu0 0.0
    %3253 = vmatprep.subr.mxu0 0.0
    %3254 = vmatpush1.xpose.msra.mxu0 0.0
    %3255 = vmatprep.subr.mxu0 0.0
    %3256 = vmatpush1.xpose.msra.mxu0 0.0
    %3257 = vmatprep.subr.mxu0 0.0
    %3258 = vmatpush1.xpose.msra.mxu0 0.0
    %3259 = vmatprep.subr.mxu0 0.0
    %3260 = vmatpush1.xpose.msra.mxu0 0.0
    %3261 = vmatprep.subr.mxu0 0.0
    %3262 = vmatpush1.xpose.msra.mxu0 0.0
    %3263 = vmatprep.subr.mxu0 0.0
    %3264 = vmatpush1.xpose.msra.mxu0 0.0
    %3265 = vmatprep.subr.mxu0 0.0
    %3266 = vmatpush1.xpose.msra.mxu0 0.0
    %3267 = vmatprep.subr.mxu0 0.0
    %3268 = vmatpush1.xpose.msra.mxu0 0.0
    %3269 = vmatprep.subr.mxu0 0.0
    %3270 = vmatpush1.xpose.msra.mxu0 0.0
    %3271 = vmatprep.subr.mxu0 0.0
    %3272 = vmatpush1.xpose.msra.mxu0 0.0
    %3273 = vmatprep.mubr.f32.mxu0 0.0
    %3274 = vmatmul.mubr.f32.gmra.mrb[0].mxu0 %v3205
    %v3275 = vpop.f32.mrb[0].mxu0
    %v3276 = vadd.f32 0.0, %v3275
    %v3277 = vpop.f32.mrb[0].mxu0
    %3278 = vdwg.mxu0
    %v3279 = vsel %vm322, %v3198, -inf
    %3280 = vmax.xlane.f32.xlu0 %v3279
    %v3281 = vpop.xlane.xlu0 %3280
    %v3282 = vsel %vm322, %v3276, -inf
    %3283 = vmax.xlane.f32.xlu0 %v3282
    %v3284 = vpop.xlane.xlu0 %3283
    %v3285 = vsub.f32 %v3198, %v3281
    %v3286 = vsub.f32 %v3276, %v3284
    %v3287 = vmul.f32 %v3285, 1.442695
    %v3288 = vpow.pop %v3287
    %v3289 = vmul.f32 %v3286, 1.442695
    %v3290 = vpow.pop %v3289
    %v3291 = vsel %vm322, %v3288, 0.0
    %3292 = vadd.xlane.f32.xlu0 %v3291
    %v3293 = vpop.xlane.xlu0 %3292
    %v3294 = vsel %vm322, %v3290, 0.0
    %3295 = vadd.xlane.f32.xlu0 %v3294
    %v3296 = vpop.xlane.xlu0 %3295
    %v3297 = vrcp.pop %v3293
    %v3298 = vrcp.pop %v3296
    %v3299 = vmul.f32 %v3288, %v3297
    %v3300 = vmul.f32 %v3290, %v3298
    %3301 = vrot.lane.b32.xlu0 %v2127, 40
    %v3302 = vpop.permute.xlu0 %3301
    %v3305 = vsel %vm322, %v3299, 0
    %3307 = vmatprep.subr.mxu0 0.0
    %3308 = vmatpush1.msra.mxu0 %v3302
    %3309 = vmatprep.subr.mxu0 0.0
    %3310 = vmatpush1.msra.mxu0 0.0
    %3311 = vmatprep.subr.mxu0 0.0
    %3312 = vmatpush1.msra.mxu0 0.0
    %3313 = vmatprep.subr.mxu0 0.0
    %3314 = vmatpush1.msra.mxu0 0.0
    %3315 = vmatprep.subr.mxu0 0.0
    %3316 = vmatpush1.msra.mxu0 0.0
    %3317 = vmatprep.subr.mxu0 0.0
    %3318 = vmatpush1.msra.mxu0 0.0
    %3319 = vmatprep.subr.mxu0 0.0
    %3320 = vmatpush1.msra.mxu0 0.0
    %3321 = vmatprep.subr.mxu0 0.0
    %3322 = vmatpush1.msra.mxu0 0.0
    %3323 = vmatprep.subr.mxu0 0.0
    %3324 = vmatpush1.msra.mxu0 0.0
    %3325 = vmatprep.subr.mxu0 0.0
    %3326 = vmatpush1.msra.mxu0 0.0
    %3327 = vmatprep.subr.mxu0 0.0
    %3328 = vmatpush1.msra.mxu0 0.0
    %3329 = vmatprep.subr.mxu0 0.0
    %3330 = vmatpush1.msra.mxu0 0.0
    %3331 = vmatprep.subr.mxu0 0.0
    %3332 = vmatpush1.msra.mxu0 0.0
    %3333 = vmatprep.subr.mxu0 0.0
    %3334 = vmatpush1.msra.mxu0 0.0
    %3335 = vmatprep.subr.mxu0 0.0
    %3336 = vmatpush1.msra.mxu0 0.0
    %3337 = vmatprep.subr.mxu0 0.0
    %3338 = vmatpush1.msra.mxu0 0.0
    %3339 = vmatprep.subr.mxu0 0.0
    %3340 = vmatpush1.msra.mxu0 0.0
    %3341 = vmatprep.subr.mxu0 0.0
    %3342 = vmatpush1.msra.mxu0 0.0
    %3343 = vmatprep.subr.mxu0 0.0
    %3344 = vmatpush1.msra.mxu0 0.0
    %3345 = vmatprep.subr.mxu0 0.0
    %3346 = vmatpush1.msra.mxu0 0.0
    %3347 = vmatprep.subr.mxu0 0.0
    %3348 = vmatpush1.msra.mxu0 0.0
    %3349 = vmatprep.subr.mxu0 0.0
    %3350 = vmatpush1.msra.mxu0 0.0
    %3351 = vmatprep.subr.mxu0 0.0
    %3352 = vmatpush1.msra.mxu0 0.0
    %3353 = vmatprep.subr.mxu0 0.0
    %3354 = vmatpush1.msra.mxu0 0.0
    %3355 = vmatprep.subr.mxu0 0.0
    %3356 = vmatpush1.msra.mxu0 0.0
    %3357 = vmatprep.subr.mxu0 0.0
    %3358 = vmatpush1.msra.mxu0 0.0
    %3359 = vmatprep.subr.mxu0 0.0
    %3360 = vmatpush1.msra.mxu0 0.0
    %3361 = vmatprep.subr.mxu0 0.0
    %3362 = vmatpush1.msra.mxu0 0.0
    %3363 = vmatprep.subr.mxu0 0.0
    %3364 = vmatpush1.msra.mxu0 0.0
    %3365 = vmatprep.subr.mxu0 0.0
    %3366 = vmatpush1.msra.mxu0 0.0
    %3367 = vmatprep.subr.mxu0 0.0
    %3368 = vmatpush1.msra.mxu0 0.0
    %3369 = vmatprep.subr.mxu0 0.0
    %3370 = vmatpush1.msra.mxu0 0.0
    %3371 = vmatprep.mubr.f32.mxu0 0.0
    %3372 = vmatmul.mubr.f32.gmra.mrb[0].mxu0 %v3305
    %v3373 = vpop.f32.mrb[0].mxu0
    %v3374 = vadd.f32 0.0, %v3373
    %v3375 = vpop.f32.mrb[0].mxu0
    %3376 = vdwg.mxu0
    %3377 = vrot.lane.b32.xlu0 %v2132, 40
    %v3378 = vpop.permute.xlu0 %3377
    %v3381 = vsel %vm322, %v3300, 0
    %3383 = vmatprep.subr.mxu0 0.0
    %3384 = vmatpush1.msra.mxu0 %v3378
    %3385 = vmatprep.subr.mxu0 0.0
    %3386 = vmatpush1.msra.mxu0 0.0
    %3387 = vmatprep.subr.mxu0 0.0
    %3388 = vmatpush1.msra.mxu0 0.0
    %3389 = vmatprep.subr.mxu0 0.0
    %3390 = vmatpush1.msra.mxu0 0.0
    %3391 = vmatprep.subr.mxu0 0.0
    %3392 = vmatpush1.msra.mxu0 0.0
    %3393 = vmatprep.subr.mxu0 0.0
    %3394 = vmatpush1.msra.mxu0 0.0
    %3395 = vmatprep.subr.mxu0 0.0
    %3396 = vmatpush1.msra.mxu0 0.0
    %3397 = vmatprep.subr.mxu0 0.0
    %3398 = vmatpush1.msra.mxu0 0.0
    %3399 = vmatprep.subr.mxu0 0.0
    %3400 = vmatpush1.msra.mxu0 0.0
    %3401 = vmatprep.subr.mxu0 0.0
    %3402 = vmatpush1.msra.mxu0 0.0
    %3403 = vmatprep.subr.mxu0 0.0
    %3404 = vmatpush1.msra.mxu0 0.0
    %3405 = vmatprep.subr.mxu0 0.0
    %3406 = vmatpush1.msra.mxu0 0.0
    %3407 = vmatprep.subr.mxu0 0.0
    %3408 = vmatpush1.msra.mxu0 0.0
    %3409 = vmatprep.subr.mxu0 0.0
    %3410 = vmatpush1.msra.mxu0 0.0
    %3411 = vmatprep.subr.mxu0 0.0
    %3412 = vmatpush1.msra.mxu0 0.0
    %3413 = vmatprep.subr.mxu0 0.0
    %3414 = vmatpush1.msra.mxu0 0.0
    %3415 = vmatprep.subr.mxu0 0.0
    %3416 = vmatpush1.msra.mxu0 0.0
    %3417 = vmatprep.subr.mxu0 0.0
    %3418 = vmatpush1.msra.mxu0 0.0
    %3419 = vmatprep.subr.mxu0 0.0
    %3420 = vmatpush1.msra.mxu0 0.0
    %3421 = vmatprep.subr.mxu0 0.0
    %3422 = vmatpush1.msra.mxu0 0.0
    %3423 = vmatprep.subr.mxu0 0.0
    %3424 = vmatpush1.msra.mxu0 0.0
    %3425 = vmatprep.subr.mxu0 0.0
    %3426 = vmatpush1.msra.mxu0 0.0
    %3427 = vmatprep.subr.mxu0 0.0
    %3428 = vmatpush1.msra.mxu0 0.0
    %3429 = vmatprep.subr.mxu0 0.0
    %3430 = vmatpush1.msra.mxu0 0.0
    %3431 = vmatprep.subr.mxu0 0.0
    %3432 = vmatpush1.msra.mxu0 0.0
    %3433 = vmatprep.subr.mxu0 0.0
    %3434 = vmatpush1.msra.mxu0 0.0
    %3435 = vmatprep.subr.mxu0 0.0
    %3436 = vmatpush1.msra.mxu0 0.0
    %3437 = vmatprep.subr.mxu0 0.0
    %3438 = vmatpush1.msra.mxu0 0.0
    %3439 = vmatprep.subr.mxu0 0.0
    %3440 = vmatpush1.msra.mxu0 0.0
    %3441 = vmatprep.subr.mxu0 0.0
    %3442 = vmatpush1.msra.mxu0 0.0
    %3443 = vmatprep.subr.mxu0 0.0
    %3444 = vmatpush1.msra.mxu0 0.0
    %3445 = vmatprep.subr.mxu0 0.0
    %3446 = vmatpush1.msra.mxu0 0.0
    %3447 = vmatprep.mubr.f32.mxu0 0.0
    %3448 = vmatmul.mubr.f32.gmra.mrb[0].mxu0 %v3381
    %v3449 = vpop.f32.mrb[0].mxu0
    %v3450 = vadd.f32 0.0, %v3449
    %v3451 = vpop.f32.mrb[0].mxu0
    %3452 = vdwg.mxu0
    %3455 = vrot.lane.b32.xlu0 %v2714, 8
    %v3456 = vpop.permute.xlu0 %3455
    %3457 = vrot.lane.b32.xlu0 %v2790, 8
    %v3458 = vpop.permute.xlu0 %3457
    %3463 = vrot.lane.b32.xlu0 %v3044, 16
    %v3464 = vpop.permute.xlu0 %3463
    %3465 = vrot.lane.b32.xlu0 %v3120, 16
    %v3466 = vpop.permute.xlu0 %3465
    %3471 = vrot.lane.b32.xlu0 %v3374, 24
    %v3472 = vpop.permute.xlu0 %3471
    %3473 = vrot.lane.b32.xlu0 %v3450, 24
    %v3474 = vpop.permute.xlu0 %3473
    %v3477 = vsel %vm322, %v2384, %v3456
    %v3478 = vsel %vm322, %v2460, %v3458
    %v3479 = vsel %vm1664, %v3477, %v3464
    %v3480 = vsel %vm1664, %v3478, %v3466
    %v3481 = vsel %vm1667, %v3479, %v3472
    %v3482 = vsel %vm1667, %v3480, %v3474
    %s3483 = scalar_lea.vmem [#allocation4], 32
    %v3484 = vld [vmem:[%s3483] sm:$0xff]
    %v3485 = vld [vmem:[%s3483 + $0x8] sm:$0xff]
    %v3486 = vld [vmem:[%s3483 + $0x10] sm:$0xff]
    %v3487 = vld [vmem:[%s3483 + $0x18] sm:$0xff]
    %s3488 = scalar_lea.vmem %s7, 1
    %v3489 = vld [vmem:[%s3488] sm:$0x1]
    %v3491 = vlaneseq
    %v3492 = vshrl.u32 %v3491, 7
    %v3493 = vsub.s32 0, %v3492
    %v3494 = vrot.slane %v3489, %v3493
    %v3497 = vsel %vm237, %v3481, 0
    %v3500 = vsel %vm237, %v3482, 0
    %3502 = vmatprep.subr.mxu0 0.0
    %3503 = vmatpush1.msra.mxu0 %v3484
    %3504 = vmatprep.subr.mxu0 0.0
    %3505 = vmatpush1.msra.mxu0 %v3485
    %3506 = vmatprep.subr.mxu0 0.0
    %3507 = vmatpush1.msra.mxu0 %v3486
    %3508 = vmatprep.subr.mxu0 0.0
    %3509 = vmatpush1.msra.mxu0 %v3487
    %3510 = vmatprep.subr.mxu0 0.0
    %3511 = vmatpush1.msra.mxu0 0.0
    %3512 = vmatprep.subr.mxu0 0.0
    %3513 = vmatpush1.msra.mxu0 0.0
    %3514 = vmatprep.subr.mxu0 0.0
    %3515 = vmatpush1.msra.mxu0 0.0
    %3516 = vmatprep.subr.mxu0 0.0
    %3517 = vmatpush1.msra.mxu0 0.0
    %3518 = vmatprep.subr.mxu0 0.0
    %3519 = vmatpush1.msra.mxu0 0.0
    %3520 = vmatprep.subr.mxu0 0.0
    %3521 = vmatpush1.msra.mxu0 0.0
    %3522 = vmatprep.subr.mxu0 0.0
    %3523 = vmatpush1.msra.mxu0 0.0
    %3524 = vmatprep.subr.mxu0 0.0
    %3525 = vmatpush1.msra.mxu0 0.0
    %3526 = vmatprep.subr.mxu0 0.0
    %3527 = vmatpush1.msra.mxu0 0.0
    %3528 = vmatprep.subr.mxu0 0.0
    %3529 = vmatpush1.msra.mxu0 0.0
    %3530 = vmatprep.subr.mxu0 0.0
    %3531 = vmatpush1.msra.mxu0 0.0
    %3532 = vmatprep.subr.mxu0 0.0
    %3533 = vmatpush1.msra.mxu0 0.0
    %3534 = vmatprep.subr.mxu0 0.0
    %3535 = vmatpush1.msra.mxu0 0.0
    %3536 = vmatprep.subr.mxu0 0.0
    %3537 = vmatpush1.msra.mxu0 0.0
    %3538 = vmatprep.subr.mxu0 0.0
    %3539 = vmatpush1.msra.mxu0 0.0
    %3540 = vmatprep.subr.mxu0 0.0
    %3541 = vmatpush1.msra.mxu0 0.0
    %3542 = vmatprep.subr.mxu0 0.0
    %3543 = vmatpush1.msra.mxu0 0.0
    %3544 = vmatprep.subr.mxu0 0.0
    %3545 = vmatpush1.msra.mxu0 0.0
    %3546 = vmatprep.subr.mxu0 0.0
    %3547 = vmatpush1.msra.mxu0 0.0
    %3548 = vmatprep.subr.mxu0 0.0
    %3549 = vmatpush1.msra.mxu0 0.0
    %3550 = vmatprep.subr.mxu0 0.0
    %3551 = vmatpush1.msra.mxu0 0.0
    %3552 = vmatprep.subr.mxu0 0.0
    %3553 = vmatpush1.msra.mxu0 0.0
    %3554 = vmatprep.subr.mxu0 0.0
    %3555 = vmatpush1.msra.mxu0 0.0
    %3556 = vmatprep.subr.mxu0 0.0
    %3557 = vmatpush1.msra.mxu0 0.0
    %3558 = vmatprep.subr.mxu0 0.0
    %3559 = vmatpush1.msra.mxu0 0.0
    %3560 = vmatprep.subr.mxu0 0.0
    %3561 = vmatpush1.msra.mxu0 0.0
    %3562 = vmatprep.subr.mxu0 0.0
    %3563 = vmatpush1.msra.mxu0 0.0
    %3564 = vmatprep.subr.mxu0 0.0
    %3565 = vmatpush1.msra.mxu0 0.0
    %3566 = vmatprep.mubr.f32.mxu0 0.0
    %3567 = vmatmul.mubr.f32.gmra.mrb[0].mxu0 %v3497
    %v3568 = vpop.f32.mrb[0].mxu0
    %v3569 = vadd.f32 %v3494, %v3568
    %v3570 = vpop.f32.mrb[0].mxu0
    %3571 = vmatprep.mubr.f32.mxu0 0.0
    %3572 = vmatmul.mubr.f32.gmra.mrb[0].mxu0 %v3500
    %v3573 = vpop.f32.mrb[0].mxu0
    %v3574 = vadd.f32 %v3494, %v3573
    %v3575 = vpop.f32.mrb[0].mxu0
    %3576 = vdwg.mxu0
    %v3577 = vadd.f32 %v2039, %v3569
    %v3578 = vadd.f32 %v2040, %v3574
    %s3579 = scalar_lea.vmem %s12, 1
    %v3580 = vld [vmem:[%s3579] sm:$0x1]
    %s3581 = scalar_lea.vmem %s13, 1
    %v3582 = vld [vmem:[%s3581] sm:$0x1]
    %v3583 = vsel %vm237, %v3577, 0.0
    %3584 = vadd.xlane.f32.xlu0 %v3583
    %v3585 = vpop.xlane.xlu0 %3584
    %v3586 = vsel %vm237, %v3578, 0.0
    %3587 = vadd.xlane.f32.xlu0 %v3586
    %v3588 = vpop.xlane.xlu0 %3587
    %v3589 = vmul.f32 %v3585, %v1772
    %v3590 = vmul.f32 %v3588, %v1772
    %v3591 = vsub.f32 %v3577, %v3589
    %v3592 = vsub.f32 %v3578, %v3590
    %v3593 = vmul.f32 %v3591, %v3591
    %v3594 = vmul.f32 %v3592, %v3592
    %v3595 = vsel %vm237, %v3593, 0.0
    %3596 = vadd.xlane.f32.xlu0 %v3595
    %v3597 = vpop.xlane.xlu0 %3596
    %v3598 = vsel %vm237, %v3594, 0.0
    %3599 = vadd.xlane.f32.xlu0 %v3598
    %v3600 = vpop.xlane.xlu0 %3599
    %v3601 = vmul.f32 %v3597, %v1772
    %v3602 = vmul.f32 %v3600, %v1772
    %v3603 = vadd.f32 %v3601, 1e-05
    %v3604 = vadd.f32 %v3602, 1e-05
    %v3605 = vrsqrt.pop %v3603
    %v3606 = vrsqrt.pop %v3604
    %v3607 = vmul.f32 %v3591, %v3605
    %v3608 = vmul.f32 %v3592, %v3606
    %v3610 = vlaneseq
    %v3611 = vshrl.u32 %v3610, 7
    %v3612 = vsub.s32 0, %v3611
    %v3613 = vrot.slane %v3580, %v3612
    %v3615 = vmul.f32 %v3607, %v3613
    %v3616 = vmul.f32 %v3608, %v3613
    %v3618 = vlaneseq
    %v3619 = vshrl.u32 %v3618, 7
    %v3620 = vsub.s32 0, %v3619
    %v3621 = vrot.slane %v3582, %v3620
    %v3623 = vadd.f32 %v3615, %v3621
    %v3624 = vadd.f32 %v3616, %v3621
    %s3625 = scalar_lea.vmem [#allocation6], 32
    %v3626 = vld [vmem:[%s3625] sm:$0xff]
    %v3627 = vld [vmem:[%s3625 + $0x8] sm:$0xff]
    %v3628 = vld [vmem:[%s3625 + $0x10] sm:$0xff]
    %v3629 = vld [vmem:[%s3625 + $0x18] sm:$0xff]
    %s3630 = scalar_lea.vmem %s9, 1
    %v3631 = vld [vmem:[%s3630] sm:$0x1]
    %v3633 = vlaneseq
    %v3634 = vshrl.u32 %v3633, 7
    %v3635 = vsub.s32 0, %v3634
    %v3636 = vrot.slane %v3631, %v3635
    %v3639 = vsel %vm237, %v3623, 0
    %v3642 = vsel %vm237, %v3624, 0
    %3644 = vmatprep.subr.mxu0 0.0
    %3645 = vmatpush1.msra.mxu0 %v3626
    %3646 = vmatprep.subr.mxu0 0.0
    %3647 = vmatpush1.msra.mxu0 %v3627
    %3648 = vmatprep.subr.mxu0 0.0
    %3649 = vmatpush1.msra.mxu0 %v3628
    %3650 = vmatprep.subr.mxu0 0.0
    %3651 = vmatpush1.msra.mxu0 %v3629
    %3652 = vmatprep.subr.mxu0 0.0
    %3653 = vmatpush1.msra.mxu0 0.0
    %3654 = vmatprep.subr.mxu0 0.0
    %3655 = vmatpush1.msra.mxu0 0.0
    %3656 = vmatprep.subr.mxu0 0.0
    %3657 = vmatpush1.msra.mxu0 0.0
    %3658 = vmatprep.subr.mxu0 0.0
    %3659 = vmatpush1.msra.mxu0 0.0
    %3660 = vmatprep.subr.mxu0 0.0
    %3661 = vmatpush1.msra.mxu0 0.0
    %3662 = vmatprep.subr.mxu0 0.0
    %3663 = vmatpush1.msra.mxu0 0.0
    %3664 = vmatprep.subr.mxu0 0.0
    %3665 = vmatpush1.msra.mxu0 0.0
    %3666 = vmatprep.subr.mxu0 0.0
    %3667 = vmatpush1.msra.mxu0 0.0
    %3668 = vmatprep.subr.mxu0 0.0
    %3669 = vmatpush1.msra.mxu0 0.0
    %3670 = vmatprep.subr.mxu0 0.0
    %3671 = vmatpush1.msra.mxu0 0.0
    %3672 = vmatprep.subr.mxu0 0.0
    %3673 = vmatpush1.msra.mxu0 0.0
    %3674 = vmatprep.subr.mxu0 0.0
    %3675 = vmatpush1.msra.mxu0 0.0
    %3676 = vmatprep.subr.mxu0 0.0
    %3677 = vmatpush1.msra.mxu0 0.0
    %3678 = vmatprep.subr.mxu0 0.0
    %3679 = vmatpush1.msra.mxu0 0.0
    %3680 = vmatprep.subr.mxu0 0.0
    %3681 = vmatpush1.msra.mxu0 0.0
    %3682 = vmatprep.subr.mxu0 0.0
    %3683 = vmatpush1.msra.mxu0 0.0
    %3684 = vmatprep.subr.mxu0 0.0
    %3685 = vmatpush1.msra.mxu0 0.0
    %3686 = vmatprep.subr.mxu0 0.0
    %3687 = vmatpush1.msra.mxu0 0.0
    %3688 = vmatprep.subr.mxu0 0.0
    %3689 = vmatpush1.msra.mxu0 0.0
    %3690 = vmatprep.subr.mxu0 0.0
    %3691 = vmatpush1.msra.mxu0 0.0
    %3692 = vmatprep.subr.mxu0 0.0
    %3693 = vmatpush1.msra.mxu0 0.0
    %3694 = vmatprep.subr.mxu0 0.0
    %3695 = vmatpush1.msra.mxu0 0.0
    %3696 = vmatprep.subr.mxu0 0.0
    %3697 = vmatpush1.msra.mxu0 0.0
    %3698 = vmatprep.subr.mxu0 0.0
    %3699 = vmatpush1.msra.mxu0 0.0
    %3700 = vmatprep.subr.mxu0 0.0
    %3701 = vmatpush1.msra.mxu0 0.0
    %3702 = vmatprep.subr.mxu0 0.0
    %3703 = vmatpush1.msra.mxu0 0.0
    %3704 = vmatprep.subr.mxu0 0.0
    %3705 = vmatpush1.msra.mxu0 0.0
    %3706 = vmatprep.subr.mxu0 0.0
    %3707 = vmatpush1.msra.mxu0 0.0
    %3708 = vmatprep.mubr.f32.mxu0 0.0
    %3709 = vmatmul.mubr.f32.gmra.mrb[0].mxu0 %v3639
    %v3710 = vpop.f32.mrb[0].mxu0
    %v3711 = vadd.f32 %v3636, %v3710
    %v3712 = vpop.f32.mrb[0].mxu0
    %3713 = vmatprep.mubr.f32.mxu0 0.0
    %3714 = vmatmul.mubr.f32.gmra.mrb[0].mxu0 %v3642
    %v3715 = vpop.f32.mrb[0].mxu0
    %v3716 = vadd.f32 %v3636, %v3715
    %v3717 = vpop.f32.mrb[0].mxu0
    %3718 = vdwg.mxu0
    %v3719 = vmax.f32 %v3711, 0.0
    %v3720 = vmax.f32 %v3716, 0.0
    %s3721 = scalar_lea.vmem [#allocation7], 32
    %v3722 = vld [vmem:[%s3721] sm:$0xff]
    %v3723 = vld [vmem:[%s3721 + $0x8] sm:$0xff]
    %v3724 = vld [vmem:[%s3721 + $0x10] sm:$0xff]
    %v3725 = vld [vmem:[%s3721 + $0x18] sm:$0xff]
    %s3726 = scalar_lea.vmem %s11, 1
    %v3727 = vld [vmem:[%s3726] sm:$0x1]
    %v3729 = vlaneseq
    %v3730 = vshrl.u32 %v3729, 7
    %v3731 = vsub.s32 0, %v3730
    %v3732 = vrot.slane %v3727, %v3731
    %v3735 = vsel %vm237, %v3719, 0
    %v3738 = vsel %vm237, %v3720, 0
    %3740 = vmatprep.subr.mxu0 0.0
    %3741 = vmatpush1.msra.mxu0 %v3722
    %3742 = vmatprep.subr.mxu0 0.0
    %3743 = vmatpush1.msra.mxu0 %v3723
    %3744 = vmatprep.subr.mxu0 0.0
    %3745 = vmatpush1.msra.mxu0 %v3724
    %3746 = vmatprep.subr.mxu0 0.0
    %3747 = vmatpush1.msra.mxu0 %v3725
    %3748 = vmatprep.subr.mxu0 0.0
    %3749 = vmatpush1.msra.mxu0 0.0
    %3750 = vmatprep.subr.mxu0 0.0
    %3751 = vmatpush1.msra.mxu0 0.0
    %3752 = vmatprep.subr.mxu0 0.0
    %3753 = vmatpush1.msra.mxu0 0.0
    %3754 = vmatprep.subr.mxu0 0.0
    %3755 = vmatpush1.msra.mxu0 0.0
    %3756 = vmatprep.subr.mxu0 0.0
    %3757 = vmatpush1.msra.mxu0 0.0
    %3758 = vmatprep.subr.mxu0 0.0
    %3759 = vmatpush1.msra.mxu0 0.0
    %3760 = vmatprep.subr.mxu0 0.0
    %3761 = vmatpush1.msra.mxu0 0.0
    %3762 = vmatprep.subr.mxu0 0.0
    %3763 = vmatpush1.msra.mxu0 0.0
    %3764 = vmatprep.subr.mxu0 0.0
    %3765 = vmatpush1.msra.mxu0 0.0
    %3766 = vmatprep.subr.mxu0 0.0
    %3767 = vmatpush1.msra.mxu0 0.0
    %3768 = vmatprep.subr.mxu0 0.0
    %3769 = vmatpush1.msra.mxu0 0.0
    %3770 = vmatprep.subr.mxu0 0.0
    %3771 = vmatpush1.msra.mxu0 0.0
    %3772 = vmatprep.subr.mxu0 0.0
    %3773 = vmatpush1.msra.mxu0 0.0
    %3774 = vmatprep.subr.mxu0 0.0
    %3775 = vmatpush1.msra.mxu0 0.0
    %3776 = vmatprep.subr.mxu0 0.0
    %3777 = vmatpush1.msra.mxu0 0.0
    %3778 = vmatprep.subr.mxu0 0.0
    %3779 = vmatpush1.msra.mxu0 0.0
    %3780 = vmatprep.subr.mxu0 0.0
    %3781 = vmatpush1.msra.mxu0 0.0
    %3782 = vmatprep.subr.mxu0 0.0
    %3783 = vmatpush1.msra.mxu0 0.0
    %3784 = vmatprep.subr.mxu0 0.0
    %3785 = vmatpush1.msra.mxu0 0.0
    %3786 = vmatprep.subr.mxu0 0.0
    %3787 = vmatpush1.msra.mxu0 0.0
    %3788 = vmatprep.subr.mxu0 0.0
    %3789 = vmatpush1.msra.mxu0 0.0
    %3790 = vmatprep.subr.mxu0 0.0
    %3791 = vmatpush1.msra.mxu0 0.0
    %3792 = vmatprep.subr.mxu0 0.0
    %3793 = vmatpush1.msra.mxu0 0.0
    %3794 = vmatprep.subr.mxu0 0.0
    %3795 = vmatpush1.msra.mxu0 0.0
    %3796 = vmatprep.subr.mxu0 0.0
    %3797 = vmatpush1.msra.mxu0 0.0
    %3798 = vmatprep.subr.mxu0 0.0
    %3799 = vmatpush1.msra.mxu0 0.0
    %3800 = vmatprep.subr.mxu0 0.0
    %3801 = vmatpush1.msra.mxu0 0.0
    %3802 = vmatprep.subr.mxu0 0.0
    %3803 = vmatpush1.msra.mxu0 0.0
    %3804 = vmatprep.mubr.f32.mxu0 0.0
    %3805 = vmatmul.mubr.f32.gmra.mrb[0].mxu0 %v3735
    %v3806 = vpop.f32.mrb[0].mxu0
    %v3807 = vadd.f32 %v3732, %v3806
    %v3808 = vpop.f32.mrb[0].mxu0
    %3809 = vmatprep.mubr.f32.mxu0 0.0
    %3810 = vmatmul.mubr.f32.gmra.mrb[0].mxu0 %v3738
    %v3811 = vpop.f32.mrb[0].mxu0
    %v3812 = vadd.f32 %v3732, %v3811
    %v3813 = vpop.f32.mrb[0].mxu0
    %3814 = vdwg.mxu0
    %v3815 = vadd.f32 %v3623, %v3807
    %v3816 = vadd.f32 %v3624, %v3812
    %s3817 = scalar_lea.vmem %s14, 1
    %v3818 = vld [vmem:[%s3817] sm:$0x1]
    %s3819 = scalar_lea.vmem %s15, 1
    %v3820 = vld [vmem:[%s3819] sm:$0x1]
    %v3821 = vsel %vm237, %v3815, 0.0
    %3822 = vadd.xlane.f32.xlu0 %v3821
    %v3823 = vpop.xlane.xlu0 %3822
    %v3824 = vsel %vm237, %v3816, 0.0
    %3825 = vadd.xlane.f32.xlu0 %v3824
    %v3826 = vpop.xlane.xlu0 %3825
    %v3827 = vmul.f32 %v3823, %v1772
    %v3828 = vmul.f32 %v3826, %v1772
    %v3829 = vsub.f32 %v3815, %v3827
    %v3830 = vsub.f32 %v3816, %v3828
    %v3831 = vmul.f32 %v3829, %v3829
    %v3832 = vmul.f32 %v3830, %v3830
    %v3833 = vsel %vm237, %v3831, 0.0
    %3834 = vadd.xlane.f32.xlu0 %v3833
    %v3835 = vpop.xlane.xlu0 %3834
    %v3836 = vsel %vm237, %v3832, 0.0
    %3837 = vadd.xlane.f32.xlu0 %v3836
    %v3838 = vpop.xlane.xlu0 %3837
    %v3839 = vmul.f32 %v3835, %v1772
    %v3840 = vmul.f32 %v3838, %v1772
    %v3841 = vadd.f32 %v3839, 1e-05
    %v3842 = vadd.f32 %v3840, 1e-05
    %v3843 = vrsqrt.pop %v3841
    %v3844 = vrsqrt.pop %v3842
    %v3845 = vmul.f32 %v3829, %v3843
    %v3846 = vmul.f32 %v3830, %v3844
    %v3848 = vlaneseq
    %v3849 = vshrl.u32 %v3848, 7
    %v3850 = vsub.s32 0, %v3849
    %v3851 = vrot.slane %v3818, %v3850
    %v3853 = vmul.f32 %v3845, %v3851
    %v3854 = vmul.f32 %v3846, %v3851
    %v3856 = vlaneseq
    %v3857 = vshrl.u32 %v3856, 7
    %v3858 = vsub.s32 0, %v3857
    %v3859 = vrot.slane %v3820, %v3858
    %v3861 = vadd.f32 %v3853, %v3859
    %v3862 = vadd.f32 %v3854, %v3859
    %s3863 = scalar_lea.vmem [#allocation2], 64
    %v3864 = vld [vmem:[%s3863] sm:$0xff]
    %v3865 = vld [vmem:[%s3863 + $0x8] sm:$0xff]
    %v3866 = vld [vmem:[%s3863 + $0x10] sm:$0xff]
    %v3867 = vld [vmem:[%s3863 + $0x18] sm:$0xff]
    %s3868 = scalar_lea.vmem %s5, 2
    %v3869 = vld [vmem:[%s3868] sm:$0x1]
    %v3871 = vlaneseq
    %v3872 = vshrl.u32 %v3871, 7
    %v3873 = vsub.s32 0, %v3872
    %v3874 = vrot.slane %v3869, %v3873
    %v3877 = vsel %vm237, %v3861, 0
    %v3880 = vsel %vm237, %v3862, 0
    %3882 = vmatprep.subr.mxu0 0.0
    %3883 = vmatpush1.msra.mxu0 %v3864
    %3884 = vmatprep.subr.mxu0 0.0
    %3885 = vmatpush1.msra.mxu0 %v3865
    %3886 = vmatprep.subr.mxu0 0.0
    %3887 = vmatpush1.msra.mxu0 %v3866
    %3888 = vmatprep.subr.mxu0 0.0
    %3889 = vmatpush1.msra.mxu0 %v3867
    %3890 = vmatprep.subr.mxu0 0.0
    %3891 = vmatpush1.msra.mxu0 0.0
    %3892 = vmatprep.subr.mxu0 0.0
    %3893 = vmatpush1.msra.mxu0 0.0
    %3894 = vmatprep.subr.mxu0 0.0
    %3895 = vmatpush1.msra.mxu0 0.0
    %3896 = vmatprep.subr.mxu0 0.0
    %3897 = vmatpush1.msra.mxu0 0.0
    %3898 = vmatprep.subr.mxu0 0.0
    %3899 = vmatpush1.msra.mxu0 0.0
    %3900 = vmatprep.subr.mxu0 0.0
    %3901 = vmatpush1.msra.mxu0 0.0
    %3902 = vmatprep.subr.mxu0 0.0
    %3903 = vmatpush1.msra.mxu0 0.0
    %3904 = vmatprep.subr.mxu0 0.0
    %3905 = vmatpush1.msra.mxu0 0.0
    %3906 = vmatprep.subr.mxu0 0.0
    %3907 = vmatpush1.msra.mxu0 0.0
    %3908 = vmatprep.subr.mxu0 0.0
    %3909 = vmatpush1.msra.mxu0 0.0
    %3910 = vmatprep.subr.mxu0 0.0
    %3911 = vmatpush1.msra.mxu0 0.0
    %3912 = vmatprep.subr.mxu0 0.0
    %3913 = vmatpush1.msra.mxu0 0.0
    %3914 = vmatprep.subr.mxu0 0.0
    %3915 = vmatpush1.msra.mxu0 0.0
    %3916 = vmatprep.subr.mxu0 0.0
    %3917 = vmatpush1.msra.mxu0 0.0
    %3918 = vmatprep.subr.mxu0 0.0
    %3919 = vmatpush1.msra.mxu0 0.0
    %3920 = vmatprep.subr.mxu0 0.0
    %3921 = vmatpush1.msra.mxu0 0.0
    %3922 = vmatprep.subr.mxu0 0.0
    %3923 = vmatpush1.msra.mxu0 0.0
    %3924 = vmatprep.subr.mxu0 0.0
    %3925 = vmatpush1.msra.mxu0 0.0
    %3926 = vmatprep.subr.mxu0 0.0
    %3927 = vmatpush1.msra.mxu0 0.0
    %3928 = vmatprep.subr.mxu0 0.0
    %3929 = vmatpush1.msra.mxu0 0.0
    %3930 = vmatprep.subr.mxu0 0.0
    %3931 = vmatpush1.msra.mxu0 0.0
    %3932 = vmatprep.subr.mxu0 0.0
    %3933 = vmatpush1.msra.mxu0 0.0
    %3934 = vmatprep.subr.mxu0 0.0
    %3935 = vmatpush1.msra.mxu0 0.0
    %3936 = vmatprep.subr.mxu0 0.0
    %3937 = vmatpush1.msra.mxu0 0.0
    %3938 = vmatprep.subr.mxu0 0.0
    %3939 = vmatpush1.msra.mxu0 0.0
    %3940 = vmatprep.subr.mxu0 0.0
    %3941 = vmatpush1.msra.mxu0 0.0
    %3942 = vmatprep.subr.mxu0 0.0
    %3943 = vmatpush1.msra.mxu0 0.0
    %3944 = vmatprep.subr.mxu0 0.0
    %3945 = vmatpush1.msra.mxu0 0.0
    %3946 = vmatprep.mubr.f32.mxu0 0.0
    %3947 = vmatmul.mubr.f32.gmra.mrb[0].mxu0 %v3877
    %v3948 = vpop.f32.mrb[0].mxu0
    %v3949 = vadd.f32 %v3874, %v3948
    %v3950 = vpop.f32.mrb[0].mxu0
    %3951 = vmatprep.mubr.f32.mxu0 0.0
    %3952 = vmatmul.mubr.f32.gmra.mrb[0].mxu0 %v3880
    %v3953 = vpop.f32.mrb[0].mxu0
    %v3954 = vadd.f32 %v3874, %v3953
    %v3955 = vpop.f32.mrb[0].mxu0
    %3956 = vdwg.mxu0
    %3958 = vrot.lane.b32.xlu0 %v3949, 96
    %v3959 = vpop.permute.xlu0 %3958
    %v3960 = vsel %vm322, %v3949, 0
    %v3962 = vsel %vm322, %v3959, 0
    %3964 = vmatprep.subr.mxu0 0.0
    %3965 = vmatpush1.xpose.msra.mxu0 %v3962
    %3966 = vmatprep.subr.mxu0 0.0
    %3967 = vmatpush1.xpose.msra.mxu0 0.0
    %3968 = vmatprep.subr.mxu0 0.0
    %3969 = vmatpush1.xpose.msra.mxu0 0.0
    %3970 = vmatprep.subr.mxu0 0.0
    %3971 = vmatpush1.xpose.msra.mxu0 0.0
    %3972 = vmatprep.subr.mxu0 0.0
    %3973 = vmatpush1.xpose.msra.mxu0 0.0
    %3974 = vmatprep.subr.mxu0 0.0
    %3975 = vmatpush1.xpose.msra.mxu0 0.0
    %3976 = vmatprep.subr.mxu0 0.0
    %3977 = vmatpush1.xpose.msra.mxu0 0.0
    %3978 = vmatprep.subr.mxu0 0.0
    %3979 = vmatpush1.xpose.msra.mxu0 0.0
    %3980 = vmatprep.subr.mxu0 0.0
    %3981 = vmatpush1.xpose.msra.mxu0 0.0
    %3982 = vmatprep.subr.mxu0 0.0
    %3983 = vmatpush1.xpose.msra.mxu0 0.0
    %3984 = vmatprep.subr.mxu0 0.0
    %3985 = vmatpush1.xpose.msra.mxu0 0.0
    %3986 = vmatprep.subr.mxu0 0.0
    %3987 = vmatpush1.xpose.msra.mxu0 0.0
    %3988 = vmatprep.subr.mxu0 0.0
    %3989 = vmatpush1.xpose.msra.mxu0 0.0
    %3990 = vmatprep.subr.mxu0 0.0
    %3991 = vmatpush1.xpose.msra.mxu0 0.0
    %3992 = vmatprep.subr.mxu0 0.0
    %3993 = vmatpush1.xpose.msra.mxu0 0.0
    %3994 = vmatprep.subr.mxu0 0.0
    %3995 = vmatpush1.xpose.msra.mxu0 0.0
    %3996 = vmatprep.subr.mxu0 0.0
    %3997 = vmatpush1.xpose.msra.mxu0 0.0
    %3998 = vmatprep.subr.mxu0 0.0
    %3999 = vmatpush1.xpose.msra.mxu0 0.0
    %4000 = vmatprep.subr.mxu0 0.0
    %4001 = vmatpush1.xpose.msra.mxu0 0.0
    %4002 = vmatprep.subr.mxu0 0.0
    %4003 = vmatpush1.xpose.msra.mxu0 0.0
    %4004 = vmatprep.subr.mxu0 0.0
    %4005 = vmatpush1.xpose.msra.mxu0 0.0
    %4006 = vmatprep.subr.mxu0 0.0
    %4007 = vmatpush1.xpose.msra.mxu0 0.0
    %4008 = vmatprep.subr.mxu0 0.0
    %4009 = vmatpush1.xpose.msra.mxu0 0.0
    %4010 = vmatprep.subr.mxu0 0.0
    %4011 = vmatpush1.xpose.msra.mxu0 0.0
    %4012 = vmatprep.subr.mxu0 0.0
    %4013 = vmatpush1.xpose.msra.mxu0 0.0
    %4014 = vmatprep.subr.mxu0 0.0
    %4015 = vmatpush1.xpose.msra.mxu0 0.0
    %4016 = vmatprep.subr.mxu0 0.0
    %4017 = vmatpush1.xpose.msra.mxu0 0.0
    %4018 = vmatprep.subr.mxu0 0.0
    %4019 = vmatpush1.xpose.msra.mxu0 0.0
    %4020 = vmatprep.subr.mxu0 0.0
    %4021 = vmatpush1.xpose.msra.mxu0 0.0
    %4022 = vmatprep.subr.mxu0 0.0
    %4023 = vmatpush1.xpose.msra.mxu0 0.0
    %4024 = vmatprep.subr.mxu0 0.0
    %4025 = vmatpush1.xpose.msra.mxu0 0.0
    %4026 = vmatprep.subr.mxu0 0.0
    %4027 = vmatpush1.xpose.msra.mxu0 0.0
    %4028 = vmatprep.mubr.f32.mxu0 0.0
    %4029 = vmatmul.mubr.f32.gmra.mrb[0].mxu0 %v3960
    %v4030 = vpop.f32.mrb[0].mxu0
    %v4031 = vadd.f32 0.0, %v4030
    %v4032 = vpop.f32.mrb[0].mxu0
    %4033 = vdwg.mxu0
    %4035 = vrot.lane.b32.xlu0 %v3954, 96
    %v4036 = vpop.permute.xlu0 %4035
    %v4037 = vsel %vm322, %v3954, 0
    %v4039 = vsel %vm322, %v4036, 0
    %4041 = vmatprep.subr.mxu0 0.0
    %4042 = vmatpush1.xpose.msra.mxu0 %v4039
    %4043 = vmatprep.subr.mxu0 0.0
    %4044 = vmatpush1.xpose.msra.mxu0 0.0
    %4045 = vmatprep.subr.mxu0 0.0
    %4046 = vmatpush1.xpose.msra.mxu0 0.0
    %4047 = vmatprep.subr.mxu0 0.0
    %4048 = vmatpush1.xpose.msra.mxu0 0.0
    %4049 = vmatprep.subr.mxu0 0.0
    %4050 = vmatpush1.xpose.msra.mxu0 0.0
    %4051 = vmatprep.subr.mxu0 0.0
    %4052 = vmatpush1.xpose.msra.mxu0 0.0
    %4053 = vmatprep.subr.mxu0 0.0
    %4054 = vmatpush1.xpose.msra.mxu0 0.0
    %4055 = vmatprep.subr.mxu0 0.0
    %4056 = vmatpush1.xpose.msra.mxu0 0.0
    %4057 = vmatprep.subr.mxu0 0.0
    %4058 = vmatpush1.xpose.msra.mxu0 0.0
    %4059 = vmatprep.subr.mxu0 0.0
    %4060 = vmatpush1.xpose.msra.mxu0 0.0
    %4061 = vmatprep.subr.mxu0 0.0
    %4062 = vmatpush1.xpose.msra.mxu0 0.0
    %4063 = vmatprep.subr.mxu0 0.0
    %4064 = vmatpush1.xpose.msra.mxu0 0.0
    %4065 = vmatprep.subr.mxu0 0.0
    %4066 = vmatpush1.xpose.msra.mxu0 0.0
    %4067 = vmatprep.subr.mxu0 0.0
    %4068 = vmatpush1.xpose.msra.mxu0 0.0
    %4069 = vmatprep.subr.mxu0 0.0
    %4070 = vmatpush1.xpose.msra.mxu0 0.0
    %4071 = vmatprep.subr.mxu0 0.0
    %4072 = vmatpush1.xpose.msra.mxu0 0.0
    %4073 = vmatprep.subr.mxu0 0.0
    %4074 = vmatpush1.xpose.msra.mxu0 0.0
    %4075 = vmatprep.subr.mxu0 0.0
    %4076 = vmatpush1.xpose.msra.mxu0 0.0
    %4077 = vmatprep.subr.mxu0 0.0
    %4078 = vmatpush1.xpose.msra.mxu0 0.0
    %4079 = vmatprep.subr.mxu0 0.0
    %4080 = vmatpush1.xpose.msra.mxu0 0.0
    %4081 = vmatprep.subr.mxu0 0.0
    %4082 = vmatpush1.xpose.msra.mxu0 0.0
    %4083 = vmatprep.subr.mxu0 0.0
    %4084 = vmatpush1.xpose.msra.mxu0 0.0
    %4085 = vmatprep.subr.mxu0 0.0
    %4086 = vmatpush1.xpose.msra.mxu0 0.0
    %4087 = vmatprep.subr.mxu0 0.0
    %4088 = vmatpush1.xpose.msra.mxu0 0.0
    %4089 = vmatprep.subr.mxu0 0.0
    %4090 = vmatpush1.xpose.msra.mxu0 0.0
    %4091 = vmatprep.subr.mxu0 0.0
    %4092 = vmatpush1.xpose.msra.mxu0 0.0
    %4093 = vmatprep.subr.mxu0 0.0
    %4094 = vmatpush1.xpose.msra.mxu0 0.0
    %4095 = vmatprep.subr.mxu0 0.0
    %4096 = vmatpush1.xpose.msra.mxu0 0.0
    %4097 = vmatprep.subr.mxu0 0.0
    %4098 = vmatpush1.xpose.msra.mxu0 0.0
    %4099 = vmatprep.subr.mxu0 0.0
    %4100 = vmatpush1.xpose.msra.mxu0 0.0
    %4101 = vmatprep.subr.mxu0 0.0
    %4102 = vmatpush1.xpose.msra.mxu0 0.0
    %4103 = vmatprep.subr.mxu0 0.0
    %4104 = vmatpush1.xpose.msra.mxu0 0.0
    %4105 = vmatprep.mubr.f32.mxu0 0.0
    %4106 = vmatmul.mubr.f32.gmra.mrb[0].mxu0 %v4037
    %v4107 = vpop.f32.mrb[0].mxu0
    %v4108 = vadd.f32 0.0, %v4107
    %v4109 = vpop.f32.mrb[0].mxu0
    %4110 = vdwg.mxu0
    %v4111 = vsel %vm322, %v4031, -inf
    %4112 = vmax.xlane.f32.xlu0 %v4111
    %v4113 = vpop.xlane.xlu0 %4112
    %v4114 = vsel %vm322, %v4108, -inf
    %4115 = vmax.xlane.f32.xlu0 %v4114
    %v4116 = vpop.xlane.xlu0 %4115
    %v4117 = vsub.f32 %v4031, %v4113
    %v4118 = vsub.f32 %v4108, %v4116
    %v4119 = vmul.f32 %v4117, 1.442695
    %v4120 = vpow.pop %v4119
    %v4121 = vmul.f32 %v4118, 1.442695
    %v4122 = vpow.pop %v4121
    %v4123 = vsel %vm322, %v4120, 0.0
    %4124 = vadd.xlane.f32.xlu0 %v4123
    %v4125 = vpop.xlane.xlu0 %4124
    %v4126 = vsel %vm322, %v4122, 0.0
    %4127 = vadd.xlane.f32.xlu0 %v4126
    %v4128 = vpop.xlane.xlu0 %4127
    %v4129 = vrcp.pop %v4125
    %v4130 = vrcp.pop %v4128
    %v4131 = vmul.f32 %v4120, %v4129
    %v4132 = vmul.f32 %v4122, %v4130
    %4133 = vrot.lane.b32.xlu0 %v3949, 64
    %v4134 = vpop.permute.xlu0 %4133
    %v4137 = vsel %vm322, %v4131, 0
    %4139 = vmatprep.subr.mxu0 0.0
    %4140 = vmatpush1.msra.mxu0 %v4134
    %4141 = vmatprep.subr.mxu0 0.0
    %4142 = vmatpush1.msra.mxu0 0.0
    %4143 = vmatprep.subr.mxu0 0.0
    %4144 = vmatpush1.msra.mxu0 0.0
    %4145 = vmatprep.subr.mxu0 0.0
    %4146 = vmatpush1.msra.mxu0 0.0
    %4147 = vmatprep.subr.mxu0 0.0
    %4148 = vmatpush1.msra.mxu0 0.0
    %4149 = vmatprep.subr.mxu0 0.0
    %4150 = vmatpush1.msra.mxu0 0.0
    %4151 = vmatprep.subr.mxu0 0.0
    %4152 = vmatpush1.msra.mxu0 0.0
    %4153 = vmatprep.subr.mxu0 0.0
    %4154 = vmatpush1.msra.mxu0 0.0
    %4155 = vmatprep.subr.mxu0 0.0
    %4156 = vmatpush1.msra.mxu0 0.0
    %4157 = vmatprep.subr.mxu0 0.0
    %4158 = vmatpush1.msra.mxu0 0.0
    %4159 = vmatprep.subr.mxu0 0.0
    %4160 = vmatpush1.msra.mxu0 0.0
    %4161 = vmatprep.subr.mxu0 0.0
    %4162 = vmatpush1.msra.mxu0 0.0
    %4163 = vmatprep.subr.mxu0 0.0
    %4164 = vmatpush1.msra.mxu0 0.0
    %4165 = vmatprep.subr.mxu0 0.0
    %4166 = vmatpush1.msra.mxu0 0.0
    %4167 = vmatprep.subr.mxu0 0.0
    %4168 = vmatpush1.msra.mxu0 0.0
    %4169 = vmatprep.subr.mxu0 0.0
    %4170 = vmatpush1.msra.mxu0 0.0
    %4171 = vmatprep.subr.mxu0 0.0
    %4172 = vmatpush1.msra.mxu0 0.0
    %4173 = vmatprep.subr.mxu0 0.0
    %4174 = vmatpush1.msra.mxu0 0.0
    %4175 = vmatprep.subr.mxu0 0.0
    %4176 = vmatpush1.msra.mxu0 0.0
    %4177 = vmatprep.subr.mxu0 0.0
    %4178 = vmatpush1.msra.mxu0 0.0
    %4179 = vmatprep.subr.mxu0 0.0
    %4180 = vmatpush1.msra.mxu0 0.0
    %4181 = vmatprep.subr.mxu0 0.0
    %4182 = vmatpush1.msra.mxu0 0.0
    %4183 = vmatprep.subr.mxu0 0.0
    %4184 = vmatpush1.msra.mxu0 0.0
    %4185 = vmatprep.subr.mxu0 0.0
    %4186 = vmatpush1.msra.mxu0 0.0
    %4187 = vmatprep.subr.mxu0 0.0
    %4188 = vmatpush1.msra.mxu0 0.0
    %4189 = vmatprep.subr.mxu0 0.0
    %4190 = vmatpush1.msra.mxu0 0.0
    %4191 = vmatprep.subr.mxu0 0.0
    %4192 = vmatpush1.msra.mxu0 0.0
    %4193 = vmatprep.subr.mxu0 0.0
    %4194 = vmatpush1.msra.mxu0 0.0
    %4195 = vmatprep.subr.mxu0 0.0
    %4196 = vmatpush1.msra.mxu0 0.0
    %4197 = vmatprep.subr.mxu0 0.0
    %4198 = vmatpush1.msra.mxu0 0.0
    %4199 = vmatprep.subr.mxu0 0.0
    %4200 = vmatpush1.msra.mxu0 0.0
    %4201 = vmatprep.subr.mxu0 0.0
    %4202 = vmatpush1.msra.mxu0 0.0
    %4203 = vmatprep.mubr.f32.mxu0 0.0
    %4204 = vmatmul.mubr.f32.gmra.mrb[0].mxu0 %v4137
    %v4205 = vpop.f32.mrb[0].mxu0
    %v4206 = vadd.f32 0.0, %v4205
    %v4207 = vpop.f32.mrb[0].mxu0
    %4208 = vdwg.mxu0
    %4209 = vrot.lane.b32.xlu0 %v3954, 64
    %v4210 = vpop.permute.xlu0 %4209
    %v4213 = vsel %vm322, %v4132, 0
    %4215 = vmatprep.subr.mxu0 0.0
    %4216 = vmatpush1.msra.mxu0 %v4210
    %4217 = vmatprep.subr.mxu0 0.0
    %4218 = vmatpush1.msra.mxu0 0.0
    %4219 = vmatprep.subr.mxu0 0.0
    %4220 = vmatpush1.msra.mxu0 0.0
    %4221 = vmatprep.subr.mxu0 0.0
    %4222 = vmatpush1.msra.mxu0 0.0
    %4223 = vmatprep.subr.mxu0 0.0
    %4224 = vmatpush1.msra.mxu0 0.0
    %4225 = vmatprep.subr.mxu0 0.0
    %4226 = vmatpush1.msra.mxu0 0.0
    %4227 = vmatprep.subr.mxu0 0.0
    %4228 = vmatpush1.msra.mxu0 0.0
    %4229 = vmatprep.subr.mxu0 0.0
    %4230 = vmatpush1.msra.mxu0 0.0
    %4231 = vmatprep.subr.mxu0 0.0
    %4232 = vmatpush1.msra.mxu0 0.0
    %4233 = vmatprep.subr.mxu0 0.0
    %4234 = vmatpush1.msra.mxu0 0.0
    %4235 = vmatprep.subr.mxu0 0.0
    %4236 = vmatpush1.msra.mxu0 0.0
    %4237 = vmatprep.subr.mxu0 0.0
    %4238 = vmatpush1.msra.mxu0 0.0
    %4239 = vmatprep.subr.mxu0 0.0
    %4240 = vmatpush1.msra.mxu0 0.0
    %4241 = vmatprep.subr.mxu0 0.0
    %4242 = vmatpush1.msra.mxu0 0.0
    %4243 = vmatprep.subr.mxu0 0.0
    %4244 = vmatpush1.msra.mxu0 0.0
    %4245 = vmatprep.subr.mxu0 0.0
    %4246 = vmatpush1.msra.mxu0 0.0
    %4247 = vmatprep.subr.mxu0 0.0
    %4248 = vmatpush1.msra.mxu0 0.0
    %4249 = vmatprep.subr.mxu0 0.0
    %4250 = vmatpush1.msra.mxu0 0.0
    %4251 = vmatprep.subr.mxu0 0.0
    %4252 = vmatpush1.msra.mxu0 0.0
    %4253 = vmatprep.subr.mxu0 0.0
    %4254 = vmatpush1.msra.mxu0 0.0
    %4255 = vmatprep.subr.mxu0 0.0
    %4256 = vmatpush1.msra.mxu0 0.0
    %4257 = vmatprep.subr.mxu0 0.0
    %4258 = vmatpush1.msra.mxu0 0.0
    %4259 = vmatprep.subr.mxu0 0.0
    %4260 = vmatpush1.msra.mxu0 0.0
    %4261 = vmatprep.subr.mxu0 0.0
    %4262 = vmatpush1.msra.mxu0 0.0
    %4263 = vmatprep.subr.mxu0 0.0
    %4264 = vmatpush1.msra.mxu0 0.0
    %4265 = vmatprep.subr.mxu0 0.0
    %4266 = vmatpush1.msra.mxu0 0.0
    %4267 = vmatprep.subr.mxu0 0.0
    %4268 = vmatpush1.msra.mxu0 0.0
    %4269 = vmatprep.subr.mxu0 0.0
    %4270 = vmatpush1.msra.mxu0 0.0
    %4271 = vmatprep.subr.mxu0 0.0
    %4272 = vmatpush1.msra.mxu0 0.0
    %4273 = vmatprep.subr.mxu0 0.0
    %4274 = vmatpush1.msra.mxu0 0.0
    %4275 = vmatprep.subr.mxu0 0.0
    %4276 = vmatpush1.msra.mxu0 0.0
    %4277 = vmatprep.subr.mxu0 0.0
    %4278 = vmatpush1.msra.mxu0 0.0
    %4279 = vmatprep.mubr.f32.mxu0 0.0
    %4280 = vmatmul.mubr.f32.gmra.mrb[0].mxu0 %v4213
    %v4281 = vpop.f32.mrb[0].mxu0
    %v4282 = vadd.f32 0.0, %v4281
    %v4283 = vpop.f32.mrb[0].mxu0
    %4284 = vdwg.mxu0
    %4285 = vrot.lane.b32.xlu0 %v3949, 120
    %v4286 = vpop.permute.xlu0 %4285
    %4287 = vrot.lane.b32.xlu0 %v3949, 88
    %v4288 = vpop.permute.xlu0 %4287
    %v4289 = vsel %vm322, %v4286, 0
    %v4291 = vsel %vm322, %v4288, 0
    %4293 = vmatprep.subr.mxu0 0.0
    %4294 = vmatpush1.xpose.msra.mxu0 %v4291
    %4295 = vmatprep.subr.mxu0 0.0
    %4296 = vmatpush1.xpose.msra.mxu0 0.0
    %4297 = vmatprep.subr.mxu0 0.0
    %4298 = vmatpush1.xpose.msra.mxu0 0.0
    %4299 = vmatprep.subr.mxu0 0.0
    %4300 = vmatpush1.xpose.msra.mxu0 0.0
    %4301 = vmatprep.subr.mxu0 0.0
    %4302 = vmatpush1.xpose.msra.mxu0 0.0
    %4303 = vmatprep.subr.mxu0 0.0
    %4304 = vmatpush1.xpose.msra.mxu0 0.0
    %4305 = vmatprep.subr.mxu0 0.0
    %4306 = vmatpush1.xpose.msra.mxu0 0.0
    %4307 = vmatprep.subr.mxu0 0.0
    %4308 = vmatpush1.xpose.msra.mxu0 0.0
    %4309 = vmatprep.subr.mxu0 0.0
    %4310 = vmatpush1.xpose.msra.mxu0 0.0
    %4311 = vmatprep.subr.mxu0 0.0
    %4312 = vmatpush1.xpose.msra.mxu0 0.0
    %4313 = vmatprep.subr.mxu0 0.0
    %4314 = vmatpush1.xpose.msra.mxu0 0.0
    %4315 = vmatprep.subr.mxu0 0.0
    %4316 = vmatpush1.xpose.msra.mxu0 0.0
    %4317 = vmatprep.subr.mxu0 0.0
    %4318 = vmatpush1.xpose.msra.mxu0 0.0
    %4319 = vmatprep.subr.mxu0 0.0
    %4320 = vmatpush1.xpose.msra.mxu0 0.0
    %4321 = vmatprep.subr.mxu0 0.0
    %4322 = vmatpush1.xpose.msra.mxu0 0.0
    %4323 = vmatprep.subr.mxu0 0.0
    %4324 = vmatpush1.xpose.msra.mxu0 0.0
    %4325 = vmatprep.subr.mxu0 0.0
    %4326 = vmatpush1.xpose.msra.mxu0 0.0
    %4327 = vmatprep.subr.mxu0 0.0
    %4328 = vmatpush1.xpose.msra.mxu0 0.0
    %4329 = vmatprep.subr.mxu0 0.0
    %4330 = vmatpush1.xpose.msra.mxu0 0.0
    %4331 = vmatprep.subr.mxu0 0.0
    %4332 = vmatpush1.xpose.msra.mxu0 0.0
    %4333 = vmatprep.subr.mxu0 0.0
    %4334 = vmatpush1.xpose.msra.mxu0 0.0
    %4335 = vmatprep.subr.mxu0 0.0
    %4336 = vmatpush1.xpose.msra.mxu0 0.0
    %4337 = vmatprep.subr.mxu0 0.0
    %4338 = vmatpush1.xpose.msra.mxu0 0.0
    %4339 = vmatprep.subr.mxu0 0.0
    %4340 = vmatpush1.xpose.msra.mxu0 0.0
    %4341 = vmatprep.subr.mxu0 0.0
    %4342 = vmatpush1.xpose.msra.mxu0 0.0
    %4343 = vmatprep.subr.mxu0 0.0
    %4344 = vmatpush1.xpose.msra.mxu0 0.0
    %4345 = vmatprep.subr.mxu0 0.0
    %4346 = vmatpush1.xpose.msra.mxu0 0.0
    %4347 = vmatprep.subr.mxu0 0.0
    %4348 = vmatpush1.xpose.msra.mxu0 0.0
    %4349 = vmatprep.subr.mxu0 0.0
    %4350 = vmatpush1.xpose.msra.mxu0 0.0
    %4351 = vmatprep.subr.mxu0 0.0
    %4352 = vmatpush1.xpose.msra.mxu0 0.0
    %4353 = vmatprep.subr.mxu0 0.0
    %4354 = vmatpush1.xpose.msra.mxu0 0.0
    %4355 = vmatprep.subr.mxu0 0.0
    %4356 = vmatpush1.xpose.msra.mxu0 0.0
    %4357 = vmatprep.mubr.f32.mxu0 0.0
    %4358 = vmatmul.mubr.f32.gmra.mrb[0].mxu0 %v4289
    %v4359 = vpop.f32.mrb[0].mxu0
    %v4360 = vadd.f32 0.0, %v4359
    %v4361 = vpop.f32.mrb[0].mxu0
    %4362 = vdwg.mxu0
    %4363 = vrot.lane.b32.xlu0 %v3954, 120
    %v4364 = vpop.permute.xlu0 %4363
    %4365 = vrot.lane.b32.xlu0 %v3954, 88
    %v4366 = vpop.permute.xlu0 %4365
    %v4367 = vsel %vm322, %v4364, 0
    %v4369 = vsel %vm322, %v4366, 0
    %4371 = vmatprep.subr.mxu0 0.0
    %4372 = vmatpush1.xpose.msra.mxu0 %v4369
    %4373 = vmatprep.subr.mxu0 0.0
    %4374 = vmatpush1.xpose.msra.mxu0 0.0
    %4375 = vmatprep.subr.mxu0 0.0
    %4376 = vmatpush1.xpose.msra.mxu0 0.0
    %4377 = vmatprep.subr.mxu0 0.0
    %4378 = vmatpush1.xpose.msra.mxu0 0.0
    %4379 = vmatprep.subr.mxu0 0.0
    %4380 = vmatpush1.xpose.msra.mxu0 0.0
    %4381 = vmatprep.subr.mxu0 0.0
    %4382 = vmatpush1.xpose.msra.mxu0 0.0
    %4383 = vmatprep.subr.mxu0 0.0
    %4384 = vmatpush1.xpose.msra.mxu0 0.0
    %4385 = vmatprep.subr.mxu0 0.0
    %4386 = vmatpush1.xpose.msra.mxu0 0.0
    %4387 = vmatprep.subr.mxu0 0.0
    %4388 = vmatpush1.xpose.msra.mxu0 0.0
    %4389 = vmatprep.subr.mxu0 0.0
    %4390 = vmatpush1.xpose.msra.mxu0 0.0
    %4391 = vmatprep.subr.mxu0 0.0
    %4392 = vmatpush1.xpose.msra.mxu0 0.0
    %4393 = vmatprep.subr.mxu0 0.0
    %4394 = vmatpush1.xpose.msra.mxu0 0.0
    %4395 = vmatprep.subr.mxu0 0.0
    %4396 = vmatpush1.xpose.msra.mxu0 0.0
    %4397 = vmatprep.subr.mxu0 0.0
    %4398 = vmatpush1.xpose.msra.mxu0 0.0
    %4399 = vmatprep.subr.mxu0 0.0
    %4400 = vmatpush1.xpose.msra.mxu0 0.0
    %4401 = vmatprep.subr.mxu0 0.0
    %4402 = vmatpush1.xpose.msra.mxu0 0.0
    %4403 = vmatprep.subr.mxu0 0.0
    %4404 = vmatpush1.xpose.msra.mxu0 0.0
    %4405 = vmatprep.subr.mxu0 0.0
    %4406 = vmatpush1.xpose.msra.mxu0 0.0
    %4407 = vmatprep.subr.mxu0 0.0
    %4408 = vmatpush1.xpose.msra.mxu0 0.0
    %4409 = vmatprep.subr.mxu0 0.0
    %4410 = vmatpush1.xpose.msra.mxu0 0.0
    %4411 = vmatprep.subr.mxu0 0.0
    %4412 = vmatpush1.xpose.msra.mxu0 0.0
    %4413 = vmatprep.subr.mxu0 0.0
    %4414 = vmatpush1.xpose.msra.mxu0 0.0
    %4415 = vmatprep.subr.mxu0 0.0
    %4416 = vmatpush1.xpose.msra.mxu0 0.0
    %4417 = vmatprep.subr.mxu0 0.0
    %4418 = vmatpush1.xpose.msra.mxu0 0.0
    %4419 = vmatprep.subr.mxu0 0.0
    %4420 = vmatpush1.xpose.msra.mxu0 0.0
    %4421 = vmatprep.subr.mxu0 0.0
    %4422 = vmatpush1.xpose.msra.mxu0 0.0
    %4423 = vmatprep.subr.mxu0 0.0
    %4424 = vmatpush1.xpose.msra.mxu0 0.0
    %4425 = vmatprep.subr.mxu0 0.0
    %4426 = vmatpush1.xpose.msra.mxu0 0.0
    %4427 = vmatprep.subr.mxu0 0.0
    %4428 = vmatpush1.xpose.msra.mxu0 0.0
    %4429 = vmatprep.subr.mxu0 0.0
    %4430 = vmatpush1.xpose.msra.mxu0 0.0
    %4431 = vmatprep.subr.mxu0 0.0
    %4432 = vmatpush1.xpose.msra.mxu0 0.0
    %4433 = vmatprep.subr.mxu0 0.0
    %4434 = vmatpush1.xpose.msra.mxu0 0.0
    %4435 = vmatprep.mubr.f32.mxu0 0.0
    %4436 = vmatmul.mubr.f32.gmra.mrb[0].mxu0 %v4367
    %v4437 = vpop.f32.mrb[0].mxu0
    %v4438 = vadd.f32 0.0, %v4437
    %v4439 = vpop.f32.mrb[0].mxu0
    %4440 = vdwg.mxu0
    %v4441 = vsel %vm322, %v4360, -inf
    %4442 = vmax.xlane.f32.xlu0 %v4441
    %v4443 = vpop.xlane.xlu0 %4442
    %v4444 = vsel %vm322, %v4438, -inf
    %4445 = vmax.xlane.f32.xlu0 %v4444
    %v4446 = vpop.xlane.xlu0 %4445
    %v4447 = vsub.f32 %v4360, %v4443
    %v4448 = vsub.f32 %v4438, %v4446
    %v4449 = vmul.f32 %v4447, 1.442695
    %v4450 = vpow.pop %v4449
    %v4451 = vmul.f32 %v4448, 1.442695
    %v4452 = vpow.pop %v4451
    %v4453 = vsel %vm322, %v4450, 0.0
    %4454 = vadd.xlane.f32.xlu0 %v4453
    %v4455 = vpop.xlane.xlu0 %4454
    %v4456 = vsel %vm322, %v4452, 0.0
    %4457 = vadd.xlane.f32.xlu0 %v4456
    %v4458 = vpop.xlane.xlu0 %4457
    %v4459 = vrcp.pop %v4455
    %v4460 = vrcp.pop %v4458
    %v4461 = vmul.f32 %v4450, %v4459
    %v4462 = vmul.f32 %v4452, %v4460
    %4463 = vrot.lane.b32.xlu0 %v3949, 56
    %v4464 = vpop.permute.xlu0 %4463
    %v4467 = vsel %vm322, %v4461, 0
    %4469 = vmatprep.subr.mxu0 0.0
    %4470 = vmatpush1.msra.mxu0 %v4464
    %4471 = vmatprep.subr.mxu0 0.0
    %4472 = vmatpush1.msra.mxu0 0.0
    %4473 = vmatprep.subr.mxu0 0.0
    %4474 = vmatpush1.msra.mxu0 0.0
    %4475 = vmatprep.subr.mxu0 0.0
    %4476 = vmatpush1.msra.mxu0 0.0
    %4477 = vmatprep.subr.mxu0 0.0
    %4478 = vmatpush1.msra.mxu0 0.0
    %4479 = vmatprep.subr.mxu0 0.0
    %4480 = vmatpush1.msra.mxu0 0.0
    %4481 = vmatprep.subr.mxu0 0.0
    %4482 = vmatpush1.msra.mxu0 0.0
    %4483 = vmatprep.subr.mxu0 0.0
    %4484 = vmatpush1.msra.mxu0 0.0
    %4485 = vmatprep.subr.mxu0 0.0
    %4486 = vmatpush1.msra.mxu0 0.0
    %4487 = vmatprep.subr.mxu0 0.0
    %4488 = vmatpush1.msra.mxu0 0.0
    %4489 = vmatprep.subr.mxu0 0.0
    %4490 = vmatpush1.msra.mxu0 0.0
    %4491 = vmatprep.subr.mxu0 0.0
    %4492 = vmatpush1.msra.mxu0 0.0
    %4493 = vmatprep.subr.mxu0 0.0
    %4494 = vmatpush1.msra.mxu0 0.0
    %4495 = vmatprep.subr.mxu0 0.0
    %4496 = vmatpush1.msra.mxu0 0.0
    %4497 = vmatprep.subr.mxu0 0.0
    %4498 = vmatpush1.msra.mxu0 0.0
    %4499 = vmatprep.subr.mxu0 0.0
    %4500 = vmatpush1.msra.mxu0 0.0
    %4501 = vmatprep.subr.mxu0 0.0
    %4502 = vmatpush1.msra.mxu0 0.0
    %4503 = vmatprep.subr.mxu0 0.0
    %4504 = vmatpush1.msra.mxu0 0.0
    %4505 = vmatprep.subr.mxu0 0.0
    %4506 = vmatpush1.msra.mxu0 0.0
    %4507 = vmatprep.subr.mxu0 0.0
    %4508 = vmatpush1.msra.mxu0 0.0
    %4509 = vmatprep.subr.mxu0 0.0
    %4510 = vmatpush1.msra.mxu0 0.0
    %4511 = vmatprep.subr.mxu0 0.0
    %4512 = vmatpush1.msra.mxu0 0.0
    %4513 = vmatprep.subr.mxu0 0.0
    %4514 = vmatpush1.msra.mxu0 0.0
    %4515 = vmatprep.subr.mxu0 0.0
    %4516 = vmatpush1.msra.mxu0 0.0
    %4517 = vmatprep.subr.mxu0 0.0
    %4518 = vmatpush1.msra.mxu0 0.0
    %4519 = vmatprep.subr.mxu0 0.0
    %4520 = vmatpush1.msra.mxu0 0.0
    %4521 = vmatprep.subr.mxu0 0.0
    %4522 = vmatpush1.msra.mxu0 0.0
    %4523 = vmatprep.subr.mxu0 0.0
    %4524 = vmatpush1.msra.mxu0 0.0
    %4525 = vmatprep.subr.mxu0 0.0
    %4526 = vmatpush1.msra.mxu0 0.0
    %4527 = vmatprep.subr.mxu0 0.0
    %4528 = vmatpush1.msra.mxu0 0.0
    %4529 = vmatprep.subr.mxu0 0.0
    %4530 = vmatpush1.msra.mxu0 0.0
    %4531 = vmatprep.subr.mxu0 0.0
    %4532 = vmatpush1.msra.mxu0 0.0
    %4533 = vmatprep.mubr.f32.mxu0 0.0
    %4534 = vmatmul.mubr.f32.gmra.mrb[0].mxu0 %v4467
    %v4535 = vpop.f32.mrb[0].mxu0
    %v4536 = vadd.f32 0.0, %v4535
    %v4537 = vpop.f32.mrb[0].mxu0
    %4538 = vdwg.mxu0
    %4539 = vrot.lane.b32.xlu0 %v3954, 56
    %v4540 = vpop.permute.xlu0 %4539
    %v4543 = vsel %vm322, %v4462, 0
    %4545 = vmatprep.subr.mxu0 0.0
    %4546 = vmatpush1.msra.mxu0 %v4540
    %4547 = vmatprep.subr.mxu0 0.0
    %4548 = vmatpush1.msra.mxu0 0.0
    %4549 = vmatprep.subr.mxu0 0.0
    %4550 = vmatpush1.msra.mxu0 0.0
    %4551 = vmatprep.subr.mxu0 0.0
    %4552 = vmatpush1.msra.mxu0 0.0
    %4553 = vmatprep.subr.mxu0 0.0
    %4554 = vmatpush1.msra.mxu0 0.0
    %4555 = vmatprep.subr.mxu0 0.0
    %4556 = vmatpush1.msra.mxu0 0.0
    %4557 = vmatprep.subr.mxu0 0.0
    %4558 = vmatpush1.msra.mxu0 0.0
    %4559 = vmatprep.subr.mxu0 0.0
    %4560 = vmatpush1.msra.mxu0 0.0
    %4561 = vmatprep.subr.mxu0 0.0
    %4562 = vmatpush1.msra.mxu0 0.0
    %4563 = vmatprep.subr.mxu0 0.0
    %4564 = vmatpush1.msra.mxu0 0.0
    %4565 = vmatprep.subr.mxu0 0.0
    %4566 = vmatpush1.msra.mxu0 0.0
    %4567 = vmatprep.subr.mxu0 0.0
    %4568 = vmatpush1.msra.mxu0 0.0
    %4569 = vmatprep.subr.mxu0 0.0
    %4570 = vmatpush1.msra.mxu0 0.0
    %4571 = vmatprep.subr.mxu0 0.0
    %4572 = vmatpush1.msra.mxu0 0.0
    %4573 = vmatprep.subr.mxu0 0.0
    %4574 = vmatpush1.msra.mxu0 0.0
    %4575 = vmatprep.subr.mxu0 0.0
    %4576 = vmatpush1.msra.mxu0 0.0
    %4577 = vmatprep.subr.mxu0 0.0
    %4578 = vmatpush1.msra.mxu0 0.0
    %4579 = vmatprep.subr.mxu0 0.0
    %4580 = vmatpush1.msra.mxu0 0.0
    %4581 = vmatprep.subr.mxu0 0.0
    %4582 = vmatpush1.msra.mxu0 0.0
    %4583 = vmatprep.subr.mxu0 0.0
    %4584 = vmatpush1.msra.mxu0 0.0
    %4585 = vmatprep.subr.mxu0 0.0
    %4586 = vmatpush1.msra.mxu0 0.0
    %4587 = vmatprep.subr.mxu0 0.0
    %4588 = vmatpush1.msra.mxu0 0.0
    %4589 = vmatprep.subr.mxu0 0.0
    %4590 = vmatpush1.msra.mxu0 0.0
    %4591 = vmatprep.subr.mxu0 0.0
    %4592 = vmatpush1.msra.mxu0 0.0
    %4593 = vmatprep.subr.mxu0 0.0
    %4594 = vmatpush1.msra.mxu0 0.0
    %4595 = vmatprep.subr.mxu0 0.0
    %4596 = vmatpush1.msra.mxu0 0.0
    %4597 = vmatprep.subr.mxu0 0.0
    %4598 = vmatpush1.msra.mxu0 0.0
    %4599 = vmatprep.subr.mxu0 0.0
    %4600 = vmatpush1.msra.mxu0 0.0
    %4601 = vmatprep.subr.mxu0 0.0
    %4602 = vmatpush1.msra.mxu0 0.0
    %4603 = vmatprep.subr.mxu0 0.0
    %4604 = vmatpush1.msra.mxu0 0.0
    %4605 = vmatprep.subr.mxu0 0.0
    %4606 = vmatpush1.msra.mxu0 0.0
    %4607 = vmatprep.subr.mxu0 0.0
    %4608 = vmatpush1.msra.mxu0 0.0
    %4609 = vmatprep.mubr.f32.mxu0 0.0
    %4610 = vmatmul.mubr.f32.gmra.mrb[0].mxu0 %v4543
    %v4611 = vpop.f32.mrb[0].mxu0
    %v4612 = vadd.f32 0.0, %v4611
    %v4613 = vpop.f32.mrb[0].mxu0
    %4614 = vdwg.mxu0
    %4615 = vrot.lane.b32.xlu0 %v3949, 112
    %v4616 = vpop.permute.xlu0 %4615
    %4617 = vrot.lane.b32.xlu0 %v3949, 80
    %v4618 = vpop.permute.xlu0 %4617
    %v4619 = vsel %vm322, %v4616, 0
    %v4621 = vsel %vm322, %v4618, 0
    %4623 = vmatprep.subr.mxu0 0.0
    %4624 = vmatpush1.xpose.msra.mxu0 %v4621
    %4625 = vmatprep.subr.mxu0 0.0
    %4626 = vmatpush1.xpose.msra.mxu0 0.0
    %4627 = vmatprep.subr.mxu0 0.0
    %4628 = vmatpush1.xpose.msra.mxu0 0.0
    %4629 = vmatprep.subr.mxu0 0.0
    %4630 = vmatpush1.xpose.msra.mxu0 0.0
    %4631 = vmatprep.subr.mxu0 0.0
    %4632 = vmatpush1.xpose.msra.mxu0 0.0
    %4633 = vmatprep.subr.mxu0 0.0
    %4634 = vmatpush1.xpose.msra.mxu0 0.0
    %4635 = vmatprep.subr.mxu0 0.0
    %4636 = vmatpush1.xpose.msra.mxu0 0.0
    %4637 = vmatprep.subr.mxu0 0.0
    %4638 = vmatpush1.xpose.msra.mxu0 0.0
    %4639 = vmatprep.subr.mxu0 0.0
    %4640 = vmatpush1.xpose.msra.mxu0 0.0
    %4641 = vmatprep.subr.mxu0 0.0
    %4642 = vmatpush1.xpose.msra.mxu0 0.0
    %4643 = vmatprep.subr.mxu0 0.0
    %4644 = vmatpush1.xpose.msra.mxu0 0.0
    %4645 = vmatprep.subr.mxu0 0.0
    %4646 = vmatpush1.xpose.msra.mxu0 0.0
    %4647 = vmatprep.subr.mxu0 0.0
    %4648 = vmatpush1.xpose.msra.mxu0 0.0
    %4649 = vmatprep.subr.mxu0 0.0
    %4650 = vmatpush1.xpose.msra.mxu0 0.0
    %4651 = vmatprep.subr.mxu0 0.0
    %4652 = vmatpush1.xpose.msra.mxu0 0.0
    %4653 = vmatprep.subr.mxu0 0.0
    %4654 = vmatpush1.xpose.msra.mxu0 0.0
    %4655 = vmatprep.subr.mxu0 0.0
    %4656 = vmatpush1.xpose.msra.mxu0 0.0
    %4657 = vmatprep.subr.mxu0 0.0
    %4658 = vmatpush1.xpose.msra.mxu0 0.0
    %4659 = vmatprep.subr.mxu0 0.0
    %4660 = vmatpush1.xpose.msra.mxu0 0.0
    %4661 = vmatprep.subr.mxu0 0.0
    %4662 = vmatpush1.xpose.msra.mxu0 0.0
    %4663 = vmatprep.subr.mxu0 0.0
    %4664 = vmatpush1.xpose.msra.mxu0 0.0
    %4665 = vmatprep.subr.mxu0 0.0
    %4666 = vmatpush1.xpose.msra.mxu0 0.0
    %4667 = vmatprep.subr.mxu0 0.0
    %4668 = vmatpush1.xpose.msra.mxu0 0.0
    %4669 = vmatprep.subr.mxu0 0.0
    %4670 = vmatpush1.xpose.msra.mxu0 0.0
    %4671 = vmatprep.subr.mxu0 0.0
    %4672 = vmatpush1.xpose.msra.mxu0 0.0
    %4673 = vmatprep.subr.mxu0 0.0
    %4674 = vmatpush1.xpose.msra.mxu0 0.0
    %4675 = vmatprep.subr.mxu0 0.0
    %4676 = vmatpush1.xpose.msra.mxu0 0.0
    %4677 = vmatprep.subr.mxu0 0.0
    %4678 = vmatpush1.xpose.msra.mxu0 0.0
    %4679 = vmatprep.subr.mxu0 0.0
    %4680 = vmatpush1.xpose.msra.mxu0 0.0
    %4681 = vmatprep.subr.mxu0 0.0
    %4682 = vmatpush1.xpose.msra.mxu0 0.0
    %4683 = vmatprep.subr.mxu0 0.0
    %4684 = vmatpush1.xpose.msra.mxu0 0.0
    %4685 = vmatprep.subr.mxu0 0.0
    %4686 = vmatpush1.xpose.msra.mxu0 0.0
    %4687 = vmatprep.mubr.f32.mxu0 0.0
    %4688 = vmatmul.mubr.f32.gmra.mrb[0].mxu0 %v4619
    %v4689 = vpop.f32.mrb[0].mxu0
    %v4690 = vadd.f32 0.0, %v4689
    %v4691 = vpop.f32.mrb[0].mxu0
    %4692 = vdwg.mxu0
    %4693 = vrot.lane.b32.xlu0 %v3954, 112
    %v4694 = vpop.permute.xlu0 %4693
    %4695 = vrot.lane.b32.xlu0 %v3954, 80
    %v4696 = vpop.permute.xlu0 %4695
    %v4697 = vsel %vm322, %v4694, 0
    %v4699 = vsel %vm322, %v4696, 0
    %4701 = vmatprep.subr.mxu0 0.0
    %4702 = vmatpush1.xpose.msra.mxu0 %v4699
    %4703 = vmatprep.subr.mxu0 0.0
    %4704 = vmatpush1.xpose.msra.mxu0 0.0
    %4705 = vmatprep.subr.mxu0 0.0
    %4706 = vmatpush1.xpose.msra.mxu0 0.0
    %4707 = vmatprep.subr.mxu0 0.0
    %4708 = vmatpush1.xpose.msra.mxu0 0.0
    %4709 = vmatprep.subr.mxu0 0.0
    %4710 = vmatpush1.xpose.msra.mxu0 0.0
    %4711 = vmatprep.subr.mxu0 0.0
    %4712 = vmatpush1.xpose.msra.mxu0 0.0
    %4713 = vmatprep.subr.mxu0 0.0
    %4714 = vmatpush1.xpose.msra.mxu0 0.0
    %4715 = vmatprep.subr.mxu0 0.0
    %4716 = vmatpush1.xpose.msra.mxu0 0.0
    %4717 = vmatprep.subr.mxu0 0.0
    %4718 = vmatpush1.xpose.msra.mxu0 0.0
    %4719 = vmatprep.subr.mxu0 0.0
    %4720 = vmatpush1.xpose.msra.mxu0 0.0
    %4721 = vmatprep.subr.mxu0 0.0
    %4722 = vmatpush1.xpose.msra.mxu0 0.0
    %4723 = vmatprep.subr.mxu0 0.0
    %4724 = vmatpush1.xpose.msra.mxu0 0.0
    %4725 = vmatprep.subr.mxu0 0.0
    %4726 = vmatpush1.xpose.msra.mxu0 0.0
    %4727 = vmatprep.subr.mxu0 0.0
    %4728 = vmatpush1.xpose.msra.mxu0 0.0
    %4729 = vmatprep.subr.mxu0 0.0
    %4730 = vmatpush1.xpose.msra.mxu0 0.0
    %4731 = vmatprep.subr.mxu0 0.0
    %4732 = vmatpush1.xpose.msra.mxu0 0.0
    %4733 = vmatprep.subr.mxu0 0.0
    %4734 = vmatpush1.xpose.msra.mxu0 0.0
    %4735 = vmatprep.subr.mxu0 0.0
    %4736 = vmatpush1.xpose.msra.mxu0 0.0
    %4737 = vmatprep.subr.mxu0 0.0
    %4738 = vmatpush1.xpose.msra.mxu0 0.0
    %4739 = vmatprep.subr.mxu0 0.0
    %4740 = vmatpush1.xpose.msra.mxu0 0.0
    %4741 = vmatprep.subr.mxu0 0.0
    %4742 = vmatpush1.xpose.msra.mxu0 0.0
    %4743 = vmatprep.subr.mxu0 0.0
    %4744 = vmatpush1.xpose.msra.mxu0 0.0
    %4745 = vmatprep.subr.mxu0 0.0
    %4746 = vmatpush1.xpose.msra.mxu0 0.0
    %4747 = vmatprep.subr.mxu0 0.0
    %4748 = vmatpush1.xpose.msra.mxu0 0.0
    %4749 = vmatprep.subr.mxu0 0.0
    %4750 = vmatpush1.xpose.msra.mxu0 0.0
    %4751 = vmatprep.subr.mxu0 0.0
    %4752 = vmatpush1.xpose.msra.mxu0 0.0
    %4753 = vmatprep.subr.mxu0 0.0
    %4754 = vmatpush1.xpose.msra.mxu0 0.0
    %4755 = vmatprep.subr.mxu0 0.0
    %4756 = vmatpush1.xpose.msra.mxu0 0.0
    %4757 = vmatprep.subr.mxu0 0.0
    %4758 = vmatpush1.xpose.msra.mxu0 0.0
    %4759 = vmatprep.subr.mxu0 0.0
    %4760 = vmatpush1.xpose.msra.mxu0 0.0
    %4761 = vmatprep.subr.mxu0 0.0
    %4762 = vmatpush1.xpose.msra.mxu0 0.0
    %4763 = vmatprep.subr.mxu0 0.0
    %4764 = vmatpush1.xpose.msra.mxu0 0.0
    %4765 = vmatprep.mubr.f32.mxu0 0.0
    %4766 = vmatmul.mubr.f32.gmra.mrb[0].mxu0 %v4697
    %v4767 = vpop.f32.mrb[0].mxu0
    %v4768 = vadd.f32 0.0, %v4767
    %v4769 = vpop.f32.mrb[0].mxu0
    %4770 = vdwg.mxu0
    %v4771 = vsel %vm322, %v4690, -inf
    %4772 = vmax.xlane.f32.xlu0 %v4771
    %v4773 = vpop.xlane.xlu0 %4772
    %v4774 = vsel %vm322, %v4768, -inf
    %4775 = vmax.xlane.f32.xlu0 %v4774
    %v4776 = vpop.xlane.xlu0 %4775
    %v4777 = vsub.f32 %v4690, %v4773
    %v4778 = vsub.f32 %v4768, %v4776
    %v4779 = vmul.f32 %v4777, 1.442695
    %v4780 = vpow.pop %v4779
    %v4781 = vmul.f32 %v4778, 1.442695
    %v4782 = vpow.pop %v4781
    %v4783 = vsel %vm322, %v4780, 0.0
    %4784 = vadd.xlane.f32.xlu0 %v4783
    %v4785 = vpop.xlane.xlu0 %4784
    %v4786 = vsel %vm322, %v4782, 0.0
    %4787 = vadd.xlane.f32.xlu0 %v4786
    %v4788 = vpop.xlane.xlu0 %4787
    %v4789 = vrcp.pop %v4785
    %v4790 = vrcp.pop %v4788
    %v4791 = vmul.f32 %v4780, %v4789
    %v4792 = vmul.f32 %v4782, %v4790
    %4793 = vrot.lane.b32.xlu0 %v3949, 48
    %v4794 = vpop.permute.xlu0 %4793
    %v4797 = vsel %vm322, %v4791, 0
    %4799 = vmatprep.subr.mxu0 0.0
    %4800 = vmatpush1.msra.mxu0 %v4794
    %4801 = vmatprep.subr.mxu0 0.0
    %4802 = vmatpush1.msra.mxu0 0.0
    %4803 = vmatprep.subr.mxu0 0.0
    %4804 = vmatpush1.msra.mxu0 0.0
    %4805 = vmatprep.subr.mxu0 0.0
    %4806 = vmatpush1.msra.mxu0 0.0
    %4807 = vmatprep.subr.mxu0 0.0
    %4808 = vmatpush1.msra.mxu0 0.0
    %4809 = vmatprep.subr.mxu0 0.0
    %4810 = vmatpush1.msra.mxu0 0.0
    %4811 = vmatprep.subr.mxu0 0.0
    %4812 = vmatpush1.msra.mxu0 0.0
    %4813 = vmatprep.subr.mxu0 0.0
    %4814 = vmatpush1.msra.mxu0 0.0
    %4815 = vmatprep.subr.mxu0 0.0
    %4816 = vmatpush1.msra.mxu0 0.0
    %4817 = vmatprep.subr.mxu0 0.0
    %4818 = vmatpush1.msra.mxu0 0.0
    %4819 = vmatprep.subr.mxu0 0.0
    %4820 = vmatpush1.msra.mxu0 0.0
    %4821 = vmatprep.subr.mxu0 0.0
    %4822 = vmatpush1.msra.mxu0 0.0
    %4823 = vmatprep.subr.mxu0 0.0
    %4824 = vmatpush1.msra.mxu0 0.0
    %4825 = vmatprep.subr.mxu0 0.0
    %4826 = vmatpush1.msra.mxu0 0.0
    %4827 = vmatprep.subr.mxu0 0.0
    %4828 = vmatpush1.msra.mxu0 0.0
    %4829 = vmatprep.subr.mxu0 0.0
    %4830 = vmatpush1.msra.mxu0 0.0
    %4831 = vmatprep.subr.mxu0 0.0
    %4832 = vmatpush1.msra.mxu0 0.0
    %4833 = vmatprep.subr.mxu0 0.0
    %4834 = vmatpush1.msra.mxu0 0.0
    %4835 = vmatprep.subr.mxu0 0.0
    %4836 = vmatpush1.msra.mxu0 0.0
    %4837 = vmatprep.subr.mxu0 0.0
    %4838 = vmatpush1.msra.mxu0 0.0
    %4839 = vmatprep.subr.mxu0 0.0
    %4840 = vmatpush1.msra.mxu0 0.0
    %4841 = vmatprep.subr.mxu0 0.0
    %4842 = vmatpush1.msra.mxu0 0.0
    %4843 = vmatprep.subr.mxu0 0.0
    %4844 = vmatpush1.msra.mxu0 0.0
    %4845 = vmatprep.subr.mxu0 0.0
    %4846 = vmatpush1.msra.mxu0 0.0
    %4847 = vmatprep.subr.mxu0 0.0
    %4848 = vmatpush1.msra.mxu0 0.0
    %4849 = vmatprep.subr.mxu0 0.0
    %4850 = vmatpush1.msra.mxu0 0.0
    %4851 = vmatprep.subr.mxu0 0.0
    %4852 = vmatpush1.msra.mxu0 0.0
    %4853 = vmatprep.subr.mxu0 0.0
    %4854 = vmatpush1.msra.mxu0 0.0
    %4855 = vmatprep.subr.mxu0 0.0
    %4856 = vmatpush1.msra.mxu0 0.0
    %4857 = vmatprep.subr.mxu0 0.0
    %4858 = vmatpush1.msra.mxu0 0.0
    %4859 = vmatprep.subr.mxu0 0.0
    %4860 = vmatpush1.msra.mxu0 0.0
    %4861 = vmatprep.subr.mxu0 0.0
    %4862 = vmatpush1.msra.mxu0 0.0
    %4863 = vmatprep.mubr.f32.mxu0 0.0
    %4864 = vmatmul.mubr.f32.gmra.mrb[0].mxu0 %v4797
    %v4865 = vpop.f32.mrb[0].mxu0
    %v4866 = vadd.f32 0.0, %v4865
    %v4867 = vpop.f32.mrb[0].mxu0
    %4868 = vdwg.mxu0
    %4869 = vrot.lane.b32.xlu0 %v3954, 48
    %v4870 = vpop.permute.xlu0 %4869
    %v4873 = vsel %vm322, %v4792, 0
    %4875 = vmatprep.subr.mxu0 0.0
    %4876 = vmatpush1.msra.mxu0 %v4870
    %4877 = vmatprep.subr.mxu0 0.0
    %4878 = vmatpush1.msra.mxu0 0.0
    %4879 = vmatprep.subr.mxu0 0.0
    %4880 = vmatpush1.msra.mxu0 0.0
    %4881 = vmatprep.subr.mxu0 0.0
    %4882 = vmatpush1.msra.mxu0 0.0
    %4883 = vmatprep.subr.mxu0 0.0
    %4884 = vmatpush1.msra.mxu0 0.0
    %4885 = vmatprep.subr.mxu0 0.0
    %4886 = vmatpush1.msra.mxu0 0.0
    %4887 = vmatprep.subr.mxu0 0.0
    %4888 = vmatpush1.msra.mxu0 0.0
    %4889 = vmatprep.subr.mxu0 0.0
    %4890 = vmatpush1.msra.mxu0 0.0
    %4891 = vmatprep.subr.mxu0 0.0
    %4892 = vmatpush1.msra.mxu0 0.0
    %4893 = vmatprep.subr.mxu0 0.0
    %4894 = vmatpush1.msra.mxu0 0.0
    %4895 = vmatprep.subr.mxu0 0.0
    %4896 = vmatpush1.msra.mxu0 0.0
    %4897 = vmatprep.subr.mxu0 0.0
    %4898 = vmatpush1.msra.mxu0 0.0
    %4899 = vmatprep.subr.mxu0 0.0
    %4900 = vmatpush1.msra.mxu0 0.0
    %4901 = vmatprep.subr.mxu0 0.0
    %4902 = vmatpush1.msra.mxu0 0.0
    %4903 = vmatprep.subr.mxu0 0.0
    %4904 = vmatpush1.msra.mxu0 0.0
    %4905 = vmatprep.subr.mxu0 0.0
    %4906 = vmatpush1.msra.mxu0 0.0
    %4907 = vmatprep.subr.mxu0 0.0
    %4908 = vmatpush1.msra.mxu0 0.0
    %4909 = vmatprep.subr.mxu0 0.0
    %4910 = vmatpush1.msra.mxu0 0.0
    %4911 = vmatprep.subr.mxu0 0.0
    %4912 = vmatpush1.msra.mxu0 0.0
    %4913 = vmatprep.subr.mxu0 0.0
    %4914 = vmatpush1.msra.mxu0 0.0
    %4915 = vmatprep.subr.mxu0 0.0
    %4916 = vmatpush1.msra.mxu0 0.0
    %4917 = vmatprep.subr.mxu0 0.0
    %4918 = vmatpush1.msra.mxu0 0.0
    %4919 = vmatprep.subr.mxu0 0.0
    %4920 = vmatpush1.msra.mxu0 0.0
    %4921 = vmatprep.subr.mxu0 0.0
    %4922 = vmatpush1.msra.mxu0 0.0
    %4923 = vmatprep.subr.mxu0 0.0
    %4924 = vmatpush1.msra.mxu0 0.0
    %4925 = vmatprep.subr.mxu0 0.0
    %4926 = vmatpush1.msra.mxu0 0.0
    %4927 = vmatprep.subr.mxu0 0.0
    %4928 = vmatpush1.msra.mxu0 0.0
    %4929 = vmatprep.subr.mxu0 0.0
    %4930 = vmatpush1.msra.mxu0 0.0
    %4931 = vmatprep.subr.mxu0 0.0
    %4932 = vmatpush1.msra.mxu0 0.0
    %4933 = vmatprep.subr.mxu0 0.0
    %4934 = vmatpush1.msra.mxu0 0.0
    %4935 = vmatprep.subr.mxu0 0.0
    %4936 = vmatpush1.msra.mxu0 0.0
    %4937 = vmatprep.subr.mxu0 0.0
    %4938 = vmatpush1.msra.mxu0 0.0
    %4939 = vmatprep.mubr.f32.mxu0 0.0
    %4940 = vmatmul.mubr.f32.gmra.mrb[0].mxu0 %v4873
    %v4941 = vpop.f32.mrb[0].mxu0
    %v4942 = vadd.f32 0.0, %v4941
    %v4943 = vpop.f32.mrb[0].mxu0
    %4944 = vdwg.mxu0
    %4945 = vrot.lane.b32.xlu0 %v3949, 104
    %v4946 = vpop.permute.xlu0 %4945
    %4947 = vrot.lane.b32.xlu0 %v3949, 72
    %v4948 = vpop.permute.xlu0 %4947
    %v4949 = vsel %vm322, %v4946, 0
    %v4951 = vsel %vm322, %v4948, 0
    %4953 = vmatprep.subr.mxu0 0.0
    %4954 = vmatpush1.xpose.msra.mxu0 %v4951
    %4955 = vmatprep.subr.mxu0 0.0
    %4956 = vmatpush1.xpose.msra.mxu0 0.0
    %4957 = vmatprep.subr.mxu0 0.0
    %4958 = vmatpush1.xpose.msra.mxu0 0.0
    %4959 = vmatprep.subr.mxu0 0.0
    %4960 = vmatpush1.xpose.msra.mxu0 0.0
    %4961 = vmatprep.subr.mxu0 0.0
    %4962 = vmatpush1.xpose.msra.mxu0 0.0
    %4963 = vmatprep.subr.mxu0 0.0
    %4964 = vmatpush1.xpose.msra.mxu0 0.0
    %4965 = vmatprep.subr.mxu0 0.0
    %4966 = vmatpush1.xpose.msra.mxu0 0.0
    %4967 = vmatprep.subr.mxu0 0.0
    %4968 = vmatpush1.xpose.msra.mxu0 0.0
    %4969 = vmatprep.subr.mxu0 0.0
    %4970 = vmatpush1.xpose.msra.mxu0 0.0
    %4971 = vmatprep.subr.mxu0 0.0
    %4972 = vmatpush1.xpose.msra.mxu0 0.0
    %4973 = vmatprep.subr.mxu0 0.0
    %4974 = vmatpush1.xpose.msra.mxu0 0.0
    %4975 = vmatprep.subr.mxu0 0.0
    %4976 = vmatpush1.xpose.msra.mxu0 0.0
    %4977 = vmatprep.subr.mxu0 0.0
    %4978 = vmatpush1.xpose.msra.mxu0 0.0
    %4979 = vmatprep.subr.mxu0 0.0
    %4980 = vmatpush1.xpose.msra.mxu0 0.0
    %4981 = vmatprep.subr.mxu0 0.0
    %4982 = vmatpush1.xpose.msra.mxu0 0.0
    %4983 = vmatprep.subr.mxu0 0.0
    %4984 = vmatpush1.xpose.msra.mxu0 0.0
    %4985 = vmatprep.subr.mxu0 0.0
    %4986 = vmatpush1.xpose.msra.mxu0 0.0
    %4987 = vmatprep.subr.mxu0 0.0
    %4988 = vmatpush1.xpose.msra.mxu0 0.0
    %4989 = vmatprep.subr.mxu0 0.0
    %4990 = vmatpush1.xpose.msra.mxu0 0.0
    %4991 = vmatprep.subr.mxu0 0.0
    %4992 = vmatpush1.xpose.msra.mxu0 0.0
    %4993 = vmatprep.subr.mxu0 0.0
    %4994 = vmatpush1.xpose.msra.mxu0 0.0
    %4995 = vmatprep.subr.mxu0 0.0
    %4996 = vmatpush1.xpose.msra.mxu0 0.0
    %4997 = vmatprep.subr.mxu0 0.0
    %4998 = vmatpush1.xpose.msra.mxu0 0.0
    %4999 = vmatprep.subr.mxu0 0.0
    %5000 = vmatpush1.xpose.msra.mxu0 0.0
    %5001 = vmatprep.subr.mxu0 0.0
    %5002 = vmatpush1.xpose.msra.mxu0 0.0
    %5003 = vmatprep.subr.mxu0 0.0
    %5004 = vmatpush1.xpose.msra.mxu0 0.0
    %5005 = vmatprep.subr.mxu0 0.0
    %5006 = vmatpush1.xpose.msra.mxu0 0.0
    %5007 = vmatprep.subr.mxu0 0.0
    %5008 = vmatpush1.xpose.msra.mxu0 0.0
    %5009 = vmatprep.subr.mxu0 0.0
    %5010 = vmatpush1.xpose.msra.mxu0 0.0
    %5011 = vmatprep.subr.mxu0 0.0
    %5012 = vmatpush1.xpose.msra.mxu0 0.0
    %5013 = vmatprep.subr.mxu0 0.0
    %5014 = vmatpush1.xpose.msra.mxu0 0.0
    %5015 = vmatprep.subr.mxu0 0.0
    %5016 = vmatpush1.xpose.msra.mxu0 0.0
    %5017 = vmatprep.mubr.f32.mxu0 0.0
    %5018 = vmatmul.mubr.f32.gmra.mrb[0].mxu0 %v4949
    %v5019 = vpop.f32.mrb[0].mxu0
    %v5020 = vadd.f32 0.0, %v5019
    %v5021 = vpop.f32.mrb[0].mxu0
    %5022 = vdwg.mxu0
    %5023 = vrot.lane.b32.xlu0 %v3954, 104
    %v5024 = vpop.permute.xlu0 %5023
    %5025 = vrot.lane.b32.xlu0 %v3954, 72
    %v5026 = vpop.permute.xlu0 %5025
    %v5027 = vsel %vm322, %v5024, 0
    %v5029 = vsel %vm322, %v5026, 0
    %5031 = vmatprep.subr.mxu0 0.0
    %5032 = vmatpush1.xpose.msra.mxu0 %v5029
    %5033 = vmatprep.subr.mxu0 0.0
    %5034 = vmatpush1.xpose.msra.mxu0 0.0
    %5035 = vmatprep.subr.mxu0 0.0
    %5036 = vmatpush1.xpose.msra.mxu0 0.0
    %5037 = vmatprep.subr.mxu0 0.0
    %5038 = vmatpush1.xpose.msra.mxu0 0.0
    %5039 = vmatprep.subr.mxu0 0.0
    %5040 = vmatpush1.xpose.msra.mxu0 0.0
    %5041 = vmatprep.subr.mxu0 0.0
    %5042 = vmatpush1.xpose.msra.mxu0 0.0
    %5043 = vmatprep.subr.mxu0 0.0
    %5044 = vmatpush1.xpose.msra.mxu0 0.0
    %5045 = vmatprep.subr.mxu0 0.0
    %5046 = vmatpush1.xpose.msra.mxu0 0.0
    %5047 = vmatprep.subr.mxu0 0.0
    %5048 = vmatpush1.xpose.msra.mxu0 0.0
    %5049 = vmatprep.subr.mxu0 0.0
    %5050 = vmatpush1.xpose.msra.mxu0 0.0
    %5051 = vmatprep.subr.mxu0 0.0
    %5052 = vmatpush1.xpose.msra.mxu0 0.0
    %5053 = vmatprep.subr.mxu0 0.0
    %5054 = vmatpush1.xpose.msra.mxu0 0.0
    %5055 = vmatprep.subr.mxu0 0.0
    %5056 = vmatpush1.xpose.msra.mxu0 0.0
    %5057 = vmatprep.subr.mxu0 0.0
    %5058 = vmatpush1.xpose.msra.mxu0 0.0
    %5059 = vmatprep.subr.mxu0 0.0
    %5060 = vmatpush1.xpose.msra.mxu0 0.0
    %5061 = vmatprep.subr.mxu0 0.0
    %5062 = vmatpush1.xpose.msra.mxu0 0.0
    %5063 = vmatprep.subr.mxu0 0.0
    %5064 = vmatpush1.xpose.msra.mxu0 0.0
    %5065 = vmatprep.subr.mxu0 0.0
    %5066 = vmatpush1.xpose.msra.mxu0 0.0
    %5067 = vmatprep.subr.mxu0 0.0
    %5068 = vmatpush1.xpose.msra.mxu0 0.0
    %5069 = vmatprep.subr.mxu0 0.0
    %5070 = vmatpush1.xpose.msra.mxu0 0.0
    %5071 = vmatprep.subr.mxu0 0.0
    %5072 = vmatpush1.xpose.msra.mxu0 0.0
    %5073 = vmatprep.subr.mxu0 0.0
    %5074 = vmatpush1.xpose.msra.mxu0 0.0
    %5075 = vmatprep.subr.mxu0 0.0
    %5076 = vmatpush1.xpose.msra.mxu0 0.0
    %5077 = vmatprep.subr.mxu0 0.0
    %5078 = vmatpush1.xpose.msra.mxu0 0.0
    %5079 = vmatprep.subr.mxu0 0.0
    %5080 = vmatpush1.xpose.msra.mxu0 0.0
    %5081 = vmatprep.subr.mxu0 0.0
    %5082 = vmatpush1.xpose.msra.mxu0 0.0
    %5083 = vmatprep.subr.mxu0 0.0
    %5084 = vmatpush1.xpose.msra.mxu0 0.0
    %5085 = vmatprep.subr.mxu0 0.0
    %5086 = vmatpush1.xpose.msra.mxu0 0.0
    %5087 = vmatprep.subr.mxu0 0.0
    %5088 = vmatpush1.xpose.msra.mxu0 0.0
    %5089 = vmatprep.subr.mxu0 0.0
    %5090 = vmatpush1.xpose.msra.mxu0 0.0
    %5091 = vmatprep.subr.mxu0 0.0
    %5092 = vmatpush1.xpose.msra.mxu0 0.0
    %5093 = vmatprep.subr.mxu0 0.0
    %5094 = vmatpush1.xpose.msra.mxu0 0.0
    %5095 = vmatprep.mubr.f32.mxu0 0.0
    %5096 = vmatmul.mubr.f32.gmra.mrb[0].mxu0 %v5027
    %v5097 = vpop.f32.mrb[0].mxu0
    %v5098 = vadd.f32 0.0, %v5097
    %v5099 = vpop.f32.mrb[0].mxu0
    %5100 = vdwg.mxu0
    %v5101 = vsel %vm322, %v5020, -inf
    %5102 = vmax.xlane.f32.xlu0 %v5101
    %v5103 = vpop.xlane.xlu0 %5102
    %v5104 = vsel %vm322, %v5098, -inf
    %5105 = vmax.xlane.f32.xlu0 %v5104
    %v5106 = vpop.xlane.xlu0 %5105
    %v5107 = vsub.f32 %v5020, %v5103
    %v5108 = vsub.f32 %v5098, %v5106
    %v5109 = vmul.f32 %v5107, 1.442695
    %v5110 = vpow.pop %v5109
    %v5111 = vmul.f32 %v5108, 1.442695
    %v5112 = vpow.pop %v5111
    %v5113 = vsel %vm322, %v5110, 0.0
    %5114 = vadd.xlane.f32.xlu0 %v5113
    %v5115 = vpop.xlane.xlu0 %5114
    %v5116 = vsel %vm322, %v5112, 0.0
    %5117 = vadd.xlane.f32.xlu0 %v5116
    %v5118 = vpop.xlane.xlu0 %5117
    %v5119 = vrcp.pop %v5115
    %v5120 = vrcp.pop %v5118
    %v5121 = vmul.f32 %v5110, %v5119
    %v5122 = vmul.f32 %v5112, %v5120
    %5123 = vrot.lane.b32.xlu0 %v3949, 40
    %v5124 = vpop.permute.xlu0 %5123
    %v5127 = vsel %vm322, %v5121, 0
    %5129 = vmatprep.subr.mxu0 0.0
    %5130 = vmatpush1.msra.mxu0 %v5124
    %5131 = vmatprep.subr.mxu0 0.0
    %5132 = vmatpush1.msra.mxu0 0.0
    %5133 = vmatprep.subr.mxu0 0.0
    %5134 = vmatpush1.msra.mxu0 0.0
    %5135 = vmatprep.subr.mxu0 0.0
    %5136 = vmatpush1.msra.mxu0 0.0
    %5137 = vmatprep.subr.mxu0 0.0
    %5138 = vmatpush1.msra.mxu0 0.0
    %5139 = vmatprep.subr.mxu0 0.0
    %5140 = vmatpush1.msra.mxu0 0.0
    %5141 = vmatprep.subr.mxu0 0.0
    %5142 = vmatpush1.msra.mxu0 0.0
    %5143 = vmatprep.subr.mxu0 0.0
    %5144 = vmatpush1.msra.mxu0 0.0
    %5145 = vmatprep.subr.mxu0 0.0
    %5146 = vmatpush1.msra.mxu0 0.0
    %5147 = vmatprep.subr.mxu0 0.0
    %5148 = vmatpush1.msra.mxu0 0.0
    %5149 = vmatprep.subr.mxu0 0.0
    %5150 = vmatpush1.msra.mxu0 0.0
    %5151 = vmatprep.subr.mxu0 0.0
    %5152 = vmatpush1.msra.mxu0 0.0
    %5153 = vmatprep.subr.mxu0 0.0
    %5154 = vmatpush1.msra.mxu0 0.0
    %5155 = vmatprep.subr.mxu0 0.0
    %5156 = vmatpush1.msra.mxu0 0.0
    %5157 = vmatprep.subr.mxu0 0.0
    %5158 = vmatpush1.msra.mxu0 0.0
    %5159 = vmatprep.subr.mxu0 0.0
    %5160 = vmatpush1.msra.mxu0 0.0
    %5161 = vmatprep.subr.mxu0 0.0
    %5162 = vmatpush1.msra.mxu0 0.0
    %5163 = vmatprep.subr.mxu0 0.0
    %5164 = vmatpush1.msra.mxu0 0.0
    %5165 = vmatprep.subr.mxu0 0.0
    %5166 = vmatpush1.msra.mxu0 0.0
    %5167 = vmatprep.subr.mxu0 0.0
    %5168 = vmatpush1.msra.mxu0 0.0
    %5169 = vmatprep.subr.mxu0 0.0
    %5170 = vmatpush1.msra.mxu0 0.0
    %5171 = vmatprep.subr.mxu0 0.0
    %5172 = vmatpush1.msra.mxu0 0.0
    %5173 = vmatprep.subr.mxu0 0.0
    %5174 = vmatpush1.msra.mxu0 0.0
    %5175 = vmatprep.subr.mxu0 0.0
    %5176 = vmatpush1.msra.mxu0 0.0
    %5177 = vmatprep.subr.mxu0 0.0
    %5178 = vmatpush1.msra.mxu0 0.0
    %5179 = vmatprep.subr.mxu0 0.0
    %5180 = vmatpush1.msra.mxu0 0.0
    %5181 = vmatprep.subr.mxu0 0.0
    %5182 = vmatpush1.msra.mxu0 0.0
    %5183 = vmatprep.subr.mxu0 0.0
    %5184 = vmatpush1.msra.mxu0 0.0
    %5185 = vmatprep.subr.mxu0 0.0
    %5186 = vmatpush1.msra.mxu0 0.0
    %5187 = vmatprep.subr.mxu0 0.0
    %5188 = vmatpush1.msra.mxu0 0.0
    %5189 = vmatprep.subr.mxu0 0.0
    %5190 = vmatpush1.msra.mxu0 0.0
    %5191 = vmatprep.subr.mxu0 0.0
    %5192 = vmatpush1.msra.mxu0 0.0
    %5193 = vmatprep.mubr.f32.mxu0 0.0
    %5194 = vmatmul.mubr.f32.gmra.mrb[0].mxu0 %v5127
    %v5195 = vpop.f32.mrb[0].mxu0
    %v5196 = vadd.f32 0.0, %v5195
    %v5197 = vpop.f32.mrb[0].mxu0
    %5198 = vdwg.mxu0
    %5199 = vrot.lane.b32.xlu0 %v3954, 40
    %v5200 = vpop.permute.xlu0 %5199
    %v5203 = vsel %vm322, %v5122, 0
    %5205 = vmatprep.subr.mxu0 0.0
    %5206 = vmatpush1.msra.mxu0 %v5200
    %5207 = vmatprep.subr.mxu0 0.0
    %5208 = vmatpush1.msra.mxu0 0.0
    %5209 = vmatprep.subr.mxu0 0.0
    %5210 = vmatpush1.msra.mxu0 0.0
    %5211 = vmatprep.subr.mxu0 0.0
    %5212 = vmatpush1.msra.mxu0 0.0
    %5213 = vmatprep.subr.mxu0 0.0
    %5214 = vmatpush1.msra.mxu0 0.0
    %5215 = vmatprep.subr.mxu0 0.0
    %5216 = vmatpush1.msra.mxu0 0.0
    %5217 = vmatprep.subr.mxu0 0.0
    %5218 = vmatpush1.msra.mxu0 0.0
    %5219 = vmatprep.subr.mxu0 0.0
    %5220 = vmatpush1.msra.mxu0 0.0
    %5221 = vmatprep.subr.mxu0 0.0
    %5222 = vmatpush1.msra.mxu0 0.0
    %5223 = vmatprep.subr.mxu0 0.0
    %5224 = vmatpush1.msra.mxu0 0.0
    %5225 = vmatprep.subr.mxu0 0.0
    %5226 = vmatpush1.msra.mxu0 0.0
    %5227 = vmatprep.subr.mxu0 0.0
    %5228 = vmatpush1.msra.mxu0 0.0
    %5229 = vmatprep.subr.mxu0 0.0
    %5230 = vmatpush1.msra.mxu0 0.0
    %5231 = vmatprep.subr.mxu0 0.0
    %5232 = vmatpush1.msra.mxu0 0.0
    %5233 = vmatprep.subr.mxu0 0.0
    %5234 = vmatpush1.msra.mxu0 0.0
    %5235 = vmatprep.subr.mxu0 0.0
    %5236 = vmatpush1.msra.mxu0 0.0
    %5237 = vmatprep.subr.mxu0 0.0
    %5238 = vmatpush1.msra.mxu0 0.0
    %5239 = vmatprep.subr.mxu0 0.0
    %5240 = vmatpush1.msra.mxu0 0.0
    %5241 = vmatprep.subr.mxu0 0.0
    %5242 = vmatpush1.msra.mxu0 0.0
    %5243 = vmatprep.subr.mxu0 0.0
    %5244 = vmatpush1.msra.mxu0 0.0
    %5245 = vmatprep.subr.mxu0 0.0
    %5246 = vmatpush1.msra.mxu0 0.0
    %5247 = vmatprep.subr.mxu0 0.0
    %5248 = vmatpush1.msra.mxu0 0.0
    %5249 = vmatprep.subr.mxu0 0.0
    %5250 = vmatpush1.msra.mxu0 0.0
    %5251 = vmatprep.subr.mxu0 0.0
    %5252 = vmatpush1.msra.mxu0 0.0
    %5253 = vmatprep.subr.mxu0 0.0
    %5254 = vmatpush1.msra.mxu0 0.0
    %5255 = vmatprep.subr.mxu0 0.0
    %5256 = vmatpush1.msra.mxu0 0.0
    %5257 = vmatprep.subr.mxu0 0.0
    %5258 = vmatpush1.msra.mxu0 0.0
    %5259 = vmatprep.subr.mxu0 0.0
    %5260 = vmatpush1.msra.mxu0 0.0
    %5261 = vmatprep.subr.mxu0 0.0
    %5262 = vmatpush1.msra.mxu0 0.0
    %5263 = vmatprep.subr.mxu0 0.0
    %5264 = vmatpush1.msra.mxu0 0.0
    %5265 = vmatprep.subr.mxu0 0.0
    %5266 = vmatpush1.msra.mxu0 0.0
    %5267 = vmatprep.subr.mxu0 0.0
    %5268 = vmatpush1.msra.mxu0 0.0
    %5269 = vmatprep.mubr.f32.mxu0 0.0
    %5270 = vmatmul.mubr.f32.gmra.mrb[0].mxu0 %v5203
    %v5271 = vpop.f32.mrb[0].mxu0
    %v5272 = vadd.f32 0.0, %v5271
    %v5273 = vpop.f32.mrb[0].mxu0
    %5274 = vdwg.mxu0
    %5277 = vrot.lane.b32.xlu0 %v4536, 8
    %v5278 = vpop.permute.xlu0 %5277
    %5279 = vrot.lane.b32.xlu0 %v4612, 8
    %v5280 = vpop.permute.xlu0 %5279
    %5285 = vrot.lane.b32.xlu0 %v4866, 16
    %v5286 = vpop.permute.xlu0 %5285
    %5287 = vrot.lane.b32.xlu0 %v4942, 16
    %v5288 = vpop.permute.xlu0 %5287
    %5293 = vrot.lane.b32.xlu0 %v5196, 24
    %v5294 = vpop.permute.xlu0 %5293
    %5295 = vrot.lane.b32.xlu0 %v5272, 24
    %v5296 = vpop.permute.xlu0 %5295
    %v5299 = vsel %vm322, %v4206, %v5278
    %v5300 = vsel %vm322, %v4282, %v5280
    %v5301 = vsel %vm1664, %v5299, %v5286
    %v5302 = vsel %vm1664, %v5300, %v5288
    %v5303 = vsel %vm1667, %v5301, %v5294
    %v5304 = vsel %vm1667, %v5302, %v5296
    %s5305 = scalar_lea.vmem [#allocation4], 64
    %v5306 = vld [vmem:[%s5305] sm:$0xff]
    %v5307 = vld [vmem:[%s5305 + $0x8] sm:$0xff]
    %v5308 = vld [vmem:[%s5305 + $0x10] sm:$0xff]
    %v5309 = vld [vmem:[%s5305 + $0x18] sm:$0xff]
    %s5310 = scalar_lea.vmem %s7, 2
    %v5311 = vld [vmem:[%s5310] sm:$0x1]
    %v5313 = vlaneseq
    %v5314 = vshrl.u32 %v5313, 7
    %v5315 = vsub.s32 0, %v5314
    %v5316 = vrot.slane %v5311, %v5315
    %v5319 = vsel %vm237, %v5303, 0
    %v5322 = vsel %vm237, %v5304, 0
    %5324 = vmatprep.subr.mxu0 0.0
    %5325 = vmatpush1.msra.mxu0 %v5306
    %5326 = vmatprep.subr.mxu0 0.0
    %5327 = vmatpush1.msra.mxu0 %v5307
    %5328 = vmatprep.subr.mxu0 0.0
    %5329 = vmatpush1.msra.mxu0 %v5308
    %5330 = vmatprep.subr.mxu0 0.0
    %5331 = vmatpush1.msra.mxu0 %v5309
    %5332 = vmatprep.subr.mxu0 0.0
    %5333 = vmatpush1.msra.mxu0 0.0
    %5334 = vmatprep.subr.mxu0 0.0
    %5335 = vmatpush1.msra.mxu0 0.0
    %5336 = vmatprep.subr.mxu0 0.0
    %5337 = vmatpush1.msra.mxu0 0.0
    %5338 = vmatprep.subr.mxu0 0.0
    %5339 = vmatpush1.msra.mxu0 0.0
    %5340 = vmatprep.subr.mxu0 0.0
    %5341 = vmatpush1.msra.mxu0 0.0
    %5342 = vmatprep.subr.mxu0 0.0
    %5343 = vmatpush1.msra.mxu0 0.0
    %5344 = vmatprep.subr.mxu0 0.0
    %5345 = vmatpush1.msra.mxu0 0.0
    %5346 = vmatprep.subr.mxu0 0.0
    %5347 = vmatpush1.msra.mxu0 0.0
    %5348 = vmatprep.subr.mxu0 0.0
    %5349 = vmatpush1.msra.mxu0 0.0
    %5350 = vmatprep.subr.mxu0 0.0
    %5351 = vmatpush1.msra.mxu0 0.0
    %5352 = vmatprep.subr.mxu0 0.0
    %5353 = vmatpush1.msra.mxu0 0.0
    %5354 = vmatprep.subr.mxu0 0.0
    %5355 = vmatpush1.msra.mxu0 0.0
    %5356 = vmatprep.subr.mxu0 0.0
    %5357 = vmatpush1.msra.mxu0 0.0
    %5358 = vmatprep.subr.mxu0 0.0
    %5359 = vmatpush1.msra.mxu0 0.0
    %5360 = vmatprep.subr.mxu0 0.0
    %5361 = vmatpush1.msra.mxu0 0.0
    %5362 = vmatprep.subr.mxu0 0.0
    %5363 = vmatpush1.msra.mxu0 0.0
    %5364 = vmatprep.subr.mxu0 0.0
    %5365 = vmatpush1.msra.mxu0 0.0
    %5366 = vmatprep.subr.mxu0 0.0
    %5367 = vmatpush1.msra.mxu0 0.0
    %5368 = vmatprep.subr.mxu0 0.0
    %5369 = vmatpush1.msra.mxu0 0.0
    %5370 = vmatprep.subr.mxu0 0.0
    %5371 = vmatpush1.msra.mxu0 0.0
    %5372 = vmatprep.subr.mxu0 0.0
    %5373 = vmatpush1.msra.mxu0 0.0
    %5374 = vmatprep.subr.mxu0 0.0
    %5375 = vmatpush1.msra.mxu0 0.0
    %5376 = vmatprep.subr.mxu0 0.0
    %5377 = vmatpush1.msra.mxu0 0.0
    %5378 = vmatprep.subr.mxu0 0.0
    %5379 = vmatpush1.msra.mxu0 0.0
    %5380 = vmatprep.subr.mxu0 0.0
    %5381 = vmatpush1.msra.mxu0 0.0
    %5382 = vmatprep.subr.mxu0 0.0
    %5383 = vmatpush1.msra.mxu0 0.0
    %5384 = vmatprep.subr.mxu0 0.0
    %5385 = vmatpush1.msra.mxu0 0.0
    %5386 = vmatprep.subr.mxu0 0.0
    %5387 = vmatpush1.msra.mxu0 0.0
    %5388 = vmatprep.mubr.f32.mxu0 0.0
    %5389 = vmatmul.mubr.f32.gmra.mrb[0].mxu0 %v5319
    %v5390 = vpop.f32.mrb[0].mxu0
    %v5391 = vadd.f32 %v5316, %v5390
    %v5392 = vpop.f32.mrb[0].mxu0
    %5393 = vmatprep.mubr.f32.mxu0 0.0
    %5394 = vmatmul.mubr.f32.gmra.mrb[0].mxu0 %v5322
    %v5395 = vpop.f32.mrb[0].mxu0
    %v5396 = vadd.f32 %v5316, %v5395
    %v5397 = vpop.f32.mrb[0].mxu0
    %5398 = vdwg.mxu0
    %v5399 = vadd.f32 %v3861, %v5391
    %v5400 = vadd.f32 %v3862, %v5396
    %s5401 = scalar_lea.vmem %s12, 2
    %v5402 = vld [vmem:[%s5401] sm:$0x1]
    %s5403 = scalar_lea.vmem %s13, 2
    %v5404 = vld [vmem:[%s5403] sm:$0x1]
    %v5405 = vsel %vm237, %v5399, 0.0
    %5406 = vadd.xlane.f32.xlu0 %v5405
    %v5407 = vpop.xlane.xlu0 %5406
    %v5408 = vsel %vm237, %v5400, 0.0
    %5409 = vadd.xlane.f32.xlu0 %v5408
    %v5410 = vpop.xlane.xlu0 %5409
    %v5411 = vmul.f32 %v5407, %v1772
    %v5412 = vmul.f32 %v5410, %v1772
    %v5413 = vsub.f32 %v5399, %v5411
    %v5414 = vsub.f32 %v5400, %v5412
    %v5415 = vmul.f32 %v5413, %v5413
    %v5416 = vmul.f32 %v5414, %v5414
    %v5417 = vsel %vm237, %v5415, 0.0
    %5418 = vadd.xlane.f32.xlu0 %v5417
    %v5419 = vpop.xlane.xlu0 %5418
    %v5420 = vsel %vm237, %v5416, 0.0
    %5421 = vadd.xlane.f32.xlu0 %v5420
    %v5422 = vpop.xlane.xlu0 %5421
    %v5423 = vmul.f32 %v5419, %v1772
    %v5424 = vmul.f32 %v5422, %v1772
    %v5425 = vadd.f32 %v5423, 1e-05
    %v5426 = vadd.f32 %v5424, 1e-05
    %v5427 = vrsqrt.pop %v5425
    %v5428 = vrsqrt.pop %v5426
    %v5429 = vmul.f32 %v5413, %v5427
    %v5430 = vmul.f32 %v5414, %v5428
    %v5432 = vlaneseq
    %v5433 = vshrl.u32 %v5432, 7
    %v5434 = vsub.s32 0, %v5433
    %v5435 = vrot.slane %v5402, %v5434
    %v5437 = vmul.f32 %v5429, %v5435
    %v5438 = vmul.f32 %v5430, %v5435
    %v5440 = vlaneseq
    %v5441 = vshrl.u32 %v5440, 7
    %v5442 = vsub.s32 0, %v5441
    %v5443 = vrot.slane %v5404, %v5442
    %v5445 = vadd.f32 %v5437, %v5443
    %v5446 = vadd.f32 %v5438, %v5443
    %s5447 = scalar_lea.vmem [#allocation6], 64
    %v5448 = vld [vmem:[%s5447] sm:$0xff]
    %v5449 = vld [vmem:[%s5447 + $0x8] sm:$0xff]
    %v5450 = vld [vmem:[%s5447 + $0x10] sm:$0xff]
    %v5451 = vld [vmem:[%s5447 + $0x18] sm:$0xff]
    %s5452 = scalar_lea.vmem %s9, 2
    %v5453 = vld [vmem:[%s5452] sm:$0x1]
    %v5455 = vlaneseq
    %v5456 = vshrl.u32 %v5455, 7
    %v5457 = vsub.s32 0, %v5456
    %v5458 = vrot.slane %v5453, %v5457
    %v5461 = vsel %vm237, %v5445, 0
    %v5464 = vsel %vm237, %v5446, 0
    %5466 = vmatprep.subr.mxu0 0.0
    %5467 = vmatpush1.msra.mxu0 %v5448
    %5468 = vmatprep.subr.mxu0 0.0
    %5469 = vmatpush1.msra.mxu0 %v5449
    %5470 = vmatprep.subr.mxu0 0.0
    %5471 = vmatpush1.msra.mxu0 %v5450
    %5472 = vmatprep.subr.mxu0 0.0
    %5473 = vmatpush1.msra.mxu0 %v5451
    %5474 = vmatprep.subr.mxu0 0.0
    %5475 = vmatpush1.msra.mxu0 0.0
    %5476 = vmatprep.subr.mxu0 0.0
    %5477 = vmatpush1.msra.mxu0 0.0
    %5478 = vmatprep.subr.mxu0 0.0
    %5479 = vmatpush1.msra.mxu0 0.0
    %5480 = vmatprep.subr.mxu0 0.0
    %5481 = vmatpush1.msra.mxu0 0.0
    %5482 = vmatprep.subr.mxu0 0.0
    %5483 = vmatpush1.msra.mxu0 0.0
    %5484 = vmatprep.subr.mxu0 0.0
    %5485 = vmatpush1.msra.mxu0 0.0
    %5486 = vmatprep.subr.mxu0 0.0
    %5487 = vmatpush1.msra.mxu0 0.0
    %5488 = vmatprep.subr.mxu0 0.0
    %5489 = vmatpush1.msra.mxu0 0.0
    %5490 = vmatprep.subr.mxu0 0.0
    %5491 = vmatpush1.msra.mxu0 0.0
    %5492 = vmatprep.subr.mxu0 0.0
    %5493 = vmatpush1.msra.mxu0 0.0
    %5494 = vmatprep.subr.mxu0 0.0
    %5495 = vmatpush1.msra.mxu0 0.0
    %5496 = vmatprep.subr.mxu0 0.0
    %5497 = vmatpush1.msra.mxu0 0.0
    %5498 = vmatprep.subr.mxu0 0.0
    %5499 = vmatpush1.msra.mxu0 0.0
    %5500 = vmatprep.subr.mxu0 0.0
    %5501 = vmatpush1.msra.mxu0 0.0
    %5502 = vmatprep.subr.mxu0 0.0
    %5503 = vmatpush1.msra.mxu0 0.0
    %5504 = vmatprep.subr.mxu0 0.0
    %5505 = vmatpush1.msra.mxu0 0.0
    %5506 = vmatprep.subr.mxu0 0.0
    %5507 = vmatpush1.msra.mxu0 0.0
    %5508 = vmatprep.subr.mxu0 0.0
    %5509 = vmatpush1.msra.mxu0 0.0
    %5510 = vmatprep.subr.mxu0 0.0
    %5511 = vmatpush1.msra.mxu0 0.0
    %5512 = vmatprep.subr.mxu0 0.0
    %5513 = vmatpush1.msra.mxu0 0.0
    %5514 = vmatprep.subr.mxu0 0.0
    %5515 = vmatpush1.msra.mxu0 0.0
    %5516 = vmatprep.subr.mxu0 0.0
    %5517 = vmatpush1.msra.mxu0 0.0
    %5518 = vmatprep.subr.mxu0 0.0
    %5519 = vmatpush1.msra.mxu0 0.0
    %5520 = vmatprep.subr.mxu0 0.0
    %5521 = vmatpush1.msra.mxu0 0.0
    %5522 = vmatprep.subr.mxu0 0.0
    %5523 = vmatpush1.msra.mxu0 0.0
    %5524 = vmatprep.subr.mxu0 0.0
    %5525 = vmatpush1.msra.mxu0 0.0
    %5526 = vmatprep.subr.mxu0 0.0
    %5527 = vmatpush1.msra.mxu0 0.0
    %5528 = vmatprep.subr.mxu0 0.0
    %5529 = vmatpush1.msra.mxu0 0.0
    %5530 = vmatprep.mubr.f32.mxu0 0.0
    %5531 = vmatmul.mubr.f32.gmra.mrb[0].mxu0 %v5461
    %v5532 = vpop.f32.mrb[0].mxu0
    %v5533 = vadd.f32 %v5458, %v5532
    %v5534 = vpop.f32.mrb[0].mxu0
    %5535 = vmatprep.mubr.f32.mxu0 0.0
    %5536 = vmatmul.mubr.f32.gmra.mrb[0].mxu0 %v5464
    %v5537 = vpop.f32.mrb[0].mxu0
    %v5538 = vadd.f32 %v5458, %v5537
    %v5539 = vpop.f32.mrb[0].mxu0
    %5540 = vdwg.mxu0
    %v5541 = vmax.f32 %v5533, 0.0
    %v5542 = vmax.f32 %v5538, 0.0
    %s5543 = scalar_lea.vmem [#allocation7], 64
    %v5544 = vld [vmem:[%s5543] sm:$0xff]
    %v5545 = vld [vmem:[%s5543 + $0x8] sm:$0xff]
    %v5546 = vld [vmem:[%s5543 + $0x10] sm:$0xff]
    %v5547 = vld [vmem:[%s5543 + $0x18] sm:$0xff]
    %s5548 = scalar_lea.vmem %s11, 2
    %v5549 = vld [vmem:[%s5548] sm:$0x1]
    %v5551 = vlaneseq
    %v5552 = vshrl.u32 %v5551, 7
    %v5553 = vsub.s32 0, %v5552
    %v5554 = vrot.slane %v5549, %v5553
    %v5557 = vsel %vm237, %v5541, 0
    %v5560 = vsel %vm237, %v5542, 0
    %5562 = vmatprep.subr.mxu0 0.0
    %5563 = vmatpush1.msra.mxu0 %v5544
    %5564 = vmatprep.subr.mxu0 0.0
    %5565 = vmatpush1.msra.mxu0 %v5545
    %5566 = vmatprep.subr.mxu0 0.0
    %5567 = vmatpush1.msra.mxu0 %v5546
    %5568 = vmatprep.subr.mxu0 0.0
    %5569 = vmatpush1.msra.mxu0 %v5547
    %5570 = vmatprep.subr.mxu0 0.0
    %5571 = vmatpush1.msra.mxu0 0.0
    %5572 = vmatprep.subr.mxu0 0.0
    %5573 = vmatpush1.msra.mxu0 0.0
    %5574 = vmatprep.subr.mxu0 0.0
    %5575 = vmatpush1.msra.mxu0 0.0
    %5576 = vmatprep.subr.mxu0 0.0
    %5577 = vmatpush1.msra.mxu0 0.0
    %5578 = vmatprep.subr.mxu0 0.0
    %5579 = vmatpush1.msra.mxu0 0.0
    %5580 = vmatprep.subr.mxu0 0.0
    %5581 = vmatpush1.msra.mxu0 0.0
    %5582 = vmatprep.subr.mxu0 0.0
    %5583 = vmatpush1.msra.mxu0 0.0
    %5584 = vmatprep.subr.mxu0 0.0
    %5585 = vmatpush1.msra.mxu0 0.0
    %5586 = vmatprep.subr.mxu0 0.0
    %5587 = vmatpush1.msra.mxu0 0.0
    %5588 = vmatprep.subr.mxu0 0.0
    %5589 = vmatpush1.msra.mxu0 0.0
    %5590 = vmatprep.subr.mxu0 0.0
    %5591 = vmatpush1.msra.mxu0 0.0
    %5592 = vmatprep.subr.mxu0 0.0
    %5593 = vmatpush1.msra.mxu0 0.0
    %5594 = vmatprep.subr.mxu0 0.0
    %5595 = vmatpush1.msra.mxu0 0.0
    %5596 = vmatprep.subr.mxu0 0.0
    %5597 = vmatpush1.msra.mxu0 0.0
    %5598 = vmatprep.subr.mxu0 0.0
    %5599 = vmatpush1.msra.mxu0 0.0
    %5600 = vmatprep.subr.mxu0 0.0
    %5601 = vmatpush1.msra.mxu0 0.0
    %5602 = vmatprep.subr.mxu0 0.0
    %5603 = vmatpush1.msra.mxu0 0.0
    %5604 = vmatprep.subr.mxu0 0.0
    %5605 = vmatpush1.msra.mxu0 0.0
    %5606 = vmatprep.subr.mxu0 0.0
    %5607 = vmatpush1.msra.mxu0 0.0
    %5608 = vmatprep.subr.mxu0 0.0
    %5609 = vmatpush1.msra.mxu0 0.0
    %5610 = vmatprep.subr.mxu0 0.0
    %5611 = vmatpush1.msra.mxu0 0.0
    %5612 = vmatprep.subr.mxu0 0.0
    %5613 = vmatpush1.msra.mxu0 0.0
    %5614 = vmatprep.subr.mxu0 0.0
    %5615 = vmatpush1.msra.mxu0 0.0
    %5616 = vmatprep.subr.mxu0 0.0
    %5617 = vmatpush1.msra.mxu0 0.0
    %5618 = vmatprep.subr.mxu0 0.0
    %5619 = vmatpush1.msra.mxu0 0.0
    %5620 = vmatprep.subr.mxu0 0.0
    %5621 = vmatpush1.msra.mxu0 0.0
    %5622 = vmatprep.subr.mxu0 0.0
    %5623 = vmatpush1.msra.mxu0 0.0
    %5624 = vmatprep.subr.mxu0 0.0
    %5625 = vmatpush1.msra.mxu0 0.0
    %5626 = vmatprep.mubr.f32.mxu0 0.0
    %5627 = vmatmul.mubr.f32.gmra.mrb[0].mxu0 %v5557
    %v5628 = vpop.f32.mrb[0].mxu0
    %v5629 = vadd.f32 %v5554, %v5628
    %v5630 = vpop.f32.mrb[0].mxu0
    %5631 = vmatprep.mubr.f32.mxu0 0.0
    %5632 = vmatmul.mubr.f32.gmra.mrb[0].mxu0 %v5560
    %v5633 = vpop.f32.mrb[0].mxu0
    %v5634 = vadd.f32 %v5554, %v5633
    %v5635 = vpop.f32.mrb[0].mxu0
    %5636 = vdwg.mxu0
    %v5637 = vadd.f32 %v5445, %v5629
    %v5638 = vadd.f32 %v5446, %v5634
    %s5639 = scalar_lea.vmem %s14, 2
    %v5640 = vld [vmem:[%s5639] sm:$0x1]
    %s5641 = scalar_lea.vmem %s15, 2
    %v5642 = vld [vmem:[%s5641] sm:$0x1]
    %v5643 = vsel %vm237, %v5637, 0.0
    %5644 = vadd.xlane.f32.xlu0 %v5643
    %v5645 = vpop.xlane.xlu0 %5644
    %v5646 = vsel %vm237, %v5638, 0.0
    %5647 = vadd.xlane.f32.xlu0 %v5646
    %v5648 = vpop.xlane.xlu0 %5647
    %v5649 = vmul.f32 %v5645, %v1772
    %v5650 = vmul.f32 %v5648, %v1772
    %v5651 = vsub.f32 %v5637, %v5649
    %v5652 = vsub.f32 %v5638, %v5650
    %v5653 = vmul.f32 %v5651, %v5651
    %v5654 = vmul.f32 %v5652, %v5652
    %v5655 = vsel %vm237, %v5653, 0.0
    %5656 = vadd.xlane.f32.xlu0 %v5655
    %v5657 = vpop.xlane.xlu0 %5656
    %v5658 = vsel %vm237, %v5654, 0.0
    %5659 = vadd.xlane.f32.xlu0 %v5658
    %v5660 = vpop.xlane.xlu0 %5659
    %v5661 = vmul.f32 %v5657, %v1772
    %v5662 = vmul.f32 %v5660, %v1772
    %v5663 = vadd.f32 %v5661, 1e-05
    %v5664 = vadd.f32 %v5662, 1e-05
    %v5665 = vrsqrt.pop %v5663
    %v5666 = vrsqrt.pop %v5664
    %v5667 = vmul.f32 %v5651, %v5665
    %v5668 = vmul.f32 %v5652, %v5666
    %v5670 = vlaneseq
    %v5671 = vshrl.u32 %v5670, 7
    %v5672 = vsub.s32 0, %v5671
    %v5673 = vrot.slane %v5640, %v5672
    %v5675 = vmul.f32 %v5667, %v5673
    %v5676 = vmul.f32 %v5668, %v5673
    %v5678 = vlaneseq
    %v5679 = vshrl.u32 %v5678, 7
    %v5680 = vsub.s32 0, %v5679
    %v5681 = vrot.slane %v5642, %v5680
    %v5683 = vadd.f32 %v5675, %v5681
    %v5684 = vadd.f32 %v5676, %v5681
    %s5685 = scalar_lea.vmem [#allocation2], 96
    %v5686 = vld [vmem:[%s5685] sm:$0xff]
    %v5687 = vld [vmem:[%s5685 + $0x8] sm:$0xff]
    %v5688 = vld [vmem:[%s5685 + $0x10] sm:$0xff]
    %v5689 = vld [vmem:[%s5685 + $0x18] sm:$0xff]
    %s5690 = scalar_lea.vmem %s5, 3
    %v5691 = vld [vmem:[%s5690] sm:$0x1]
    %v5693 = vlaneseq
    %v5694 = vshrl.u32 %v5693, 7
    %v5695 = vsub.s32 0, %v5694
    %v5696 = vrot.slane %v5691, %v5695
    %v5699 = vsel %vm237, %v5683, 0
    %v5702 = vsel %vm237, %v5684, 0
    %5704 = vmatprep.subr.mxu0 0.0
    %5705 = vmatpush1.msra.mxu0 %v5686
    %5706 = vmatprep.subr.mxu0 0.0
    %5707 = vmatpush1.msra.mxu0 %v5687
    %5708 = vmatprep.subr.mxu0 0.0
    %5709 = vmatpush1.msra.mxu0 %v5688
    %5710 = vmatprep.subr.mxu0 0.0
    %5711 = vmatpush1.msra.mxu0 %v5689
    %5712 = vmatprep.subr.mxu0 0.0
    %5713 = vmatpush1.msra.mxu0 0.0
    %5714 = vmatprep.subr.mxu0 0.0
    %5715 = vmatpush1.msra.mxu0 0.0
    %5716 = vmatprep.subr.mxu0 0.0
    %5717 = vmatpush1.msra.mxu0 0.0
    %5718 = vmatprep.subr.mxu0 0.0
    %5719 = vmatpush1.msra.mxu0 0.0
    %5720 = vmatprep.subr.mxu0 0.0
    %5721 = vmatpush1.msra.mxu0 0.0
    %5722 = vmatprep.subr.mxu0 0.0
    %5723 = vmatpush1.msra.mxu0 0.0
    %5724 = vmatprep.subr.mxu0 0.0
    %5725 = vmatpush1.msra.mxu0 0.0
    %5726 = vmatprep.subr.mxu0 0.0
    %5727 = vmatpush1.msra.mxu0 0.0
    %5728 = vmatprep.subr.mxu0 0.0
    %5729 = vmatpush1.msra.mxu0 0.0
    %5730 = vmatprep.subr.mxu0 0.0
    %5731 = vmatpush1.msra.mxu0 0.0
    %5732 = vmatprep.subr.mxu0 0.0
    %5733 = vmatpush1.msra.mxu0 0.0
    %5734 = vmatprep.subr.mxu0 0.0
    %5735 = vmatpush1.msra.mxu0 0.0
    %5736 = vmatprep.subr.mxu0 0.0
    %5737 = vmatpush1.msra.mxu0 0.0
    %5738 = vmatprep.subr.mxu0 0.0
    %5739 = vmatpush1.msra.mxu0 0.0
    %5740 = vmatprep.subr.mxu0 0.0
    %5741 = vmatpush1.msra.mxu0 0.0
    %5742 = vmatprep.subr.mxu0 0.0
    %5743 = vmatpush1.msra.mxu0 0.0
    %5744 = vmatprep.subr.mxu0 0.0
    %5745 = vmatpush1.msra.mxu0 0.0
    %5746 = vmatprep.subr.mxu0 0.0
    %5747 = vmatpush1.msra.mxu0 0.0
    %5748 = vmatprep.subr.mxu0 0.0
    %5749 = vmatpush1.msra.mxu0 0.0
    %5750 = vmatprep.subr.mxu0 0.0
    %5751 = vmatpush1.msra.mxu0 0.0
    %5752 = vmatprep.subr.mxu0 0.0
    %5753 = vmatpush1.msra.mxu0 0.0
    %5754 = vmatprep.subr.mxu0 0.0
    %5755 = vmatpush1.msra.mxu0 0.0
    %5756 = vmatprep.subr.mxu0 0.0
    %5757 = vmatpush1.msra.mxu0 0.0
    %5758 = vmatprep.subr.mxu0 0.0
    %5759 = vmatpush1.msra.mxu0 0.0
    %5760 = vmatprep.subr.mxu0 0.0
    %5761 = vmatpush1.msra.mxu0 0.0
    %5762 = vmatprep.subr.mxu0 0.0
    %5763 = vmatpush1.msra.mxu0 0.0
    %5764 = vmatprep.subr.mxu0 0.0
    %5765 = vmatpush1.msra.mxu0 0.0
    %5766 = vmatprep.subr.mxu0 0.0
    %5767 = vmatpush1.msra.mxu0 0.0
    %5768 = vmatprep.mubr.f32.mxu0 0.0
    %5769 = vmatmul.mubr.f32.gmra.mrb[0].mxu0 %v5699
    %v5770 = vpop.f32.mrb[0].mxu0
    %v5771 = vadd.f32 %v5696, %v5770
    %v5772 = vpop.f32.mrb[0].mxu0
    %5773 = vmatprep.mubr.f32.mxu0 0.0
    %5774 = vmatmul.mubr.f32.gmra.mrb[0].mxu0 %v5702
    %v5775 = vpop.f32.mrb[0].mxu0
    %v5776 = vadd.f32 %v5696, %v5775
    %v5777 = vpop.f32.mrb[0].mxu0
    %5778 = vdwg.mxu0
    %5780 = vrot.lane.b32.xlu0 %v5771, 96
    %v5781 = vpop.permute.xlu0 %5780
    %v5782 = vsel %vm322, %v5771, 0
    %v5784 = vsel %vm322, %v5781, 0
    %5786 = vmatprep.subr.mxu0 0.0
    %5787 = vmatpush1.xpose.msra.mxu0 %v5784
    %5788 = vmatprep.subr.mxu0 0.0
    %5789 = vmatpush1.xpose.msra.mxu0 0.0
    %5790 = vmatprep.subr.mxu0 0.0
    %5791 = vmatpush1.xpose.msra.mxu0 0.0
    %5792 = vmatprep.subr.mxu0 0.0
    %5793 = vmatpush1.xpose.msra.mxu0 0.0
    %5794 = vmatprep.subr.mxu0 0.0
    %5795 = vmatpush1.xpose.msra.mxu0 0.0
    %5796 = vmatprep.subr.mxu0 0.0
    %5797 = vmatpush1.xpose.msra.mxu0 0.0
    %5798 = vmatprep.subr.mxu0 0.0
    %5799 = vmatpush1.xpose.msra.mxu0 0.0
    %5800 = vmatprep.subr.mxu0 0.0
    %5801 = vmatpush1.xpose.msra.mxu0 0.0
    %5802 = vmatprep.subr.mxu0 0.0
    %5803 = vmatpush1.xpose.msra.mxu0 0.0
    %5804 = vmatprep.subr.mxu0 0.0
    %5805 = vmatpush1.xpose.msra.mxu0 0.0
    %5806 = vmatprep.subr.mxu0 0.0
    %5807 = vmatpush1.xpose.msra.mxu0 0.0
    %5808 = vmatprep.subr.mxu0 0.0
    %5809 = vmatpush1.xpose.msra.mxu0 0.0
    %5810 = vmatprep.subr.mxu0 0.0
    %5811 = vmatpush1.xpose.msra.mxu0 0.0
    %5812 = vmatprep.subr.mxu0 0.0
    %5813 = vmatpush1.xpose.msra.mxu0 0.0
    %5814 = vmatprep.subr.mxu0 0.0
    %5815 = vmatpush1.xpose.msra.mxu0 0.0
    %5816 = vmatprep.subr.mxu0 0.0
    %5817 = vmatpush1.xpose.msra.mxu0 0.0
    %5818 = vmatprep.subr.mxu0 0.0
    %5819 = vmatpush1.xpose.msra.mxu0 0.0
    %5820 = vmatprep.subr.mxu0 0.0
    %5821 = vmatpush1.xpose.msra.mxu0 0.0
    %5822 = vmatprep.subr.mxu0 0.0
    %5823 = vmatpush1.xpose.msra.mxu0 0.0
    %5824 = vmatprep.subr.mxu0 0.0
    %5825 = vmatpush1.xpose.msra.mxu0 0.0
    %5826 = vmatprep.subr.mxu0 0.0
    %5827 = vmatpush1.xpose.msra.mxu0 0.0
    %5828 = vmatprep.subr.mxu0 0.0
    %5829 = vmatpush1.xpose.msra.mxu0 0.0
    %5830 = vmatprep.subr.mxu0 0.0
    %5831 = vmatpush1.xpose.msra.mxu0 0.0
    %5832 = vmatprep.subr.mxu0 0.0
    %5833 = vmatpush1.xpose.msra.mxu0 0.0
    %5834 = vmatprep.subr.mxu0 0.0
    %5835 = vmatpush1.xpose.msra.mxu0 0.0
    %5836 = vmatprep.subr.mxu0 0.0
    %5837 = vmatpush1.xpose.msra.mxu0 0.0
    %5838 = vmatprep.subr.mxu0 0.0
    %5839 = vmatpush1.xpose.msra.mxu0 0.0
    %5840 = vmatprep.subr.mxu0 0.0
    %5841 = vmatpush1.xpose.msra.mxu0 0.0
    %5842 = vmatprep.subr.mxu0 0.0
    %5843 = vmatpush1.xpose.msra.mxu0 0.0
    %5844 = vmatprep.subr.mxu0 0.0
    %5845 = vmatpush1.xpose.msra.mxu0 0.0
    %5846 = vmatprep.subr.mxu0 0.0
    %5847 = vmatpush1.xpose.msra.mxu0 0.0
    %5848 = vmatprep.subr.mxu0 0.0
    %5849 = vmatpush1.xpose.msra.mxu0 0.0
    %5850 = vmatprep.mubr.f32.mxu0 0.0
    %5851 = vmatmul.mubr.f32.gmra.mrb[0].mxu0 %v5782
    %v5852 = vpop.f32.mrb[0].mxu0
    %v5853 = vadd.f32 0.0, %v5852
    %v5854 = vpop.f32.mrb[0].mxu0
    %5855 = vdwg.mxu0
    %5857 = vrot.lane.b32.xlu0 %v5776, 96
    %v5858 = vpop.permute.xlu0 %5857
    %v5859 = vsel %vm322, %v5776, 0
    %v5861 = vsel %vm322, %v5858, 0
    %5863 = vmatprep.subr.mxu0 0.0
    %5864 = vmatpush1.xpose.msra.mxu0 %v5861
    %5865 = vmatprep.subr.mxu0 0.0
    %5866 = vmatpush1.xpose.msra.mxu0 0.0
    %5867 = vmatprep.subr.mxu0 0.0
    %5868 = vmatpush1.xpose.msra.mxu0 0.0
    %5869 = vmatprep.subr.mxu0 0.0
    %5870 = vmatpush1.xpose.msra.mxu0 0.0
    %5871 = vmatprep.subr.mxu0 0.0
    %5872 = vmatpush1.xpose.msra.mxu0 0.0
    %5873 = vmatprep.subr.mxu0 0.0
    %5874 = vmatpush1.xpose.msra.mxu0 0.0
    %5875 = vmatprep.subr.mxu0 0.0
    %5876 = vmatpush1.xpose.msra.mxu0 0.0
    %5877 = vmatprep.subr.mxu0 0.0
    %5878 = vmatpush1.xpose.msra.mxu0 0.0
    %5879 = vmatprep.subr.mxu0 0.0
    %5880 = vmatpush1.xpose.msra.mxu0 0.0
    %5881 = vmatprep.subr.mxu0 0.0
    %5882 = vmatpush1.xpose.msra.mxu0 0.0
    %5883 = vmatprep.subr.mxu0 0.0
    %5884 = vmatpush1.xpose.msra.mxu0 0.0
    %5885 = vmatprep.subr.mxu0 0.0
    %5886 = vmatpush1.xpose.msra.mxu0 0.0
    %5887 = vmatprep.subr.mxu0 0.0
    %5888 = vmatpush1.xpose.msra.mxu0 0.0
    %5889 = vmatprep.subr.mxu0 0.0
    %5890 = vmatpush1.xpose.msra.mxu0 0.0
    %5891 = vmatprep.subr.mxu0 0.0
    %5892 = vmatpush1.xpose.msra.mxu0 0.0
    %5893 = vmatprep.subr.mxu0 0.0
    %5894 = vmatpush1.xpose.msra.mxu0 0.0
    %5895 = vmatprep.subr.mxu0 0.0
    %5896 = vmatpush1.xpose.msra.mxu0 0.0
    %5897 = vmatprep.subr.mxu0 0.0
    %5898 = vmatpush1.xpose.msra.mxu0 0.0
    %5899 = vmatprep.subr.mxu0 0.0
    %5900 = vmatpush1.xpose.msra.mxu0 0.0
    %5901 = vmatprep.subr.mxu0 0.0
    %5902 = vmatpush1.xpose.msra.mxu0 0.0
    %5903 = vmatprep.subr.mxu0 0.0
    %5904 = vmatpush1.xpose.msra.mxu0 0.0
    %5905 = vmatprep.subr.mxu0 0.0
    %5906 = vmatpush1.xpose.msra.mxu0 0.0
    %5907 = vmatprep.subr.mxu0 0.0
    %5908 = vmatpush1.xpose.msra.mxu0 0.0
    %5909 = vmatprep.subr.mxu0 0.0
    %5910 = vmatpush1.xpose.msra.mxu0 0.0
    %5911 = vmatprep.subr.mxu0 0.0
    %5912 = vmatpush1.xpose.msra.mxu0 0.0
    %5913 = vmatprep.subr.mxu0 0.0
    %5914 = vmatpush1.xpose.msra.mxu0 0.0
    %5915 = vmatprep.subr.mxu0 0.0
    %5916 = vmatpush1.xpose.msra.mxu0 0.0
    %5917 = vmatprep.subr.mxu0 0.0
    %5918 = vmatpush1.xpose.msra.mxu0 0.0
    %5919 = vmatprep.subr.mxu0 0.0
    %5920 = vmatpush1.xpose.msra.mxu0 0.0
    %5921 = vmatprep.subr.mxu0 0.0
    %5922 = vmatpush1.xpose.msra.mxu0 0.0
    %5923 = vmatprep.subr.mxu0 0.0
    %5924 = vmatpush1.xpose.msra.mxu0 0.0
    %5925 = vmatprep.subr.mxu0 0.0
    %5926 = vmatpush1.xpose.msra.mxu0 0.0
    %5927 = vmatprep.mubr.f32.mxu0 0.0
    %5928 = vmatmul.mubr.f32.gmra.mrb[0].mxu0 %v5859
    %v5929 = vpop.f32.mrb[0].mxu0
    %v5930 = vadd.f32 0.0, %v5929
    %v5931 = vpop.f32.mrb[0].mxu0
    %5932 = vdwg.mxu0
    %v5933 = vsel %vm322, %v5853, -inf
    %5934 = vmax.xlane.f32.xlu0 %v5933
    %v5935 = vpop.xlane.xlu0 %5934
    %v5936 = vsel %vm322, %v5930, -inf
    %5937 = vmax.xlane.f32.xlu0 %v5936
    %v5938 = vpop.xlane.xlu0 %5937
    %v5939 = vsub.f32 %v5853, %v5935
    %v5940 = vsub.f32 %v5930, %v5938
    %v5941 = vmul.f32 %v5939, 1.442695
    %v5942 = vpow.pop %v5941
    %v5943 = vmul.f32 %v5940, 1.442695
    %v5944 = vpow.pop %v5943
    %v5945 = vsel %vm322, %v5942, 0.0
    %5946 = vadd.xlane.f32.xlu0 %v5945
    %v5947 = vpop.xlane.xlu0 %5946
    %v5948 = vsel %vm322, %v5944, 0.0
    %5949 = vadd.xlane.f32.xlu0 %v5948
    %v5950 = vpop.xlane.xlu0 %5949
    %v5951 = vrcp.pop %v5947
    %v5952 = vrcp.pop %v5950
    %v5953 = vmul.f32 %v5942, %v5951
    %v5954 = vmul.f32 %v5944, %v5952
    %5955 = vrot.lane.b32.xlu0 %v5771, 64
    %v5956 = vpop.permute.xlu0 %5955
    %v5959 = vsel %vm322, %v5953, 0
    %5961 = vmatprep.subr.mxu0 0.0
    %5962 = vmatpush1.msra.mxu0 %v5956
    %5963 = vmatprep.subr.mxu0 0.0
    %5964 = vmatpush1.msra.mxu0 0.0
    %5965 = vmatprep.subr.mxu0 0.0
    %5966 = vmatpush1.msra.mxu0 0.0
    %5967 = vmatprep.subr.mxu0 0.0
    %5968 = vmatpush1.msra.mxu0 0.0
    %5969 = vmatprep.subr.mxu0 0.0
    %5970 = vmatpush1.msra.mxu0 0.0
    %5971 = vmatprep.subr.mxu0 0.0
    %5972 = vmatpush1.msra.mxu0 0.0
    %5973 = vmatprep.subr.mxu0 0.0
    %5974 = vmatpush1.msra.mxu0 0.0
    %5975 = vmatprep.subr.mxu0 0.0
    %5976 = vmatpush1.msra.mxu0 0.0
    %5977 = vmatprep.subr.mxu0 0.0
    %5978 = vmatpush1.msra.mxu0 0.0
    %5979 = vmatprep.subr.mxu0 0.0
    %5980 = vmatpush1.msra.mxu0 0.0
    %5981 = vmatprep.subr.mxu0 0.0
    %5982 = vmatpush1.msra.mxu0 0.0
    %5983 = vmatprep.subr.mxu0 0.0
    %5984 = vmatpush1.msra.mxu0 0.0
    %5985 = vmatprep.subr.mxu0 0.0
    %5986 = vmatpush1.msra.mxu0 0.0
    %5987 = vmatprep.subr.mxu0 0.0
    %5988 = vmatpush1.msra.mxu0 0.0
    %5989 = vmatprep.subr.mxu0 0.0
    %5990 = vmatpush1.msra.mxu0 0.0
    %5991 = vmatprep.subr.mxu0 0.0
    %5992 = vmatpush1.msra.mxu0 0.0
    %5993 = vmatprep.subr.mxu0 0.0
    %5994 = vmatpush1.msra.mxu0 0.0
    %5995 = vmatprep.subr.mxu0 0.0
    %5996 = vmatpush1.msra.mxu0 0.0
    %5997 = vmatprep.subr.mxu0 0.0
    %5998 = vmatpush1.msra.mxu0 0.0
    %5999 = vmatprep.subr.mxu0 0.0
    %6000 = vmatpush1.msra.mxu0 0.0
    %6001 = vmatprep.subr.mxu0 0.0
    %6002 = vmatpush1.msra.mxu0 0.0
    %6003 = vmatprep.subr.mxu0 0.0
    %6004 = vmatpush1.msra.mxu0 0.0
    %6005 = vmatprep.subr.mxu0 0.0
    %6006 = vmatpush1.msra.mxu0 0.0
    %6007 = vmatprep.subr.mxu0 0.0
    %6008 = vmatpush1.msra.mxu0 0.0
    %6009 = vmatprep.subr.mxu0 0.0
    %6010 = vmatpush1.msra.mxu0 0.0
    %6011 = vmatprep.subr.mxu0 0.0
    %6012 = vmatpush1.msra.mxu0 0.0
    %6013 = vmatprep.subr.mxu0 0.0
    %6014 = vmatpush1.msra.mxu0 0.0
    %6015 = vmatprep.subr.mxu0 0.0
    %6016 = vmatpush1.msra.mxu0 0.0
    %6017 = vmatprep.subr.mxu0 0.0
    %6018 = vmatpush1.msra.mxu0 0.0
    %6019 = vmatprep.subr.mxu0 0.0
    %6020 = vmatpush1.msra.mxu0 0.0
    %6021 = vmatprep.subr.mxu0 0.0
    %6022 = vmatpush1.msra.mxu0 0.0
    %6023 = vmatprep.subr.mxu0 0.0
    %6024 = vmatpush1.msra.mxu0 0.0
    %6025 = vmatprep.mubr.f32.mxu0 0.0
    %6026 = vmatmul.mubr.f32.gmra.mrb[0].mxu0 %v5959
    %v6027 = vpop.f32.mrb[0].mxu0
    %v6028 = vadd.f32 0.0, %v6027
    %v6029 = vpop.f32.mrb[0].mxu0
    %6030 = vdwg.mxu0
    %6031 = vrot.lane.b32.xlu0 %v5776, 64
    %v6032 = vpop.permute.xlu0 %6031
    %v6035 = vsel %vm322, %v5954, 0
    %6037 = vmatprep.subr.mxu0 0.0
    %6038 = vmatpush1.msra.mxu0 %v6032
    %6039 = vmatprep.subr.mxu0 0.0
    %6040 = vmatpush1.msra.mxu0 0.0
    %6041 = vmatprep.subr.mxu0 0.0
    %6042 = vmatpush1.msra.mxu0 0.0
    %6043 = vmatprep.subr.mxu0 0.0
    %6044 = vmatpush1.msra.mxu0 0.0
    %6045 = vmatprep.subr.mxu0 0.0
    %6046 = vmatpush1.msra.mxu0 0.0
    %6047 = vmatprep.subr.mxu0 0.0
    %6048 = vmatpush1.msra.mxu0 0.0
    %6049 = vmatprep.subr.mxu0 0.0
    %6050 = vmatpush1.msra.mxu0 0.0
    %6051 = vmatprep.subr.mxu0 0.0
    %6052 = vmatpush1.msra.mxu0 0.0
    %6053 = vmatprep.subr.mxu0 0.0
    %6054 = vmatpush1.msra.mxu0 0.0
    %6055 = vmatprep.subr.mxu0 0.0
    %6056 = vmatpush1.msra.mxu0 0.0
    %6057 = vmatprep.subr.mxu0 0.0
    %6058 = vmatpush1.msra.mxu0 0.0
    %6059 = vmatprep.subr.mxu0 0.0
    %6060 = vmatpush1.msra.mxu0 0.0
    %6061 = vmatprep.subr.mxu0 0.0
    %6062 = vmatpush1.msra.mxu0 0.0
    %6063 = vmatprep.subr.mxu0 0.0
    %6064 = vmatpush1.msra.mxu0 0.0
    %6065 = vmatprep.subr.mxu0 0.0
    %6066 = vmatpush1.msra.mxu0 0.0
    %6067 = vmatprep.subr.mxu0 0.0
    %6068 = vmatpush1.msra.mxu0 0.0
    %6069 = vmatprep.subr.mxu0 0.0
    %6070 = vmatpush1.msra.mxu0 0.0
    %6071 = vmatprep.subr.mxu0 0.0
    %6072 = vmatpush1.msra.mxu0 0.0
    %6073 = vmatprep.subr.mxu0 0.0
    %6074 = vmatpush1.msra.mxu0 0.0
    %6075 = vmatprep.subr.mxu0 0.0
    %6076 = vmatpush1.msra.mxu0 0.0
    %6077 = vmatprep.subr.mxu0 0.0
    %6078 = vmatpush1.msra.mxu0 0.0
    %6079 = vmatprep.subr.mxu0 0.0
    %6080 = vmatpush1.msra.mxu0 0.0
    %6081 = vmatprep.subr.mxu0 0.0
    %6082 = vmatpush1.msra.mxu0 0.0
    %6083 = vmatprep.subr.mxu0 0.0
    %6084 = vmatpush1.msra.mxu0 0.0
    %6085 = vmatprep.subr.mxu0 0.0
    %6086 = vmatpush1.msra.mxu0 0.0
    %6087 = vmatprep.subr.mxu0 0.0
    %6088 = vmatpush1.msra.mxu0 0.0
    %6089 = vmatprep.subr.mxu0 0.0
    %6090 = vmatpush1.msra.mxu0 0.0
    %6091 = vmatprep.subr.mxu0 0.0
    %6092 = vmatpush1.msra.mxu0 0.0
    %6093 = vmatprep.subr.mxu0 0.0
    %6094 = vmatpush1.msra.mxu0 0.0
    %6095 = vmatprep.subr.mxu0 0.0
    %6096 = vmatpush1.msra.mxu0 0.0
    %6097 = vmatprep.subr.mxu0 0.0
    %6098 = vmatpush1.msra.mxu0 0.0
    %6099 = vmatprep.subr.mxu0 0.0
    %6100 = vmatpush1.msra.mxu0 0.0
    %6101 = vmatprep.mubr.f32.mxu0 0.0
    %6102 = vmatmul.mubr.f32.gmra.mrb[0].mxu0 %v6035
    %v6103 = vpop.f32.mrb[0].mxu0
    %v6104 = vadd.f32 0.0, %v6103
    %v6105 = vpop.f32.mrb[0].mxu0
    %6106 = vdwg.mxu0
    %6107 = vrot.lane.b32.xlu0 %v5771, 120
    %v6108 = vpop.permute.xlu0 %6107
    %6109 = vrot.lane.b32.xlu0 %v5771, 88
    %v6110 = vpop.permute.xlu0 %6109
    %v6111 = vsel %vm322, %v6108, 0
    %v6113 = vsel %vm322, %v6110, 0
    %6115 = vmatprep.subr.mxu0 0.0
    %6116 = vmatpush1.xpose.msra.mxu0 %v6113
    %6117 = vmatprep.subr.mxu0 0.0
    %6118 = vmatpush1.xpose.msra.mxu0 0.0
    %6119 = vmatprep.subr.mxu0 0.0
    %6120 = vmatpush1.xpose.msra.mxu0 0.0
    %6121 = vmatprep.subr.mxu0 0.0
    %6122 = vmatpush1.xpose.msra.mxu0 0.0
    %6123 = vmatprep.subr.mxu0 0.0
    %6124 = vmatpush1.xpose.msra.mxu0 0.0
    %6125 = vmatprep.subr.mxu0 0.0
    %6126 = vmatpush1.xpose.msra.mxu0 0.0
    %6127 = vmatprep.subr.mxu0 0.0
    %6128 = vmatpush1.xpose.msra.mxu0 0.0
    %6129 = vmatprep.subr.mxu0 0.0
    %6130 = vmatpush1.xpose.msra.mxu0 0.0
    %6131 = vmatprep.subr.mxu0 0.0
    %6132 = vmatpush1.xpose.msra.mxu0 0.0
    %6133 = vmatprep.subr.mxu0 0.0
    %6134 = vmatpush1.xpose.msra.mxu0 0.0
    %6135 = vmatprep.subr.mxu0 0.0
    %6136 = vmatpush1.xpose.msra.mxu0 0.0
    %6137 = vmatprep.subr.mxu0 0.0
    %6138 = vmatpush1.xpose.msra.mxu0 0.0
    %6139 = vmatprep.subr.mxu0 0.0
    %6140 = vmatpush1.xpose.msra.mxu0 0.0
    %6141 = vmatprep.subr.mxu0 0.0
    %6142 = vmatpush1.xpose.msra.mxu0 0.0
    %6143 = vmatprep.subr.mxu0 0.0
    %6144 = vmatpush1.xpose.msra.mxu0 0.0
    %6145 = vmatprep.subr.mxu0 0.0
    %6146 = vmatpush1.xpose.msra.mxu0 0.0
    %6147 = vmatprep.subr.mxu0 0.0
    %6148 = vmatpush1.xpose.msra.mxu0 0.0
    %6149 = vmatprep.subr.mxu0 0.0
    %6150 = vmatpush1.xpose.msra.mxu0 0.0
    %6151 = vmatprep.subr.mxu0 0.0
    %6152 = vmatpush1.xpose.msra.mxu0 0.0
    %6153 = vmatprep.subr.mxu0 0.0
    %6154 = vmatpush1.xpose.msra.mxu0 0.0
    %6155 = vmatprep.subr.mxu0 0.0
    %6156 = vmatpush1.xpose.msra.mxu0 0.0
    %6157 = vmatprep.subr.mxu0 0.0
    %6158 = vmatpush1.xpose.msra.mxu0 0.0
    %6159 = vmatprep.subr.mxu0 0.0
    %6160 = vmatpush1.xpose.msra.mxu0 0.0
    %6161 = vmatprep.subr.mxu0 0.0
    %6162 = vmatpush1.xpose.msra.mxu0 0.0
    %6163 = vmatprep.subr.mxu0 0.0
    %6164 = vmatpush1.xpose.msra.mxu0 0.0
    %6165 = vmatprep.subr.mxu0 0.0
    %6166 = vmatpush1.xpose.msra.mxu0 0.0
    %6167 = vmatprep.subr.mxu0 0.0
    %6168 = vmatpush1.xpose.msra.mxu0 0.0
    %6169 = vmatprep.subr.mxu0 0.0
    %6170 = vmatpush1.xpose.msra.mxu0 0.0
    %6171 = vmatprep.subr.mxu0 0.0
    %6172 = vmatpush1.xpose.msra.mxu0 0.0
    %6173 = vmatprep.subr.mxu0 0.0
    %6174 = vmatpush1.xpose.msra.mxu0 0.0
    %6175 = vmatprep.subr.mxu0 0.0
    %6176 = vmatpush1.xpose.msra.mxu0 0.0
    %6177 = vmatprep.subr.mxu0 0.0
    %6178 = vmatpush1.xpose.msra.mxu0 0.0
    %6179 = vmatprep.mubr.f32.mxu0 0.0
    %6180 = vmatmul.mubr.f32.gmra.mrb[0].mxu0 %v6111
    %v6181 = vpop.f32.mrb[0].mxu0
    %v6182 = vadd.f32 0.0, %v6181
    %v6183 = vpop.f32.mrb[0].mxu0
    %6184 = vdwg.mxu0
    %6185 = vrot.lane.b32.xlu0 %v5776, 120
    %v6186 = vpop.permute.xlu0 %6185
    %6187 = vrot.lane.b32.xlu0 %v5776, 88
    %v6188 = vpop.permute.xlu0 %6187
    %v6189 = vsel %vm322, %v6186, 0
    %v6191 = vsel %vm322, %v6188, 0
    %6193 = vmatprep.subr.mxu0 0.0
    %6194 = vmatpush1.xpose.msra.mxu0 %v6191
    %6195 = vmatprep.subr.mxu0 0.0
    %6196 = vmatpush1.xpose.msra.mxu0 0.0
    %6197 = vmatprep.subr.mxu0 0.0
    %6198 = vmatpush1.xpose.msra.mxu0 0.0
    %6199 = vmatprep.subr.mxu0 0.0
    %6200 = vmatpush1.xpose.msra.mxu0 0.0
    %6201 = vmatprep.subr.mxu0 0.0
    %6202 = vmatpush1.xpose.msra.mxu0 0.0
    %6203 = vmatprep.subr.mxu0 0.0
    %6204 = vmatpush1.xpose.msra.mxu0 0.0
    %6205 = vmatprep.subr.mxu0 0.0
    %6206 = vmatpush1.xpose.msra.mxu0 0.0
    %6207 = vmatprep.subr.mxu0 0.0
    %6208 = vmatpush1.xpose.msra.mxu0 0.0
    %6209 = vmatprep.subr.mxu0 0.0
    %6210 = vmatpush1.xpose.msra.mxu0 0.0
    %6211 = vmatprep.subr.mxu0 0.0
    %6212 = vmatpush1.xpose.msra.mxu0 0.0
    %6213 = vmatprep.subr.mxu0 0.0
    %6214 = vmatpush1.xpose.msra.mxu0 0.0
    %6215 = vmatprep.subr.mxu0 0.0
    %6216 = vmatpush1.xpose.msra.mxu0 0.0
    %6217 = vmatprep.subr.mxu0 0.0
    %6218 = vmatpush1.xpose.msra.mxu0 0.0
    %6219 = vmatprep.subr.mxu0 0.0
    %6220 = vmatpush1.xpose.msra.mxu0 0.0
    %6221 = vmatprep.subr.mxu0 0.0
    %6222 = vmatpush1.xpose.msra.mxu0 0.0
    %6223 = vmatprep.subr.mxu0 0.0
    %6224 = vmatpush1.xpose.msra.mxu0 0.0
    %6225 = vmatprep.subr.mxu0 0.0
    %6226 = vmatpush1.xpose.msra.mxu0 0.0
    %6227 = vmatprep.subr.mxu0 0.0
    %6228 = vmatpush1.xpose.msra.mxu0 0.0
    %6229 = vmatprep.subr.mxu0 0.0
    %6230 = vmatpush1.xpose.msra.mxu0 0.0
    %6231 = vmatprep.subr.mxu0 0.0
    %6232 = vmatpush1.xpose.msra.mxu0 0.0
    %6233 = vmatprep.subr.mxu0 0.0
    %6234 = vmatpush1.xpose.msra.mxu0 0.0
    %6235 = vmatprep.subr.mxu0 0.0
    %6236 = vmatpush1.xpose.msra.mxu0 0.0
    %6237 = vmatprep.subr.mxu0 0.0
    %6238 = vmatpush1.xpose.msra.mxu0 0.0
    %6239 = vmatprep.subr.mxu0 0.0
    %6240 = vmatpush1.xpose.msra.mxu0 0.0
    %6241 = vmatprep.subr.mxu0 0.0
    %6242 = vmatpush1.xpose.msra.mxu0 0.0
    %6243 = vmatprep.subr.mxu0 0.0
    %6244 = vmatpush1.xpose.msra.mxu0 0.0
    %6245 = vmatprep.subr.mxu0 0.0
    %6246 = vmatpush1.xpose.msra.mxu0 0.0
    %6247 = vmatprep.subr.mxu0 0.0
    %6248 = vmatpush1.xpose.msra.mxu0 0.0
    %6249 = vmatprep.subr.mxu0 0.0
    %6250 = vmatpush1.xpose.msra.mxu0 0.0
    %6251 = vmatprep.subr.mxu0 0.0
    %6252 = vmatpush1.xpose.msra.mxu0 0.0
    %6253 = vmatprep.subr.mxu0 0.0
    %6254 = vmatpush1.xpose.msra.mxu0 0.0
    %6255 = vmatprep.subr.mxu0 0.0
    %6256 = vmatpush1.xpose.msra.mxu0 0.0
    %6257 = vmatprep.mubr.f32.mxu0 0.0
    %6258 = vmatmul.mubr.f32.gmra.mrb[0].mxu0 %v6189
    %v6259 = vpop.f32.mrb[0].mxu0
    %v6260 = vadd.f32 0.0, %v6259
    %v6261 = vpop.f32.mrb[0].mxu0
    %6262 = vdwg.mxu0
    %v6263 = vsel %vm322, %v6182, -inf
    %6264 = vmax.xlane.f32.xlu0 %v6263
    %v6265 = vpop.xlane.xlu0 %6264
    %v6266 = vsel %vm322, %v6260, -inf
    %6267 = vmax.xlane.f32.xlu0 %v6266
    %v6268 = vpop.xlane.xlu0 %6267
    %v6269 = vsub.f32 %v6182, %v6265
    %v6270 = vsub.f32 %v6260, %v6268
    %v6271 = vmul.f32 %v6269, 1.442695
    %v6272 = vpow.pop %v6271
    %v6273 = vmul.f32 %v6270, 1.442695
    %v6274 = vpow.pop %v6273
    %v6275 = vsel %vm322, %v6272, 0.0
    %6276 = vadd.xlane.f32.xlu0 %v6275
    %v6277 = vpop.xlane.xlu0 %6276
    %v6278 = vsel %vm322, %v6274, 0.0
    %6279 = vadd.xlane.f32.xlu0 %v6278
    %v6280 = vpop.xlane.xlu0 %6279
    %v6281 = vrcp.pop %v6277
    %v6282 = vrcp.pop %v6280
    %v6283 = vmul.f32 %v6272, %v6281
    %v6284 = vmul.f32 %v6274, %v6282
    %6285 = vrot.lane.b32.xlu0 %v5771, 56
    %v6286 = vpop.permute.xlu0 %6285
    %v6289 = vsel %vm322, %v6283, 0
    %6291 = vmatprep.subr.mxu0 0.0
    %6292 = vmatpush1.msra.mxu0 %v6286
    %6293 = vmatprep.subr.mxu0 0.0
    %6294 = vmatpush1.msra.mxu0 0.0
    %6295 = vmatprep.subr.mxu0 0.0
    %6296 = vmatpush1.msra.mxu0 0.0
    %6297 = vmatprep.subr.mxu0 0.0
    %6298 = vmatpush1.msra.mxu0 0.0
    %6299 = vmatprep.subr.mxu0 0.0
    %6300 = vmatpush1.msra.mxu0 0.0
    %6301 = vmatprep.subr.mxu0 0.0
    %6302 = vmatpush1.msra.mxu0 0.0
    %6303 = vmatprep.subr.mxu0 0.0
    %6304 = vmatpush1.msra.mxu0 0.0
    %6305 = vmatprep.subr.mxu0 0.0
    %6306 = vmatpush1.msra.mxu0 0.0
    %6307 = vmatprep.subr.mxu0 0.0
    %6308 = vmatpush1.msra.mxu0 0.0
    %6309 = vmatprep.subr.mxu0 0.0
    %6310 = vmatpush1.msra.mxu0 0.0
    %6311 = vmatprep.subr.mxu0 0.0
    %6312 = vmatpush1.msra.mxu0 0.0
    %6313 = vmatprep.subr.mxu0 0.0
    %6314 = vmatpush1.msra.mxu0 0.0
    %6315 = vmatprep.subr.mxu0 0.0
    %6316 = vmatpush1.msra.mxu0 0.0
    %6317 = vmatprep.subr.mxu0 0.0
    %6318 = vmatpush1.msra.mxu0 0.0
    %6319 = vmatprep.subr.mxu0 0.0
    %6320 = vmatpush1.msra.mxu0 0.0
    %6321 = vmatprep.subr.mxu0 0.0
    %6322 = vmatpush1.msra.mxu0 0.0
    %6323 = vmatprep.subr.mxu0 0.0
    %6324 = vmatpush1.msra.mxu0 0.0
    %6325 = vmatprep.subr.mxu0 0.0
    %6326 = vmatpush1.msra.mxu0 0.0
    %6327 = vmatprep.subr.mxu0 0.0
    %6328 = vmatpush1.msra.mxu0 0.0
    %6329 = vmatprep.subr.mxu0 0.0
    %6330 = vmatpush1.msra.mxu0 0.0
    %6331 = vmatprep.subr.mxu0 0.0
    %6332 = vmatpush1.msra.mxu0 0.0
    %6333 = vmatprep.subr.mxu0 0.0
    %6334 = vmatpush1.msra.mxu0 0.0
    %6335 = vmatprep.subr.mxu0 0.0
    %6336 = vmatpush1.msra.mxu0 0.0
    %6337 = vmatprep.subr.mxu0 0.0
    %6338 = vmatpush1.msra.mxu0 0.0
    %6339 = vmatprep.subr.mxu0 0.0
    %6340 = vmatpush1.msra.mxu0 0.0
    %6341 = vmatprep.subr.mxu0 0.0
    %6342 = vmatpush1.msra.mxu0 0.0
    %6343 = vmatprep.subr.mxu0 0.0
    %6344 = vmatpush1.msra.mxu0 0.0
    %6345 = vmatprep.subr.mxu0 0.0
    %6346 = vmatpush1.msra.mxu0 0.0
    %6347 = vmatprep.subr.mxu0 0.0
    %6348 = vmatpush1.msra.mxu0 0.0
    %6349 = vmatprep.subr.mxu0 0.0
    %6350 = vmatpush1.msra.mxu0 0.0
    %6351 = vmatprep.subr.mxu0 0.0
    %6352 = vmatpush1.msra.mxu0 0.0
    %6353 = vmatprep.subr.mxu0 0.0
    %6354 = vmatpush1.msra.mxu0 0.0
    %6355 = vmatprep.mubr.f32.mxu0 0.0
    %6356 = vmatmul.mubr.f32.gmra.mrb[0].mxu0 %v6289
    %v6357 = vpop.f32.mrb[0].mxu0
    %v6358 = vadd.f32 0.0, %v6357
    %v6359 = vpop.f32.mrb[0].mxu0
    %6360 = vdwg.mxu0
    %6361 = vrot.lane.b32.xlu0 %v5776, 56
    %v6362 = vpop.permute.xlu0 %6361
    %v6365 = vsel %vm322, %v6284, 0
    %6367 = vmatprep.subr.mxu0 0.0
    %6368 = vmatpush1.msra.mxu0 %v6362
    %6369 = vmatprep.subr.mxu0 0.0
    %6370 = vmatpush1.msra.mxu0 0.0
    %6371 = vmatprep.subr.mxu0 0.0
    %6372 = vmatpush1.msra.mxu0 0.0
    %6373 = vmatprep.subr.mxu0 0.0
    %6374 = vmatpush1.msra.mxu0 0.0
    %6375 = vmatprep.subr.mxu0 0.0
    %6376 = vmatpush1.msra.mxu0 0.0
    %6377 = vmatprep.subr.mxu0 0.0
    %6378 = vmatpush1.msra.mxu0 0.0
    %6379 = vmatprep.subr.mxu0 0.0
    %6380 = vmatpush1.msra.mxu0 0.0
    %6381 = vmatprep.subr.mxu0 0.0
    %6382 = vmatpush1.msra.mxu0 0.0
    %6383 = vmatprep.subr.mxu0 0.0
    %6384 = vmatpush1.msra.mxu0 0.0
    %6385 = vmatprep.subr.mxu0 0.0
    %6386 = vmatpush1.msra.mxu0 0.0
    %6387 = vmatprep.subr.mxu0 0.0
    %6388 = vmatpush1.msra.mxu0 0.0
    %6389 = vmatprep.subr.mxu0 0.0
    %6390 = vmatpush1.msra.mxu0 0.0
    %6391 = vmatprep.subr.mxu0 0.0
    %6392 = vmatpush1.msra.mxu0 0.0
    %6393 = vmatprep.subr.mxu0 0.0
    %6394 = vmatpush1.msra.mxu0 0.0
    %6395 = vmatprep.subr.mxu0 0.0
    %6396 = vmatpush1.msra.mxu0 0.0
    %6397 = vmatprep.subr.mxu0 0.0
    %6398 = vmatpush1.msra.mxu0 0.0
    %6399 = vmatprep.subr.mxu0 0.0
    %6400 = vmatpush1.msra.mxu0 0.0
    %6401 = vmatprep.subr.mxu0 0.0
    %6402 = vmatpush1.msra.mxu0 0.0
    %6403 = vmatprep.subr.mxu0 0.0
    %6404 = vmatpush1.msra.mxu0 0.0
    %6405 = vmatprep.subr.mxu0 0.0
    %6406 = vmatpush1.msra.mxu0 0.0
    %6407 = vmatprep.subr.mxu0 0.0
    %6408 = vmatpush1.msra.mxu0 0.0
    %6409 = vmatprep.subr.mxu0 0.0
    %6410 = vmatpush1.msra.mxu0 0.0
    %6411 = vmatprep.subr.mxu0 0.0
    %6412 = vmatpush1.msra.mxu0 0.0
    %6413 = vmatprep.subr.mxu0 0.0
    %6414 = vmatpush1.msra.mxu0 0.0
    %6415 = vmatprep.subr.mxu0 0.0
    %6416 = vmatpush1.msra.mxu0 0.0
    %6417 = vmatprep.subr.mxu0 0.0
    %6418 = vmatpush1.msra.mxu0 0.0
    %6419 = vmatprep.subr.mxu0 0.0
    %6420 = vmatpush1.msra.mxu0 0.0
    %6421 = vmatprep.subr.mxu0 0.0
    %6422 = vmatpush1.msra.mxu0 0.0
    %6423 = vmatprep.subr.mxu0 0.0
    %6424 = vmatpush1.msra.mxu0 0.0
    %6425 = vmatprep.subr.mxu0 0.0
    %6426 = vmatpush1.msra.mxu0 0.0
    %6427 = vmatprep.subr.mxu0 0.0
    %6428 = vmatpush1.msra.mxu0 0.0
    %6429 = vmatprep.subr.mxu0 0.0
    %6430 = vmatpush1.msra.mxu0 0.0
    %6431 = vmatprep.mubr.f32.mxu0 0.0
    %6432 = vmatmul.mubr.f32.gmra.mrb[0].mxu0 %v6365
    %v6433 = vpop.f32.mrb[0].mxu0
    %v6434 = vadd.f32 0.0, %v6433
    %v6435 = vpop.f32.mrb[0].mxu0
    %6436 = vdwg.mxu0
    %6437 = vrot.lane.b32.xlu0 %v5771, 112
    %v6438 = vpop.permute.xlu0 %6437
    %6439 = vrot.lane.b32.xlu0 %v5771, 80
    %v6440 = vpop.permute.xlu0 %6439
    %v6441 = vsel %vm322, %v6438, 0
    %v6443 = vsel %vm322, %v6440, 0
    %6445 = vmatprep.subr.mxu0 0.0
    %6446 = vmatpush1.xpose.msra.mxu0 %v6443
    %6447 = vmatprep.subr.mxu0 0.0
    %6448 = vmatpush1.xpose.msra.mxu0 0.0
    %6449 = vmatprep.subr.mxu0 0.0
    %6450 = vmatpush1.xpose.msra.mxu0 0.0
    %6451 = vmatprep.subr.mxu0 0.0
    %6452 = vmatpush1.xpose.msra.mxu0 0.0
    %6453 = vmatprep.subr.mxu0 0.0
    %6454 = vmatpush1.xpose.msra.mxu0 0.0
    %6455 = vmatprep.subr.mxu0 0.0
    %6456 = vmatpush1.xpose.msra.mxu0 0.0
    %6457 = vmatprep.subr.mxu0 0.0
    %6458 = vmatpush1.xpose.msra.mxu0 0.0
    %6459 = vmatprep.subr.mxu0 0.0
    %6460 = vmatpush1.xpose.msra.mxu0 0.0
    %6461 = vmatprep.subr.mxu0 0.0
    %6462 = vmatpush1.xpose.msra.mxu0 0.0
    %6463 = vmatprep.subr.mxu0 0.0
    %6464 = vmatpush1.xpose.msra.mxu0 0.0
    %6465 = vmatprep.subr.mxu0 0.0
    %6466 = vmatpush1.xpose.msra.mxu0 0.0
    %6467 = vmatprep.subr.mxu0 0.0
    %6468 = vmatpush1.xpose.msra.mxu0 0.0
    %6469 = vmatprep.subr.mxu0 0.0
    %6470 = vmatpush1.xpose.msra.mxu0 0.0
    %6471 = vmatprep.subr.mxu0 0.0
    %6472 = vmatpush1.xpose.msra.mxu0 0.0
    %6473 = vmatprep.subr.mxu0 0.0
    %6474 = vmatpush1.xpose.msra.mxu0 0.0
    %6475 = vmatprep.subr.mxu0 0.0
    %6476 = vmatpush1.xpose.msra.mxu0 0.0
    %6477 = vmatprep.subr.mxu0 0.0
    %6478 = vmatpush1.xpose.msra.mxu0 0.0
    %6479 = vmatprep.subr.mxu0 0.0
    %6480 = vmatpush1.xpose.msra.mxu0 0.0
    %6481 = vmatprep.subr.mxu0 0.0
    %6482 = vmatpush1.xpose.msra.mxu0 0.0
    %6483 = vmatprep.subr.mxu0 0.0
    %6484 = vmatpush1.xpose.msra.mxu0 0.0
    %6485 = vmatprep.subr.mxu0 0.0
    %6486 = vmatpush1.xpose.msra.mxu0 0.0
    %6487 = vmatprep.subr.mxu0 0.0
    %6488 = vmatpush1.xpose.msra.mxu0 0.0
    %6489 = vmatprep.subr.mxu0 0.0
    %6490 = vmatpush1.xpose.msra.mxu0 0.0
    %6491 = vmatprep.subr.mxu0 0.0
    %6492 = vmatpush1.xpose.msra.mxu0 0.0
    %6493 = vmatprep.subr.mxu0 0.0
    %6494 = vmatpush1.xpose.msra.mxu0 0.0
    %6495 = vmatprep.subr.mxu0 0.0
    %6496 = vmatpush1.xpose.msra.mxu0 0.0
    %6497 = vmatprep.subr.mxu0 0.0
    %6498 = vmatpush1.xpose.msra.mxu0 0.0
    %6499 = vmatprep.subr.mxu0 0.0
    %6500 = vmatpush1.xpose.msra.mxu0 0.0
    %6501 = vmatprep.subr.mxu0 0.0
    %6502 = vmatpush1.xpose.msra.mxu0 0.0
    %6503 = vmatprep.subr.mxu0 0.0
    %6504 = vmatpush1.xpose.msra.mxu0 0.0
    %6505 = vmatprep.subr.mxu0 0.0
    %6506 = vmatpush1.xpose.msra.mxu0 0.0
    %6507 = vmatprep.subr.mxu0 0.0
    %6508 = vmatpush1.xpose.msra.mxu0 0.0
    %6509 = vmatprep.mubr.f32.mxu0 0.0
    %6510 = vmatmul.mubr.f32.gmra.mrb[0].mxu0 %v6441
    %v6511 = vpop.f32.mrb[0].mxu0
    %v6512 = vadd.f32 0.0, %v6511
    %v6513 = vpop.f32.mrb[0].mxu0
    %6514 = vdwg.mxu0
    %6515 = vrot.lane.b32.xlu0 %v5776, 112
    %v6516 = vpop.permute.xlu0 %6515
    %6517 = vrot.lane.b32.xlu0 %v5776, 80
    %v6518 = vpop.permute.xlu0 %6517
    %v6519 = vsel %vm322, %v6516, 0
    %v6521 = vsel %vm322, %v6518, 0
    %6523 = vmatprep.subr.mxu0 0.0
    %6524 = vmatpush1.xpose.msra.mxu0 %v6521
    %6525 = vmatprep.subr.mxu0 0.0
    %6526 = vmatpush1.xpose.msra.mxu0 0.0
    %6527 = vmatprep.subr.mxu0 0.0
    %6528 = vmatpush1.xpose.msra.mxu0 0.0
    %6529 = vmatprep.subr.mxu0 0.0
    %6530 = vmatpush1.xpose.msra.mxu0 0.0
    %6531 = vmatprep.subr.mxu0 0.0
    %6532 = vmatpush1.xpose.msra.mxu0 0.0
    %6533 = vmatprep.subr.mxu0 0.0
    %6534 = vmatpush1.xpose.msra.mxu0 0.0
    %6535 = vmatprep.subr.mxu0 0.0
    %6536 = vmatpush1.xpose.msra.mxu0 0.0
    %6537 = vmatprep.subr.mxu0 0.0
    %6538 = vmatpush1.xpose.msra.mxu0 0.0
    %6539 = vmatprep.subr.mxu0 0.0
    %6540 = vmatpush1.xpose.msra.mxu0 0.0
    %6541 = vmatprep.subr.mxu0 0.0
    %6542 = vmatpush1.xpose.msra.mxu0 0.0
    %6543 = vmatprep.subr.mxu0 0.0
    %6544 = vmatpush1.xpose.msra.mxu0 0.0
    %6545 = vmatprep.subr.mxu0 0.0
    %6546 = vmatpush1.xpose.msra.mxu0 0.0
    %6547 = vmatprep.subr.mxu0 0.0
    %6548 = vmatpush1.xpose.msra.mxu0 0.0
    %6549 = vmatprep.subr.mxu0 0.0
    %6550 = vmatpush1.xpose.msra.mxu0 0.0
    %6551 = vmatprep.subr.mxu0 0.0
    %6552 = vmatpush1.xpose.msra.mxu0 0.0
    %6553 = vmatprep.subr.mxu0 0.0
    %6554 = vmatpush1.xpose.msra.mxu0 0.0
    %6555 = vmatprep.subr.mxu0 0.0
    %6556 = vmatpush1.xpose.msra.mxu0 0.0
    %6557 = vmatprep.subr.mxu0 0.0
    %6558 = vmatpush1.xpose.msra.mxu0 0.0
    %6559 = vmatprep.subr.mxu0 0.0
    %6560 = vmatpush1.xpose.msra.mxu0 0.0
    %6561 = vmatprep.subr.mxu0 0.0
    %6562 = vmatpush1.xpose.msra.mxu0 0.0
    %6563 = vmatprep.subr.mxu0 0.0
    %6564 = vmatpush1.xpose.msra.mxu0 0.0
    %6565 = vmatprep.subr.mxu0 0.0
    %6566 = vmatpush1.xpose.msra.mxu0 0.0
    %6567 = vmatprep.subr.mxu0 0.0
    %6568 = vmatpush1.xpose.msra.mxu0 0.0
    %6569 = vmatprep.subr.mxu0 0.0
    %6570 = vmatpush1.xpose.msra.mxu0 0.0
    %6571 = vmatprep.subr.mxu0 0.0
    %6572 = vmatpush1.xpose.msra.mxu0 0.0
    %6573 = vmatprep.subr.mxu0 0.0
    %6574 = vmatpush1.xpose.msra.mxu0 0.0
    %6575 = vmatprep.subr.mxu0 0.0
    %6576 = vmatpush1.xpose.msra.mxu0 0.0
    %6577 = vmatprep.subr.mxu0 0.0
    %6578 = vmatpush1.xpose.msra.mxu0 0.0
    %6579 = vmatprep.subr.mxu0 0.0
    %6580 = vmatpush1.xpose.msra.mxu0 0.0
    %6581 = vmatprep.subr.mxu0 0.0
    %6582 = vmatpush1.xpose.msra.mxu0 0.0
    %6583 = vmatprep.subr.mxu0 0.0
    %6584 = vmatpush1.xpose.msra.mxu0 0.0
    %6585 = vmatprep.subr.mxu0 0.0
    %6586 = vmatpush1.xpose.msra.mxu0 0.0
    %6587 = vmatprep.mubr.f32.mxu0 0.0
    %6588 = vmatmul.mubr.f32.gmra.mrb[0].mxu0 %v6519
    %v6589 = vpop.f32.mrb[0].mxu0
    %v6590 = vadd.f32 0.0, %v6589
    %v6591 = vpop.f32.mrb[0].mxu0
    %6592 = vdwg.mxu0
    %v6593 = vsel %vm322, %v6512, -inf
    %6594 = vmax.xlane.f32.xlu0 %v6593
    %v6595 = vpop.xlane.xlu0 %6594
    %v6596 = vsel %vm322, %v6590, -inf
    %6597 = vmax.xlane.f32.xlu0 %v6596
    %v6598 = vpop.xlane.xlu0 %6597
    %v6599 = vsub.f32 %v6512, %v6595
    %v6600 = vsub.f32 %v6590, %v6598
    %v6601 = vmul.f32 %v6599, 1.442695
    %v6602 = vpow.pop %v6601
    %v6603 = vmul.f32 %v6600, 1.442695
    %v6604 = vpow.pop %v6603
    %v6605 = vsel %vm322, %v6602, 0.0
    %6606 = vadd.xlane.f32.xlu0 %v6605
    %v6607 = vpop.xlane.xlu0 %6606
    %v6608 = vsel %vm322, %v6604, 0.0
    %6609 = vadd.xlane.f32.xlu0 %v6608
    %v6610 = vpop.xlane.xlu0 %6609
    %v6611 = vrcp.pop %v6607
    %v6612 = vrcp.pop %v6610
    %v6613 = vmul.f32 %v6602, %v6611
    %v6614 = vmul.f32 %v6604, %v6612
    %6615 = vrot.lane.b32.xlu0 %v5771, 48
    %v6616 = vpop.permute.xlu0 %6615
    %v6619 = vsel %vm322, %v6613, 0
    %6621 = vmatprep.subr.mxu0 0.0
    %6622 = vmatpush1.msra.mxu0 %v6616
    %6623 = vmatprep.subr.mxu0 0.0
    %6624 = vmatpush1.msra.mxu0 0.0
    %6625 = vmatprep.subr.mxu0 0.0
    %6626 = vmatpush1.msra.mxu0 0.0
    %6627 = vmatprep.subr.mxu0 0.0
    %6628 = vmatpush1.msra.mxu0 0.0
    %6629 = vmatprep.subr.mxu0 0.0
    %6630 = vmatpush1.msra.mxu0 0.0
    %6631 = vmatprep.subr.mxu0 0.0
    %6632 = vmatpush1.msra.mxu0 0.0
    %6633 = vmatprep.subr.mxu0 0.0
    %6634 = vmatpush1.msra.mxu0 0.0
    %6635 = vmatprep.subr.mxu0 0.0
    %6636 = vmatpush1.msra.mxu0 0.0
    %6637 = vmatprep.subr.mxu0 0.0
    %6638 = vmatpush1.msra.mxu0 0.0
    %6639 = vmatprep.subr.mxu0 0.0
    %6640 = vmatpush1.msra.mxu0 0.0
    %6641 = vmatprep.subr.mxu0 0.0
    %6642 = vmatpush1.msra.mxu0 0.0
    %6643 = vmatprep.subr.mxu0 0.0
    %6644 = vmatpush1.msra.mxu0 0.0
    %6645 = vmatprep.subr.mxu0 0.0
    %6646 = vmatpush1.msra.mxu0 0.0
    %6647 = vmatprep.subr.mxu0 0.0
    %6648 = vmatpush1.msra.mxu0 0.0
    %6649 = vmatprep.subr.mxu0 0.0
    %6650 = vmatpush1.msra.mxu0 0.0
    %6651 = vmatprep.subr.mxu0 0.0
    %6652 = vmatpush1.msra.mxu0 0.0
    %6653 = vmatprep.subr.mxu0 0.0
    %6654 = vmatpush1.msra.mxu0 0.0
    %6655 = vmatprep.subr.mxu0 0.0
    %6656 = vmatpush1.msra.mxu0 0.0
    %6657 = vmatprep.subr.mxu0 0.0
    %6658 = vmatpush1.msra.mxu0 0.0
    %6659 = vmatprep.subr.mxu0 0.0
    %6660 = vmatpush1.msra.mxu0 0.0
    %6661 = vmatprep.subr.mxu0 0.0
    %6662 = vmatpush1.msra.mxu0 0.0
    %6663 = vmatprep.subr.mxu0 0.0
    %6664 = vmatpush1.msra.mxu0 0.0
    %6665 = vmatprep.subr.mxu0 0.0
    %6666 = vmatpush1.msra.mxu0 0.0
    %6667 = vmatprep.subr.mxu0 0.0
    %6668 = vmatpush1.msra.mxu0 0.0
    %6669 = vmatprep.subr.mxu0 0.0
    %6670 = vmatpush1.msra.mxu0 0.0
    %6671 = vmatprep.subr.mxu0 0.0
    %6672 = vmatpush1.msra.mxu0 0.0
    %6673 = vmatprep.subr.mxu0 0.0
    %6674 = vmatpush1.msra.mxu0 0.0
    %6675 = vmatprep.subr.mxu0 0.0
    %6676 = vmatpush1.msra.mxu0 0.0
    %6677 = vmatprep.subr.mxu0 0.0
    %6678 = vmatpush1.msra.mxu0 0.0
    %6679 = vmatprep.subr.mxu0 0.0
    %6680 = vmatpush1.msra.mxu0 0.0
    %6681 = vmatprep.subr.mxu0 0.0
    %6682 = vmatpush1.msra.mxu0 0.0
    %6683 = vmatprep.subr.mxu0 0.0
    %6684 = vmatpush1.msra.mxu0 0.0
    %6685 = vmatprep.mubr.f32.mxu0 0.0
    %6686 = vmatmul.mubr.f32.gmra.mrb[0].mxu0 %v6619
    %v6687 = vpop.f32.mrb[0].mxu0
    %v6688 = vadd.f32 0.0, %v6687
    %v6689 = vpop.f32.mrb[0].mxu0
    %6690 = vdwg.mxu0
    %6691 = vrot.lane.b32.xlu0 %v5776, 48
    %v6692 = vpop.permute.xlu0 %6691
    %v6695 = vsel %vm322, %v6614, 0
    %6697 = vmatprep.subr.mxu0 0.0
    %6698 = vmatpush1.msra.mxu0 %v6692
    %6699 = vmatprep.subr.mxu0 0.0
    %6700 = vmatpush1.msra.mxu0 0.0
    %6701 = vmatprep.subr.mxu0 0.0
    %6702 = vmatpush1.msra.mxu0 0.0
    %6703 = vmatprep.subr.mxu0 0.0
    %6704 = vmatpush1.msra.mxu0 0.0
    %6705 = vmatprep.subr.mxu0 0.0
    %6706 = vmatpush1.msra.mxu0 0.0
    %6707 = vmatprep.subr.mxu0 0.0
    %6708 = vmatpush1.msra.mxu0 0.0
    %6709 = vmatprep.subr.mxu0 0.0
    %6710 = vmatpush1.msra.mxu0 0.0
    %6711 = vmatprep.subr.mxu0 0.0
    %6712 = vmatpush1.msra.mxu0 0.0
    %6713 = vmatprep.subr.mxu0 0.0
    %6714 = vmatpush1.msra.mxu0 0.0
    %6715 = vmatprep.subr.mxu0 0.0
    %6716 = vmatpush1.msra.mxu0 0.0
    %6717 = vmatprep.subr.mxu0 0.0
    %6718 = vmatpush1.msra.mxu0 0.0
    %6719 = vmatprep.subr.mxu0 0.0
    %6720 = vmatpush1.msra.mxu0 0.0
    %6721 = vmatprep.subr.mxu0 0.0
    %6722 = vmatpush1.msra.mxu0 0.0
    %6723 = vmatprep.subr.mxu0 0.0
    %6724 = vmatpush1.msra.mxu0 0.0
    %6725 = vmatprep.subr.mxu0 0.0
    %6726 = vmatpush1.msra.mxu0 0.0
    %6727 = vmatprep.subr.mxu0 0.0
    %6728 = vmatpush1.msra.mxu0 0.0
    %6729 = vmatprep.subr.mxu0 0.0
    %6730 = vmatpush1.msra.mxu0 0.0
    %6731 = vmatprep.subr.mxu0 0.0
    %6732 = vmatpush1.msra.mxu0 0.0
    %6733 = vmatprep.subr.mxu0 0.0
    %6734 = vmatpush1.msra.mxu0 0.0
    %6735 = vmatprep.subr.mxu0 0.0
    %6736 = vmatpush1.msra.mxu0 0.0
    %6737 = vmatprep.subr.mxu0 0.0
    %6738 = vmatpush1.msra.mxu0 0.0
    %6739 = vmatprep.subr.mxu0 0.0
    %6740 = vmatpush1.msra.mxu0 0.0
    %6741 = vmatprep.subr.mxu0 0.0
    %6742 = vmatpush1.msra.mxu0 0.0
    %6743 = vmatprep.subr.mxu0 0.0
    %6744 = vmatpush1.msra.mxu0 0.0
    %6745 = vmatprep.subr.mxu0 0.0
    %6746 = vmatpush1.msra.mxu0 0.0
    %6747 = vmatprep.subr.mxu0 0.0
    %6748 = vmatpush1.msra.mxu0 0.0
    %6749 = vmatprep.subr.mxu0 0.0
    %6750 = vmatpush1.msra.mxu0 0.0
    %6751 = vmatprep.subr.mxu0 0.0
    %6752 = vmatpush1.msra.mxu0 0.0
    %6753 = vmatprep.subr.mxu0 0.0
    %6754 = vmatpush1.msra.mxu0 0.0
    %6755 = vmatprep.subr.mxu0 0.0
    %6756 = vmatpush1.msra.mxu0 0.0
    %6757 = vmatprep.subr.mxu0 0.0
    %6758 = vmatpush1.msra.mxu0 0.0
    %6759 = vmatprep.subr.mxu0 0.0
    %6760 = vmatpush1.msra.mxu0 0.0
    %6761 = vmatprep.mubr.f32.mxu0 0.0
    %6762 = vmatmul.mubr.f32.gmra.mrb[0].mxu0 %v6695
    %v6763 = vpop.f32.mrb[0].mxu0
    %v6764 = vadd.f32 0.0, %v6763
    %v6765 = vpop.f32.mrb[0].mxu0
    %6766 = vdwg.mxu0
    %6767 = vrot.lane.b32.xlu0 %v5771, 104
    %v6768 = vpop.permute.xlu0 %6767
    %6769 = vrot.lane.b32.xlu0 %v5771, 72
    %v6770 = vpop.permute.xlu0 %6769
    %v6771 = vsel %vm322, %v6768, 0
    %v6773 = vsel %vm322, %v6770, 0
    %6775 = vmatprep.subr.mxu0 0.0
    %6776 = vmatpush1.xpose.msra.mxu0 %v6773
    %6777 = vmatprep.subr.mxu0 0.0
    %6778 = vmatpush1.xpose.msra.mxu0 0.0
    %6779 = vmatprep.subr.mxu0 0.0
    %6780 = vmatpush1.xpose.msra.mxu0 0.0
    %6781 = vmatprep.subr.mxu0 0.0
    %6782 = vmatpush1.xpose.msra.mxu0 0.0
    %6783 = vmatprep.subr.mxu0 0.0
    %6784 = vmatpush1.xpose.msra.mxu0 0.0
    %6785 = vmatprep.subr.mxu0 0.0
    %6786 = vmatpush1.xpose.msra.mxu0 0.0
    %6787 = vmatprep.subr.mxu0 0.0
    %6788 = vmatpush1.xpose.msra.mxu0 0.0
    %6789 = vmatprep.subr.mxu0 0.0
    %6790 = vmatpush1.xpose.msra.mxu0 0.0
    %6791 = vmatprep.subr.mxu0 0.0
    %6792 = vmatpush1.xpose.msra.mxu0 0.0
    %6793 = vmatprep.subr.mxu0 0.0
    %6794 = vmatpush1.xpose.msra.mxu0 0.0
    %6795 = vmatprep.subr.mxu0 0.0
    %6796 = vmatpush1.xpose.msra.mxu0 0.0
    %6797 = vmatprep.subr.mxu0 0.0
    %6798 = vmatpush1.xpose.msra.mxu0 0.0
    %6799 = vmatprep.subr.mxu0 0.0
    %6800 = vmatpush1.xpose.msra.mxu0 0.0
    %6801 = vmatprep.subr.mxu0 0.0
    %6802 = vmatpush1.xpose.msra.mxu0 0.0
    %6803 = vmatprep.subr.mxu0 0.0
    %6804 = vmatpush1.xpose.msra.mxu0 0.0
    %6805 = vmatprep.subr.mxu0 0.0
    %6806 = vmatpush1.xpose.msra.mxu0 0.0
    %6807 = vmatprep.subr.mxu0 0.0
    %6808 = vmatpush1.xpose.msra.mxu0 0.0
    %6809 = vmatprep.subr.mxu0 0.0
    %6810 = vmatpush1.xpose.msra.mxu0 0.0
    %6811 = vmatprep.subr.mxu0 0.0
    %6812 = vmatpush1.xpose.msra.mxu0 0.0
    %6813 = vmatprep.subr.mxu0 0.0
    %6814 = vmatpush1.xpose.msra.mxu0 0.0
    %6815 = vmatprep.subr.mxu0 0.0
    %6816 = vmatpush1.xpose.msra.mxu0 0.0
    %6817 = vmatprep.subr.mxu0 0.0
    %6818 = vmatpush1.xpose.msra.mxu0 0.0
    %6819 = vmatprep.subr.mxu0 0.0
    %6820 = vmatpush1.xpose.msra.mxu0 0.0
    %6821 = vmatprep.subr.mxu0 0.0
    %6822 = vmatpush1.xpose.msra.mxu0 0.0
    %6823 = vmatprep.subr.mxu0 0.0
    %6824 = vmatpush1.xpose.msra.mxu0 0.0
    %6825 = vmatprep.subr.mxu0 0.0
    %6826 = vmatpush1.xpose.msra.mxu0 0.0
    %6827 = vmatprep.subr.mxu0 0.0
    %6828 = vmatpush1.xpose.msra.mxu0 0.0
    %6829 = vmatprep.subr.mxu0 0.0
    %6830 = vmatpush1.xpose.msra.mxu0 0.0
    %6831 = vmatprep.subr.mxu0 0.0
    %6832 = vmatpush1.xpose.msra.mxu0 0.0
    %6833 = vmatprep.subr.mxu0 0.0
    %6834 = vmatpush1.xpose.msra.mxu0 0.0
    %6835 = vmatprep.subr.mxu0 0.0
    %6836 = vmatpush1.xpose.msra.mxu0 0.0
    %6837 = vmatprep.subr.mxu0 0.0
    %6838 = vmatpush1.xpose.msra.mxu0 0.0
    %6839 = vmatprep.mubr.f32.mxu0 0.0
    %6840 = vmatmul.mubr.f32.gmra.mrb[0].mxu0 %v6771
    %v6841 = vpop.f32.mrb[0].mxu0
    %v6842 = vadd.f32 0.0, %v6841
    %v6843 = vpop.f32.mrb[0].mxu0
    %6844 = vdwg.mxu0
    %6845 = vrot.lane.b32.xlu0 %v5776, 104
    %v6846 = vpop.permute.xlu0 %6845
    %6847 = vrot.lane.b32.xlu0 %v5776, 72
    %v6848 = vpop.permute.xlu0 %6847
    %v6849 = vsel %vm322, %v6846, 0
    %v6851 = vsel %vm322, %v6848, 0
    %6853 = vmatprep.subr.mxu0 0.0
    %6854 = vmatpush1.xpose.msra.mxu0 %v6851
    %6855 = vmatprep.subr.mxu0 0.0
    %6856 = vmatpush1.xpose.msra.mxu0 0.0
    %6857 = vmatprep.subr.mxu0 0.0
    %6858 = vmatpush1.xpose.msra.mxu0 0.0
    %6859 = vmatprep.subr.mxu0 0.0
    %6860 = vmatpush1.xpose.msra.mxu0 0.0
    %6861 = vmatprep.subr.mxu0 0.0
    %6862 = vmatpush1.xpose.msra.mxu0 0.0
    %6863 = vmatprep.subr.mxu0 0.0
    %6864 = vmatpush1.xpose.msra.mxu0 0.0
    %6865 = vmatprep.subr.mxu0 0.0
    %6866 = vmatpush1.xpose.msra.mxu0 0.0
    %6867 = vmatprep.subr.mxu0 0.0
    %6868 = vmatpush1.xpose.msra.mxu0 0.0
    %6869 = vmatprep.subr.mxu0 0.0
    %6870 = vmatpush1.xpose.msra.mxu0 0.0
    %6871 = vmatprep.subr.mxu0 0.0
    %6872 = vmatpush1.xpose.msra.mxu0 0.0
    %6873 = vmatprep.subr.mxu0 0.0
    %6874 = vmatpush1.xpose.msra.mxu0 0.0
    %6875 = vmatprep.subr.mxu0 0.0
    %6876 = vmatpush1.xpose.msra.mxu0 0.0
    %6877 = vmatprep.subr.mxu0 0.0
    %6878 = vmatpush1.xpose.msra.mxu0 0.0
    %6879 = vmatprep.subr.mxu0 0.0
    %6880 = vmatpush1.xpose.msra.mxu0 0.0
    %6881 = vmatprep.subr.mxu0 0.0
    %6882 = vmatpush1.xpose.msra.mxu0 0.0
    %6883 = vmatprep.subr.mxu0 0.0
    %6884 = vmatpush1.xpose.msra.mxu0 0.0
    %6885 = vmatprep.subr.mxu0 0.0
    %6886 = vmatpush1.xpose.msra.mxu0 0.0
    %6887 = vmatprep.subr.mxu0 0.0
    %6888 = vmatpush1.xpose.msra.mxu0 0.0
    %6889 = vmatprep.subr.mxu0 0.0
    %6890 = vmatpush1.xpose.msra.mxu0 0.0
    %6891 = vmatprep.subr.mxu0 0.0
    %6892 = vmatpush1.xpose.msra.mxu0 0.0
    %6893 = vmatprep.subr.mxu0 0.0
    %6894 = vmatpush1.xpose.msra.mxu0 0.0
    %6895 = vmatprep.subr.mxu0 0.0
    %6896 = vmatpush1.xpose.msra.mxu0 0.0
    %6897 = vmatprep.subr.mxu0 0.0
    %6898 = vmatpush1.xpose.msra.mxu0 0.0
    %6899 = vmatprep.subr.mxu0 0.0
    %6900 = vmatpush1.xpose.msra.mxu0 0.0
    %6901 = vmatprep.subr.mxu0 0.0
    %6902 = vmatpush1.xpose.msra.mxu0 0.0
    %6903 = vmatprep.subr.mxu0 0.0
    %6904 = vmatpush1.xpose.msra.mxu0 0.0
    %6905 = vmatprep.subr.mxu0 0.0
    %6906 = vmatpush1.xpose.msra.mxu0 0.0
    %6907 = vmatprep.subr.mxu0 0.0
    %6908 = vmatpush1.xpose.msra.mxu0 0.0
    %6909 = vmatprep.subr.mxu0 0.0
    %6910 = vmatpush1.xpose.msra.mxu0 0.0
    %6911 = vmatprep.subr.mxu0 0.0
    %6912 = vmatpush1.xpose.msra.mxu0 0.0
    %6913 = vmatprep.subr.mxu0 0.0
    %6914 = vmatpush1.xpose.msra.mxu0 0.0
    %6915 = vmatprep.subr.mxu0 0.0
    %6916 = vmatpush1.xpose.msra.mxu0 0.0
    %6917 = vmatprep.mubr.f32.mxu0 0.0
    %6918 = vmatmul.mubr.f32.gmra.mrb[0].mxu0 %v6849
    %v6919 = vpop.f32.mrb[0].mxu0
    %v6920 = vadd.f32 0.0, %v6919
    %v6921 = vpop.f32.mrb[0].mxu0
    %6922 = vdwg.mxu0
    %v6923 = vsel %vm322, %v6842, -inf
    %6924 = vmax.xlane.f32.xlu0 %v6923
    %v6925 = vpop.xlane.xlu0 %6924
    %v6926 = vsel %vm322, %v6920, -inf
    %6927 = vmax.xlane.f32.xlu0 %v6926
    %v6928 = vpop.xlane.xlu0 %6927
    %v6929 = vsub.f32 %v6842, %v6925
    %v6930 = vsub.f32 %v6920, %v6928
    %v6931 = vmul.f32 %v6929, 1.442695
    %v6932 = vpow.pop %v6931
    %v6933 = vmul.f32 %v6930, 1.442695
    %v6934 = vpow.pop %v6933
    %v6935 = vsel %vm322, %v6932, 0.0
    %6936 = vadd.xlane.f32.xlu0 %v6935
    %v6937 = vpop.xlane.xlu0 %6936
    %v6938 = vsel %vm322, %v6934, 0.0
    %6939 = vadd.xlane.f32.xlu0 %v6938
    %v6940 = vpop.xlane.xlu0 %6939
    %v6941 = vrcp.pop %v6937
    %v6942 = vrcp.pop %v6940
    %v6943 = vmul.f32 %v6932, %v6941
    %v6944 = vmul.f32 %v6934, %v6942
    %6945 = vrot.lane.b32.xlu0 %v5771, 40
    %v6946 = vpop.permute.xlu0 %6945
    %v6949 = vsel %vm322, %v6943, 0
    %6951 = vmatprep.subr.mxu0 0.0
    %6952 = vmatpush1.msra.mxu0 %v6946
    %6953 = vmatprep.subr.mxu0 0.0
    %6954 = vmatpush1.msra.mxu0 0.0
    %6955 = vmatprep.subr.mxu0 0.0
    %6956 = vmatpush1.msra.mxu0 0.0
    %6957 = vmatprep.subr.mxu0 0.0
    %6958 = vmatpush1.msra.mxu0 0.0
    %6959 = vmatprep.subr.mxu0 0.0
    %6960 = vmatpush1.msra.mxu0 0.0
    %6961 = vmatprep.subr.mxu0 0.0
    %6962 = vmatpush1.msra.mxu0 0.0
    %6963 = vmatprep.subr.mxu0 0.0
    %6964 = vmatpush1.msra.mxu0 0.0
    %6965 = vmatprep.subr.mxu0 0.0
    %6966 = vmatpush1.msra.mxu0 0.0
    %6967 = vmatprep.subr.mxu0 0.0
    %6968 = vmatpush1.msra.mxu0 0.0
    %6969 = vmatprep.subr.mxu0 0.0
    %6970 = vmatpush1.msra.mxu0 0.0
    %6971 = vmatprep.subr.mxu0 0.0
    %6972 = vmatpush1.msra.mxu0 0.0
    %6973 = vmatprep.subr.mxu0 0.0
    %6974 = vmatpush1.msra.mxu0 0.0
    %6975 = vmatprep.subr.mxu0 0.0
    %6976 = vmatpush1.msra.mxu0 0.0
    %6977 = vmatprep.subr.mxu0 0.0
    %6978 = vmatpush1.msra.mxu0 0.0
    %6979 = vmatprep.subr.mxu0 0.0
    %6980 = vmatpush1.msra.mxu0 0.0
    %6981 = vmatprep.subr.mxu0 0.0
    %6982 = vmatpush1.msra.mxu0 0.0
    %6983 = vmatprep.subr.mxu0 0.0
    %6984 = vmatpush1.msra.mxu0 0.0
    %6985 = vmatprep.subr.mxu0 0.0
    %6986 = vmatpush1.msra.mxu0 0.0
    %6987 = vmatprep.subr.mxu0 0.0
    %6988 = vmatpush1.msra.mxu0 0.0
    %6989 = vmatprep.subr.mxu0 0.0
    %6990 = vmatpush1.msra.mxu0 0.0
    %6991 = vmatprep.subr.mxu0 0.0
    %6992 = vmatpush1.msra.mxu0 0.0
    %6993 = vmatprep.subr.mxu0 0.0
    %6994 = vmatpush1.msra.mxu0 0.0
    %6995 = vmatprep.subr.mxu0 0.0
    %6996 = vmatpush1.msra.mxu0 0.0
    %6997 = vmatprep.subr.mxu0 0.0
    %6998 = vmatpush1.msra.mxu0 0.0
    %6999 = vmatprep.subr.mxu0 0.0
    %7000 = vmatpush1.msra.mxu0 0.0
    %7001 = vmatprep.subr.mxu0 0.0
    %7002 = vmatpush1.msra.mxu0 0.0
    %7003 = vmatprep.subr.mxu0 0.0
    %7004 = vmatpush1.msra.mxu0 0.0
    %7005 = vmatprep.subr.mxu0 0.0
    %7006 = vmatpush1.msra.mxu0 0.0
    %7007 = vmatprep.subr.mxu0 0.0
    %7008 = vmatpush1.msra.mxu0 0.0
    %7009 = vmatprep.subr.mxu0 0.0
    %7010 = vmatpush1.msra.mxu0 0.0
    %7011 = vmatprep.subr.mxu0 0.0
    %7012 = vmatpush1.msra.mxu0 0.0
    %7013 = vmatprep.subr.mxu0 0.0
    %7014 = vmatpush1.msra.mxu0 0.0
    %7015 = vmatprep.mubr.f32.mxu0 0.0
    %7016 = vmatmul.mubr.f32.gmra.mrb[0].mxu0 %v6949
    %v7017 = vpop.f32.mrb[0].mxu0
    %v7018 = vadd.f32 0.0, %v7017
    %v7019 = vpop.f32.mrb[0].mxu0
    %7020 = vdwg.mxu0
    %7021 = vrot.lane.b32.xlu0 %v5776, 40
    %v7022 = vpop.permute.xlu0 %7021
    %v7025 = vsel %vm322, %v6944, 0
    %7027 = vmatprep.subr.mxu0 0.0
    %7028 = vmatpush1.msra.mxu0 %v7022
    %7029 = vmatprep.subr.mxu0 0.0
    %7030 = vmatpush1.msra.mxu0 0.0
    %7031 = vmatprep.subr.mxu0 0.0
    %7032 = vmatpush1.msra.mxu0 0.0
    %7033 = vmatprep.subr.mxu0 0.0
    %7034 = vmatpush1.msra.mxu0 0.0
    %7035 = vmatprep.subr.mxu0 0.0
    %7036 = vmatpush1.msra.mxu0 0.0
    %7037 = vmatprep.subr.mxu0 0.0
    %7038 = vmatpush1.msra.mxu0 0.0
    %7039 = vmatprep.subr.mxu0 0.0
    %7040 = vmatpush1.msra.mxu0 0.0
    %7041 = vmatprep.subr.mxu0 0.0
    %7042 = vmatpush1.msra.mxu0 0.0
    %7043 = vmatprep.subr.mxu0 0.0
    %7044 = vmatpush1.msra.mxu0 0.0
    %7045 = vmatprep.subr.mxu0 0.0
    %7046 = vmatpush1.msra.mxu0 0.0
    %7047 = vmatprep.subr.mxu0 0.0
    %7048 = vmatpush1.msra.mxu0 0.0
    %7049 = vmatprep.subr.mxu0 0.0
    %7050 = vmatpush1.msra.mxu0 0.0
    %7051 = vmatprep.subr.mxu0 0.0
    %7052 = vmatpush1.msra.mxu0 0.0
    %7053 = vmatprep.subr.mxu0 0.0
    %7054 = vmatpush1.msra.mxu0 0.0
    %7055 = vmatprep.subr.mxu0 0.0
    %7056 = vmatpush1.msra.mxu0 0.0
    %7057 = vmatprep.subr.mxu0 0.0
    %7058 = vmatpush1.msra.mxu0 0.0
    %7059 = vmatprep.subr.mxu0 0.0
    %7060 = vmatpush1.msra.mxu0 0.0
    %7061 = vmatprep.subr.mxu0 0.0
    %7062 = vmatpush1.msra.mxu0 0.0
    %7063 = vmatprep.subr.mxu0 0.0
    %7064 = vmatpush1.msra.mxu0 0.0
    %7065 = vmatprep.subr.mxu0 0.0
    %7066 = vmatpush1.msra.mxu0 0.0
    %7067 = vmatprep.subr.mxu0 0.0
    %7068 = vmatpush1.msra.mxu0 0.0
    %7069 = vmatprep.subr.mxu0 0.0
    %7070 = vmatpush1.msra.mxu0 0.0
    %7071 = vmatprep.subr.mxu0 0.0
    %7072 = vmatpush1.msra.mxu0 0.0
    %7073 = vmatprep.subr.mxu0 0.0
    %7074 = vmatpush1.msra.mxu0 0.0
    %7075 = vmatprep.subr.mxu0 0.0
    %7076 = vmatpush1.msra.mxu0 0.0
    %7077 = vmatprep.subr.mxu0 0.0
    %7078 = vmatpush1.msra.mxu0 0.0
    %7079 = vmatprep.subr.mxu0 0.0
    %7080 = vmatpush1.msra.mxu0 0.0
    %7081 = vmatprep.subr.mxu0 0.0
    %7082 = vmatpush1.msra.mxu0 0.0
    %7083 = vmatprep.subr.mxu0 0.0
    %7084 = vmatpush1.msra.mxu0 0.0
    %7085 = vmatprep.subr.mxu0 0.0
    %7086 = vmatpush1.msra.mxu0 0.0
    %7087 = vmatprep.subr.mxu0 0.0
    %7088 = vmatpush1.msra.mxu0 0.0
    %7089 = vmatprep.subr.mxu0 0.0
    %7090 = vmatpush1.msra.mxu0 0.0
    %7091 = vmatprep.mubr.f32.mxu0 0.0
    %7092 = vmatmul.mubr.f32.gmra.mrb[0].mxu0 %v7025
    %v7093 = vpop.f32.mrb[0].mxu0
    %v7094 = vadd.f32 0.0, %v7093
    %v7095 = vpop.f32.mrb[0].mxu0
    %7096 = vdwg.mxu0
    %7099 = vrot.lane.b32.xlu0 %v6358, 8
    %v7100 = vpop.permute.xlu0 %7099
    %7101 = vrot.lane.b32.xlu0 %v6434, 8
    %v7102 = vpop.permute.xlu0 %7101
    %7107 = vrot.lane.b32.xlu0 %v6688, 16
    %v7108 = vpop.permute.xlu0 %7107
    %7109 = vrot.lane.b32.xlu0 %v6764, 16
    %v7110 = vpop.permute.xlu0 %7109
    %7115 = vrot.lane.b32.xlu0 %v7018, 24
    %v7116 = vpop.permute.xlu0 %7115
    %7117 = vrot.lane.b32.xlu0 %v7094, 24
    %v7118 = vpop.permute.xlu0 %7117
    %v7121 = vsel %vm322, %v6028, %v7100
    %v7122 = vsel %vm322, %v6104, %v7102
    %v7123 = vsel %vm1664, %v7121, %v7108
    %v7124 = vsel %vm1664, %v7122, %v7110
    %v7125 = vsel %vm1667, %v7123, %v7116
    %v7126 = vsel %vm1667, %v7124, %v7118
    %s7127 = scalar_lea.vmem [#allocation4], 96
    %v7128 = vld [vmem:[%s7127] sm:$0xff]
    %v7129 = vld [vmem:[%s7127 + $0x8] sm:$0xff]
    %v7130 = vld [vmem:[%s7127 + $0x10] sm:$0xff]
    %v7131 = vld [vmem:[%s7127 + $0x18] sm:$0xff]
    %s7132 = scalar_lea.vmem %s7, 3
    %v7133 = vld [vmem:[%s7132] sm:$0x1]
    %v7135 = vlaneseq
    %v7136 = vshrl.u32 %v7135, 7
    %v7137 = vsub.s32 0, %v7136
    %v7138 = vrot.slane %v7133, %v7137
    %v7141 = vsel %vm237, %v7125, 0
    %v7144 = vsel %vm237, %v7126, 0
    %7146 = vmatprep.subr.mxu0 0.0
    %7147 = vmatpush1.msra.mxu0 %v7128
    %7148 = vmatprep.subr.mxu0 0.0
    %7149 = vmatpush1.msra.mxu0 %v7129
    %7150 = vmatprep.subr.mxu0 0.0
    %7151 = vmatpush1.msra.mxu0 %v7130
    %7152 = vmatprep.subr.mxu0 0.0
    %7153 = vmatpush1.msra.mxu0 %v7131
    %7154 = vmatprep.subr.mxu0 0.0
    %7155 = vmatpush1.msra.mxu0 0.0
    %7156 = vmatprep.subr.mxu0 0.0
    %7157 = vmatpush1.msra.mxu0 0.0
    %7158 = vmatprep.subr.mxu0 0.0
    %7159 = vmatpush1.msra.mxu0 0.0
    %7160 = vmatprep.subr.mxu0 0.0
    %7161 = vmatpush1.msra.mxu0 0.0
    %7162 = vmatprep.subr.mxu0 0.0
    %7163 = vmatpush1.msra.mxu0 0.0
    %7164 = vmatprep.subr.mxu0 0.0
    %7165 = vmatpush1.msra.mxu0 0.0
    %7166 = vmatprep.subr.mxu0 0.0
    %7167 = vmatpush1.msra.mxu0 0.0
    %7168 = vmatprep.subr.mxu0 0.0
    %7169 = vmatpush1.msra.mxu0 0.0
    %7170 = vmatprep.subr.mxu0 0.0
    %7171 = vmatpush1.msra.mxu0 0.0
    %7172 = vmatprep.subr.mxu0 0.0
    %7173 = vmatpush1.msra.mxu0 0.0
    %7174 = vmatprep.subr.mxu0 0.0
    %7175 = vmatpush1.msra.mxu0 0.0
    %7176 = vmatprep.subr.mxu0 0.0
    %7177 = vmatpush1.msra.mxu0 0.0
    %7178 = vmatprep.subr.mxu0 0.0
    %7179 = vmatpush1.msra.mxu0 0.0
    %7180 = vmatprep.subr.mxu0 0.0
    %7181 = vmatpush1.msra.mxu0 0.0
    %7182 = vmatprep.subr.mxu0 0.0
    %7183 = vmatpush1.msra.mxu0 0.0
    %7184 = vmatprep.subr.mxu0 0.0
    %7185 = vmatpush1.msra.mxu0 0.0
    %7186 = vmatprep.subr.mxu0 0.0
    %7187 = vmatpush1.msra.mxu0 0.0
    %7188 = vmatprep.subr.mxu0 0.0
    %7189 = vmatpush1.msra.mxu0 0.0
    %7190 = vmatprep.subr.mxu0 0.0
    %7191 = vmatpush1.msra.mxu0 0.0
    %7192 = vmatprep.subr.mxu0 0.0
    %7193 = vmatpush1.msra.mxu0 0.0
    %7194 = vmatprep.subr.mxu0 0.0
    %7195 = vmatpush1.msra.mxu0 0.0
    %7196 = vmatprep.subr.mxu0 0.0
    %7197 = vmatpush1.msra.mxu0 0.0
    %7198 = vmatprep.subr.mxu0 0.0
    %7199 = vmatpush1.msra.mxu0 0.0
    %7200 = vmatprep.subr.mxu0 0.0
    %7201 = vmatpush1.msra.mxu0 0.0
    %7202 = vmatprep.subr.mxu0 0.0
    %7203 = vmatpush1.msra.mxu0 0.0
    %7204 = vmatprep.subr.mxu0 0.0
    %7205 = vmatpush1.msra.mxu0 0.0
    %7206 = vmatprep.subr.mxu0 0.0
    %7207 = vmatpush1.msra.mxu0 0.0
    %7208 = vmatprep.subr.mxu0 0.0
    %7209 = vmatpush1.msra.mxu0 0.0
    %7210 = vmatprep.mubr.f32.mxu0 0.0
    %7211 = vmatmul.mubr.f32.gmra.mrb[0].mxu0 %v7141
    %v7212 = vpop.f32.mrb[0].mxu0
    %v7213 = vadd.f32 %v7138, %v7212
    %v7214 = vpop.f32.mrb[0].mxu0
    %7215 = vmatprep.mubr.f32.mxu0 0.0
    %7216 = vmatmul.mubr.f32.gmra.mrb[0].mxu0 %v7144
    %v7217 = vpop.f32.mrb[0].mxu0
    %v7218 = vadd.f32 %v7138, %v7217
    %v7219 = vpop.f32.mrb[0].mxu0
    %7220 = vdwg.mxu0
    %v7221 = vadd.f32 %v5683, %v7213
    %v7222 = vadd.f32 %v5684, %v7218
    %s7223 = scalar_lea.vmem %s12, 3
    %v7224 = vld [vmem:[%s7223] sm:$0x1]
    %s7225 = scalar_lea.vmem %s13, 3
    %v7226 = vld [vmem:[%s7225] sm:$0x1]
    %v7227 = vsel %vm237, %v7221, 0.0
    %7228 = vadd.xlane.f32.xlu0 %v7227
    %v7229 = vpop.xlane.xlu0 %7228
    %v7230 = vsel %vm237, %v7222, 0.0
    %7231 = vadd.xlane.f32.xlu0 %v7230
    %v7232 = vpop.xlane.xlu0 %7231
    %v7233 = vmul.f32 %v7229, %v1772
    %v7234 = vmul.f32 %v7232, %v1772
    %v7235 = vsub.f32 %v7221, %v7233
    %v7236 = vsub.f32 %v7222, %v7234
    %v7237 = vmul.f32 %v7235, %v7235
    %v7238 = vmul.f32 %v7236, %v7236
    %v7239 = vsel %vm237, %v7237, 0.0
    %7240 = vadd.xlane.f32.xlu0 %v7239
    %v7241 = vpop.xlane.xlu0 %7240
    %v7242 = vsel %vm237, %v7238, 0.0
    %7243 = vadd.xlane.f32.xlu0 %v7242
    %v7244 = vpop.xlane.xlu0 %7243
    %v7245 = vmul.f32 %v7241, %v1772
    %v7246 = vmul.f32 %v7244, %v1772
    %v7247 = vadd.f32 %v7245, 1e-05
    %v7248 = vadd.f32 %v7246, 1e-05
    %v7249 = vrsqrt.pop %v7247
    %v7250 = vrsqrt.pop %v7248
    %v7251 = vmul.f32 %v7235, %v7249
    %v7252 = vmul.f32 %v7236, %v7250
    %v7254 = vlaneseq
    %v7255 = vshrl.u32 %v7254, 7
    %v7256 = vsub.s32 0, %v7255
    %v7257 = vrot.slane %v7224, %v7256
    %v7259 = vmul.f32 %v7251, %v7257
    %v7260 = vmul.f32 %v7252, %v7257
    %v7262 = vlaneseq
    %v7263 = vshrl.u32 %v7262, 7
    %v7264 = vsub.s32 0, %v7263
    %v7265 = vrot.slane %v7226, %v7264
    %v7267 = vadd.f32 %v7259, %v7265
    %v7268 = vadd.f32 %v7260, %v7265
    %s7269 = scalar_lea.vmem [#allocation6], 96
    %v7270 = vld [vmem:[%s7269] sm:$0xff]
    %v7271 = vld [vmem:[%s7269 + $0x8] sm:$0xff]
    %v7272 = vld [vmem:[%s7269 + $0x10] sm:$0xff]
    %v7273 = vld [vmem:[%s7269 + $0x18] sm:$0xff]
    %s7274 = scalar_lea.vmem %s9, 3
    %v7275 = vld [vmem:[%s7274] sm:$0x1]
    %v7277 = vlaneseq
    %v7278 = vshrl.u32 %v7277, 7
    %v7279 = vsub.s32 0, %v7278
    %v7280 = vrot.slane %v7275, %v7279
    %v7283 = vsel %vm237, %v7267, 0
    %v7286 = vsel %vm237, %v7268, 0
    %7288 = vmatprep.subr.mxu0 0.0
    %7289 = vmatpush1.msra.mxu0 %v7270
    %7290 = vmatprep.subr.mxu0 0.0
    %7291 = vmatpush1.msra.mxu0 %v7271
    %7292 = vmatprep.subr.mxu0 0.0
    %7293 = vmatpush1.msra.mxu0 %v7272
    %7294 = vmatprep.subr.mxu0 0.0
    %7295 = vmatpush1.msra.mxu0 %v7273
    %7296 = vmatprep.subr.mxu0 0.0
    %7297 = vmatpush1.msra.mxu0 0.0
    %7298 = vmatprep.subr.mxu0 0.0
    %7299 = vmatpush1.msra.mxu0 0.0
    %7300 = vmatprep.subr.mxu0 0.0
    %7301 = vmatpush1.msra.mxu0 0.0
    %7302 = vmatprep.subr.mxu0 0.0
    %7303 = vmatpush1.msra.mxu0 0.0
    %7304 = vmatprep.subr.mxu0 0.0
    %7305 = vmatpush1.msra.mxu0 0.0
    %7306 = vmatprep.subr.mxu0 0.0
    %7307 = vmatpush1.msra.mxu0 0.0
    %7308 = vmatprep.subr.mxu0 0.0
    %7309 = vmatpush1.msra.mxu0 0.0
    %7310 = vmatprep.subr.mxu0 0.0
    %7311 = vmatpush1.msra.mxu0 0.0
    %7312 = vmatprep.subr.mxu0 0.0
    %7313 = vmatpush1.msra.mxu0 0.0
    %7314 = vmatprep.subr.mxu0 0.0
    %7315 = vmatpush1.msra.mxu0 0.0
    %7316 = vmatprep.subr.mxu0 0.0
    %7317 = vmatpush1.msra.mxu0 0.0
    %7318 = vmatprep.subr.mxu0 0.0
    %7319 = vmatpush1.msra.mxu0 0.0
    %7320 = vmatprep.subr.mxu0 0.0
    %7321 = vmatpush1.msra.mxu0 0.0
    %7322 = vmatprep.subr.mxu0 0.0
    %7323 = vmatpush1.msra.mxu0 0.0
    %7324 = vmatprep.subr.mxu0 0.0
    %7325 = vmatpush1.msra.mxu0 0.0
    %7326 = vmatprep.subr.mxu0 0.0
    %7327 = vmatpush1.msra.mxu0 0.0
    %7328 = vmatprep.subr.mxu0 0.0
    %7329 = vmatpush1.msra.mxu0 0.0
    %7330 = vmatprep.subr.mxu0 0.0
    %7331 = vmatpush1.msra.mxu0 0.0
    %7332 = vmatprep.subr.mxu0 0.0
    %7333 = vmatpush1.msra.mxu0 0.0
    %7334 = vmatprep.subr.mxu0 0.0
    %7335 = vmatpush1.msra.mxu0 0.0
    %7336 = vmatprep.subr.mxu0 0.0
    %7337 = vmatpush1.msra.mxu0 0.0
    %7338 = vmatprep.subr.mxu0 0.0
    %7339 = vmatpush1.msra.mxu0 0.0
    %7340 = vmatprep.subr.mxu0 0.0
    %7341 = vmatpush1.msra.mxu0 0.0
    %7342 = vmatprep.subr.mxu0 0.0
    %7343 = vmatpush1.msra.mxu0 0.0
    %7344 = vmatprep.subr.mxu0 0.0
    %7345 = vmatpush1.msra.mxu0 0.0
    %7346 = vmatprep.subr.mxu0 0.0
    %7347 = vmatpush1.msra.mxu0 0.0
    %7348 = vmatprep.subr.mxu0 0.0
    %7349 = vmatpush1.msra.mxu0 0.0
    %7350 = vmatprep.subr.mxu0 0.0
    %7351 = vmatpush1.msra.mxu0 0.0
    %7352 = vmatprep.mubr.f32.mxu0 0.0
    %7353 = vmatmul.mubr.f32.gmra.mrb[0].mxu0 %v7283
    %v7354 = vpop.f32.mrb[0].mxu0
    %v7355 = vadd.f32 %v7280, %v7354
    %v7356 = vpop.f32.mrb[0].mxu0
    %7357 = vmatprep.mubr.f32.mxu0 0.0
    %7358 = vmatmul.mubr.f32.gmra.mrb[0].mxu0 %v7286
    %v7359 = vpop.f32.mrb[0].mxu0
    %v7360 = vadd.f32 %v7280, %v7359
    %v7361 = vpop.f32.mrb[0].mxu0
    %7362 = vdwg.mxu0
    %v7363 = vmax.f32 %v7355, 0.0
    %v7364 = vmax.f32 %v7360, 0.0
    %s7365 = scalar_lea.vmem [#allocation7], 96
    %v7366 = vld [vmem:[%s7365] sm:$0xff]
    %v7367 = vld [vmem:[%s7365 + $0x8] sm:$0xff]
    %v7368 = vld [vmem:[%s7365 + $0x10] sm:$0xff]
    %v7369 = vld [vmem:[%s7365 + $0x18] sm:$0xff]
    %s7370 = scalar_lea.vmem %s11, 3
    %v7371 = vld [vmem:[%s7370] sm:$0x1]
    %v7373 = vlaneseq
    %v7374 = vshrl.u32 %v7373, 7
    %v7375 = vsub.s32 0, %v7374
    %v7376 = vrot.slane %v7371, %v7375
    %v7379 = vsel %vm237, %v7363, 0
    %v7382 = vsel %vm237, %v7364, 0
    %7384 = vmatprep.subr.mxu0 0.0
    %7385 = vmatpush1.msra.mxu0 %v7366
    %7386 = vmatprep.subr.mxu0 0.0
    %7387 = vmatpush1.msra.mxu0 %v7367
    %7388 = vmatprep.subr.mxu0 0.0
    %7389 = vmatpush1.msra.mxu0 %v7368
    %7390 = vmatprep.subr.mxu0 0.0
    %7391 = vmatpush1.msra.mxu0 %v7369
    %7392 = vmatprep.subr.mxu0 0.0
    %7393 = vmatpush1.msra.mxu0 0.0
    %7394 = vmatprep.subr.mxu0 0.0
    %7395 = vmatpush1.msra.mxu0 0.0
    %7396 = vmatprep.subr.mxu0 0.0
    %7397 = vmatpush1.msra.mxu0 0.0
    %7398 = vmatprep.subr.mxu0 0.0
    %7399 = vmatpush1.msra.mxu0 0.0
    %7400 = vmatprep.subr.mxu0 0.0
    %7401 = vmatpush1.msra.mxu0 0.0
    %7402 = vmatprep.subr.mxu0 0.0
    %7403 = vmatpush1.msra.mxu0 0.0
    %7404 = vmatprep.subr.mxu0 0.0
    %7405 = vmatpush1.msra.mxu0 0.0
    %7406 = vmatprep.subr.mxu0 0.0
    %7407 = vmatpush1.msra.mxu0 0.0
    %7408 = vmatprep.subr.mxu0 0.0
    %7409 = vmatpush1.msra.mxu0 0.0
    %7410 = vmatprep.subr.mxu0 0.0
    %7411 = vmatpush1.msra.mxu0 0.0
    %7412 = vmatprep.subr.mxu0 0.0
    %7413 = vmatpush1.msra.mxu0 0.0
    %7414 = vmatprep.subr.mxu0 0.0
    %7415 = vmatpush1.msra.mxu0 0.0
    %7416 = vmatprep.subr.mxu0 0.0
    %7417 = vmatpush1.msra.mxu0 0.0
    %7418 = vmatprep.subr.mxu0 0.0
    %7419 = vmatpush1.msra.mxu0 0.0
    %7420 = vmatprep.subr.mxu0 0.0
    %7421 = vmatpush1.msra.mxu0 0.0
    %7422 = vmatprep.subr.mxu0 0.0
    %7423 = vmatpush1.msra.mxu0 0.0
    %7424 = vmatprep.subr.mxu0 0.0
    %7425 = vmatpush1.msra.mxu0 0.0
    %7426 = vmatprep.subr.mxu0 0.0
    %7427 = vmatpush1.msra.mxu0 0.0
    %7428 = vmatprep.subr.mxu0 0.0
    %7429 = vmatpush1.msra.mxu0 0.0
    %7430 = vmatprep.subr.mxu0 0.0
    %7431 = vmatpush1.msra.mxu0 0.0
    %7432 = vmatprep.subr.mxu0 0.0
    %7433 = vmatpush1.msra.mxu0 0.0
    %7434 = vmatprep.subr.mxu0 0.0
    %7435 = vmatpush1.msra.mxu0 0.0
    %7436 = vmatprep.subr.mxu0 0.0
    %7437 = vmatpush1.msra.mxu0 0.0
    %7438 = vmatprep.subr.mxu0 0.0
    %7439 = vmatpush1.msra.mxu0 0.0
    %7440 = vmatprep.subr.mxu0 0.0
    %7441 = vmatpush1.msra.mxu0 0.0
    %7442 = vmatprep.subr.mxu0 0.0
    %7443 = vmatpush1.msra.mxu0 0.0
    %7444 = vmatprep.subr.mxu0 0.0
    %7445 = vmatpush1.msra.mxu0 0.0
    %7446 = vmatprep.subr.mxu0 0.0
    %7447 = vmatpush1.msra.mxu0 0.0
    %7448 = vmatprep.mubr.f32.mxu0 0.0
    %7449 = vmatmul.mubr.f32.gmra.mrb[0].mxu0 %v7379
    %v7450 = vpop.f32.mrb[0].mxu0
    %v7451 = vadd.f32 %v7376, %v7450
    %v7452 = vpop.f32.mrb[0].mxu0
    %7453 = vmatprep.mubr.f32.mxu0 0.0
    %7454 = vmatmul.mubr.f32.gmra.mrb[0].mxu0 %v7382
    %v7455 = vpop.f32.mrb[0].mxu0
    %v7456 = vadd.f32 %v7376, %v7455
    %v7457 = vpop.f32.mrb[0].mxu0
    %7458 = vdwg.mxu0
    %v7459 = vadd.f32 %v7267, %v7451
    %v7460 = vadd.f32 %v7268, %v7456
    %s7461 = scalar_lea.vmem %s14, 3
    %v7462 = vld [vmem:[%s7461] sm:$0x1]
    %s7463 = scalar_lea.vmem %s15, 3
    %v7464 = vld [vmem:[%s7463] sm:$0x1]
    %v7465 = vsel %vm237, %v7459, 0.0
    %7466 = vadd.xlane.f32.xlu0 %v7465
    %v7467 = vpop.xlane.xlu0 %7466
    %v7468 = vsel %vm237, %v7460, 0.0
    %7469 = vadd.xlane.f32.xlu0 %v7468
    %v7470 = vpop.xlane.xlu0 %7469
    %v7471 = vmul.f32 %v7467, %v1772
    %v7472 = vmul.f32 %v7470, %v1772
    %v7473 = vsub.f32 %v7459, %v7471
    %v7474 = vsub.f32 %v7460, %v7472
    %v7475 = vmul.f32 %v7473, %v7473
    %v7476 = vmul.f32 %v7474, %v7474
    %v7477 = vsel %vm237, %v7475, 0.0
    %7478 = vadd.xlane.f32.xlu0 %v7477
    %v7479 = vpop.xlane.xlu0 %7478
    %v7480 = vsel %vm237, %v7476, 0.0
    %7481 = vadd.xlane.f32.xlu0 %v7480
    %v7482 = vpop.xlane.xlu0 %7481
    %v7483 = vmul.f32 %v7479, %v1772
    %v7484 = vmul.f32 %v7482, %v1772
    %v7485 = vadd.f32 %v7483, 1e-05
    %v7486 = vadd.f32 %v7484, 1e-05
    %v7487 = vrsqrt.pop %v7485
    %v7488 = vrsqrt.pop %v7486
    %v7489 = vmul.f32 %v7473, %v7487
    %v7490 = vmul.f32 %v7474, %v7488
    %v7492 = vlaneseq
    %v7493 = vshrl.u32 %v7492, 7
    %v7494 = vsub.s32 0, %v7493
    %v7495 = vrot.slane %v7462, %v7494
    %v7497 = vmul.f32 %v7489, %v7495
    %v7498 = vmul.f32 %v7490, %v7495
    %v7500 = vlaneseq
    %v7501 = vshrl.u32 %v7500, 7
    %v7502 = vsub.s32 0, %v7501
    %v7503 = vrot.slane %v7464, %v7502
    %v7505 = vadd.f32 %v7497, %v7503
    %v7506 = vadd.f32 %v7498, %v7503
    %v7507 = vld [vmem:[%s16] sm:$0xff]
    %v7508 = vld [vmem:[%s16 + $0x8] sm:$0xff]
    %v7509 = vld [vmem:[%s16 + $0x10] sm:$0xff]
    %v7510 = vld [vmem:[%s16 + $0x18] sm:$0xff]
    %v7511 = vld [vmem:[%s17] sm:$0x1]
    %v7513 = vlaneseq
    %v7514 = vshrl.u32 %v7513, 7
    %v7515 = vsub.s32 0, %v7514
    %v7516 = vrot.slane %v7511, %v7515
    %v7519 = vsel %vm237, %v7505, 0
    %v7522 = vsel %vm237, %v7506, 0
    %7524 = vmatprep.subr.mxu0 0.0
    %7525 = vmatpush1.msra.mxu0 %v7507
    %7526 = vmatprep.subr.mxu0 0.0
    %7527 = vmatpush1.msra.mxu0 %v7508
    %7528 = vmatprep.subr.mxu0 0.0
    %7529 = vmatpush1.msra.mxu0 %v7509
    %7530 = vmatprep.subr.mxu0 0.0
    %7531 = vmatpush1.msra.mxu0 %v7510
    %7532 = vmatprep.subr.mxu0 0.0
    %7533 = vmatpush1.msra.mxu0 0.0
    %7534 = vmatprep.subr.mxu0 0.0
    %7535 = vmatpush1.msra.mxu0 0.0
    %7536 = vmatprep.subr.mxu0 0.0
    %7537 = vmatpush1.msra.mxu0 0.0
    %7538 = vmatprep.subr.mxu0 0.0
    %7539 = vmatpush1.msra.mxu0 0.0
    %7540 = vmatprep.subr.mxu0 0.0
    %7541 = vmatpush1.msra.mxu0 0.0
    %7542 = vmatprep.subr.mxu0 0.0
    %7543 = vmatpush1.msra.mxu0 0.0
    %7544 = vmatprep.subr.mxu0 0.0
    %7545 = vmatpush1.msra.mxu0 0.0
    %7546 = vmatprep.subr.mxu0 0.0
    %7547 = vmatpush1.msra.mxu0 0.0
    %7548 = vmatprep.subr.mxu0 0.0
    %7549 = vmatpush1.msra.mxu0 0.0
    %7550 = vmatprep.subr.mxu0 0.0
    %7551 = vmatpush1.msra.mxu0 0.0
    %7552 = vmatprep.subr.mxu0 0.0
    %7553 = vmatpush1.msra.mxu0 0.0
    %7554 = vmatprep.subr.mxu0 0.0
    %7555 = vmatpush1.msra.mxu0 0.0
    %7556 = vmatprep.subr.mxu0 0.0
    %7557 = vmatpush1.msra.mxu0 0.0
    %7558 = vmatprep.subr.mxu0 0.0
    %7559 = vmatpush1.msra.mxu0 0.0
    %7560 = vmatprep.subr.mxu0 0.0
    %7561 = vmatpush1.msra.mxu0 0.0
    %7562 = vmatprep.subr.mxu0 0.0
    %7563 = vmatpush1.msra.mxu0 0.0
    %7564 = vmatprep.subr.mxu0 0.0
    %7565 = vmatpush1.msra.mxu0 0.0
    %7566 = vmatprep.subr.mxu0 0.0
    %7567 = vmatpush1.msra.mxu0 0.0
    %7568 = vmatprep.subr.mxu0 0.0
    %7569 = vmatpush1.msra.mxu0 0.0
    %7570 = vmatprep.subr.mxu0 0.0
    %7571 = vmatpush1.msra.mxu0 0.0
    %7572 = vmatprep.subr.mxu0 0.0
    %7573 = vmatpush1.msra.mxu0 0.0
    %7574 = vmatprep.subr.mxu0 0.0
    %7575 = vmatpush1.msra.mxu0 0.0
    %7576 = vmatprep.subr.mxu0 0.0
    %7577 = vmatpush1.msra.mxu0 0.0
    %7578 = vmatprep.subr.mxu0 0.0
    %7579 = vmatpush1.msra.mxu0 0.0
    %7580 = vmatprep.subr.mxu0 0.0
    %7581 = vmatpush1.msra.mxu0 0.0
    %7582 = vmatprep.subr.mxu0 0.0
    %7583 = vmatpush1.msra.mxu0 0.0
    %7584 = vmatprep.subr.mxu0 0.0
    %7585 = vmatpush1.msra.mxu0 0.0
    %7586 = vmatprep.subr.mxu0 0.0
    %7587 = vmatpush1.msra.mxu0 0.0
    %7588 = vmatprep.mubr.f32.mxu0 0.0
    %7589 = vmatmul.mubr.f32.gmra.mrb[0].mxu0 %v7519
    %v7590 = vpop.f32.mrb[0].mxu0
    %v7591 = vadd.f32 %v7516, %v7590
    %v7592 = vpop.f32.mrb[0].mxu0
    %7593 = vmatprep.mubr.f32.mxu0 0.0
    %7594 = vmatmul.mubr.f32.gmra.mrb[0].mxu0 %v7522
    %v7595 = vpop.f32.mrb[0].mxu0
    %v7596 = vadd.f32 %v7516, %v7595
    %v7597 = vpop.f32.mrb[0].mxu0
    %7598 = vdwg.mxu0
    %7599 = vst.msk [vmem:[%s18] sm:$0xff] %vm124, %v7591
    %7600 = vst.msk [vmem:[%s18 + $0x8] sm:$0xff] %vm124, %v7596
    // Predicated region
    $region90: #{tpu_custom_call.1} parent=1 // pred_check
      _
    $region91: #{tpu_custom_call.1} parent=1 // pred_check_branch
      %7602 = sbr.rel (0) target = $region93
    $region92: #{tpu_custom_call.1} parent=1 // pred_region
      _
    $region93: #{tpu_custom_call.1} parent=1 // pred_fallthru
      _
    // Predicated region
    $region94: #{tpu_custom_call.1} parent=1 // pred_check
      _
    $region95: #{tpu_custom_call.1} parent=1 // pred_check_branch
      %7604 = sbr.rel (0) target = $region97
    $region96: #{tpu_custom_call.1} parent=1 // pred_region
      _
    $region97: #{tpu_custom_call.1} parent=1 // pred_fallthru
      _
    %7605 = vsyncpa [#allocation3], 1
    %7606 = vsyncpa [#allocation5], 1
    %7607 = vsyncpa [#allocation8], 1

</llo_original>
